<compile_context>
chip_gen: v5e
topology: v5e:2x2
jax: 0.10.0
libtpu: 0.0.40
codegen_flags: <defaults>
</compile_context>

<pallas_src>
import jax
import jax.numpy as jnp
from jax import lax
from jax.experimental import pallas as pl
from jax.experimental.pallas import tpu as pltpu


# --------------------------------------------------------------------------- kernel


def llama_mlp_kernel(x_ref, wgu_ref, wd_ref, o_ref, acc_ref):
    # x_ref  : (tm, H)      token tile
    # wgu_ref: (2, H, ti)   [gate; up] weights, pre-transposed to (in, out) at init
    # wd_ref : (ti, H)      down_proj weights, pre-transposed to (in, out) at init
    # o_ref  : (tm, H)      output tile (resident across the I reduction axis)
    # acc_ref: (tm, H) f32  accumulator scratch
    j = pl.program_id(1)

    @pl.when(j == 0)
    def _init():
        acc_ref[...] = jnp.zeros_like(acc_ref)

    x = x_ref[...]

    # Canonical (K, N) MXU feeds -- no in-kernel weight transposes or reshapes.
    gate = lax.dot_general(x, wgu_ref[0], (((1,), (0,)), ((), ())),
                           preferred_element_type=jnp.float32)
    up = lax.dot_general(x, wgu_ref[1], (((1,), (0,)), ((), ())),
                         preferred_element_type=jnp.float32)

    # SiLU * up in f32 (sigmoid -> EUP), single cast to the down-proj weight dtype.
    inter = (gate * jax.nn.sigmoid(gate) * up).astype(wd_ref.dtype)

    # inter (tm, ti) @ Wd_t (ti, H), accumulated over the I axis.
    acc_ref[...] += lax.dot_general(inter, wd_ref[...], (((1,), (0,)), ((), ())),
                                    preferred_element_type=jnp.float32)

    @pl.when(j == pl.num_programs(1) - 1)
    def _finalize():
        o_ref[...] = acc_ref[...].astype(o_ref.dtype)


# ------------------------------------------------------------------ one-time packing


def pack_weights(w_gate, w_up, w_down):
    """One-time (model-load) repack of PyTorch-layout (out, in) weights.

    Returns:
      w_gu:     (2, H, I)  gate/up transposed to (in, out) and stacked
      w_down_t: (I, H)     down_proj transposed to (in, out)
    Do this once when loading the model, NOT per forward call.
    """
    assert w_gate.shape == w_up.shape
    return jnp.stack([w_gate.T, w_up.T], axis=0), w_down.T


# ----------------------------------------------------------------------- tile tuning


def _round_up(x, m):
    return ((x + m - 1) // m) * m


def _pick_divisor_tile(total, want, align=128):
    """Largest t <= want with total % t == 0 and (t % align == 0 or t == total)."""
    want = max(1, min(want, total))
    if total % want == 0 and (want % align == 0 or want == total):
        return want
    t = (want // align) * align
    while t >= align:
        if total % t == 0:
            return t
        t -= align
    return total


def _device_defaults():
    """(tm, ti, vmem_cap_bytes) tuned per TPU generation."""
    kind = ""
    try:
        kind = jax.devices()[0].device_kind.lower()
    except Exception:  # pragma: no cover - defensive
        pass
    if "v7" in kind:
        # 64 MiB VMEM/core, knee ~310 FLOP/B -> tm=512 compute-bound; tight cap.
        return 512, 512, 56 << 20
    if "v6" in kind or "trillium" in kind:
        # 128 MiB VMEM, knee ~650 FLOP/B -> need tm ~1024 to be MXU-bound.
        return 1024, 512, 100 << 20
    if "v5" in kind:
        # 128 MiB VMEM, knee ~240 FLOP/B.
        return 512, 512, 100 << 20
    # Unknown part: be conservative on VMEM.
    return 512, 512, 56 << 20


def _vmem_estimate(tm, ti, H, a_bytes, w_bytes):
    io = 2 * (tm * H * a_bytes          # x tile (double-buffered)
              + 2 * ti * H * w_bytes    # fused gate/up tile
              + ti * H * w_bytes        # down tile
              + tm * H * a_bytes)       # output tile
    scratch = tm * H * 4                # f32 accumulator
    temps = (tm * 2 * ti * 4            # gate/up f32 dot results
             + tm * ti * (4 + w_bytes))  # inter f32 + cast copy
    return io + scratch + temps


# -------------------------------------------------------------------------- wrapper


def llama_mlp(x, w_gu, w_down_t, *, tm=None, ti=None):
    """x: (B, S, H); w_gu: (2, H, I), w_down_t: (I, H) from pack_weights()."""
    B, S, H = x.shape
    assert w_gu.ndim == 3 and w_gu.shape[0] == 2 and w_gu.shape[1] == H
    I = w_gu.shape[2]
    assert w_down_t.shape == (I, H)

    M = B * S
    a_bytes = jnp.dtype(x.dtype).itemsize
    w_bytes = jnp.dtype(w_gu.dtype).itemsize

    dev_tm, dev_ti, vmem_cap = _device_defaults()
    tm = dev_tm if tm is None else tm
    ti = dev_ti if ti is None else ti

    # Intermediate tile must divide I and stay lane-aligned.
    ti = _pick_divisor_tile(I, ti)

    # Token tile selection (intensity knob).
    if M >= 256:
        tm = max(128, (min(tm, _round_up(M, 128)) // 128) * 128)
        # Prefer >= 2 token tiles so the parallel axis can feed both v7x TensorCores.
        if M >= 512 and _round_up(M, tm) // tm < 2:
            tm = _round_up((M + 1) // 2, 128)
    else:
        tm = _round_up(M, 8)

    # Shrink tiles (ti first -- preserves intensity) until the temp-aware working set
    # fits the per-core VMEM cap.
    headroom = 8 << 20
    while _vmem_estimate(tm, ti, H, a_bytes, w_bytes) + headroom > vmem_cap:
        if ti > 256:
            new_ti = _pick_divisor_tile(I, ti // 2)
            if new_ti < ti:
                ti = new_ti
                continue
        if tm > 256:
            tm = max(256, (tm // 2) // 8 * 8)
            continue
        if ti > 128:
            new_ti = _pick_divisor_tile(I, ti // 2)
            if new_ti < ti:
                ti = new_ti
                continue
        break

    # Pad ragged token counts (padded rows compute zeros and are sliced off).
    x2d = x.reshape(M, H)
    M_pad = _round_up(M, tm)
    if M_pad != M:
        x2d = jnp.pad(x2d, ((0, M_pad - M), (0, 0)))

    grid_m = M_pad // tm
    grid_i = I // ti

    vmem_limit = int(min(max(_vmem_estimate(tm, ti, H, a_bytes, w_bytes) + headroom,
                             32 << 20), vmem_cap))

    cost = pl.CostEstimate(
        flops=6 * M_pad * H * I,                      # gate + up + down matmuls
        transcendentals=M_pad * I,                    # sigmoid
        # Weights are re-streamed once per token tile (index_map depends only on j).
        bytes_accessed=2 * M_pad * H * a_bytes + grid_m * 3 * H * I * w_bytes)

    out2d = pl.pallas_call(
        llama_mlp_kernel,
        out_shape=jax.ShapeDtypeStruct((M_pad, H), x.dtype),
        grid_spec=pltpu.PrefetchScalarGridSpec(
            num_scalar_prefetch=0,
            grid=(grid_m, grid_i),                    # tokens (parallel), I (reduction)
            in_specs=[
                pl.BlockSpec((tm, H), lambda i, j: (i, 0)),        # x tile
                pl.BlockSpec((2, H, ti), lambda i, j: (0, 0, j)),  # gate/up (K, N) tile
                pl.BlockSpec((ti, H), lambda i, j: (j, 0)),        # down (K, N) tile
            ],
            out_specs=pl.BlockSpec((tm, H), lambda i, j: (i, 0)),
            scratch_shapes=[pltpu.VMEM((tm, H), jnp.float32)],
        ),
        compiler_params=pltpu.CompilerParams(
            dimension_semantics=("parallel", "arbitrary"),
            vmem_limit_bytes=vmem_limit),
        cost_estimate=cost,
    )(x2d, w_gu, w_down_t)

    if M_pad != M:
        out2d = out2d[:M]
    return out2d.reshape(B, S, H)


# ------------------------------------------------------------------------ reference


def llama_mlp_ref(x, w_gate, w_up, w_down, inter_dtype=None):
    """Pure-JAX reference mirroring the PyTorch forward (tp == 1 path).

    Uses f32 compute on the given inputs; `inter_dtype` mirrors the kernel's cast of
    the SiLU*up intermediate to the down-proj weight dtype.
    """
    xf = x.astype(jnp.float32)
    gate = jnp.einsum("bsh,ih->bsi", xf, w_gate.astype(jnp.float32))
    up = jnp.einsum("bsh,ih->bsi", xf, w_up.astype(jnp.float32))
    inter = jax.nn.silu(gate) * up
    if inter_dtype is not None:
        inter = inter.astype(inter_dtype).astype(jnp.float32)
    return jnp.einsum("bsi,hi->bsh", inter, w_down.astype(jnp.float32))


# ------------------------------------------------------------------------------ main

if __name__ == "__main__":
    key = jax.random.PRNGKey(0)
    kx, kg, ku, kd, kx2, kg2, ku2, kd2 = jax.random.split(key, 8)

    # ---- main test: small config, bf16 activations/weights, f32 accumulation ----
    B, S, H, I = 2, 256, 256, 512
    x = jax.random.normal(kx, (B, S, H), dtype=jnp.float32).astype(jnp.bfloat16)
    # PyTorch Linear weight layout: (out_features, in_features)
    w_gate = (jax.random.normal(kg, (I, H), dtype=jnp.float32) * 0.02).astype(jnp.bfloat16)
    w_up = (jax.random.normal(ku, (I, H), dtype=jnp.float32) * 0.02).astype(jnp.bfloat16)
    w_down = (jax.random.normal(kd, (H, I), dtype=jnp.float32) * 0.02).astype(jnp.bfloat16)

    # One-time packing at model load, not per forward call.
    w_gu, w_down_t = pack_weights(w_gate, w_up, w_down)

    out = jax.block_until_ready(llama_mlp(x, w_gu, w_down_t))
    ref = llama_mlp_ref(x, w_gate, w_up, w_down, inter_dtype=jnp.bfloat16)
    assert out.shape == (B, S, H)
    assert jnp.allclose(out.astype(jnp.float32), ref, atol=5e-3, rtol=5e-2), \
        "mismatch vs reference (main)"

    # ---- ragged test: token count not a multiple of the tile (padding path) ----
    B2, S2, H2, I2 = 1, 201, 256, 384
    x2 = jax.random.normal(kx2, (B2, S2, H2), dtype=jnp.float32).astype(jnp.bfloat16)
    w_gate2 = (jax.random.normal(kg2, (I2, H2), dtype=jnp.float32) * 0.02).astype(jnp.bfloat16)
    w_up2 = (jax.random.normal(ku2, (I2, H2), dtype=jnp.float32) * 0.02).astype(jnp.bfloat16)
    w_down2 = (jax.random.normal(kd2, (H2, I2), dtype=jnp.float32) * 0.02).astype(jnp.bfloat16)
    w_gu2, w_down_t2 = pack_weights(w_gate2, w_up2, w_down2)

    out2 = jax.block_until_ready(llama_mlp(x2, w_gu2, w_down_t2))
    ref2 = llama_mlp_ref(x2, w_gate2, w_up2, w_down2, inter_dtype=jnp.bfloat16)
    assert out2.shape == (B2, S2, H2)
    assert jnp.allclose(out2.astype(jnp.float32), ref2, atol=5e-3, rtol=5e-2), \
        "mismatch vs reference (ragged)"

    print("KERNEL_OK")
</pallas_src>

<mosaic_0001>
module attributes {stable_mosaic.version = 11 : i64} {
  func.func @llama_mlp_kernel(%arg0: i32, %arg1: i32, %arg2: memref<256x256xbf16, #tpu.memory_space<vmem>>, %arg3: memref<2x256x512xbf16, #tpu.memory_space<vmem>>, %arg4: memref<512x256xbf16, #tpu.memory_space<vmem>>, %arg5: memref<256x256xbf16, #tpu.memory_space<vmem>>, %arg6: memref<256x256xf32, #tpu.memory_space<vmem>>) attributes {dimension_semantics = [#tpu.dimension_semantics<parallel>, #tpu.dimension_semantics<arbitrary>], iteration_bounds = array<i64: 2, 1>, scalar_prefetch = 0 : i64, scratch_operands = 1 : i64, tpu.core_type = #tpu.core_type<tc>, window_params = [{transform_indices = @transform_0, window_bounds = array<i64: 256, 256>}, {transform_indices = @transform_1, window_bounds = array<i64: 2, 256, 512>}, {transform_indices = @transform_2, window_bounds = array<i64: 512, 256>}, {transform_indices = @transform_3, window_bounds = array<i64: 256, 256>}]} {
    %c0_i32 = arith.constant 0 : i32
    %0 = arith.cmpi eq, %arg1, %c0_i32 : i32
    %1 = arith.extui %0 : i1 to i32
    %c0_i32_0 = arith.constant 0 : i32
    %2 = arith.cmpi ne, %1, %c0_i32_0 : i32
    scf.if %2 {
      %cst_18 = arith.constant 0.000000e+00 : f32
      %26 = vector.broadcast %cst_18 : f32 to vector<256x256xf32>
      %c0_19 = arith.constant 0 : index
      %c0_20 = arith.constant 0 : index
      %27 = vector.load %arg6[%c0_19, %c0_20] : memref<256x256xf32, #tpu.memory_space<vmem>>, vector<256x256xf32>
      tpu.vector_store %arg6[%c0_19, %c0_20], %26 {strides = array<i32>} : memref<256x256xf32, #tpu.memory_space<vmem>>, vector<256x256xf32>,
    } else {
    }
    %c0 = arith.constant 0 : index
    %c0_1 = arith.constant 0 : index
    %3 = vector.load %arg2[%c0, %c0_1] : memref<256x256xbf16, #tpu.memory_space<vmem>>, vector<256x256xbf16>
    %c0_2 = arith.constant 0 : index
    %c0_3 = arith.constant 0 : index
    %c0_4 = arith.constant 0 : index
    %4 = vector.load %arg3[%c0_2, %c0_3, %c0_4] : memref<2x256x512xbf16, #tpu.memory_space<vmem>>, vector<1x256x512xbf16>
    %5 = vector.shape_cast %4 : vector<1x256x512xbf16> to vector<256x512xbf16>
    %cst = arith.constant dense<0.000000e+00> : vector<256x512xf32>
    %6 = tpu.matmul %3, %5, %cst {dimension_numbers = #tpu.dot_dimension_numbers<[1], [0], [0], [1], [0, 0, 1, 1], [], []>} : vector<256x256xbf16>, vector<256x512xbf16>, vector<256x512xf32> -> vector<256x512xf32>
    %c1 = arith.constant 1 : index
    %c0_5 = arith.constant 0 : index
    %c0_6 = arith.constant 0 : index
    %7 = vector.load %arg3[%c1, %c0_5, %c0_6] : memref<2x256x512xbf16, #tpu.memory_space<vmem>>, vector<1x256x512xbf16>
    %8 = vector.shape_cast %7 : vector<1x256x512xbf16> to vector<256x512xbf16>
    %cst_7 = arith.constant dense<0.000000e+00> : vector<256x512xf32>
    %9 = tpu.matmul %3, %8, %cst_7 {dimension_numbers = #tpu.dot_dimension_numbers<[1], [0], [0], [1], [0, 0, 1, 1], [], []>} : vector<256x256xbf16>, vector<256x512xbf16>, vector<256x512xf32> -> vector<256x512xf32>
    %10 = arith.negf %6 : vector<256x512xf32>
    %11 = math.exp %10 : vector<256x512xf32>
    %cst_8 = arith.constant 1.000000e+00 : f32
    %12 = vector.broadcast %cst_8 : f32 to vector<256x512xf32>
    %13 = arith.addf %12, %11 : vector<256x512xf32>
    %14 = arith.divf %12, %13 : vector<256x512xf32>
    %15 = arith.mulf %6, %14 : vector<256x512xf32>
    %16 = arith.mulf %15, %9 : vector<256x512xf32>
    %17 = arith.truncf %16 : vector<256x512xf32> to vector<256x512xbf16>
    %c0_9 = arith.constant 0 : index
    %c0_10 = arith.constant 0 : index
    %18 = vector.load %arg6[%c0_9, %c0_10] : memref<256x256xf32, #tpu.memory_space<vmem>>, vector<256x256xf32>
    %c0_11 = arith.constant 0 : index
    %c0_12 = arith.constant 0 : index
    %19 = vector.load %arg4[%c0_11, %c0_12] : memref<512x256xbf16, #tpu.memory_space<vmem>>, vector<512x256xbf16>
    %cst_13 = arith.constant dense<0.000000e+00> : vector<256x256xf32>
    %20 = tpu.matmul %17, %19, %cst_13 {dimension_numbers = #tpu.dot_dimension_numbers<[1], [0], [0], [1], [0, 0, 1, 1], [], []>} : vector<256x512xbf16>, vector<512x256xbf16>, vector<256x256xf32> -> vector<256x256xf32>
    %21 = arith.addf %18, %20 : vector<256x256xf32>
    %c0_14 = arith.constant 0 : index
    %c0_15 = arith.constant 0 : index
    %22 = vector.load %arg6[%c0_14, %c0_15] : memref<256x256xf32, #tpu.memory_space<vmem>>, vector<256x256xf32>
    tpu.vector_store %arg6[%c0_14, %c0_15], %21 {strides = array<i32>} : memref<256x256xf32, #tpu.memory_space<vmem>>, vector<256x256xf32>,
    %c0_i32_16 = arith.constant 0 : i32
    %23 = arith.cmpi eq, %arg1, %c0_i32_16 : i32
    %24 = arith.extui %23 : i1 to i32
    %c0_i32_17 = arith.constant 0 : i32
    %25 = arith.cmpi ne, %24, %c0_i32_17 : i32
    scf.if %25 {
      %c0_18 = arith.constant 0 : index
      %c0_19 = arith.constant 0 : index
      %26 = vector.load %arg6[%c0_18, %c0_19] : memref<256x256xf32, #tpu.memory_space<vmem>>, vector<256x256xf32>
      %27 = arith.truncf %26 : vector<256x256xf32> to vector<256x256xbf16>
      %c0_20 = arith.constant 0 : index
      %c0_21 = arith.constant 0 : index
      %28 = vector.load %arg5[%c0_20, %c0_21] : memref<256x256xbf16, #tpu.memory_space<vmem>>, vector<256x256xbf16>
      tpu.vector_store %arg5[%c0_20, %c0_21], %27 {strides = array<i32>} : memref<256x256xbf16, #tpu.memory_space<vmem>>, vector<256x256xbf16>,
    } else {
    }
    return
  }
  func.func @transform_0(%arg0: i32, %arg1: i32) -> (i32, i32) {
    %c0_i32 = arith.constant 0 : i32
    %c0_i32_0 = arith.constant 0 : i32
    return %arg0, %c0_i32 : i32, i32
  }
  func.func @transform_1(%arg0: i32, %arg1: i32) -> (i32, i32, i32) {
    %c0_i32 = arith.constant 0 : i32
    %c0_i32_0 = arith.constant 0 : i32
    %c0_i32_1 = arith.constant 0 : i32
    return %c0_i32, %c0_i32_0, %arg1 : i32, i32, i32
  }
  func.func @transform_2(%arg0: i32, %arg1: i32) -> (i32, i32) {
    %c0_i32 = arith.constant 0 : i32
    %c0_i32_0 = arith.constant 0 : i32
    return %arg1, %c0_i32 : i32, i32
  }
  func.func @transform_3(%arg0: i32, %arg1: i32) -> (i32, i32) {
    %c0_i32 = arith.constant 0 : i32
    %c0_i32_0 = arith.constant 0 : i32
    return %arg0, %c0_i32 : i32, i32
  }
}

</mosaic_0001>

<llo_original>
// kernel: tpu_custom_call.1
$region0: #{tpu_custom_call.1}
  #allocation0 [shape = 'u32[]', space=smem, size = 0x4, offset = 0x4, fixed_abs, tag = 'smem constant byte address 0x4 - core index']
  #allocation1 [shape = 'u32[72,128]{1,0:T(1,128)}', space=vmem, size = 0x9000, scoped, tag = 'internal scratch']
  #allocation2 [shape = 'f32[256,256]{1,0:T(8,128)}', space=vmem, size = 0x40000, scoped, tag = 'scratch operand']
  %s0 = inlined_call_operand.hbm [shape: bf16[512,256], index: 0, kind: input, shape index: {}]
  %s1 = inlined_call_operand.hbm [shape: bf16[2,256,512], index: 1, kind: input, shape index: {}]
  %s2 = inlined_call_operand.hbm [shape: bf16[512,256], index: 2, kind: input, shape index: {}]
  %s3 = inlined_call_operand.hbm [shape: bf16[512,256], index: 3, kind: output, shape index: {}]
  %s4 = sld [smem:[#allocation0]]
  $region65: #{tpu_custom_call.1} parent=0
    _
  %s6 = ssub.s32 1, %s4
  %s7 = scalar_select 0, %s6, %s4
  $region1: #{tpu_custom_call.1} parent=0
    #allocation3 [shape = 'u8[262144]{0}', space=vmem, size = 0x40000, scoped, tag = 'input window, operand 0']
    #allocation4 [shape = 's32[2]{0}', space=sflag, size = 0x8, scoped, tag = 'scoped memory for tpu_custom_call.1']
    #allocation5 [shape = 's32[2]{0}', space=sflag, size = 0x8, scoped, tag = 'scoped memory for tpu_custom_call.1']
    #allocation6 [shape = 'u8[524288]{0}', space=vmem, size = 0x80000, scoped, tag = 'input window, operand 1, single buffered']
    #allocation7 [shape = 's32[1]{0}', space=sflag, size = 0x4, scoped, tag = 'scoped memory for tpu_custom_call.1']
    #allocation8 [shape = 'u8[262144]{0}', space=vmem, size = 0x40000, scoped, tag = 'input window, operand 2, single buffered']
    #allocation9 [shape = 'u8[262144]{0}', space=vmem, size = 0x40000, scoped, tag = 'output window, operand 0']
    %8 = vsyncpa [#allocation4], 0
    %s9 = scalar_lea.sflag [#allocation4], 1
    %10 = vsyncpa %s9, 0
    %11 = vsyncpa [#allocation7], 0
    %12 = vsyncpa [#allocation5], 0
    %s13 = scalar_lea.sflag [#allocation5], 1
    %14 = vsyncpa %s13, 0
    loop: start=0, step=1, limit=4
    $region2: #{tpu_custom_call.1} parent=1 // loop_pre_header
      _
    $region3: #{tpu_custom_call.1} parent=1 // loop_header
      %s16 = sphi 0, %s20
      %p17 = scmp.ge.s32.totalorder %s16, 4
      %s23 = sphi 0, %s35
      %s24 = sphi 0, %s31
      %s25 = sphi 0, %s23
      %s26 = sphi 0, %s24
      %s27 = sphi 0, %s25
      %s28 = sphi 0, %s26
      %s38 = sphi 0, %s40
      %s41 = sphi 0, %s38
      %s42 = sphi 0, %s41
      %s58 = sphi 0, %s42
      %s64 = sphi 0, %s66
      %s67 = sphi 0, %s64
      %s68 = sphi 0, %s67
      %s84 = sphi 0, %s68
      %s90 = sphi 0, %s92
      %s93 = sphi 0, %s90
      %s94 = sphi 0, %s93
      %s110 = sphi 0, %s94
      %s116 = sphi 0, %s118
      %s119 = sphi 0, %s116
      %s120 = sphi 0, %s119
      %s136 = sphi 0, %s120
    $region4: #{tpu_custom_call.1} parent=1 // loop_header_branch
      %19 = sbr.rel (%p17) target = $region8
    $region5: #{tpu_custom_call.1} parent=1 // loop_body
      %s21 = ssub.s32 %s16, 1
      %s22 = ssub.s32 %s16, 2
      %s29 = sadd.s32 1, %s24
      %p30 = scmp.ge.s32.totalorder %s29, 1
      %s31 = scalar_select %p30, 0, %s29
      %s32 = sadd.s32 1, %s23
      %s33 = scalar_select %p30, %s32, %s23
      %p34 = scmp.ge.s32.totalorder %s33, 2
      %s35 = scalar_select %p34, 0, %s33
      %s36 = ssub.s32 %s23, %s35
      %p37 = scmp.eq.s32.totalorder %s36, 0
      %s39 = sadd.s32 %s38, 1
      %s40 = scalar_select %p37, %s38, %s39
      %p43 = pneg %p37
      %p44 = scmp.eq.s32.totalorder %s16, 1
      %p45 = por %p43, %p44
      %p46 = scmp.ne.s32.totalorder %s38, %s41
      %p47 = scmp.eq.s32.totalorder %s16, 0
      %p48 = por %p46, %p47
      %p49 = scmp.ne.s32.totalorder %s38, %s41
      %p50 = scmp.eq.s32.totalorder %s21, 1
      %p51 = por %p49, %p50
      %p52 = scmp.ne.s32.totalorder %s41, %s42
      %p53 = scmp.eq.s32.totalorder %s21, 0
      %p54 = por %p52, %p53
      %p55 = scmp.ne.s32.totalorder %s41, %s42
      %p56 = scmp.eq.s32.totalorder %s22, 1
      %p57 = por %p55, %p56
      %p59 = scmp.ne.s32.totalorder %s42, %s58
      %p60 = scmp.eq.s32.totalorder %s22, 0
      %p61 = por %p59, %p60
      %s62 = ssub.s32 %s24, %s31
      %p63 = scmp.eq.s32.totalorder %s62, 0
      %s65 = sadd.s32 %s64, 1
      %s66 = scalar_select %p63, %s64, %s65
      %p69 = pneg %p63
      %p70 = scmp.eq.s32.totalorder %s16, 1
      %p71 = por %p69, %p70
      %p72 = scmp.ne.s32.totalorder %s64, %s67
      %p73 = scmp.eq.s32.totalorder %s16, 0
      %p74 = por %p72, %p73
      %p75 = scmp.ne.s32.totalorder %s64, %s67
      %p76 = scmp.eq.s32.totalorder %s21, 1
      %p77 = por %p75, %p76
      %p78 = scmp.ne.s32.totalorder %s67, %s68
      %p79 = scmp.eq.s32.totalorder %s21, 0
      %p80 = por %p78, %p79
      %p81 = scmp.ne.s32.totalorder %s67, %s68
      %p82 = scmp.eq.s32.totalorder %s22, 1
      %p83 = por %p81, %p82
      %p85 = scmp.ne.s32.totalorder %s68, %s84
      %p86 = scmp.eq.s32.totalorder %s22, 0
      %p87 = por %p85, %p86
      %s88 = ssub.s32 %s24, %s31
      %p89 = scmp.eq.s32.totalorder %s88, 0
      %s91 = sadd.s32 %s90, 1
      %s92 = scalar_select %p89, %s90, %s91
      %p95 = pneg %p89
      %p96 = scmp.eq.s32.totalorder %s16, 1
      %p97 = por %p95, %p96
      %p98 = scmp.ne.s32.totalorder %s90, %s93
      %p99 = scmp.eq.s32.totalorder %s16, 0
      %p100 = por %p98, %p99
      %p101 = scmp.ne.s32.totalorder %s90, %s93
      %p102 = scmp.eq.s32.totalorder %s21, 1
      %p103 = por %p101, %p102
      %p104 = scmp.ne.s32.totalorder %s93, %s94
      %p105 = scmp.eq.s32.totalorder %s21, 0
      %p106 = por %p104, %p105
      %p107 = scmp.ne.s32.totalorder %s93, %s94
      %p108 = scmp.eq.s32.totalorder %s22, 1
      %p109 = por %p107, %p108
      %p111 = scmp.ne.s32.totalorder %s94, %s110
      %p112 = scmp.eq.s32.totalorder %s22, 0
      %p113 = por %p111, %p112
      %s114 = ssub.s32 %s23, %s35
      %p115 = scmp.eq.s32.totalorder %s114, 0
      %s117 = sadd.s32 %s116, 1
      %s118 = scalar_select %p115, %s116, %s117
      %p121 = pneg %p115
      %p122 = scmp.eq.s32.totalorder %s16, 1
      %p123 = por %p121, %p122
      %p124 = scmp.ne.s32.totalorder %s116, %s119
      %p125 = scmp.eq.s32.totalorder %s16, 0
      %p126 = por %p124, %p125
      %p127 = scmp.ne.s32.totalorder %s116, %s119
      %p128 = scmp.eq.s32.totalorder %s21, 1
      %p129 = por %p127, %p128
      %p130 = scmp.ne.s32.totalorder %s119, %s120
      %p131 = scmp.eq.s32.totalorder %s21, 0
      %p132 = por %p130, %p131
      %p133 = scmp.ne.s32.totalorder %s119, %s120
      %p134 = scmp.eq.s32.totalorder %s22, 1
      %p135 = por %p133, %p134
      %p137 = scmp.ne.s32.totalorder %s120, %s136
      %p138 = scmp.eq.s32.totalorder %s22, 0
      %p139 = por %p137, %p138
      %p140 = scmp.le.s32.totalorder 1, %s16
      %p141 = scmp.lt.s32.totalorder %s16, 3
      %p142 = pnand %p140, %p141
      %p143 = pneg %p142
      // Predicated region
      $region9: #{tpu_custom_call.1} parent=5 // pred_check
        _
      $region10: #{tpu_custom_call.1} parent=5 // pred_check_branch
        %145 = sbr.rel (%p142) target = $region12
      $region11: #{tpu_custom_call.1} parent=5 // pred_region
        %s146 = ssub.s32 %s16, 1
        // Predicated region
        $region13: #{tpu_custom_call.1} parent=11 // pred_check
          %p147 = pneg %p80
        $region14: #{tpu_custom_call.1} parent=11 // pred_check_branch
          %149 = sbr.rel (%p147) target = $region16
        $region15: #{tpu_custom_call.1} parent=11 // pred_region
          %s150 = smul.u32 4, %s26
          %152 = vsyncadd [#allocation7], 0
          %s153 = smul.addr %s150, 4
          %s154 = scalar_lea.hbm %s1, %s153
          %s155 = sshll.u32 %s154, 4
          %s156 = int_to_ptr.hbm [resolvable:$true] %s155
          %s157 = sshll.u32 [#allocation6], 4
          %s158 = int_to_ptr.vmem [resolvable:$true] %s157
          %163 = dma.hbm_to_vmem [thread:$0]  %s156, 16384, %s158, [#allocation7], 256, 256, 16
        $region16: #{tpu_custom_call.1} parent=11 // pred_fallthru
          _
        // Predicated region
        $region17: #{tpu_custom_call.1} parent=11 // pred_check
          %p164 = pneg %p106
        $region18: #{tpu_custom_call.1} parent=11 // pred_check_branch
          %166 = sbr.rel (%p164) target = $region20
        $region19: #{tpu_custom_call.1} parent=11 // pred_region
          %s167 = smul.u32 64, %s26
          %169 = vsyncadd [#allocation7], 0
          %s170 = smul.addr %s167, 2
          %s171 = smul.addr %s170, 4
          %s172 = scalar_lea.hbm %s2, %s171
          %s173 = sshll.u32 %s172, 4
          %s174 = int_to_ptr.hbm [resolvable:$true] %s173
          %s175 = sshll.u32 [#allocation8], 4
          %s176 = int_to_ptr.vmem [resolvable:$true] %s175
          %181 = dma.hbm_to_vmem [thread:$0]  %s174, 8192, %s176, [#allocation7], 128, 128, 8
        $region20: #{tpu_custom_call.1} parent=11 // pred_fallthru
          _
      $region12: #{tpu_custom_call.1} parent=5 // pred_fallthru
        _
      %p182 = scmp.lt.s32.totalorder %s16, 2
      // Predicated region
      $region21: #{tpu_custom_call.1} parent=5 // pred_check
        %p183 = pneg %p182
      $region22: #{tpu_custom_call.1} parent=5 // pred_check_branch
        %185 = sbr.rel (%p183) target = $region24
      $region23: #{tpu_custom_call.1} parent=5 // pred_region
        // Predicated region
        $region25: #{tpu_custom_call.1} parent=23 // pred_check
          %p186 = pneg %p48
        $region26: #{tpu_custom_call.1} parent=23 // pred_check_branch
          %188 = sbr.rel (%p186) target = $region28
        $region27: #{tpu_custom_call.1} parent=23 // pred_region
          %s189 = sand.u32 %s38, 1
          %s190 = scalar_lea.sflag [#allocation4], %s189
          %s191 = sand.u32 %s38, 1
          %s192 = smul.addr %s191, 256
          %s193 = scalar_lea.vmem [#allocation3], %s192
          %s194 = smul.u32 32, %s23
          %196 = vsyncadd %s190, 0
          %s197 = smul.addr %s194, 2
          %s198 = smul.addr %s197, 4
          %s199 = scalar_lea.hbm %s0, %s198
          %s200 = sshll.u32 %s199, 4
          %s201 = int_to_ptr.hbm [resolvable:$true] %s200
          %s202 = sshll.u32 %s193, 4
          %s203 = int_to_ptr.vmem [resolvable:$true] %s202
          %208 = dma.hbm_to_vmem [thread:$0]  %s201, 4096, %s203, %s190, 128, 128, 8
        $region28: #{tpu_custom_call.1} parent=23 // pred_fallthru
          _
      $region24: #{tpu_custom_call.1} parent=5 // pred_fallthru
        _
      %p209 = scmp.le.s32.totalorder 1, %s16
      %p210 = scmp.lt.s32.totalorder %s16, 3
      %p211 = pnand %p209, %p210
      %p212 = pneg %p211
      // Predicated region
      $region29: #{tpu_custom_call.1} parent=5 // pred_check
        _
      $region30: #{tpu_custom_call.1} parent=5 // pred_check_branch
        %214 = sbr.rel (%p211) target = $region32
      $region31: #{tpu_custom_call.1} parent=5 // pred_region
        %s215 = ssub.s32 %s16, 1
        %s216 = sand.u32 %s41, 1
        %s217 = scalar_lea.sflag [#allocation4], %s216
        %s218 = sand.u32 %s41, 1
        %s219 = smul.addr %s218, 256
        %s220 = scalar_lea.vmem [#allocation3], %s219
        // Predicated region
        $region33: #{tpu_custom_call.1} parent=31 // pred_check
          %p221 = pneg %p54
        $region34: #{tpu_custom_call.1} parent=31 // pred_check_branch
          %223 = sbr.rel (%p221) target = $region36
        $region35: #{tpu_custom_call.1} parent=31 // pred_region
          %225 = dma.done %s217, 4096
        $region36: #{tpu_custom_call.1} parent=31 // pred_fallthru
          _
        // Predicated region
        $region37: #{tpu_custom_call.1} parent=31 // pred_check
          %p226 = pneg %p80
        $region38: #{tpu_custom_call.1} parent=31 // pred_check_branch
          %228 = sbr.rel (%p226) target = $region40
        $region39: #{tpu_custom_call.1} parent=31 // pred_region
          %230 = dma.done [#allocation7], 16384
        $region40: #{tpu_custom_call.1} parent=31 // pred_fallthru
          _
        // Predicated region
        $region41: #{tpu_custom_call.1} parent=31 // pred_check
          %p231 = pneg %p106
        $region42: #{tpu_custom_call.1} parent=31 // pred_check_branch
          %233 = sbr.rel (%p231) target = $region44
        $region43: #{tpu_custom_call.1} parent=31 // pred_region
          %235 = dma.done [#allocation7], 8192
        $region44: #{tpu_custom_call.1} parent=31 // pred_fallthru
          _
        %s236 = sand.u32 %s41, 1
        %s237 = scalar_lea.sflag [#allocation4], %s236
        %s238 = sand.u32 %s41, 1
        %s239 = smul.addr %s238, 256
        %s240 = scalar_lea.vmem [#allocation3], %s239
        %p241 = pneg %p54
        %p242 = pneg %p51
        %p243 = pneg %p80
        %p244 = pneg %p77
        %p245 = pneg %p106
        %p246 = pneg %p103
        %p247 = pneg %p132
        %p248 = pneg %p129
        %s249 = sand.u32 %s119, 1
        %s250 = scalar_lea.sflag [#allocation5], %s249
        %s251 = sand.u32 %s119, 1
        %s252 = smul.addr %s251, 256
        %s253 = scalar_lea.vmem [#allocation9], %s252
        %s254 = smul.u32 32, %s25
        %s255 = smul.u32 4, %s26
        %s256 = smul.u32 64, %s26
        %s257 = smul.u32 32, %s25
        %p258 = scmp.eq.s32.totalorder %s26, 0
        // Predicated region
        $region45: #{tpu_custom_call.1} parent=31 // pred_check
          %p259 = pneg %p258
        $region46: #{tpu_custom_call.1} parent=31 // pred_check_branch
          %261 = sbr.rel (%p259) target = $region48
        $region47: #{tpu_custom_call.1} parent=31 // pred_region
          %262 = vst [vmem:[#allocation2] sm:$0xff] 0.0
          %263 = vst [vmem:[#allocation2 + $0x8] sm:$0xff] 0.0
          %264 = vst [vmem:[#allocation2 + $0x10] sm:$0xff] 0.0
          %265 = vst [vmem:[#allocation2 + $0x18] sm:$0xff] 0.0
          %266 = vst [vmem:[#allocation2 + $0x20] sm:$0xff] 0.0
          %267 = vst [vmem:[#allocation2 + $0x28] sm:$0xff] 0.0
          %268 = vst [vmem:[#allocation2 + $0x30] sm:$0xff] 0.0
          %269 = vst [vmem:[#allocation2 + $0x38] sm:$0xff] 0.0
          %270 = vst [vmem:[#allocation2 + $0x40] sm:$0xff] 0.0
          %271 = vst [vmem:[#allocation2 + $0x48] sm:$0xff] 0.0
          %272 = vst [vmem:[#allocation2 + $0x50] sm:$0xff] 0.0
          %273 = vst [vmem:[#allocation2 + $0x58] sm:$0xff] 0.0
          %274 = vst [vmem:[#allocation2 + $0x60] sm:$0xff] 0.0
          %275 = vst [vmem:[#allocation2 + $0x68] sm:$0xff] 0.0
          %276 = vst [vmem:[#allocation2 + $0x70] sm:$0xff] 0.0
          %277 = vst [vmem:[#allocation2 + $0x78] sm:$0xff] 0.0
          %278 = vst [vmem:[#allocation2 + $0x80] sm:$0xff] 0.0
          %279 = vst [vmem:[#allocation2 + $0x88] sm:$0xff] 0.0
          %280 = vst [vmem:[#allocation2 + $0x90] sm:$0xff] 0.0
          %281 = vst [vmem:[#allocation2 + $0x98] sm:$0xff] 0.0
          %282 = vst [vmem:[#allocation2 + $0xa0] sm:$0xff] 0.0
          %283 = vst [vmem:[#allocation2 + $0xa8] sm:$0xff] 0.0
          %284 = vst [vmem:[#allocation2 + $0xb0] sm:$0xff] 0.0
          %285 = vst [vmem:[#allocation2 + $0xb8] sm:$0xff] 0.0
          %286 = vst [vmem:[#allocation2 + $0xc0] sm:$0xff] 0.0
          %287 = vst [vmem:[#allocation2 + $0xc8] sm:$0xff] 0.0
          %288 = vst [vmem:[#allocation2 + $0xd0] sm:$0xff] 0.0
          %289 = vst [vmem:[#allocation2 + $0xd8] sm:$0xff] 0.0
          %290 = vst [vmem:[#allocation2 + $0xe0] sm:$0xff] 0.0
          %291 = vst [vmem:[#allocation2 + $0xe8] sm:$0xff] 0.0
          %292 = vst [vmem:[#allocation2 + $0xf0] sm:$0xff] 0.0
          %293 = vst [vmem:[#allocation2 + $0xf8] sm:$0xff] 0.0
          %294 = vst [vmem:[#allocation2 + $0x100] sm:$0xff] 0.0
          %295 = vst [vmem:[#allocation2 + $0x108] sm:$0xff] 0.0
          %296 = vst [vmem:[#allocation2 + $0x110] sm:$0xff] 0.0
          %297 = vst [vmem:[#allocation2 + $0x118] sm:$0xff] 0.0
          %298 = vst [vmem:[#allocation2 + $0x120] sm:$0xff] 0.0
          %299 = vst [vmem:[#allocation2 + $0x128] sm:$0xff] 0.0
          %300 = vst [vmem:[#allocation2 + $0x130] sm:$0xff] 0.0
          %301 = vst [vmem:[#allocation2 + $0x138] sm:$0xff] 0.0
          %302 = vst [vmem:[#allocation2 + $0x140] sm:$0xff] 0.0
          %303 = vst [vmem:[#allocation2 + $0x148] sm:$0xff] 0.0
          %304 = vst [vmem:[#allocation2 + $0x150] sm:$0xff] 0.0
          %305 = vst [vmem:[#allocation2 + $0x158] sm:$0xff] 0.0
          %306 = vst [vmem:[#allocation2 + $0x160] sm:$0xff] 0.0
          %307 = vst [vmem:[#allocation2 + $0x168] sm:$0xff] 0.0
          %308 = vst [vmem:[#allocation2 + $0x170] sm:$0xff] 0.0
          %309 = vst [vmem:[#allocation2 + $0x178] sm:$0xff] 0.0
          %310 = vst [vmem:[#allocation2 + $0x180] sm:$0xff] 0.0
          %311 = vst [vmem:[#allocation2 + $0x188] sm:$0xff] 0.0
          %312 = vst [vmem:[#allocation2 + $0x190] sm:$0xff] 0.0
          %313 = vst [vmem:[#allocation2 + $0x198] sm:$0xff] 0.0
          %314 = vst [vmem:[#allocation2 + $0x1a0] sm:$0xff] 0.0
          %315 = vst [vmem:[#allocation2 + $0x1a8] sm:$0xff] 0.0
          %316 = vst [vmem:[#allocation2 + $0x1b0] sm:$0xff] 0.0
          %317 = vst [vmem:[#allocation2 + $0x1b8] sm:$0xff] 0.0
          %318 = vst [vmem:[#allocation2 + $0x1c0] sm:$0xff] 0.0
          %319 = vst [vmem:[#allocation2 + $0x1c8] sm:$0xff] 0.0
          %320 = vst [vmem:[#allocation2 + $0x1d0] sm:$0xff] 0.0
          %321 = vst [vmem:[#allocation2 + $0x1d8] sm:$0xff] 0.0
          %322 = vst [vmem:[#allocation2 + $0x1e0] sm:$0xff] 0.0
          %323 = vst [vmem:[#allocation2 + $0x1e8] sm:$0xff] 0.0
          %324 = vst [vmem:[#allocation2 + $0x1f0] sm:$0xff] 0.0
          %325 = vst [vmem:[#allocation2 + $0x1f8] sm:$0xff] 0.0
        $region48: #{tpu_custom_call.1} parent=31 // pred_fallthru
          _
        %v326 = vld [vmem:[%s220] sm:$0xff]
        %v327 = vld [vmem:[%s220 + $0x8] sm:$0xff]
        %v328 = vld [vmem:[%s220 + $0x10] sm:$0xff]
        %v329 = vld [vmem:[%s220 + $0x18] sm:$0xff]
        %v330 = vld [vmem:[%s220 + $0x20] sm:$0xff]
        %v331 = vld [vmem:[%s220 + $0x28] sm:$0xff]
        %v332 = vld [vmem:[%s220 + $0x30] sm:$0xff]
        %v333 = vld [vmem:[%s220 + $0x38] sm:$0xff]
        %v334 = vld [vmem:[%s220 + $0x40] sm:$0xff]
        %v335 = vld [vmem:[%s220 + $0x48] sm:$0xff]
        %v336 = vld [vmem:[%s220 + $0x50] sm:$0xff]
        %v337 = vld [vmem:[%s220 + $0x58] sm:$0xff]
        %v338 = vld [vmem:[%s220 + $0x60] sm:$0xff]
        %v339 = vld [vmem:[%s220 + $0x68] sm:$0xff]
        %v340 = vld [vmem:[%s220 + $0x70] sm:$0xff]
        %v341 = vld [vmem:[%s220 + $0x78] sm:$0xff]
        %v342 = vld [vmem:[%s220 + $0x80] sm:$0xff]
        %v343 = vld [vmem:[%s220 + $0x88] sm:$0xff]
        %v344 = vld [vmem:[%s220 + $0x90] sm:$0xff]
        %v345 = vld [vmem:[%s220 + $0x98] sm:$0xff]
        %v346 = vld [vmem:[%s220 + $0xa0] sm:$0xff]
        %v347 = vld [vmem:[%s220 + $0xa8] sm:$0xff]
        %v348 = vld [vmem:[%s220 + $0xb0] sm:$0xff]
        %v349 = vld [vmem:[%s220 + $0xb8] sm:$0xff]
        %v350 = vld [vmem:[%s220 + $0xc0] sm:$0xff]
        %v351 = vld [vmem:[%s220 + $0xc8] sm:$0xff]
        %v352 = vld [vmem:[%s220 + $0xd0] sm:$0xff]
        %v353 = vld [vmem:[%s220 + $0xd8] sm:$0xff]
        %v354 = vld [vmem:[%s220 + $0xe0] sm:$0xff]
        %v355 = vld [vmem:[%s220 + $0xe8] sm:$0xff]
        %v356 = vld [vmem:[%s220 + $0xf0] sm:$0xff]
        %v357 = vld [vmem:[%s220 + $0xf8] sm:$0xff]
        %v358 = vld [vmem:[#allocation6] sm:$0xff]
        %v359 = vld [vmem:[#allocation6 + $0x8] sm:$0xff]
        %v360 = vld [vmem:[#allocation6 + $0x10] sm:$0xff]
        %v361 = vld [vmem:[#allocation6 + $0x18] sm:$0xff]
        %v362 = vld [vmem:[#allocation6 + $0x20] sm:$0xff]
        %v363 = vld [vmem:[#allocation6 + $0x28] sm:$0xff]
        %v364 = vld [vmem:[#allocation6 + $0x30] sm:$0xff]
        %v365 = vld [vmem:[#allocation6 + $0x38] sm:$0xff]
        %v366 = vld [vmem:[#allocation6 + $0x40] sm:$0xff]
        %v367 = vld [vmem:[#allocation6 + $0x48] sm:$0xff]
        %v368 = vld [vmem:[#allocation6 + $0x50] sm:$0xff]
        %v369 = vld [vmem:[#allocation6 + $0x58] sm:$0xff]
        %v370 = vld [vmem:[#allocation6 + $0x60] sm:$0xff]
        %v371 = vld [vmem:[#allocation6 + $0x68] sm:$0xff]
        %v372 = vld [vmem:[#allocation6 + $0x70] sm:$0xff]
        %v373 = vld [vmem:[#allocation6 + $0x78] sm:$0xff]
        %v374 = vld [vmem:[#allocation6 + $0x80] sm:$0xff]
        %v375 = vld [vmem:[#allocation6 + $0x88] sm:$0xff]
        %v376 = vld [vmem:[#allocation6 + $0x90] sm:$0xff]
        %v377 = vld [vmem:[#allocation6 + $0x98] sm:$0xff]
        %v378 = vld [vmem:[#allocation6 + $0xa0] sm:$0xff]
        %v379 = vld [vmem:[#allocation6 + $0xa8] sm:$0xff]
        %v380 = vld [vmem:[#allocation6 + $0xb0] sm:$0xff]
        %v381 = vld [vmem:[#allocation6 + $0xb8] sm:$0xff]
        %v382 = vld [vmem:[#allocation6 + $0xc0] sm:$0xff]
        %v383 = vld [vmem:[#allocation6 + $0xc8] sm:$0xff]
        %v384 = vld [vmem:[#allocation6 + $0xd0] sm:$0xff]
        %v385 = vld [vmem:[#allocation6 + $0xd8] sm:$0xff]
        %v386 = vld [vmem:[#allocation6 + $0xe0] sm:$0xff]
        %v387 = vld [vmem:[#allocation6 + $0xe8] sm:$0xff]
        %v388 = vld [vmem:[#allocation6 + $0xf0] sm:$0xff]
        %v389 = vld [vmem:[#allocation6 + $0xf8] sm:$0xff]
        %v390 = vld [vmem:[#allocation6 + $0x100] sm:$0xff]
        %v391 = vld [vmem:[#allocation6 + $0x108] sm:$0xff]
        %v392 = vld [vmem:[#allocation6 + $0x110] sm:$0xff]
        %v393 = vld [vmem:[#allocation6 + $0x118] sm:$0xff]
        %v394 = vld [vmem:[#allocation6 + $0x120] sm:$0xff]
        %v395 = vld [vmem:[#allocation6 + $0x128] sm:$0xff]
        %v396 = vld [vmem:[#allocation6 + $0x130] sm:$0xff]
        %v397 = vld [vmem:[#allocation6 + $0x138] sm:$0xff]
        %v398 = vld [vmem:[#allocation6 + $0x140] sm:$0xff]
        %v399 = vld [vmem:[#allocation6 + $0x148] sm:$0xff]
        %v400 = vld [vmem:[#allocation6 + $0x150] sm:$0xff]
        %v401 = vld [vmem:[#allocation6 + $0x158] sm:$0xff]
        %v402 = vld [vmem:[#allocation6 + $0x160] sm:$0xff]
        %v403 = vld [vmem:[#allocation6 + $0x168] sm:$0xff]
        %v404 = vld [vmem:[#allocation6 + $0x170] sm:$0xff]
        %v405 = vld [vmem:[#allocation6 + $0x178] sm:$0xff]
        %v406 = vld [vmem:[#allocation6 + $0x180] sm:$0xff]
        %v407 = vld [vmem:[#allocation6 + $0x188] sm:$0xff]
        %v408 = vld [vmem:[#allocation6 + $0x190] sm:$0xff]
        %v409 = vld [vmem:[#allocation6 + $0x198] sm:$0xff]
        %v410 = vld [vmem:[#allocation6 + $0x1a0] sm:$0xff]
        %v411 = vld [vmem:[#allocation6 + $0x1a8] sm:$0xff]
        %v412 = vld [vmem:[#allocation6 + $0x1b0] sm:$0xff]
        %v413 = vld [vmem:[#allocation6 + $0x1b8] sm:$0xff]
        %v414 = vld [vmem:[#allocation6 + $0x1c0] sm:$0xff]
        %v415 = vld [vmem:[#allocation6 + $0x1c8] sm:$0xff]
        %v416 = vld [vmem:[#allocation6 + $0x1d0] sm:$0xff]
        %v417 = vld [vmem:[#allocation6 + $0x1d8] sm:$0xff]
        %v418 = vld [vmem:[#allocation6 + $0x1e0] sm:$0xff]
        %v419 = vld [vmem:[#allocation6 + $0x1e8] sm:$0xff]
        %v420 = vld [vmem:[#allocation6 + $0x1f0] sm:$0xff]
        %v421 = vld [vmem:[#allocation6 + $0x1f8] sm:$0xff]
        %v454 = vunpack.c.l.b16 %v326
        %v455 = vunpack.c.h.b16 %v326
        %v456 = vunpack.c.l.b16 %v327
        %v457 = vunpack.c.h.b16 %v327
        %v458 = vunpack.c.l.b16 %v328
        %v459 = vunpack.c.h.b16 %v328
        %v460 = vunpack.c.l.b16 %v329
        %v461 = vunpack.c.h.b16 %v329
        %v462 = vunpack.c.l.b16 %v330
        %v463 = vunpack.c.h.b16 %v330
        %v464 = vunpack.c.l.b16 %v331
        %v465 = vunpack.c.h.b16 %v331
        %v466 = vunpack.c.l.b16 %v332
        %v467 = vunpack.c.h.b16 %v332
        %v468 = vunpack.c.l.b16 %v333
        %v469 = vunpack.c.h.b16 %v333
        %v470 = vunpack.c.l.b16 %v334
        %v471 = vunpack.c.h.b16 %v334
        %v472 = vunpack.c.l.b16 %v335
        %v473 = vunpack.c.h.b16 %v335
        %v474 = vunpack.c.l.b16 %v336
        %v475 = vunpack.c.h.b16 %v336
        %v476 = vunpack.c.l.b16 %v337
        %v477 = vunpack.c.h.b16 %v337
        %v478 = vunpack.c.l.b16 %v338
        %v479 = vunpack.c.h.b16 %v338
        %v480 = vunpack.c.l.b16 %v339
        %v481 = vunpack.c.h.b16 %v339
        %v482 = vunpack.c.l.b16 %v340
        %v483 = vunpack.c.h.b16 %v340
        %v484 = vunpack.c.l.b16 %v341
        %v485 = vunpack.c.h.b16 %v341
        %v486 = vunpack.c.l.b16 %v342
        %v487 = vunpack.c.h.b16 %v342
        %v488 = vunpack.c.l.b16 %v343
        %v489 = vunpack.c.h.b16 %v343
        %v490 = vunpack.c.l.b16 %v344
        %v491 = vunpack.c.h.b16 %v344
        %v492 = vunpack.c.l.b16 %v345
        %v493 = vunpack.c.h.b16 %v345
        %v494 = vunpack.c.l.b16 %v346
        %v495 = vunpack.c.h.b16 %v346
        %v496 = vunpack.c.l.b16 %v347
        %v497 = vunpack.c.h.b16 %v347
        %v498 = vunpack.c.l.b16 %v348
        %v499 = vunpack.c.h.b16 %v348
        %v500 = vunpack.c.l.b16 %v349
        %v501 = vunpack.c.h.b16 %v349
        %v502 = vunpack.c.l.b16 %v350
        %v503 = vunpack.c.h.b16 %v350
        %v504 = vunpack.c.l.b16 %v351
        %v505 = vunpack.c.h.b16 %v351
        %v506 = vunpack.c.l.b16 %v352
        %v507 = vunpack.c.h.b16 %v352
        %v508 = vunpack.c.l.b16 %v353
        %v509 = vunpack.c.h.b16 %v353
        %v510 = vunpack.c.l.b16 %v354
        %v511 = vunpack.c.h.b16 %v354
        %v512 = vunpack.c.l.b16 %v355
        %v513 = vunpack.c.h.b16 %v355
        %v514 = vunpack.c.l.b16 %v356
        %v515 = vunpack.c.h.b16 %v356
        %v516 = vunpack.c.l.b16 %v357
        %v517 = vunpack.c.h.b16 %v357
        %v518 = vpack.c.b16 %v456, %v454
        %v519 = vpack.c.b16 %v457, %v455
        %v520 = vpack.c.b16 %v460, %v458
        %v521 = vpack.c.b16 %v461, %v459
        %v522 = vpack.c.b16 %v464, %v462
        %v523 = vpack.c.b16 %v465, %v463
        %v524 = vpack.c.b16 %v468, %v466
        %v525 = vpack.c.b16 %v469, %v467
        %v526 = vpack.c.b16 %v472, %v470
        %v527 = vpack.c.b16 %v473, %v471
        %v528 = vpack.c.b16 %v476, %v474
        %v529 = vpack.c.b16 %v477, %v475
        %v530 = vpack.c.b16 %v480, %v478
        %v531 = vpack.c.b16 %v481, %v479
        %v532 = vpack.c.b16 %v484, %v482
        %v533 = vpack.c.b16 %v485, %v483
        %v534 = vpack.c.b16 %v488, %v486
        %v535 = vpack.c.b16 %v489, %v487
        %v536 = vpack.c.b16 %v492, %v490
        %v537 = vpack.c.b16 %v493, %v491
        %v538 = vpack.c.b16 %v496, %v494
        %v539 = vpack.c.b16 %v497, %v495
        %v540 = vpack.c.b16 %v500, %v498
        %v541 = vpack.c.b16 %v501, %v499
        %v542 = vpack.c.b16 %v504, %v502
        %v543 = vpack.c.b16 %v505, %v503
        %v544 = vpack.c.b16 %v508, %v506
        %v545 = vpack.c.b16 %v509, %v507
        %v546 = vpack.c.b16 %v512, %v510
        %v547 = vpack.c.b16 %v513, %v511
        %v548 = vpack.c.b16 %v516, %v514
        %v549 = vpack.c.b16 %v517, %v515
        %v646 = vunpack.c.l.b16 %v358
        %v647 = vunpack.c.h.b16 %v358
        %v648 = vunpack.c.l.b16 %v359
        %v649 = vunpack.c.h.b16 %v359
        %v650 = vunpack.c.l.b16 %v360
        %v651 = vunpack.c.h.b16 %v360
        %v652 = vunpack.c.l.b16 %v361
        %v653 = vunpack.c.h.b16 %v361
        %v654 = vunpack.c.l.b16 %v362
        %v655 = vunpack.c.h.b16 %v362
        %v656 = vunpack.c.l.b16 %v363
        %v657 = vunpack.c.h.b16 %v363
        %v658 = vunpack.c.l.b16 %v364
        %v659 = vunpack.c.h.b16 %v364
        %v660 = vunpack.c.l.b16 %v365
        %v661 = vunpack.c.h.b16 %v365
        %v662 = vunpack.c.l.b16 %v366
        %v663 = vunpack.c.h.b16 %v366
        %v664 = vunpack.c.l.b16 %v367
        %v665 = vunpack.c.h.b16 %v367
        %v666 = vunpack.c.l.b16 %v368
        %v667 = vunpack.c.h.b16 %v368
        %v668 = vunpack.c.l.b16 %v369
        %v669 = vunpack.c.h.b16 %v369
        %v670 = vunpack.c.l.b16 %v370
        %v671 = vunpack.c.h.b16 %v370
        %v672 = vunpack.c.l.b16 %v371
        %v673 = vunpack.c.h.b16 %v371
        %v674 = vunpack.c.l.b16 %v372
        %v675 = vunpack.c.h.b16 %v372
        %v676 = vunpack.c.l.b16 %v373
        %v677 = vunpack.c.h.b16 %v373
        %v678 = vunpack.c.l.b16 %v374
        %v679 = vunpack.c.h.b16 %v374
        %v680 = vunpack.c.l.b16 %v375
        %v681 = vunpack.c.h.b16 %v375
        %v682 = vunpack.c.l.b16 %v376
        %v683 = vunpack.c.h.b16 %v376
        %v684 = vunpack.c.l.b16 %v377
        %v685 = vunpack.c.h.b16 %v377
        %v686 = vunpack.c.l.b16 %v378
        %v687 = vunpack.c.h.b16 %v378
        %v688 = vunpack.c.l.b16 %v379
        %v689 = vunpack.c.h.b16 %v379
        %v690 = vunpack.c.l.b16 %v380
        %v691 = vunpack.c.h.b16 %v380
        %v692 = vunpack.c.l.b16 %v381
        %v693 = vunpack.c.h.b16 %v381
        %v694 = vunpack.c.l.b16 %v382
        %v695 = vunpack.c.h.b16 %v382
        %v696 = vunpack.c.l.b16 %v383
        %v697 = vunpack.c.h.b16 %v383
        %v698 = vunpack.c.l.b16 %v384
        %v699 = vunpack.c.h.b16 %v384
        %v700 = vunpack.c.l.b16 %v385
        %v701 = vunpack.c.h.b16 %v385
        %v702 = vunpack.c.l.b16 %v386
        %v703 = vunpack.c.h.b16 %v386
        %v704 = vunpack.c.l.b16 %v387
        %v705 = vunpack.c.h.b16 %v387
        %v706 = vunpack.c.l.b16 %v388
        %v707 = vunpack.c.h.b16 %v388
        %v708 = vunpack.c.l.b16 %v389
        %v709 = vunpack.c.h.b16 %v389
        %v710 = vunpack.c.l.b16 %v390
        %v711 = vunpack.c.h.b16 %v390
        %v712 = vunpack.c.l.b16 %v391
        %v713 = vunpack.c.h.b16 %v391
        %v714 = vunpack.c.l.b16 %v392
        %v715 = vunpack.c.h.b16 %v392
        %v716 = vunpack.c.l.b16 %v393
        %v717 = vunpack.c.h.b16 %v393
        %v718 = vunpack.c.l.b16 %v394
        %v719 = vunpack.c.h.b16 %v394
        %v720 = vunpack.c.l.b16 %v395
        %v721 = vunpack.c.h.b16 %v395
        %v722 = vunpack.c.l.b16 %v396
        %v723 = vunpack.c.h.b16 %v396
        %v724 = vunpack.c.l.b16 %v397
        %v725 = vunpack.c.h.b16 %v397
        %v726 = vunpack.c.l.b16 %v398
        %v727 = vunpack.c.h.b16 %v398
        %v728 = vunpack.c.l.b16 %v399
        %v729 = vunpack.c.h.b16 %v399
        %v730 = vunpack.c.l.b16 %v400
        %v731 = vunpack.c.h.b16 %v400
        %v732 = vunpack.c.l.b16 %v401
        %v733 = vunpack.c.h.b16 %v401
        %v734 = vunpack.c.l.b16 %v402
        %v735 = vunpack.c.h.b16 %v402
        %v736 = vunpack.c.l.b16 %v403
        %v737 = vunpack.c.h.b16 %v403
        %v738 = vunpack.c.l.b16 %v404
        %v739 = vunpack.c.h.b16 %v404
        %v740 = vunpack.c.l.b16 %v405
        %v741 = vunpack.c.h.b16 %v405
        %v742 = vunpack.c.l.b16 %v406
        %v743 = vunpack.c.h.b16 %v406
        %v744 = vunpack.c.l.b16 %v407
        %v745 = vunpack.c.h.b16 %v407
        %v746 = vunpack.c.l.b16 %v408
        %v747 = vunpack.c.h.b16 %v408
        %v748 = vunpack.c.l.b16 %v409
        %v749 = vunpack.c.h.b16 %v409
        %v750 = vunpack.c.l.b16 %v410
        %v751 = vunpack.c.h.b16 %v410
        %v752 = vunpack.c.l.b16 %v411
        %v753 = vunpack.c.h.b16 %v411
        %v754 = vunpack.c.l.b16 %v412
        %v755 = vunpack.c.h.b16 %v412
        %v756 = vunpack.c.l.b16 %v413
        %v757 = vunpack.c.h.b16 %v413
        %v758 = vunpack.c.l.b16 %v414
        %v759 = vunpack.c.h.b16 %v414
        %v760 = vunpack.c.l.b16 %v415
        %v761 = vunpack.c.h.b16 %v415
        %v762 = vunpack.c.l.b16 %v416
        %v763 = vunpack.c.h.b16 %v416
        %v764 = vunpack.c.l.b16 %v417
        %v765 = vunpack.c.h.b16 %v417
        %v766 = vunpack.c.l.b16 %v418
        %v767 = vunpack.c.h.b16 %v418
        %v768 = vunpack.c.l.b16 %v419
        %v769 = vunpack.c.h.b16 %v419
        %v770 = vunpack.c.l.b16 %v420
        %v771 = vunpack.c.h.b16 %v420
        %v772 = vunpack.c.l.b16 %v421
        %v773 = vunpack.c.h.b16 %v421
        %v774 = vpack.c.b16 %v650, %v646
        %v775 = vpack.c.b16 %v651, %v647
        %v776 = vpack.c.b16 %v652, %v648
        %v777 = vpack.c.b16 %v653, %v649
        %v778 = vpack.c.b16 %v658, %v654
        %v779 = vpack.c.b16 %v659, %v655
        %v780 = vpack.c.b16 %v660, %v656
        %v781 = vpack.c.b16 %v661, %v657
        %v782 = vpack.c.b16 %v666, %v662
        %v783 = vpack.c.b16 %v667, %v663
        %v784 = vpack.c.b16 %v668, %v664
        %v785 = vpack.c.b16 %v669, %v665
        %v786 = vpack.c.b16 %v674, %v670
        %v787 = vpack.c.b16 %v675, %v671
        %v788 = vpack.c.b16 %v676, %v672
        %v789 = vpack.c.b16 %v677, %v673
        %v790 = vpack.c.b16 %v682, %v678
        %v791 = vpack.c.b16 %v683, %v679
        %v792 = vpack.c.b16 %v684, %v680
        %v793 = vpack.c.b16 %v685, %v681
        %v794 = vpack.c.b16 %v690, %v686
        %v795 = vpack.c.b16 %v691, %v687
        %v796 = vpack.c.b16 %v692, %v688
        %v797 = vpack.c.b16 %v693, %v689
        %v798 = vpack.c.b16 %v698, %v694
        %v799 = vpack.c.b16 %v699, %v695
        %v800 = vpack.c.b16 %v700, %v696
        %v801 = vpack.c.b16 %v701, %v697
        %v802 = vpack.c.b16 %v706, %v702
        %v803 = vpack.c.b16 %v707, %v703
        %v804 = vpack.c.b16 %v708, %v704
        %v805 = vpack.c.b16 %v709, %v705
        %v806 = vpack.c.b16 %v714, %v710
        %v807 = vpack.c.b16 %v715, %v711
        %v808 = vpack.c.b16 %v716, %v712
        %v809 = vpack.c.b16 %v717, %v713
        %v810 = vpack.c.b16 %v722, %v718
        %v811 = vpack.c.b16 %v723, %v719
        %v812 = vpack.c.b16 %v724, %v720
        %v813 = vpack.c.b16 %v725, %v721
        %v814 = vpack.c.b16 %v730, %v726
        %v815 = vpack.c.b16 %v731, %v727
        %v816 = vpack.c.b16 %v732, %v728
        %v817 = vpack.c.b16 %v733, %v729
        %v818 = vpack.c.b16 %v738, %v734
        %v819 = vpack.c.b16 %v739, %v735
        %v820 = vpack.c.b16 %v740, %v736
        %v821 = vpack.c.b16 %v741, %v737
        %v822 = vpack.c.b16 %v746, %v742
        %v823 = vpack.c.b16 %v747, %v743
        %v824 = vpack.c.b16 %v748, %v744
        %v825 = vpack.c.b16 %v749, %v745
        %v826 = vpack.c.b16 %v754, %v750
        %v827 = vpack.c.b16 %v755, %v751
        %v828 = vpack.c.b16 %v756, %v752
        %v829 = vpack.c.b16 %v757, %v753
        %v830 = vpack.c.b16 %v762, %v758
        %v831 = vpack.c.b16 %v763, %v759
        %v832 = vpack.c.b16 %v764, %v760
        %v833 = vpack.c.b16 %v765, %v761
        %v834 = vpack.c.b16 %v770, %v766
        %v835 = vpack.c.b16 %v771, %v767
        %v836 = vpack.c.b16 %v772, %v768
        %v837 = vpack.c.b16 %v773, %v769
        %902 = vmatpush.bf16.msra.mxu0 %v802
        %903 = vmatpush.bf16.msra.mxu0 %v798
        %904 = vmatpush.bf16.msra.mxu0 %v794
        %905 = vmatpush.bf16.msra.mxu0 %v790
        %906 = vmatpush.bf16.msra.mxu0 %v786
        %907 = vmatpush.bf16.msra.mxu0 %v782
        %908 = vmatpush.bf16.msra.mxu0 %v778
        %909 = vmatpush.bf16.msra.mxu0 %v774
        %910 = vmatmul.bf16.gmra.mxu0 %v518
        %v911 = vpop.f32.mrf.mxu0
        %v912 = vadd.f32 0.0, %v911
        %v913 = vpop.f32.mrf.mxu0
        %v914 = vadd.f32 0.0, %v913
        %915 = vmatmul.bf16.gmra.mxu0 %v520
        %v916 = vpop.f32.mrf.mxu0
        %v917 = vadd.f32 0.0, %v916
        %v918 = vpop.f32.mrf.mxu0
        %v919 = vadd.f32 0.0, %v918
        %920 = vmatmul.bf16.gmra.mxu0 %v522
        %v921 = vpop.f32.mrf.mxu0
        %v922 = vadd.f32 0.0, %v921
        %v923 = vpop.f32.mrf.mxu0
        %v924 = vadd.f32 0.0, %v923
        %925 = vmatmul.bf16.gmra.mxu0 %v524
        %v926 = vpop.f32.mrf.mxu0
        %v927 = vadd.f32 0.0, %v926
        %v928 = vpop.f32.mrf.mxu0
        %v929 = vadd.f32 0.0, %v928
        %930 = vmatmul.bf16.gmra.mxu0 %v526
        %v931 = vpop.f32.mrf.mxu0
        %v932 = vadd.f32 0.0, %v931
        %v933 = vpop.f32.mrf.mxu0
        %v934 = vadd.f32 0.0, %v933
        %935 = vmatmul.bf16.gmra.mxu0 %v528
        %v936 = vpop.f32.mrf.mxu0
        %v937 = vadd.f32 0.0, %v936
        %v938 = vpop.f32.mrf.mxu0
        %v939 = vadd.f32 0.0, %v938
        %940 = vmatmul.bf16.gmra.mxu0 %v530
        %v941 = vpop.f32.mrf.mxu0
        %v942 = vadd.f32 0.0, %v941
        %v943 = vpop.f32.mrf.mxu0
        %v944 = vadd.f32 0.0, %v943
        %945 = vmatmul.bf16.gmra.mxu0 %v532
        %v946 = vpop.f32.mrf.mxu0
        %v947 = vadd.f32 0.0, %v946
        %v948 = vpop.f32.mrf.mxu0
        %v949 = vadd.f32 0.0, %v948
        %950 = vmatmul.bf16.gmra.mxu0 %v534
        %v951 = vpop.f32.mrf.mxu0
        %v952 = vadd.f32 0.0, %v951
        %v953 = vpop.f32.mrf.mxu0
        %v954 = vadd.f32 0.0, %v953
        %955 = vmatmul.bf16.gmra.mxu0 %v536
        %v956 = vpop.f32.mrf.mxu0
        %v957 = vadd.f32 0.0, %v956
        %v958 = vpop.f32.mrf.mxu0
        %v959 = vadd.f32 0.0, %v958
        %960 = vmatmul.bf16.gmra.mxu0 %v538
        %v961 = vpop.f32.mrf.mxu0
        %v962 = vadd.f32 0.0, %v961
        %v963 = vpop.f32.mrf.mxu0
        %v964 = vadd.f32 0.0, %v963
        %965 = vmatmul.bf16.gmra.mxu0 %v540
        %v966 = vpop.f32.mrf.mxu0
        %v967 = vadd.f32 0.0, %v966
        %v968 = vpop.f32.mrf.mxu0
        %v969 = vadd.f32 0.0, %v968
        %970 = vmatmul.bf16.gmra.mxu0 %v542
        %v971 = vpop.f32.mrf.mxu0
        %v972 = vadd.f32 0.0, %v971
        %v973 = vpop.f32.mrf.mxu0
        %v974 = vadd.f32 0.0, %v973
        %975 = vmatmul.bf16.gmra.mxu0 %v544
        %v976 = vpop.f32.mrf.mxu0
        %v977 = vadd.f32 0.0, %v976
        %v978 = vpop.f32.mrf.mxu0
        %v979 = vadd.f32 0.0, %v978
        %980 = vmatmul.bf16.gmra.mxu0 %v546
        %v981 = vpop.f32.mrf.mxu0
        %v982 = vadd.f32 0.0, %v981
        %v983 = vpop.f32.mrf.mxu0
        %v984 = vadd.f32 0.0, %v983
        %985 = vmatmul.bf16.gmra.mxu0 %v548
        %v986 = vpop.f32.mrf.mxu0
        %v987 = vadd.f32 0.0, %v986
        %v988 = vpop.f32.mrf.mxu0
        %v989 = vadd.f32 0.0, %v988
        %990 = vdwg.mxu0
        %991 = vmatpush.bf16.msra.mxu0 %v834
        %992 = vmatpush.bf16.msra.mxu0 %v830
        %993 = vmatpush.bf16.msra.mxu0 %v826
        %994 = vmatpush.bf16.msra.mxu0 %v822
        %995 = vmatpush.bf16.msra.mxu0 %v818
        %996 = vmatpush.bf16.msra.mxu0 %v814
        %997 = vmatpush.bf16.msra.mxu0 %v810
        %998 = vmatpush.bf16.msra.mxu0 %v806
        %999 = vmatmul.bf16.gmra.mxu0 %v519
        %v1000 = vpop.f32.mrf.mxu0
        %v1001 = vadd.f32 %v912, %v1000
        %v1002 = vpop.f32.mrf.mxu0
        %v1003 = vadd.f32 %v914, %v1002
        %1004 = vmatmul.bf16.gmra.mxu0 %v521
        %v1005 = vpop.f32.mrf.mxu0
        %v1006 = vadd.f32 %v917, %v1005
        %v1007 = vpop.f32.mrf.mxu0
        %v1008 = vadd.f32 %v919, %v1007
        %1009 = vmatmul.bf16.gmra.mxu0 %v523
        %v1010 = vpop.f32.mrf.mxu0
        %v1011 = vadd.f32 %v922, %v1010
        %v1012 = vpop.f32.mrf.mxu0
        %v1013 = vadd.f32 %v924, %v1012
        %1014 = vmatmul.bf16.gmra.mxu0 %v525
        %v1015 = vpop.f32.mrf.mxu0
        %v1016 = vadd.f32 %v927, %v1015
        %v1017 = vpop.f32.mrf.mxu0
        %v1018 = vadd.f32 %v929, %v1017
        %1019 = vmatmul.bf16.gmra.mxu0 %v527
        %v1020 = vpop.f32.mrf.mxu0
        %v1021 = vadd.f32 %v932, %v1020
        %v1022 = vpop.f32.mrf.mxu0
        %v1023 = vadd.f32 %v934, %v1022
        %1024 = vmatmul.bf16.gmra.mxu0 %v529
        %v1025 = vpop.f32.mrf.mxu0
        %v1026 = vadd.f32 %v937, %v1025
        %v1027 = vpop.f32.mrf.mxu0
        %v1028 = vadd.f32 %v939, %v1027
        %1029 = vmatmul.bf16.gmra.mxu0 %v531
        %v1030 = vpop.f32.mrf.mxu0
        %v1031 = vadd.f32 %v942, %v1030
        %v1032 = vpop.f32.mrf.mxu0
        %v1033 = vadd.f32 %v944, %v1032
        %1034 = vmatmul.bf16.gmra.mxu0 %v533
        %v1035 = vpop.f32.mrf.mxu0
        %v1036 = vadd.f32 %v947, %v1035
        %v1037 = vpop.f32.mrf.mxu0
        %v1038 = vadd.f32 %v949, %v1037
        %1039 = vmatmul.bf16.gmra.mxu0 %v535
        %v1040 = vpop.f32.mrf.mxu0
        %v1041 = vadd.f32 %v952, %v1040
        %v1042 = vpop.f32.mrf.mxu0
        %v1043 = vadd.f32 %v954, %v1042
        %1044 = vmatmul.bf16.gmra.mxu0 %v537
        %v1045 = vpop.f32.mrf.mxu0
        %v1046 = vadd.f32 %v957, %v1045
        %v1047 = vpop.f32.mrf.mxu0
        %v1048 = vadd.f32 %v959, %v1047
        %1049 = vmatmul.bf16.gmra.mxu0 %v539
        %v1050 = vpop.f32.mrf.mxu0
        %v1051 = vadd.f32 %v962, %v1050
        %v1052 = vpop.f32.mrf.mxu0
        %v1053 = vadd.f32 %v964, %v1052
        %1054 = vmatmul.bf16.gmra.mxu0 %v541
        %v1055 = vpop.f32.mrf.mxu0
        %v1056 = vadd.f32 %v967, %v1055
        %v1057 = vpop.f32.mrf.mxu0
        %v1058 = vadd.f32 %v969, %v1057
        %1059 = vmatmul.bf16.gmra.mxu0 %v543
        %v1060 = vpop.f32.mrf.mxu0
        %v1061 = vadd.f32 %v972, %v1060
        %v1062 = vpop.f32.mrf.mxu0
        %v1063 = vadd.f32 %v974, %v1062
        %1064 = vmatmul.bf16.gmra.mxu0 %v545
        %v1065 = vpop.f32.mrf.mxu0
        %v1066 = vadd.f32 %v977, %v1065
        %v1067 = vpop.f32.mrf.mxu0
        %v1068 = vadd.f32 %v979, %v1067
        %1069 = vmatmul.bf16.gmra.mxu0 %v547
        %v1070 = vpop.f32.mrf.mxu0
        %v1071 = vadd.f32 %v982, %v1070
        %v1072 = vpop.f32.mrf.mxu0
        %v1073 = vadd.f32 %v984, %v1072
        %1074 = vmatmul.bf16.gmra.mxu0 %v549
        %v1075 = vpop.f32.mrf.mxu0
        %v1076 = vadd.f32 %v987, %v1075
        %v1077 = vpop.f32.mrf.mxu0
        %v1078 = vadd.f32 %v989, %v1077
        %1079 = vdwg.mxu0
        %1080 = vmatpush.bf16.msra.mxu0 %v803
        %1081 = vmatpush.bf16.msra.mxu0 %v799
        %1082 = vmatpush.bf16.msra.mxu0 %v795
        %1083 = vmatpush.bf16.msra.mxu0 %v791
        %1084 = vmatpush.bf16.msra.mxu0 %v787
        %1085 = vmatpush.bf16.msra.mxu0 %v783
        %1086 = vmatpush.bf16.msra.mxu0 %v779
        %1087 = vmatpush.bf16.msra.mxu0 %v775
        %1088 = vmatmul.bf16.gmra.mxu0 %v518
        %v1089 = vpop.f32.mrf.mxu0
        %v1090 = vadd.f32 0.0, %v1089
        %v1091 = vpop.f32.mrf.mxu0
        %v1092 = vadd.f32 0.0, %v1091
        %1093 = vmatmul.bf16.gmra.mxu0 %v520
        %v1094 = vpop.f32.mrf.mxu0
        %v1095 = vadd.f32 0.0, %v1094
        %v1096 = vpop.f32.mrf.mxu0
        %v1097 = vadd.f32 0.0, %v1096
        %1098 = vmatmul.bf16.gmra.mxu0 %v522
        %v1099 = vpop.f32.mrf.mxu0
        %v1100 = vadd.f32 0.0, %v1099
        %v1101 = vpop.f32.mrf.mxu0
        %v1102 = vadd.f32 0.0, %v1101
        %1103 = vmatmul.bf16.gmra.mxu0 %v524
        %v1104 = vpop.f32.mrf.mxu0
        %v1105 = vadd.f32 0.0, %v1104
        %v1106 = vpop.f32.mrf.mxu0
        %v1107 = vadd.f32 0.0, %v1106
        %1108 = vmatmul.bf16.gmra.mxu0 %v526
        %v1109 = vpop.f32.mrf.mxu0
        %v1110 = vadd.f32 0.0, %v1109
        %v1111 = vpop.f32.mrf.mxu0
        %v1112 = vadd.f32 0.0, %v1111
        %1113 = vmatmul.bf16.gmra.mxu0 %v528
        %v1114 = vpop.f32.mrf.mxu0
        %v1115 = vadd.f32 0.0, %v1114
        %v1116 = vpop.f32.mrf.mxu0
        %v1117 = vadd.f32 0.0, %v1116
        %1118 = vmatmul.bf16.gmra.mxu0 %v530
        %v1119 = vpop.f32.mrf.mxu0
        %v1120 = vadd.f32 0.0, %v1119
        %v1121 = vpop.f32.mrf.mxu0
        %v1122 = vadd.f32 0.0, %v1121
        %1123 = vmatmul.bf16.gmra.mxu0 %v532
        %v1124 = vpop.f32.mrf.mxu0
        %v1125 = vadd.f32 0.0, %v1124
        %v1126 = vpop.f32.mrf.mxu0
        %v1127 = vadd.f32 0.0, %v1126
        %1128 = vmatmul.bf16.gmra.mxu0 %v534
        %v1129 = vpop.f32.mrf.mxu0
        %v1130 = vadd.f32 0.0, %v1129
        %v1131 = vpop.f32.mrf.mxu0
        %v1132 = vadd.f32 0.0, %v1131
        %1133 = vmatmul.bf16.gmra.mxu0 %v536
        %v1134 = vpop.f32.mrf.mxu0
        %v1135 = vadd.f32 0.0, %v1134
        %v1136 = vpop.f32.mrf.mxu0
        %v1137 = vadd.f32 0.0, %v1136
        %1138 = vmatmul.bf16.gmra.mxu0 %v538
        %v1139 = vpop.f32.mrf.mxu0
        %v1140 = vadd.f32 0.0, %v1139
        %v1141 = vpop.f32.mrf.mxu0
        %v1142 = vadd.f32 0.0, %v1141
        %1143 = vmatmul.bf16.gmra.mxu0 %v540
        %v1144 = vpop.f32.mrf.mxu0
        %v1145 = vadd.f32 0.0, %v1144
        %v1146 = vpop.f32.mrf.mxu0
        %v1147 = vadd.f32 0.0, %v1146
        %1148 = vmatmul.bf16.gmra.mxu0 %v542
        %v1149 = vpop.f32.mrf.mxu0
        %v1150 = vadd.f32 0.0, %v1149
        %v1151 = vpop.f32.mrf.mxu0
        %v1152 = vadd.f32 0.0, %v1151
        %1153 = vmatmul.bf16.gmra.mxu0 %v544
        %v1154 = vpop.f32.mrf.mxu0
        %v1155 = vadd.f32 0.0, %v1154
        %v1156 = vpop.f32.mrf.mxu0
        %v1157 = vadd.f32 0.0, %v1156
        %1158 = vmatmul.bf16.gmra.mxu0 %v546
        %v1159 = vpop.f32.mrf.mxu0
        %v1160 = vadd.f32 0.0, %v1159
        %v1161 = vpop.f32.mrf.mxu0
        %v1162 = vadd.f32 0.0, %v1161
        %1163 = vmatmul.bf16.gmra.mxu0 %v548
        %v1164 = vpop.f32.mrf.mxu0
        %v1165 = vadd.f32 0.0, %v1164
        %v1166 = vpop.f32.mrf.mxu0
        %v1167 = vadd.f32 0.0, %v1166
        %1168 = vdwg.mxu0
        %1169 = vmatpush.bf16.msra.mxu0 %v835
        %1170 = vmatpush.bf16.msra.mxu0 %v831
        %1171 = vmatpush.bf16.msra.mxu0 %v827
        %1172 = vmatpush.bf16.msra.mxu0 %v823
        %1173 = vmatpush.bf16.msra.mxu0 %v819
        %1174 = vmatpush.bf16.msra.mxu0 %v815
        %1175 = vmatpush.bf16.msra.mxu0 %v811
        %1176 = vmatpush.bf16.msra.mxu0 %v807
        %1177 = vmatmul.bf16.gmra.mxu0 %v519
        %v1178 = vpop.f32.mrf.mxu0
        %v1179 = vadd.f32 %v1090, %v1178
        %v1180 = vpop.f32.mrf.mxu0
        %v1181 = vadd.f32 %v1092, %v1180
        %1182 = vmatmul.bf16.gmra.mxu0 %v521
        %v1183 = vpop.f32.mrf.mxu0
        %v1184 = vadd.f32 %v1095, %v1183
        %v1185 = vpop.f32.mrf.mxu0
        %v1186 = vadd.f32 %v1097, %v1185
        %1187 = vmatmul.bf16.gmra.mxu0 %v523
        %v1188 = vpop.f32.mrf.mxu0
        %v1189 = vadd.f32 %v1100, %v1188
        %v1190 = vpop.f32.mrf.mxu0
        %v1191 = vadd.f32 %v1102, %v1190
        %1192 = vmatmul.bf16.gmra.mxu0 %v525
        %v1193 = vpop.f32.mrf.mxu0
        %v1194 = vadd.f32 %v1105, %v1193
        %v1195 = vpop.f32.mrf.mxu0
        %v1196 = vadd.f32 %v1107, %v1195
        %1197 = vmatmul.bf16.gmra.mxu0 %v527
        %v1198 = vpop.f32.mrf.mxu0
        %v1199 = vadd.f32 %v1110, %v1198
        %v1200 = vpop.f32.mrf.mxu0
        %v1201 = vadd.f32 %v1112, %v1200
        %1202 = vmatmul.bf16.gmra.mxu0 %v529
        %v1203 = vpop.f32.mrf.mxu0
        %v1204 = vadd.f32 %v1115, %v1203
        %v1205 = vpop.f32.mrf.mxu0
        %v1206 = vadd.f32 %v1117, %v1205
        %1207 = vmatmul.bf16.gmra.mxu0 %v531
        %v1208 = vpop.f32.mrf.mxu0
        %v1209 = vadd.f32 %v1120, %v1208
        %v1210 = vpop.f32.mrf.mxu0
        %v1211 = vadd.f32 %v1122, %v1210
        %1212 = vmatmul.bf16.gmra.mxu0 %v533
        %v1213 = vpop.f32.mrf.mxu0
        %v1214 = vadd.f32 %v1125, %v1213
        %v1215 = vpop.f32.mrf.mxu0
        %v1216 = vadd.f32 %v1127, %v1215
        %1217 = vmatmul.bf16.gmra.mxu0 %v535
        %v1218 = vpop.f32.mrf.mxu0
        %v1219 = vadd.f32 %v1130, %v1218
        %v1220 = vpop.f32.mrf.mxu0
        %v1221 = vadd.f32 %v1132, %v1220
        %1222 = vmatmul.bf16.gmra.mxu0 %v537
        %v1223 = vpop.f32.mrf.mxu0
        %v1224 = vadd.f32 %v1135, %v1223
        %v1225 = vpop.f32.mrf.mxu0
        %v1226 = vadd.f32 %v1137, %v1225
        %1227 = vmatmul.bf16.gmra.mxu0 %v539
        %v1228 = vpop.f32.mrf.mxu0
        %v1229 = vadd.f32 %v1140, %v1228
        %v1230 = vpop.f32.mrf.mxu0
        %v1231 = vadd.f32 %v1142, %v1230
        %1232 = vmatmul.bf16.gmra.mxu0 %v541
        %v1233 = vpop.f32.mrf.mxu0
        %v1234 = vadd.f32 %v1145, %v1233
        %v1235 = vpop.f32.mrf.mxu0
        %v1236 = vadd.f32 %v1147, %v1235
        %1237 = vmatmul.bf16.gmra.mxu0 %v543
        %v1238 = vpop.f32.mrf.mxu0
        %v1239 = vadd.f32 %v1150, %v1238
        %v1240 = vpop.f32.mrf.mxu0
        %v1241 = vadd.f32 %v1152, %v1240
        %1242 = vmatmul.bf16.gmra.mxu0 %v545
        %v1243 = vpop.f32.mrf.mxu0
        %v1244 = vadd.f32 %v1155, %v1243
        %v1245 = vpop.f32.mrf.mxu0
        %v1246 = vadd.f32 %v1157, %v1245
        %1247 = vmatmul.bf16.gmra.mxu0 %v547
        %v1248 = vpop.f32.mrf.mxu0
        %v1249 = vadd.f32 %v1160, %v1248
        %v1250 = vpop.f32.mrf.mxu0
        %v1251 = vadd.f32 %v1162, %v1250
        %1252 = vmatmul.bf16.gmra.mxu0 %v549
        %v1253 = vpop.f32.mrf.mxu0
        %v1254 = vadd.f32 %v1165, %v1253
        %v1255 = vpop.f32.mrf.mxu0
        %v1256 = vadd.f32 %v1167, %v1255
        %1257 = vdwg.mxu0
        %1258 = vmatpush.bf16.msra.mxu0 %v804
        %1259 = vmatpush.bf16.msra.mxu0 %v800
        %1260 = vmatpush.bf16.msra.mxu0 %v796
        %1261 = vmatpush.bf16.msra.mxu0 %v792
        %1262 = vmatpush.bf16.msra.mxu0 %v788
        %1263 = vmatpush.bf16.msra.mxu0 %v784
        %1264 = vmatpush.bf16.msra.mxu0 %v780
        %1265 = vmatpush.bf16.msra.mxu0 %v776
        %1266 = vmatmul.bf16.gmra.mxu0 %v518
        %v1267 = vpop.f32.mrf.mxu0
        %v1268 = vadd.f32 0.0, %v1267
        %v1269 = vpop.f32.mrf.mxu0
        %v1270 = vadd.f32 0.0, %v1269
        %1271 = vmatmul.bf16.gmra.mxu0 %v520
        %v1272 = vpop.f32.mrf.mxu0
        %v1273 = vadd.f32 0.0, %v1272
        %v1274 = vpop.f32.mrf.mxu0
        %v1275 = vadd.f32 0.0, %v1274
        %1276 = vmatmul.bf16.gmra.mxu0 %v522
        %v1277 = vpop.f32.mrf.mxu0
        %v1278 = vadd.f32 0.0, %v1277
        %v1279 = vpop.f32.mrf.mxu0
        %v1280 = vadd.f32 0.0, %v1279
        %1281 = vmatmul.bf16.gmra.mxu0 %v524
        %v1282 = vpop.f32.mrf.mxu0
        %v1283 = vadd.f32 0.0, %v1282
        %v1284 = vpop.f32.mrf.mxu0
        %v1285 = vadd.f32 0.0, %v1284
        %1286 = vmatmul.bf16.gmra.mxu0 %v526
        %v1287 = vpop.f32.mrf.mxu0
        %v1288 = vadd.f32 0.0, %v1287
        %v1289 = vpop.f32.mrf.mxu0
        %v1290 = vadd.f32 0.0, %v1289
        %1291 = vmatmul.bf16.gmra.mxu0 %v528
        %v1292 = vpop.f32.mrf.mxu0
        %v1293 = vadd.f32 0.0, %v1292
        %v1294 = vpop.f32.mrf.mxu0
        %v1295 = vadd.f32 0.0, %v1294
        %1296 = vmatmul.bf16.gmra.mxu0 %v530
        %v1297 = vpop.f32.mrf.mxu0
        %v1298 = vadd.f32 0.0, %v1297
        %v1299 = vpop.f32.mrf.mxu0
        %v1300 = vadd.f32 0.0, %v1299
        %1301 = vmatmul.bf16.gmra.mxu0 %v532
        %v1302 = vpop.f32.mrf.mxu0
        %v1303 = vadd.f32 0.0, %v1302
        %v1304 = vpop.f32.mrf.mxu0
        %v1305 = vadd.f32 0.0, %v1304
        %1306 = vmatmul.bf16.gmra.mxu0 %v534
        %v1307 = vpop.f32.mrf.mxu0
        %v1308 = vadd.f32 0.0, %v1307
        %v1309 = vpop.f32.mrf.mxu0
        %v1310 = vadd.f32 0.0, %v1309
        %1311 = vmatmul.bf16.gmra.mxu0 %v536
        %v1312 = vpop.f32.mrf.mxu0
        %v1313 = vadd.f32 0.0, %v1312
        %v1314 = vpop.f32.mrf.mxu0
        %v1315 = vadd.f32 0.0, %v1314
        %1316 = vmatmul.bf16.gmra.mxu0 %v538
        %v1317 = vpop.f32.mrf.mxu0
        %v1318 = vadd.f32 0.0, %v1317
        %v1319 = vpop.f32.mrf.mxu0
        %v1320 = vadd.f32 0.0, %v1319
        %1321 = vmatmul.bf16.gmra.mxu0 %v540
        %v1322 = vpop.f32.mrf.mxu0
        %v1323 = vadd.f32 0.0, %v1322
        %v1324 = vpop.f32.mrf.mxu0
        %v1325 = vadd.f32 0.0, %v1324
        %1326 = vmatmul.bf16.gmra.mxu0 %v542
        %v1327 = vpop.f32.mrf.mxu0
        %v1328 = vadd.f32 0.0, %v1327
        %v1329 = vpop.f32.mrf.mxu0
        %v1330 = vadd.f32 0.0, %v1329
        %1331 = vmatmul.bf16.gmra.mxu0 %v544
        %v1332 = vpop.f32.mrf.mxu0
        %v1333 = vadd.f32 0.0, %v1332
        %v1334 = vpop.f32.mrf.mxu0
        %v1335 = vadd.f32 0.0, %v1334
        %1336 = vmatmul.bf16.gmra.mxu0 %v546
        %v1337 = vpop.f32.mrf.mxu0
        %v1338 = vadd.f32 0.0, %v1337
        %v1339 = vpop.f32.mrf.mxu0
        %v1340 = vadd.f32 0.0, %v1339
        %1341 = vmatmul.bf16.gmra.mxu0 %v548
        %v1342 = vpop.f32.mrf.mxu0
        %v1343 = vadd.f32 0.0, %v1342
        %v1344 = vpop.f32.mrf.mxu0
        %v1345 = vadd.f32 0.0, %v1344
        %1346 = vdwg.mxu0
        %1347 = vmatpush.bf16.msra.mxu0 %v836
        %1348 = vmatpush.bf16.msra.mxu0 %v832
        %1349 = vmatpush.bf16.msra.mxu0 %v828
        %1350 = vmatpush.bf16.msra.mxu0 %v824
        %1351 = vmatpush.bf16.msra.mxu0 %v820
        %1352 = vmatpush.bf16.msra.mxu0 %v816
        %1353 = vmatpush.bf16.msra.mxu0 %v812
        %1354 = vmatpush.bf16.msra.mxu0 %v808
        %1355 = vmatmul.bf16.gmra.mxu0 %v519
        %v1356 = vpop.f32.mrf.mxu0
        %v1357 = vadd.f32 %v1268, %v1356
        %v1358 = vpop.f32.mrf.mxu0
        %v1359 = vadd.f32 %v1270, %v1358
        %1360 = vmatmul.bf16.gmra.mxu0 %v521
        %v1361 = vpop.f32.mrf.mxu0
        %v1362 = vadd.f32 %v1273, %v1361
        %v1363 = vpop.f32.mrf.mxu0
        %v1364 = vadd.f32 %v1275, %v1363
        %1365 = vmatmul.bf16.gmra.mxu0 %v523
        %v1366 = vpop.f32.mrf.mxu0
        %v1367 = vadd.f32 %v1278, %v1366
        %v1368 = vpop.f32.mrf.mxu0
        %v1369 = vadd.f32 %v1280, %v1368
        %1370 = vmatmul.bf16.gmra.mxu0 %v525
        %v1371 = vpop.f32.mrf.mxu0
        %v1372 = vadd.f32 %v1283, %v1371
        %v1373 = vpop.f32.mrf.mxu0
        %v1374 = vadd.f32 %v1285, %v1373
        %1375 = vmatmul.bf16.gmra.mxu0 %v527
        %v1376 = vpop.f32.mrf.mxu0
        %v1377 = vadd.f32 %v1288, %v1376
        %v1378 = vpop.f32.mrf.mxu0
        %v1379 = vadd.f32 %v1290, %v1378
        %1380 = vmatmul.bf16.gmra.mxu0 %v529
        %v1381 = vpop.f32.mrf.mxu0
        %v1382 = vadd.f32 %v1293, %v1381
        %v1383 = vpop.f32.mrf.mxu0
        %v1384 = vadd.f32 %v1295, %v1383
        %1385 = vmatmul.bf16.gmra.mxu0 %v531
        %v1386 = vpop.f32.mrf.mxu0
        %v1387 = vadd.f32 %v1298, %v1386
        %v1388 = vpop.f32.mrf.mxu0
        %v1389 = vadd.f32 %v1300, %v1388
        %1390 = vmatmul.bf16.gmra.mxu0 %v533
        %v1391 = vpop.f32.mrf.mxu0
        %v1392 = vadd.f32 %v1303, %v1391
        %v1393 = vpop.f32.mrf.mxu0
        %v1394 = vadd.f32 %v1305, %v1393
        %1395 = vmatmul.bf16.gmra.mxu0 %v535
        %v1396 = vpop.f32.mrf.mxu0
        %v1397 = vadd.f32 %v1308, %v1396
        %v1398 = vpop.f32.mrf.mxu0
        %v1399 = vadd.f32 %v1310, %v1398
        %1400 = vmatmul.bf16.gmra.mxu0 %v537
        %v1401 = vpop.f32.mrf.mxu0
        %v1402 = vadd.f32 %v1313, %v1401
        %v1403 = vpop.f32.mrf.mxu0
        %v1404 = vadd.f32 %v1315, %v1403
        %1405 = vmatmul.bf16.gmra.mxu0 %v539
        %v1406 = vpop.f32.mrf.mxu0
        %v1407 = vadd.f32 %v1318, %v1406
        %v1408 = vpop.f32.mrf.mxu0
        %v1409 = vadd.f32 %v1320, %v1408
        %1410 = vmatmul.bf16.gmra.mxu0 %v541
        %v1411 = vpop.f32.mrf.mxu0
        %v1412 = vadd.f32 %v1323, %v1411
        %v1413 = vpop.f32.mrf.mxu0
        %v1414 = vadd.f32 %v1325, %v1413
        %1415 = vmatmul.bf16.gmra.mxu0 %v543
        %v1416 = vpop.f32.mrf.mxu0
        %v1417 = vadd.f32 %v1328, %v1416
        %v1418 = vpop.f32.mrf.mxu0
        %v1419 = vadd.f32 %v1330, %v1418
        %1420 = vmatmul.bf16.gmra.mxu0 %v545
        %v1421 = vpop.f32.mrf.mxu0
        %v1422 = vadd.f32 %v1333, %v1421
        %v1423 = vpop.f32.mrf.mxu0
        %v1424 = vadd.f32 %v1335, %v1423
        %1425 = vmatmul.bf16.gmra.mxu0 %v547
        %v1426 = vpop.f32.mrf.mxu0
        %v1427 = vadd.f32 %v1338, %v1426
        %v1428 = vpop.f32.mrf.mxu0
        %v1429 = vadd.f32 %v1340, %v1428
        %1430 = vmatmul.bf16.gmra.mxu0 %v549
        %v1431 = vpop.f32.mrf.mxu0
        %v1432 = vadd.f32 %v1343, %v1431
        %v1433 = vpop.f32.mrf.mxu0
        %v1434 = vadd.f32 %v1345, %v1433
        %1435 = vdwg.mxu0
        %1436 = vmatpush.bf16.msra.mxu0 %v805
        %1437 = vmatpush.bf16.msra.mxu0 %v801
        %1438 = vmatpush.bf16.msra.mxu0 %v797
        %1439 = vmatpush.bf16.msra.mxu0 %v793
        %1440 = vmatpush.bf16.msra.mxu0 %v789
        %1441 = vmatpush.bf16.msra.mxu0 %v785
        %1442 = vmatpush.bf16.msra.mxu0 %v781
        %1443 = vmatpush.bf16.msra.mxu0 %v777
        %1444 = vmatmul.bf16.gmra.mxu0 %v518
        %v1445 = vpop.f32.mrf.mxu0
        %v1446 = vadd.f32 0.0, %v1445
        %v1447 = vpop.f32.mrf.mxu0
        %v1448 = vadd.f32 0.0, %v1447
        %1449 = vmatmul.bf16.gmra.mxu0 %v520
        %v1450 = vpop.f32.mrf.mxu0
        %v1451 = vadd.f32 0.0, %v1450
        %v1452 = vpop.f32.mrf.mxu0
        %v1453 = vadd.f32 0.0, %v1452
        %1454 = vmatmul.bf16.gmra.mxu0 %v522
        %v1455 = vpop.f32.mrf.mxu0
        %v1456 = vadd.f32 0.0, %v1455
        %v1457 = vpop.f32.mrf.mxu0
        %v1458 = vadd.f32 0.0, %v1457
        %1459 = vmatmul.bf16.gmra.mxu0 %v524
        %v1460 = vpop.f32.mrf.mxu0
        %v1461 = vadd.f32 0.0, %v1460
        %v1462 = vpop.f32.mrf.mxu0
        %v1463 = vadd.f32 0.0, %v1462
        %1464 = vmatmul.bf16.gmra.mxu0 %v526
        %v1465 = vpop.f32.mrf.mxu0
        %v1466 = vadd.f32 0.0, %v1465
        %v1467 = vpop.f32.mrf.mxu0
        %v1468 = vadd.f32 0.0, %v1467
        %1469 = vmatmul.bf16.gmra.mxu0 %v528
        %v1470 = vpop.f32.mrf.mxu0
        %v1471 = vadd.f32 0.0, %v1470
        %v1472 = vpop.f32.mrf.mxu0
        %v1473 = vadd.f32 0.0, %v1472
        %1474 = vmatmul.bf16.gmra.mxu0 %v530
        %v1475 = vpop.f32.mrf.mxu0
        %v1476 = vadd.f32 0.0, %v1475
        %v1477 = vpop.f32.mrf.mxu0
        %v1478 = vadd.f32 0.0, %v1477
        %1479 = vmatmul.bf16.gmra.mxu0 %v532
        %v1480 = vpop.f32.mrf.mxu0
        %v1481 = vadd.f32 0.0, %v1480
        %v1482 = vpop.f32.mrf.mxu0
        %v1483 = vadd.f32 0.0, %v1482
        %1484 = vmatmul.bf16.gmra.mxu0 %v534
        %v1485 = vpop.f32.mrf.mxu0
        %v1486 = vadd.f32 0.0, %v1485
        %v1487 = vpop.f32.mrf.mxu0
        %v1488 = vadd.f32 0.0, %v1487
        %1489 = vmatmul.bf16.gmra.mxu0 %v536
        %v1490 = vpop.f32.mrf.mxu0
        %v1491 = vadd.f32 0.0, %v1490
        %v1492 = vpop.f32.mrf.mxu0
        %v1493 = vadd.f32 0.0, %v1492
        %1494 = vmatmul.bf16.gmra.mxu0 %v538
        %v1495 = vpop.f32.mrf.mxu0
        %v1496 = vadd.f32 0.0, %v1495
        %v1497 = vpop.f32.mrf.mxu0
        %v1498 = vadd.f32 0.0, %v1497
        %1499 = vmatmul.bf16.gmra.mxu0 %v540
        %v1500 = vpop.f32.mrf.mxu0
        %v1501 = vadd.f32 0.0, %v1500
        %v1502 = vpop.f32.mrf.mxu0
        %v1503 = vadd.f32 0.0, %v1502
        %1504 = vmatmul.bf16.gmra.mxu0 %v542
        %v1505 = vpop.f32.mrf.mxu0
        %v1506 = vadd.f32 0.0, %v1505
        %v1507 = vpop.f32.mrf.mxu0
        %v1508 = vadd.f32 0.0, %v1507
        %1509 = vmatmul.bf16.gmra.mxu0 %v544
        %v1510 = vpop.f32.mrf.mxu0
        %v1511 = vadd.f32 0.0, %v1510
        %v1512 = vpop.f32.mrf.mxu0
        %v1513 = vadd.f32 0.0, %v1512
        %1514 = vmatmul.bf16.gmra.mxu0 %v546
        %v1515 = vpop.f32.mrf.mxu0
        %v1516 = vadd.f32 0.0, %v1515
        %v1517 = vpop.f32.mrf.mxu0
        %v1518 = vadd.f32 0.0, %v1517
        %1519 = vmatmul.bf16.gmra.mxu0 %v548
        %v1520 = vpop.f32.mrf.mxu0
        %v1521 = vadd.f32 0.0, %v1520
        %v1522 = vpop.f32.mrf.mxu0
        %v1523 = vadd.f32 0.0, %v1522
        %1524 = vdwg.mxu0
        %1525 = vmatpush.bf16.msra.mxu0 %v837
        %1526 = vmatpush.bf16.msra.mxu0 %v833
        %1527 = vmatpush.bf16.msra.mxu0 %v829
        %1528 = vmatpush.bf16.msra.mxu0 %v825
        %1529 = vmatpush.bf16.msra.mxu0 %v821
        %1530 = vmatpush.bf16.msra.mxu0 %v817
        %1531 = vmatpush.bf16.msra.mxu0 %v813
        %1532 = vmatpush.bf16.msra.mxu0 %v809
        %1533 = vmatmul.bf16.gmra.mxu0 %v519
        %v1534 = vpop.f32.mrf.mxu0
        %v1535 = vadd.f32 %v1446, %v1534
        %v1536 = vpop.f32.mrf.mxu0
        %v1537 = vadd.f32 %v1448, %v1536
        %1538 = vmatmul.bf16.gmra.mxu0 %v521
        %v1539 = vpop.f32.mrf.mxu0
        %v1540 = vadd.f32 %v1451, %v1539
        %v1541 = vpop.f32.mrf.mxu0
        %v1542 = vadd.f32 %v1453, %v1541
        %1543 = vmatmul.bf16.gmra.mxu0 %v523
        %v1544 = vpop.f32.mrf.mxu0
        %v1545 = vadd.f32 %v1456, %v1544
        %v1546 = vpop.f32.mrf.mxu0
        %v1547 = vadd.f32 %v1458, %v1546
        %1548 = vmatmul.bf16.gmra.mxu0 %v525
        %v1549 = vpop.f32.mrf.mxu0
        %v1550 = vadd.f32 %v1461, %v1549
        %v1551 = vpop.f32.mrf.mxu0
        %v1552 = vadd.f32 %v1463, %v1551
        %1553 = vmatmul.bf16.gmra.mxu0 %v527
        %v1554 = vpop.f32.mrf.mxu0
        %v1555 = vadd.f32 %v1466, %v1554
        %v1556 = vpop.f32.mrf.mxu0
        %v1557 = vadd.f32 %v1468, %v1556
        %1558 = vmatmul.bf16.gmra.mxu0 %v529
        %v1559 = vpop.f32.mrf.mxu0
        %v1560 = vadd.f32 %v1471, %v1559
        %v1561 = vpop.f32.mrf.mxu0
        %v1562 = vadd.f32 %v1473, %v1561
        %1563 = vmatmul.bf16.gmra.mxu0 %v531
        %v1564 = vpop.f32.mrf.mxu0
        %v1565 = vadd.f32 %v1476, %v1564
        %v1566 = vpop.f32.mrf.mxu0
        %v1567 = vadd.f32 %v1478, %v1566
        %1568 = vmatmul.bf16.gmra.mxu0 %v533
        %v1569 = vpop.f32.mrf.mxu0
        %v1570 = vadd.f32 %v1481, %v1569
        %v1571 = vpop.f32.mrf.mxu0
        %v1572 = vadd.f32 %v1483, %v1571
        %1573 = vmatmul.bf16.gmra.mxu0 %v535
        %v1574 = vpop.f32.mrf.mxu0
        %v1575 = vadd.f32 %v1486, %v1574
        %v1576 = vpop.f32.mrf.mxu0
        %v1577 = vadd.f32 %v1488, %v1576
        %1578 = vmatmul.bf16.gmra.mxu0 %v537
        %v1579 = vpop.f32.mrf.mxu0
        %v1580 = vadd.f32 %v1491, %v1579
        %v1581 = vpop.f32.mrf.mxu0
        %v1582 = vadd.f32 %v1493, %v1581
        %1583 = vmatmul.bf16.gmra.mxu0 %v539
        %v1584 = vpop.f32.mrf.mxu0
        %v1585 = vadd.f32 %v1496, %v1584
        %v1586 = vpop.f32.mrf.mxu0
        %v1587 = vadd.f32 %v1498, %v1586
        %1588 = vmatmul.bf16.gmra.mxu0 %v541
        %v1589 = vpop.f32.mrf.mxu0
        %v1590 = vadd.f32 %v1501, %v1589
        %v1591 = vpop.f32.mrf.mxu0
        %v1592 = vadd.f32 %v1503, %v1591
        %1593 = vmatmul.bf16.gmra.mxu0 %v543
        %v1594 = vpop.f32.mrf.mxu0
        %v1595 = vadd.f32 %v1506, %v1594
        %v1596 = vpop.f32.mrf.mxu0
        %v1597 = vadd.f32 %v1508, %v1596
        %1598 = vmatmul.bf16.gmra.mxu0 %v545
        %v1599 = vpop.f32.mrf.mxu0
        %v1600 = vadd.f32 %v1511, %v1599
        %v1601 = vpop.f32.mrf.mxu0
        %v1602 = vadd.f32 %v1513, %v1601
        %1603 = vmatmul.bf16.gmra.mxu0 %v547
        %v1604 = vpop.f32.mrf.mxu0
        %v1605 = vadd.f32 %v1516, %v1604
        %v1606 = vpop.f32.mrf.mxu0
        %v1607 = vadd.f32 %v1518, %v1606
        %1608 = vmatmul.bf16.gmra.mxu0 %v549
        %v1609 = vpop.f32.mrf.mxu0
        %v1610 = vadd.f32 %v1521, %v1609
        %v1611 = vpop.f32.mrf.mxu0
        %v1612 = vadd.f32 %v1523, %v1611
        %1613 = vdwg.mxu0
        %s1614 = scalar_lea.vmem [#allocation6], 512
        %v1615 = vld [vmem:[%s1614] sm:$0xff]
        %v1616 = vld [vmem:[%s1614 + $0x8] sm:$0xff]
        %v1617 = vld [vmem:[%s1614 + $0x10] sm:$0xff]
        %v1618 = vld [vmem:[%s1614 + $0x18] sm:$0xff]
        %v1619 = vld [vmem:[%s1614 + $0x20] sm:$0xff]
        %v1620 = vld [vmem:[%s1614 + $0x28] sm:$0xff]
        %v1621 = vld [vmem:[%s1614 + $0x30] sm:$0xff]
        %v1622 = vld [vmem:[%s1614 + $0x38] sm:$0xff]
        %v1623 = vld [vmem:[%s1614 + $0x40] sm:$0xff]
        %v1624 = vld [vmem:[%s1614 + $0x48] sm:$0xff]
        %v1625 = vld [vmem:[%s1614 + $0x50] sm:$0xff]
        %v1626 = vld [vmem:[%s1614 + $0x58] sm:$0xff]
        %v1627 = vld [vmem:[%s1614 + $0x60] sm:$0xff]
        %v1628 = vld [vmem:[%s1614 + $0x68] sm:$0xff]
        %v1629 = vld [vmem:[%s1614 + $0x70] sm:$0xff]
        %v1630 = vld [vmem:[%s1614 + $0x78] sm:$0xff]
        %v1631 = vld [vmem:[%s1614 + $0x80] sm:$0xff]
        %v1632 = vld [vmem:[%s1614 + $0x88] sm:$0xff]
        %v1633 = vld [vmem:[%s1614 + $0x90] sm:$0xff]
        %v1634 = vld [vmem:[%s1614 + $0x98] sm:$0xff]
        %v1635 = vld [vmem:[%s1614 + $0xa0] sm:$0xff]
        %v1636 = vld [vmem:[%s1614 + $0xa8] sm:$0xff]
        %v1637 = vld [vmem:[%s1614 + $0xb0] sm:$0xff]
        %v1638 = vld [vmem:[%s1614 + $0xb8] sm:$0xff]
        %v1639 = vld [vmem:[%s1614 + $0xc0] sm:$0xff]
        %v1640 = vld [vmem:[%s1614 + $0xc8] sm:$0xff]
        %v1641 = vld [vmem:[%s1614 + $0xd0] sm:$0xff]
        %v1642 = vld [vmem:[%s1614 + $0xd8] sm:$0xff]
        %v1643 = vld [vmem:[%s1614 + $0xe0] sm:$0xff]
        %v1644 = vld [vmem:[%s1614 + $0xe8] sm:$0xff]
        %v1645 = vld [vmem:[%s1614 + $0xf0] sm:$0xff]
        %v1646 = vld [vmem:[%s1614 + $0xf8] sm:$0xff]
        %v1647 = vld [vmem:[%s1614 + $0x100] sm:$0xff]
        %v1648 = vld [vmem:[%s1614 + $0x108] sm:$0xff]
        %v1649 = vld [vmem:[%s1614 + $0x110] sm:$0xff]
        %v1650 = vld [vmem:[%s1614 + $0x118] sm:$0xff]
        %v1651 = vld [vmem:[%s1614 + $0x120] sm:$0xff]
        %v1652 = vld [vmem:[%s1614 + $0x128] sm:$0xff]
        %v1653 = vld [vmem:[%s1614 + $0x130] sm:$0xff]
        %v1654 = vld [vmem:[%s1614 + $0x138] sm:$0xff]
        %v1655 = vld [vmem:[%s1614 + $0x140] sm:$0xff]
        %v1656 = vld [vmem:[%s1614 + $0x148] sm:$0xff]
        %v1657 = vld [vmem:[%s1614 + $0x150] sm:$0xff]
        %v1658 = vld [vmem:[%s1614 + $0x158] sm:$0xff]
        %v1659 = vld [vmem:[%s1614 + $0x160] sm:$0xff]
        %v1660 = vld [vmem:[%s1614 + $0x168] sm:$0xff]
        %v1661 = vld [vmem:[%s1614 + $0x170] sm:$0xff]
        %v1662 = vld [vmem:[%s1614 + $0x178] sm:$0xff]
        %v1663 = vld [vmem:[%s1614 + $0x180] sm:$0xff]
        %v1664 = vld [vmem:[%s1614 + $0x188] sm:$0xff]
        %v1665 = vld [vmem:[%s1614 + $0x190] sm:$0xff]
        %v1666 = vld [vmem:[%s1614 + $0x198] sm:$0xff]
        %v1667 = vld [vmem:[%s1614 + $0x1a0] sm:$0xff]
        %v1668 = vld [vmem:[%s1614 + $0x1a8] sm:$0xff]
        %v1669 = vld [vmem:[%s1614 + $0x1b0] sm:$0xff]
        %v1670 = vld [vmem:[%s1614 + $0x1b8] sm:$0xff]
        %v1671 = vld [vmem:[%s1614 + $0x1c0] sm:$0xff]
        %v1672 = vld [vmem:[%s1614 + $0x1c8] sm:$0xff]
        %v1673 = vld [vmem:[%s1614 + $0x1d0] sm:$0xff]
        %v1674 = vld [vmem:[%s1614 + $0x1d8] sm:$0xff]
        %v1675 = vld [vmem:[%s1614 + $0x1e0] sm:$0xff]
        %v1676 = vld [vmem:[%s1614 + $0x1e8] sm:$0xff]
        %v1677 = vld [vmem:[%s1614 + $0x1f0] sm:$0xff]
        %v1678 = vld [vmem:[%s1614 + $0x1f8] sm:$0xff]
        %v1743 = vunpack.c.l.b16 %v1615
        %v1744 = vunpack.c.h.b16 %v1615
        %v1745 = vunpack.c.l.b16 %v1616
        %v1746 = vunpack.c.h.b16 %v1616
        %v1747 = vunpack.c.l.b16 %v1617
        %v1748 = vunpack.c.h.b16 %v1617
        %v1749 = vunpack.c.l.b16 %v1618
        %v1750 = vunpack.c.h.b16 %v1618
        %v1751 = vunpack.c.l.b16 %v1619
        %v1752 = vunpack.c.h.b16 %v1619
        %v1753 = vunpack.c.l.b16 %v1620
        %v1754 = vunpack.c.h.b16 %v1620
        %v1755 = vunpack.c.l.b16 %v1621
        %v1756 = vunpack.c.h.b16 %v1621
        %v1757 = vunpack.c.l.b16 %v1622
        %v1758 = vunpack.c.h.b16 %v1622
        %v1759 = vunpack.c.l.b16 %v1623
        %v1760 = vunpack.c.h.b16 %v1623
        %v1761 = vunpack.c.l.b16 %v1624
        %v1762 = vunpack.c.h.b16 %v1624
        %v1763 = vunpack.c.l.b16 %v1625
        %v1764 = vunpack.c.h.b16 %v1625
        %v1765 = vunpack.c.l.b16 %v1626
        %v1766 = vunpack.c.h.b16 %v1626
        %v1767 = vunpack.c.l.b16 %v1627
        %v1768 = vunpack.c.h.b16 %v1627
        %v1769 = vunpack.c.l.b16 %v1628
        %v1770 = vunpack.c.h.b16 %v1628
        %v1771 = vunpack.c.l.b16 %v1629
        %v1772 = vunpack.c.h.b16 %v1629
        %v1773 = vunpack.c.l.b16 %v1630
        %v1774 = vunpack.c.h.b16 %v1630
        %v1775 = vunpack.c.l.b16 %v1631
        %v1776 = vunpack.c.h.b16 %v1631
        %v1777 = vunpack.c.l.b16 %v1632
        %v1778 = vunpack.c.h.b16 %v1632
        %v1779 = vunpack.c.l.b16 %v1633
        %v1780 = vunpack.c.h.b16 %v1633
        %v1781 = vunpack.c.l.b16 %v1634
        %v1782 = vunpack.c.h.b16 %v1634
        %v1783 = vunpack.c.l.b16 %v1635
        %v1784 = vunpack.c.h.b16 %v1635
        %v1785 = vunpack.c.l.b16 %v1636
        %v1786 = vunpack.c.h.b16 %v1636
        %v1787 = vunpack.c.l.b16 %v1637
        %v1788 = vunpack.c.h.b16 %v1637
        %v1789 = vunpack.c.l.b16 %v1638
        %v1790 = vunpack.c.h.b16 %v1638
        %v1791 = vunpack.c.l.b16 %v1639
        %v1792 = vunpack.c.h.b16 %v1639
        %v1793 = vunpack.c.l.b16 %v1640
        %v1794 = vunpack.c.h.b16 %v1640
        %v1795 = vunpack.c.l.b16 %v1641
        %v1796 = vunpack.c.h.b16 %v1641
        %v1797 = vunpack.c.l.b16 %v1642
        %v1798 = vunpack.c.h.b16 %v1642
        %v1799 = vunpack.c.l.b16 %v1643
        %v1800 = vunpack.c.h.b16 %v1643
        %v1801 = vunpack.c.l.b16 %v1644
        %v1802 = vunpack.c.h.b16 %v1644
        %v1803 = vunpack.c.l.b16 %v1645
        %v1804 = vunpack.c.h.b16 %v1645
        %v1805 = vunpack.c.l.b16 %v1646
        %v1806 = vunpack.c.h.b16 %v1646
        %v1807 = vunpack.c.l.b16 %v1647
        %v1808 = vunpack.c.h.b16 %v1647
        %v1809 = vunpack.c.l.b16 %v1648
        %v1810 = vunpack.c.h.b16 %v1648
        %v1811 = vunpack.c.l.b16 %v1649
        %v1812 = vunpack.c.h.b16 %v1649
        %v1813 = vunpack.c.l.b16 %v1650
        %v1814 = vunpack.c.h.b16 %v1650
        %v1815 = vunpack.c.l.b16 %v1651
        %v1816 = vunpack.c.h.b16 %v1651
        %v1817 = vunpack.c.l.b16 %v1652
        %v1818 = vunpack.c.h.b16 %v1652
        %v1819 = vunpack.c.l.b16 %v1653
        %v1820 = vunpack.c.h.b16 %v1653
        %v1821 = vunpack.c.l.b16 %v1654
        %v1822 = vunpack.c.h.b16 %v1654
        %v1823 = vunpack.c.l.b16 %v1655
        %v1824 = vunpack.c.h.b16 %v1655
        %v1825 = vunpack.c.l.b16 %v1656
        %v1826 = vunpack.c.h.b16 %v1656
        %v1827 = vunpack.c.l.b16 %v1657
        %v1828 = vunpack.c.h.b16 %v1657
        %v1829 = vunpack.c.l.b16 %v1658
        %v1830 = vunpack.c.h.b16 %v1658
        %v1831 = vunpack.c.l.b16 %v1659
        %v1832 = vunpack.c.h.b16 %v1659
        %v1833 = vunpack.c.l.b16 %v1660
        %v1834 = vunpack.c.h.b16 %v1660
        %v1835 = vunpack.c.l.b16 %v1661
        %v1836 = vunpack.c.h.b16 %v1661
        %v1837 = vunpack.c.l.b16 %v1662
        %v1838 = vunpack.c.h.b16 %v1662
        %v1839 = vunpack.c.l.b16 %v1663
        %v1840 = vunpack.c.h.b16 %v1663
        %v1841 = vunpack.c.l.b16 %v1664
        %v1842 = vunpack.c.h.b16 %v1664
        %v1843 = vunpack.c.l.b16 %v1665
        %v1844 = vunpack.c.h.b16 %v1665
        %v1845 = vunpack.c.l.b16 %v1666
        %v1846 = vunpack.c.h.b16 %v1666
        %v1847 = vunpack.c.l.b16 %v1667
        %v1848 = vunpack.c.h.b16 %v1667
        %v1849 = vunpack.c.l.b16 %v1668
        %v1850 = vunpack.c.h.b16 %v1668
        %v1851 = vunpack.c.l.b16 %v1669
        %v1852 = vunpack.c.h.b16 %v1669
        %v1853 = vunpack.c.l.b16 %v1670
        %v1854 = vunpack.c.h.b16 %v1670
        %v1855 = vunpack.c.l.b16 %v1671
        %v1856 = vunpack.c.h.b16 %v1671
        %v1857 = vunpack.c.l.b16 %v1672
        %v1858 = vunpack.c.h.b16 %v1672
        %v1859 = vunpack.c.l.b16 %v1673
        %v1860 = vunpack.c.h.b16 %v1673
        %v1861 = vunpack.c.l.b16 %v1674
        %v1862 = vunpack.c.h.b16 %v1674
        %v1863 = vunpack.c.l.b16 %v1675
        %v1864 = vunpack.c.h.b16 %v1675
        %v1865 = vunpack.c.l.b16 %v1676
        %v1866 = vunpack.c.h.b16 %v1676
        %v1867 = vunpack.c.l.b16 %v1677
        %v1868 = vunpack.c.h.b16 %v1677
        %v1869 = vunpack.c.l.b16 %v1678
        %v1870 = vunpack.c.h.b16 %v1678
        %v1871 = vpack.c.b16 %v1747, %v1743
        %v1872 = vpack.c.b16 %v1748, %v1744
        %v1873 = vpack.c.b16 %v1749, %v1745
        %v1874 = vpack.c.b16 %v1750, %v1746
        %v1875 = vpack.c.b16 %v1755, %v1751
        %v1876 = vpack.c.b16 %v1756, %v1752
        %v1877 = vpack.c.b16 %v1757, %v1753
        %v1878 = vpack.c.b16 %v1758, %v1754
        %v1879 = vpack.c.b16 %v1763, %v1759
        %v1880 = vpack.c.b16 %v1764, %v1760
        %v1881 = vpack.c.b16 %v1765, %v1761
        %v1882 = vpack.c.b16 %v1766, %v1762
        %v1883 = vpack.c.b16 %v1771, %v1767
        %v1884 = vpack.c.b16 %v1772, %v1768
        %v1885 = vpack.c.b16 %v1773, %v1769
        %v1886 = vpack.c.b16 %v1774, %v1770
        %v1887 = vpack.c.b16 %v1779, %v1775
        %v1888 = vpack.c.b16 %v1780, %v1776
        %v1889 = vpack.c.b16 %v1781, %v1777
        %v1890 = vpack.c.b16 %v1782, %v1778
        %v1891 = vpack.c.b16 %v1787, %v1783
        %v1892 = vpack.c.b16 %v1788, %v1784
        %v1893 = vpack.c.b16 %v1789, %v1785
        %v1894 = vpack.c.b16 %v1790, %v1786
        %v1895 = vpack.c.b16 %v1795, %v1791
        %v1896 = vpack.c.b16 %v1796, %v1792
        %v1897 = vpack.c.b16 %v1797, %v1793
        %v1898 = vpack.c.b16 %v1798, %v1794
        %v1899 = vpack.c.b16 %v1803, %v1799
        %v1900 = vpack.c.b16 %v1804, %v1800
        %v1901 = vpack.c.b16 %v1805, %v1801
        %v1902 = vpack.c.b16 %v1806, %v1802
        %v1903 = vpack.c.b16 %v1811, %v1807
        %v1904 = vpack.c.b16 %v1812, %v1808
        %v1905 = vpack.c.b16 %v1813, %v1809
        %v1906 = vpack.c.b16 %v1814, %v1810
        %v1907 = vpack.c.b16 %v1819, %v1815
        %v1908 = vpack.c.b16 %v1820, %v1816
        %v1909 = vpack.c.b16 %v1821, %v1817
        %v1910 = vpack.c.b16 %v1822, %v1818
        %v1911 = vpack.c.b16 %v1827, %v1823
        %v1912 = vpack.c.b16 %v1828, %v1824
        %v1913 = vpack.c.b16 %v1829, %v1825
        %v1914 = vpack.c.b16 %v1830, %v1826
        %v1915 = vpack.c.b16 %v1835, %v1831
        %v1916 = vpack.c.b16 %v1836, %v1832
        %v1917 = vpack.c.b16 %v1837, %v1833
        %v1918 = vpack.c.b16 %v1838, %v1834
        %v1919 = vpack.c.b16 %v1843, %v1839
        %v1920 = vpack.c.b16 %v1844, %v1840
        %v1921 = vpack.c.b16 %v1845, %v1841
        %v1922 = vpack.c.b16 %v1846, %v1842
        %v1923 = vpack.c.b16 %v1851, %v1847
        %v1924 = vpack.c.b16 %v1852, %v1848
        %v1925 = vpack.c.b16 %v1853, %v1849
        %v1926 = vpack.c.b16 %v1854, %v1850
        %v1927 = vpack.c.b16 %v1859, %v1855
        %v1928 = vpack.c.b16 %v1860, %v1856
        %v1929 = vpack.c.b16 %v1861, %v1857
        %v1930 = vpack.c.b16 %v1862, %v1858
        %v1931 = vpack.c.b16 %v1867, %v1863
        %v1932 = vpack.c.b16 %v1868, %v1864
        %v1933 = vpack.c.b16 %v1869, %v1865
        %v1934 = vpack.c.b16 %v1870, %v1866
        %1999 = vmatpush.bf16.msra.mxu0 %v1899
        %2000 = vmatpush.bf16.msra.mxu0 %v1895
        %2001 = vmatpush.bf16.msra.mxu0 %v1891
        %2002 = vmatpush.bf16.msra.mxu0 %v1887
        %2003 = vmatpush.bf16.msra.mxu0 %v1883
        %2004 = vmatpush.bf16.msra.mxu0 %v1879
        %2005 = vmatpush.bf16.msra.mxu0 %v1875
        %2006 = vmatpush.bf16.msra.mxu0 %v1871
        %2007 = vmatmul.bf16.gmra.mxu0 %v518
        %v2008 = vpop.f32.mrf.mxu0
        %v2009 = vadd.f32 0.0, %v2008
        %v2010 = vpop.f32.mrf.mxu0
        %v2011 = vadd.f32 0.0, %v2010
        %2012 = vmatmul.bf16.gmra.mxu0 %v520
        %v2013 = vpop.f32.mrf.mxu0
        %v2014 = vadd.f32 0.0, %v2013
        %v2015 = vpop.f32.mrf.mxu0
        %v2016 = vadd.f32 0.0, %v2015
        %2017 = vmatmul.bf16.gmra.mxu0 %v522
        %v2018 = vpop.f32.mrf.mxu0
        %v2019 = vadd.f32 0.0, %v2018
        %v2020 = vpop.f32.mrf.mxu0
        %v2021 = vadd.f32 0.0, %v2020
        %2022 = vmatmul.bf16.gmra.mxu0 %v524
        %v2023 = vpop.f32.mrf.mxu0
        %v2024 = vadd.f32 0.0, %v2023
        %v2025 = vpop.f32.mrf.mxu0
        %v2026 = vadd.f32 0.0, %v2025
        %2027 = vmatmul.bf16.gmra.mxu0 %v526
        %v2028 = vpop.f32.mrf.mxu0
        %v2029 = vadd.f32 0.0, %v2028
        %v2030 = vpop.f32.mrf.mxu0
        %v2031 = vadd.f32 0.0, %v2030
        %2032 = vmatmul.bf16.gmra.mxu0 %v528
        %v2033 = vpop.f32.mrf.mxu0
        %v2034 = vadd.f32 0.0, %v2033
        %v2035 = vpop.f32.mrf.mxu0
        %v2036 = vadd.f32 0.0, %v2035
        %2037 = vmatmul.bf16.gmra.mxu0 %v530
        %v2038 = vpop.f32.mrf.mxu0
        %v2039 = vadd.f32 0.0, %v2038
        %v2040 = vpop.f32.mrf.mxu0
        %v2041 = vadd.f32 0.0, %v2040
        %2042 = vmatmul.bf16.gmra.mxu0 %v532
        %v2043 = vpop.f32.mrf.mxu0
        %v2044 = vadd.f32 0.0, %v2043
        %v2045 = vpop.f32.mrf.mxu0
        %v2046 = vadd.f32 0.0, %v2045
        %2047 = vmatmul.bf16.gmra.mxu0 %v534
        %v2048 = vpop.f32.mrf.mxu0
        %v2049 = vadd.f32 0.0, %v2048
        %v2050 = vpop.f32.mrf.mxu0
        %v2051 = vadd.f32 0.0, %v2050
        %2052 = vmatmul.bf16.gmra.mxu0 %v536
        %v2053 = vpop.f32.mrf.mxu0
        %v2054 = vadd.f32 0.0, %v2053
        %v2055 = vpop.f32.mrf.mxu0
        %v2056 = vadd.f32 0.0, %v2055
        %2057 = vmatmul.bf16.gmra.mxu0 %v538
        %v2058 = vpop.f32.mrf.mxu0
        %v2059 = vadd.f32 0.0, %v2058
        %v2060 = vpop.f32.mrf.mxu0
        %v2061 = vadd.f32 0.0, %v2060
        %2062 = vmatmul.bf16.gmra.mxu0 %v540
        %v2063 = vpop.f32.mrf.mxu0
        %v2064 = vadd.f32 0.0, %v2063
        %v2065 = vpop.f32.mrf.mxu0
        %v2066 = vadd.f32 0.0, %v2065
        %2067 = vmatmul.bf16.gmra.mxu0 %v542
        %v2068 = vpop.f32.mrf.mxu0
        %v2069 = vadd.f32 0.0, %v2068
        %v2070 = vpop.f32.mrf.mxu0
        %v2071 = vadd.f32 0.0, %v2070
        %2072 = vmatmul.bf16.gmra.mxu0 %v544
        %v2073 = vpop.f32.mrf.mxu0
        %v2074 = vadd.f32 0.0, %v2073
        %v2075 = vpop.f32.mrf.mxu0
        %v2076 = vadd.f32 0.0, %v2075
        %2077 = vmatmul.bf16.gmra.mxu0 %v546
        %v2078 = vpop.f32.mrf.mxu0
        %v2079 = vadd.f32 0.0, %v2078
        %v2080 = vpop.f32.mrf.mxu0
        %v2081 = vadd.f32 0.0, %v2080
        %2082 = vmatmul.bf16.gmra.mxu0 %v548
        %v2083 = vpop.f32.mrf.mxu0
        %v2084 = vadd.f32 0.0, %v2083
        %v2085 = vpop.f32.mrf.mxu0
        %v2086 = vadd.f32 0.0, %v2085
        %2087 = vdwg.mxu0
        %2088 = vmatpush.bf16.msra.mxu0 %v1931
        %2089 = vmatpush.bf16.msra.mxu0 %v1927
        %2090 = vmatpush.bf16.msra.mxu0 %v1923
        %2091 = vmatpush.bf16.msra.mxu0 %v1919
        %2092 = vmatpush.bf16.msra.mxu0 %v1915
        %2093 = vmatpush.bf16.msra.mxu0 %v1911
        %2094 = vmatpush.bf16.msra.mxu0 %v1907
        %2095 = vmatpush.bf16.msra.mxu0 %v1903
        %2096 = vmatmul.bf16.gmra.mxu0 %v519
        %v2097 = vpop.f32.mrf.mxu0
        %v2098 = vadd.f32 %v2009, %v2097
        %v2099 = vpop.f32.mrf.mxu0
        %v2100 = vadd.f32 %v2011, %v2099
        %2101 = vmatmul.bf16.gmra.mxu0 %v521
        %v2102 = vpop.f32.mrf.mxu0
        %v2103 = vadd.f32 %v2014, %v2102
        %v2104 = vpop.f32.mrf.mxu0
        %v2105 = vadd.f32 %v2016, %v2104
        %2106 = vmatmul.bf16.gmra.mxu0 %v523
        %v2107 = vpop.f32.mrf.mxu0
        %v2108 = vadd.f32 %v2019, %v2107
        %v2109 = vpop.f32.mrf.mxu0
        %v2110 = vadd.f32 %v2021, %v2109
        %2111 = vmatmul.bf16.gmra.mxu0 %v525
        %v2112 = vpop.f32.mrf.mxu0
        %v2113 = vadd.f32 %v2024, %v2112
        %v2114 = vpop.f32.mrf.mxu0
        %v2115 = vadd.f32 %v2026, %v2114
        %2116 = vmatmul.bf16.gmra.mxu0 %v527
        %v2117 = vpop.f32.mrf.mxu0
        %v2118 = vadd.f32 %v2029, %v2117
        %v2119 = vpop.f32.mrf.mxu0
        %v2120 = vadd.f32 %v2031, %v2119
        %2121 = vmatmul.bf16.gmra.mxu0 %v529
        %v2122 = vpop.f32.mrf.mxu0
        %v2123 = vadd.f32 %v2034, %v2122
        %v2124 = vpop.f32.mrf.mxu0
        %v2125 = vadd.f32 %v2036, %v2124
        %2126 = vmatmul.bf16.gmra.mxu0 %v531
        %v2127 = vpop.f32.mrf.mxu0
        %v2128 = vadd.f32 %v2039, %v2127
        %v2129 = vpop.f32.mrf.mxu0
        %v2130 = vadd.f32 %v2041, %v2129
        %2131 = vmatmul.bf16.gmra.mxu0 %v533
        %v2132 = vpop.f32.mrf.mxu0
        %v2133 = vadd.f32 %v2044, %v2132
        %v2134 = vpop.f32.mrf.mxu0
        %v2135 = vadd.f32 %v2046, %v2134
        %2136 = vmatmul.bf16.gmra.mxu0 %v535
        %v2137 = vpop.f32.mrf.mxu0
        %v2138 = vadd.f32 %v2049, %v2137
        %v2139 = vpop.f32.mrf.mxu0
        %v2140 = vadd.f32 %v2051, %v2139
        %2141 = vmatmul.bf16.gmra.mxu0 %v537
        %v2142 = vpop.f32.mrf.mxu0
        %v2143 = vadd.f32 %v2054, %v2142
        %v2144 = vpop.f32.mrf.mxu0
        %v2145 = vadd.f32 %v2056, %v2144
        %2146 = vmatmul.bf16.gmra.mxu0 %v539
        %v2147 = vpop.f32.mrf.mxu0
        %v2148 = vadd.f32 %v2059, %v2147
        %v2149 = vpop.f32.mrf.mxu0
        %v2150 = vadd.f32 %v2061, %v2149
        %2151 = vmatmul.bf16.gmra.mxu0 %v541
        %v2152 = vpop.f32.mrf.mxu0
        %v2153 = vadd.f32 %v2064, %v2152
        %v2154 = vpop.f32.mrf.mxu0
        %v2155 = vadd.f32 %v2066, %v2154
        %2156 = vmatmul.bf16.gmra.mxu0 %v543
        %v2157 = vpop.f32.mrf.mxu0
        %v2158 = vadd.f32 %v2069, %v2157
        %v2159 = vpop.f32.mrf.mxu0
        %v2160 = vadd.f32 %v2071, %v2159
        %2161 = vmatmul.bf16.gmra.mxu0 %v545
        %v2162 = vpop.f32.mrf.mxu0
        %v2163 = vadd.f32 %v2074, %v2162
        %v2164 = vpop.f32.mrf.mxu0
        %v2165 = vadd.f32 %v2076, %v2164
        %2166 = vmatmul.bf16.gmra.mxu0 %v547
        %v2167 = vpop.f32.mrf.mxu0
        %v2168 = vadd.f32 %v2079, %v2167
        %v2169 = vpop.f32.mrf.mxu0
        %v2170 = vadd.f32 %v2081, %v2169
        %2171 = vmatmul.bf16.gmra.mxu0 %v549
        %v2172 = vpop.f32.mrf.mxu0
        %v2173 = vadd.f32 %v2084, %v2172
        %v2174 = vpop.f32.mrf.mxu0
        %v2175 = vadd.f32 %v2086, %v2174
        %2176 = vdwg.mxu0
        %2177 = vmatpush.bf16.msra.mxu0 %v1900
        %2178 = vmatpush.bf16.msra.mxu0 %v1896
        %2179 = vmatpush.bf16.msra.mxu0 %v1892
        %2180 = vmatpush.bf16.msra.mxu0 %v1888
        %2181 = vmatpush.bf16.msra.mxu0 %v1884
        %2182 = vmatpush.bf16.msra.mxu0 %v1880
        %2183 = vmatpush.bf16.msra.mxu0 %v1876
        %2184 = vmatpush.bf16.msra.mxu0 %v1872
        %2185 = vmatmul.bf16.gmra.mxu0 %v518
        %v2186 = vpop.f32.mrf.mxu0
        %v2187 = vadd.f32 0.0, %v2186
        %v2188 = vpop.f32.mrf.mxu0
        %v2189 = vadd.f32 0.0, %v2188
        %2190 = vmatmul.bf16.gmra.mxu0 %v520
        %v2191 = vpop.f32.mrf.mxu0
        %v2192 = vadd.f32 0.0, %v2191
        %v2193 = vpop.f32.mrf.mxu0
        %v2194 = vadd.f32 0.0, %v2193
        %2195 = vmatmul.bf16.gmra.mxu0 %v522
        %v2196 = vpop.f32.mrf.mxu0
        %v2197 = vadd.f32 0.0, %v2196
        %v2198 = vpop.f32.mrf.mxu0
        %v2199 = vadd.f32 0.0, %v2198
        %2200 = vmatmul.bf16.gmra.mxu0 %v524
        %v2201 = vpop.f32.mrf.mxu0
        %v2202 = vadd.f32 0.0, %v2201
        %v2203 = vpop.f32.mrf.mxu0
        %v2204 = vadd.f32 0.0, %v2203
        %2205 = vmatmul.bf16.gmra.mxu0 %v526
        %v2206 = vpop.f32.mrf.mxu0
        %v2207 = vadd.f32 0.0, %v2206
        %v2208 = vpop.f32.mrf.mxu0
        %v2209 = vadd.f32 0.0, %v2208
        %2210 = vmatmul.bf16.gmra.mxu0 %v528
        %v2211 = vpop.f32.mrf.mxu0
        %v2212 = vadd.f32 0.0, %v2211
        %v2213 = vpop.f32.mrf.mxu0
        %v2214 = vadd.f32 0.0, %v2213
        %2215 = vmatmul.bf16.gmra.mxu0 %v530
        %v2216 = vpop.f32.mrf.mxu0
        %v2217 = vadd.f32 0.0, %v2216
        %v2218 = vpop.f32.mrf.mxu0
        %v2219 = vadd.f32 0.0, %v2218
        %2220 = vmatmul.bf16.gmra.mxu0 %v532
        %v2221 = vpop.f32.mrf.mxu0
        %v2222 = vadd.f32 0.0, %v2221
        %v2223 = vpop.f32.mrf.mxu0
        %v2224 = vadd.f32 0.0, %v2223
        %2225 = vmatmul.bf16.gmra.mxu0 %v534
        %v2226 = vpop.f32.mrf.mxu0
        %v2227 = vadd.f32 0.0, %v2226
        %v2228 = vpop.f32.mrf.mxu0
        %v2229 = vadd.f32 0.0, %v2228
        %2230 = vmatmul.bf16.gmra.mxu0 %v536
        %v2231 = vpop.f32.mrf.mxu0
        %v2232 = vadd.f32 0.0, %v2231
        %v2233 = vpop.f32.mrf.mxu0
        %v2234 = vadd.f32 0.0, %v2233
        %2235 = vmatmul.bf16.gmra.mxu0 %v538
        %v2236 = vpop.f32.mrf.mxu0
        %v2237 = vadd.f32 0.0, %v2236
        %v2238 = vpop.f32.mrf.mxu0
        %v2239 = vadd.f32 0.0, %v2238
        %2240 = vmatmul.bf16.gmra.mxu0 %v540
        %v2241 = vpop.f32.mrf.mxu0
        %v2242 = vadd.f32 0.0, %v2241
        %v2243 = vpop.f32.mrf.mxu0
        %v2244 = vadd.f32 0.0, %v2243
        %2245 = vmatmul.bf16.gmra.mxu0 %v542
        %v2246 = vpop.f32.mrf.mxu0
        %v2247 = vadd.f32 0.0, %v2246
        %v2248 = vpop.f32.mrf.mxu0
        %v2249 = vadd.f32 0.0, %v2248
        %2250 = vmatmul.bf16.gmra.mxu0 %v544
        %v2251 = vpop.f32.mrf.mxu0
        %v2252 = vadd.f32 0.0, %v2251
        %v2253 = vpop.f32.mrf.mxu0
        %v2254 = vadd.f32 0.0, %v2253
        %2255 = vmatmul.bf16.gmra.mxu0 %v546
        %v2256 = vpop.f32.mrf.mxu0
        %v2257 = vadd.f32 0.0, %v2256
        %v2258 = vpop.f32.mrf.mxu0
        %v2259 = vadd.f32 0.0, %v2258
        %2260 = vmatmul.bf16.gmra.mxu0 %v548
        %v2261 = vpop.f32.mrf.mxu0
        %v2262 = vadd.f32 0.0, %v2261
        %v2263 = vpop.f32.mrf.mxu0
        %v2264 = vadd.f32 0.0, %v2263
        %2265 = vdwg.mxu0
        %2266 = vmatpush.bf16.msra.mxu0 %v1932
        %2267 = vmatpush.bf16.msra.mxu0 %v1928
        %2268 = vmatpush.bf16.msra.mxu0 %v1924
        %2269 = vmatpush.bf16.msra.mxu0 %v1920
        %2270 = vmatpush.bf16.msra.mxu0 %v1916
        %2271 = vmatpush.bf16.msra.mxu0 %v1912
        %2272 = vmatpush.bf16.msra.mxu0 %v1908
        %2273 = vmatpush.bf16.msra.mxu0 %v1904
        %2274 = vmatmul.bf16.gmra.mxu0 %v519
        %v2275 = vpop.f32.mrf.mxu0
        %v2276 = vadd.f32 %v2187, %v2275
        %v2277 = vpop.f32.mrf.mxu0
        %v2278 = vadd.f32 %v2189, %v2277
        %2279 = vmatmul.bf16.gmra.mxu0 %v521
        %v2280 = vpop.f32.mrf.mxu0
        %v2281 = vadd.f32 %v2192, %v2280
        %v2282 = vpop.f32.mrf.mxu0
        %v2283 = vadd.f32 %v2194, %v2282
        %2284 = vmatmul.bf16.gmra.mxu0 %v523
        %v2285 = vpop.f32.mrf.mxu0
        %v2286 = vadd.f32 %v2197, %v2285
        %v2287 = vpop.f32.mrf.mxu0
        %v2288 = vadd.f32 %v2199, %v2287
        %2289 = vmatmul.bf16.gmra.mxu0 %v525
        %v2290 = vpop.f32.mrf.mxu0
        %v2291 = vadd.f32 %v2202, %v2290
        %v2292 = vpop.f32.mrf.mxu0
        %v2293 = vadd.f32 %v2204, %v2292
        %2294 = vmatmul.bf16.gmra.mxu0 %v527
        %v2295 = vpop.f32.mrf.mxu0
        %v2296 = vadd.f32 %v2207, %v2295
        %v2297 = vpop.f32.mrf.mxu0
        %v2298 = vadd.f32 %v2209, %v2297
        %2299 = vmatmul.bf16.gmra.mxu0 %v529
        %v2300 = vpop.f32.mrf.mxu0
        %v2301 = vadd.f32 %v2212, %v2300
        %v2302 = vpop.f32.mrf.mxu0
        %v2303 = vadd.f32 %v2214, %v2302
        %2304 = vmatmul.bf16.gmra.mxu0 %v531
        %v2305 = vpop.f32.mrf.mxu0
        %v2306 = vadd.f32 %v2217, %v2305
        %v2307 = vpop.f32.mrf.mxu0
        %v2308 = vadd.f32 %v2219, %v2307
        %2309 = vmatmul.bf16.gmra.mxu0 %v533
        %v2310 = vpop.f32.mrf.mxu0
        %v2311 = vadd.f32 %v2222, %v2310
        %v2312 = vpop.f32.mrf.mxu0
        %v2313 = vadd.f32 %v2224, %v2312
        %2314 = vmatmul.bf16.gmra.mxu0 %v535
        %v2315 = vpop.f32.mrf.mxu0
        %v2316 = vadd.f32 %v2227, %v2315
        %v2317 = vpop.f32.mrf.mxu0
        %v2318 = vadd.f32 %v2229, %v2317
        %2319 = vmatmul.bf16.gmra.mxu0 %v537
        %v2320 = vpop.f32.mrf.mxu0
        %v2321 = vadd.f32 %v2232, %v2320
        %v2322 = vpop.f32.mrf.mxu0
        %v2323 = vadd.f32 %v2234, %v2322
        %2324 = vmatmul.bf16.gmra.mxu0 %v539
        %v2325 = vpop.f32.mrf.mxu0
        %v2326 = vadd.f32 %v2237, %v2325
        %v2327 = vpop.f32.mrf.mxu0
        %v2328 = vadd.f32 %v2239, %v2327
        %2329 = vmatmul.bf16.gmra.mxu0 %v541
        %v2330 = vpop.f32.mrf.mxu0
        %v2331 = vadd.f32 %v2242, %v2330
        %v2332 = vpop.f32.mrf.mxu0
        %v2333 = vadd.f32 %v2244, %v2332
        %2334 = vmatmul.bf16.gmra.mxu0 %v543
        %v2335 = vpop.f32.mrf.mxu0
        %v2336 = vadd.f32 %v2247, %v2335
        %v2337 = vpop.f32.mrf.mxu0
        %v2338 = vadd.f32 %v2249, %v2337
        %2339 = vmatmul.bf16.gmra.mxu0 %v545
        %v2340 = vpop.f32.mrf.mxu0
        %v2341 = vadd.f32 %v2252, %v2340
        %v2342 = vpop.f32.mrf.mxu0
        %v2343 = vadd.f32 %v2254, %v2342
        %2344 = vmatmul.bf16.gmra.mxu0 %v547
        %v2345 = vpop.f32.mrf.mxu0
        %v2346 = vadd.f32 %v2257, %v2345
        %v2347 = vpop.f32.mrf.mxu0
        %v2348 = vadd.f32 %v2259, %v2347
        %2349 = vmatmul.bf16.gmra.mxu0 %v549
        %v2350 = vpop.f32.mrf.mxu0
        %v2351 = vadd.f32 %v2262, %v2350
        %v2352 = vpop.f32.mrf.mxu0
        %v2353 = vadd.f32 %v2264, %v2352
        %2354 = vdwg.mxu0
        %2355 = vmatpush.bf16.msra.mxu0 %v1901
        %2356 = vmatpush.bf16.msra.mxu0 %v1897
        %2357 = vmatpush.bf16.msra.mxu0 %v1893
        %2358 = vmatpush.bf16.msra.mxu0 %v1889
        %2359 = vmatpush.bf16.msra.mxu0 %v1885
        %2360 = vmatpush.bf16.msra.mxu0 %v1881
        %2361 = vmatpush.bf16.msra.mxu0 %v1877
        %2362 = vmatpush.bf16.msra.mxu0 %v1873
        %2363 = vmatmul.bf16.gmra.mxu0 %v518
        %v2364 = vpop.f32.mrf.mxu0
        %v2365 = vadd.f32 0.0, %v2364
        %v2366 = vpop.f32.mrf.mxu0
        %v2367 = vadd.f32 0.0, %v2366
        %2368 = vmatmul.bf16.gmra.mxu0 %v520
        %v2369 = vpop.f32.mrf.mxu0
        %v2370 = vadd.f32 0.0, %v2369
        %v2371 = vpop.f32.mrf.mxu0
        %v2372 = vadd.f32 0.0, %v2371
        %2373 = vmatmul.bf16.gmra.mxu0 %v522
        %v2374 = vpop.f32.mrf.mxu0
        %v2375 = vadd.f32 0.0, %v2374
        %v2376 = vpop.f32.mrf.mxu0
        %v2377 = vadd.f32 0.0, %v2376
        %2378 = vmatmul.bf16.gmra.mxu0 %v524
        %v2379 = vpop.f32.mrf.mxu0
        %v2380 = vadd.f32 0.0, %v2379
        %v2381 = vpop.f32.mrf.mxu0
        %v2382 = vadd.f32 0.0, %v2381
        %2383 = vmatmul.bf16.gmra.mxu0 %v526
        %v2384 = vpop.f32.mrf.mxu0
        %v2385 = vadd.f32 0.0, %v2384
        %v2386 = vpop.f32.mrf.mxu0
        %v2387 = vadd.f32 0.0, %v2386
        %2388 = vmatmul.bf16.gmra.mxu0 %v528
        %v2389 = vpop.f32.mrf.mxu0
        %v2390 = vadd.f32 0.0, %v2389
        %v2391 = vpop.f32.mrf.mxu0
        %v2392 = vadd.f32 0.0, %v2391
        %2393 = vmatmul.bf16.gmra.mxu0 %v530
        %v2394 = vpop.f32.mrf.mxu0
        %v2395 = vadd.f32 0.0, %v2394
        %v2396 = vpop.f32.mrf.mxu0
        %v2397 = vadd.f32 0.0, %v2396
        %2398 = vmatmul.bf16.gmra.mxu0 %v532
        %v2399 = vpop.f32.mrf.mxu0
        %v2400 = vadd.f32 0.0, %v2399
        %v2401 = vpop.f32.mrf.mxu0
        %v2402 = vadd.f32 0.0, %v2401
        %2403 = vmatmul.bf16.gmra.mxu0 %v534
        %v2404 = vpop.f32.mrf.mxu0
        %v2405 = vadd.f32 0.0, %v2404
        %v2406 = vpop.f32.mrf.mxu0
        %v2407 = vadd.f32 0.0, %v2406
        %2408 = vmatmul.bf16.gmra.mxu0 %v536
        %v2409 = vpop.f32.mrf.mxu0
        %v2410 = vadd.f32 0.0, %v2409
        %v2411 = vpop.f32.mrf.mxu0
        %v2412 = vadd.f32 0.0, %v2411
        %2413 = vmatmul.bf16.gmra.mxu0 %v538
        %v2414 = vpop.f32.mrf.mxu0
        %v2415 = vadd.f32 0.0, %v2414
        %v2416 = vpop.f32.mrf.mxu0
        %v2417 = vadd.f32 0.0, %v2416
        %2418 = vmatmul.bf16.gmra.mxu0 %v540
        %v2419 = vpop.f32.mrf.mxu0
        %v2420 = vadd.f32 0.0, %v2419
        %v2421 = vpop.f32.mrf.mxu0
        %v2422 = vadd.f32 0.0, %v2421
        %2423 = vmatmul.bf16.gmra.mxu0 %v542
        %v2424 = vpop.f32.mrf.mxu0
        %v2425 = vadd.f32 0.0, %v2424
        %v2426 = vpop.f32.mrf.mxu0
        %v2427 = vadd.f32 0.0, %v2426
        %2428 = vmatmul.bf16.gmra.mxu0 %v544
        %v2429 = vpop.f32.mrf.mxu0
        %v2430 = vadd.f32 0.0, %v2429
        %v2431 = vpop.f32.mrf.mxu0
        %v2432 = vadd.f32 0.0, %v2431
        %2433 = vmatmul.bf16.gmra.mxu0 %v546
        %v2434 = vpop.f32.mrf.mxu0
        %v2435 = vadd.f32 0.0, %v2434
        %v2436 = vpop.f32.mrf.mxu0
        %v2437 = vadd.f32 0.0, %v2436
        %2438 = vmatmul.bf16.gmra.mxu0 %v548
        %v2439 = vpop.f32.mrf.mxu0
        %v2440 = vadd.f32 0.0, %v2439
        %v2441 = vpop.f32.mrf.mxu0
        %v2442 = vadd.f32 0.0, %v2441
        %2443 = vdwg.mxu0
        %2444 = vmatpush.bf16.msra.mxu0 %v1933
        %2445 = vmatpush.bf16.msra.mxu0 %v1929
        %2446 = vmatpush.bf16.msra.mxu0 %v1925
        %2447 = vmatpush.bf16.msra.mxu0 %v1921
        %2448 = vmatpush.bf16.msra.mxu0 %v1917
        %2449 = vmatpush.bf16.msra.mxu0 %v1913
        %2450 = vmatpush.bf16.msra.mxu0 %v1909
        %2451 = vmatpush.bf16.msra.mxu0 %v1905
        %2452 = vmatmul.bf16.gmra.mxu0 %v519
        %v2453 = vpop.f32.mrf.mxu0
        %v2454 = vadd.f32 %v2365, %v2453
        %v2455 = vpop.f32.mrf.mxu0
        %v2456 = vadd.f32 %v2367, %v2455
        %2457 = vmatmul.bf16.gmra.mxu0 %v521
        %v2458 = vpop.f32.mrf.mxu0
        %v2459 = vadd.f32 %v2370, %v2458
        %v2460 = vpop.f32.mrf.mxu0
        %v2461 = vadd.f32 %v2372, %v2460
        %2462 = vmatmul.bf16.gmra.mxu0 %v523
        %v2463 = vpop.f32.mrf.mxu0
        %v2464 = vadd.f32 %v2375, %v2463
        %v2465 = vpop.f32.mrf.mxu0
        %v2466 = vadd.f32 %v2377, %v2465
        %2467 = vmatmul.bf16.gmra.mxu0 %v525
        %v2468 = vpop.f32.mrf.mxu0
        %v2469 = vadd.f32 %v2380, %v2468
        %v2470 = vpop.f32.mrf.mxu0
        %v2471 = vadd.f32 %v2382, %v2470
        %2472 = vmatmul.bf16.gmra.mxu0 %v527
        %v2473 = vpop.f32.mrf.mxu0
        %v2474 = vadd.f32 %v2385, %v2473
        %v2475 = vpop.f32.mrf.mxu0
        %v2476 = vadd.f32 %v2387, %v2475
        %2477 = vmatmul.bf16.gmra.mxu0 %v529
        %v2478 = vpop.f32.mrf.mxu0
        %v2479 = vadd.f32 %v2390, %v2478
        %v2480 = vpop.f32.mrf.mxu0
        %v2481 = vadd.f32 %v2392, %v2480
        %2482 = vmatmul.bf16.gmra.mxu0 %v531
        %v2483 = vpop.f32.mrf.mxu0
        %v2484 = vadd.f32 %v2395, %v2483
        %v2485 = vpop.f32.mrf.mxu0
        %v2486 = vadd.f32 %v2397, %v2485
        %2487 = vmatmul.bf16.gmra.mxu0 %v533
        %v2488 = vpop.f32.mrf.mxu0
        %v2489 = vadd.f32 %v2400, %v2488
        %v2490 = vpop.f32.mrf.mxu0
        %v2491 = vadd.f32 %v2402, %v2490
        %2492 = vmatmul.bf16.gmra.mxu0 %v535
        %v2493 = vpop.f32.mrf.mxu0
        %v2494 = vadd.f32 %v2405, %v2493
        %v2495 = vpop.f32.mrf.mxu0
        %v2496 = vadd.f32 %v2407, %v2495
        %2497 = vmatmul.bf16.gmra.mxu0 %v537
        %v2498 = vpop.f32.mrf.mxu0
        %v2499 = vadd.f32 %v2410, %v2498
        %v2500 = vpop.f32.mrf.mxu0
        %v2501 = vadd.f32 %v2412, %v2500
        %2502 = vmatmul.bf16.gmra.mxu0 %v539
        %v2503 = vpop.f32.mrf.mxu0
        %v2504 = vadd.f32 %v2415, %v2503
        %v2505 = vpop.f32.mrf.mxu0
        %v2506 = vadd.f32 %v2417, %v2505
        %2507 = vmatmul.bf16.gmra.mxu0 %v541
        %v2508 = vpop.f32.mrf.mxu0
        %v2509 = vadd.f32 %v2420, %v2508
        %v2510 = vpop.f32.mrf.mxu0
        %v2511 = vadd.f32 %v2422, %v2510
        %2512 = vmatmul.bf16.gmra.mxu0 %v543
        %v2513 = vpop.f32.mrf.mxu0
        %v2514 = vadd.f32 %v2425, %v2513
        %v2515 = vpop.f32.mrf.mxu0
        %v2516 = vadd.f32 %v2427, %v2515
        %2517 = vmatmul.bf16.gmra.mxu0 %v545
        %v2518 = vpop.f32.mrf.mxu0
        %v2519 = vadd.f32 %v2430, %v2518
        %v2520 = vpop.f32.mrf.mxu0
        %v2521 = vadd.f32 %v2432, %v2520
        %2522 = vmatmul.bf16.gmra.mxu0 %v547
        %v2523 = vpop.f32.mrf.mxu0
        %v2524 = vadd.f32 %v2435, %v2523
        %v2525 = vpop.f32.mrf.mxu0
        %v2526 = vadd.f32 %v2437, %v2525
        %2527 = vmatmul.bf16.gmra.mxu0 %v549
        %v2528 = vpop.f32.mrf.mxu0
        %v2529 = vadd.f32 %v2440, %v2528
        %v2530 = vpop.f32.mrf.mxu0
        %v2531 = vadd.f32 %v2442, %v2530
        %2532 = vdwg.mxu0
        %2533 = vmatpush.bf16.msra.mxu0 %v1902
        %2534 = vmatpush.bf16.msra.mxu0 %v1898
        %2535 = vmatpush.bf16.msra.mxu0 %v1894
        %2536 = vmatpush.bf16.msra.mxu0 %v1890
        %2537 = vmatpush.bf16.msra.mxu0 %v1886
        %2538 = vmatpush.bf16.msra.mxu0 %v1882
        %2539 = vmatpush.bf16.msra.mxu0 %v1878
        %2540 = vmatpush.bf16.msra.mxu0 %v1874
        %2541 = vmatmul.bf16.gmra.mxu0 %v518
        %v2542 = vpop.f32.mrf.mxu0
        %v2543 = vadd.f32 0.0, %v2542
        %v2544 = vpop.f32.mrf.mxu0
        %v2545 = vadd.f32 0.0, %v2544
        %2546 = vmatmul.bf16.gmra.mxu0 %v520
        %v2547 = vpop.f32.mrf.mxu0
        %v2548 = vadd.f32 0.0, %v2547
        %v2549 = vpop.f32.mrf.mxu0
        %v2550 = vadd.f32 0.0, %v2549
        %2551 = vmatmul.bf16.gmra.mxu0 %v522
        %v2552 = vpop.f32.mrf.mxu0
        %v2553 = vadd.f32 0.0, %v2552
        %v2554 = vpop.f32.mrf.mxu0
        %v2555 = vadd.f32 0.0, %v2554
        %2556 = vmatmul.bf16.gmra.mxu0 %v524
        %v2557 = vpop.f32.mrf.mxu0
        %v2558 = vadd.f32 0.0, %v2557
        %v2559 = vpop.f32.mrf.mxu0
        %v2560 = vadd.f32 0.0, %v2559
        %2561 = vmatmul.bf16.gmra.mxu0 %v526
        %v2562 = vpop.f32.mrf.mxu0
        %v2563 = vadd.f32 0.0, %v2562
        %v2564 = vpop.f32.mrf.mxu0
        %v2565 = vadd.f32 0.0, %v2564
        %2566 = vmatmul.bf16.gmra.mxu0 %v528
        %v2567 = vpop.f32.mrf.mxu0
        %v2568 = vadd.f32 0.0, %v2567
        %v2569 = vpop.f32.mrf.mxu0
        %v2570 = vadd.f32 0.0, %v2569
        %2571 = vmatmul.bf16.gmra.mxu0 %v530
        %v2572 = vpop.f32.mrf.mxu0
        %v2573 = vadd.f32 0.0, %v2572
        %v2574 = vpop.f32.mrf.mxu0
        %v2575 = vadd.f32 0.0, %v2574
        %2576 = vmatmul.bf16.gmra.mxu0 %v532
        %v2577 = vpop.f32.mrf.mxu0
        %v2578 = vadd.f32 0.0, %v2577
        %v2579 = vpop.f32.mrf.mxu0
        %v2580 = vadd.f32 0.0, %v2579
        %2581 = vmatmul.bf16.gmra.mxu0 %v534
        %v2582 = vpop.f32.mrf.mxu0
        %v2583 = vadd.f32 0.0, %v2582
        %v2584 = vpop.f32.mrf.mxu0
        %v2585 = vadd.f32 0.0, %v2584
        %2586 = vmatmul.bf16.gmra.mxu0 %v536
        %v2587 = vpop.f32.mrf.mxu0
        %v2588 = vadd.f32 0.0, %v2587
        %v2589 = vpop.f32.mrf.mxu0
        %v2590 = vadd.f32 0.0, %v2589
        %2591 = vmatmul.bf16.gmra.mxu0 %v538
        %v2592 = vpop.f32.mrf.mxu0
        %v2593 = vadd.f32 0.0, %v2592
        %v2594 = vpop.f32.mrf.mxu0
        %v2595 = vadd.f32 0.0, %v2594
        %2596 = vmatmul.bf16.gmra.mxu0 %v540
        %v2597 = vpop.f32.mrf.mxu0
        %v2598 = vadd.f32 0.0, %v2597
        %v2599 = vpop.f32.mrf.mxu0
        %v2600 = vadd.f32 0.0, %v2599
        %2601 = vmatmul.bf16.gmra.mxu0 %v542
        %v2602 = vpop.f32.mrf.mxu0
        %v2603 = vadd.f32 0.0, %v2602
        %v2604 = vpop.f32.mrf.mxu0
        %v2605 = vadd.f32 0.0, %v2604
        %2606 = vmatmul.bf16.gmra.mxu0 %v544
        %v2607 = vpop.f32.mrf.mxu0
        %v2608 = vadd.f32 0.0, %v2607
        %v2609 = vpop.f32.mrf.mxu0
        %v2610 = vadd.f32 0.0, %v2609
        %2611 = vmatmul.bf16.gmra.mxu0 %v546
        %v2612 = vpop.f32.mrf.mxu0
        %v2613 = vadd.f32 0.0, %v2612
        %v2614 = vpop.f32.mrf.mxu0
        %v2615 = vadd.f32 0.0, %v2614
        %2616 = vmatmul.bf16.gmra.mxu0 %v548
        %v2617 = vpop.f32.mrf.mxu0
        %v2618 = vadd.f32 0.0, %v2617
        %v2619 = vpop.f32.mrf.mxu0
        %v2620 = vadd.f32 0.0, %v2619
        %2621 = vdwg.mxu0
        %2622 = vmatpush.bf16.msra.mxu0 %v1934
        %2623 = vmatpush.bf16.msra.mxu0 %v1930
        %2624 = vmatpush.bf16.msra.mxu0 %v1926
        %2625 = vmatpush.bf16.msra.mxu0 %v1922
        %2626 = vmatpush.bf16.msra.mxu0 %v1918
        %2627 = vmatpush.bf16.msra.mxu0 %v1914
        %2628 = vmatpush.bf16.msra.mxu0 %v1910
        %2629 = vmatpush.bf16.msra.mxu0 %v1906
        %2630 = vmatmul.bf16.gmra.mxu0 %v519
        %v2631 = vpop.f32.mrf.mxu0
        %v2632 = vadd.f32 %v2543, %v2631
        %v2633 = vpop.f32.mrf.mxu0
        %v2634 = vadd.f32 %v2545, %v2633
        %2635 = vmatmul.bf16.gmra.mxu0 %v521
        %v2636 = vpop.f32.mrf.mxu0
        %v2637 = vadd.f32 %v2548, %v2636
        %v2638 = vpop.f32.mrf.mxu0
        %v2639 = vadd.f32 %v2550, %v2638
        %2640 = vmatmul.bf16.gmra.mxu0 %v523
        %v2641 = vpop.f32.mrf.mxu0
        %v2642 = vadd.f32 %v2553, %v2641
        %v2643 = vpop.f32.mrf.mxu0
        %v2644 = vadd.f32 %v2555, %v2643
        %2645 = vmatmul.bf16.gmra.mxu0 %v525
        %v2646 = vpop.f32.mrf.mxu0
        %v2647 = vadd.f32 %v2558, %v2646
        %v2648 = vpop.f32.mrf.mxu0
        %v2649 = vadd.f32 %v2560, %v2648
        %2650 = vmatmul.bf16.gmra.mxu0 %v527
        %v2651 = vpop.f32.mrf.mxu0
        %v2652 = vadd.f32 %v2563, %v2651
        %v2653 = vpop.f32.mrf.mxu0
        %v2654 = vadd.f32 %v2565, %v2653
        %2655 = vmatmul.bf16.gmra.mxu0 %v529
        %v2656 = vpop.f32.mrf.mxu0
        %v2657 = vadd.f32 %v2568, %v2656
        %v2658 = vpop.f32.mrf.mxu0
        %v2659 = vadd.f32 %v2570, %v2658
        %2660 = vmatmul.bf16.gmra.mxu0 %v531
        %v2661 = vpop.f32.mrf.mxu0
        %v2662 = vadd.f32 %v2573, %v2661
        %v2663 = vpop.f32.mrf.mxu0
        %v2664 = vadd.f32 %v2575, %v2663
        %2665 = vmatmul.bf16.gmra.mxu0 %v533
        %v2666 = vpop.f32.mrf.mxu0
        %v2667 = vadd.f32 %v2578, %v2666
        %v2668 = vpop.f32.mrf.mxu0
        %v2669 = vadd.f32 %v2580, %v2668
        %2670 = vmatmul.bf16.gmra.mxu0 %v535
        %v2671 = vpop.f32.mrf.mxu0
        %v2672 = vadd.f32 %v2583, %v2671
        %v2673 = vpop.f32.mrf.mxu0
        %v2674 = vadd.f32 %v2585, %v2673
        %2675 = vmatmul.bf16.gmra.mxu0 %v537
        %v2676 = vpop.f32.mrf.mxu0
        %v2677 = vadd.f32 %v2588, %v2676
        %v2678 = vpop.f32.mrf.mxu0
        %v2679 = vadd.f32 %v2590, %v2678
        %2680 = vmatmul.bf16.gmra.mxu0 %v539
        %v2681 = vpop.f32.mrf.mxu0
        %v2682 = vadd.f32 %v2593, %v2681
        %v2683 = vpop.f32.mrf.mxu0
        %v2684 = vadd.f32 %v2595, %v2683
        %2685 = vmatmul.bf16.gmra.mxu0 %v541
        %v2686 = vpop.f32.mrf.mxu0
        %v2687 = vadd.f32 %v2598, %v2686
        %v2688 = vpop.f32.mrf.mxu0
        %v2689 = vadd.f32 %v2600, %v2688
        %2690 = vmatmul.bf16.gmra.mxu0 %v543
        %v2691 = vpop.f32.mrf.mxu0
        %v2692 = vadd.f32 %v2603, %v2691
        %v2693 = vpop.f32.mrf.mxu0
        %v2694 = vadd.f32 %v2605, %v2693
        %2695 = vmatmul.bf16.gmra.mxu0 %v545
        %v2696 = vpop.f32.mrf.mxu0
        %v2697 = vadd.f32 %v2608, %v2696
        %v2698 = vpop.f32.mrf.mxu0
        %v2699 = vadd.f32 %v2610, %v2698
        %2700 = vmatmul.bf16.gmra.mxu0 %v547
        %v2701 = vpop.f32.mrf.mxu0
        %v2702 = vadd.f32 %v2613, %v2701
        %v2703 = vpop.f32.mrf.mxu0
        %v2704 = vadd.f32 %v2615, %v2703
        %2705 = vmatmul.bf16.gmra.mxu0 %v549
        %v2706 = vpop.f32.mrf.mxu0
        %v2707 = vadd.f32 %v2618, %v2706
        %v2708 = vpop.f32.mrf.mxu0
        %v2709 = vadd.f32 %v2620, %v2708
        %2710 = vdwg.mxu0
        %v2711 = vxor.u32 %v1001, 2147483648
        %v2712 = vxor.u32 %v1179, 2147483648
        %v2713 = vxor.u32 %v1357, 2147483648
        %v2714 = vxor.u32 %v1535, 2147483648
        %v2715 = vxor.u32 %v1003, 2147483648
        %v2716 = vxor.u32 %v1181, 2147483648
        %v2717 = vxor.u32 %v1359, 2147483648
        %v2718 = vxor.u32 %v1537, 2147483648
        %v2719 = vxor.u32 %v1006, 2147483648
        %v2720 = vxor.u32 %v1184, 2147483648
        %v2721 = vxor.u32 %v1362, 2147483648
        %v2722 = vxor.u32 %v1540, 2147483648
        %v2723 = vxor.u32 %v1008, 2147483648
        %v2724 = vxor.u32 %v1186, 2147483648
        %v2725 = vxor.u32 %v1364, 2147483648
        %v2726 = vxor.u32 %v1542, 2147483648
        %v2727 = vxor.u32 %v1011, 2147483648
        %v2728 = vxor.u32 %v1189, 2147483648
        %v2729 = vxor.u32 %v1367, 2147483648
        %v2730 = vxor.u32 %v1545, 2147483648
        %v2731 = vxor.u32 %v1013, 2147483648
        %v2732 = vxor.u32 %v1191, 2147483648
        %v2733 = vxor.u32 %v1369, 2147483648
        %v2734 = vxor.u32 %v1547, 2147483648
        %v2735 = vxor.u32 %v1016, 2147483648
        %v2736 = vxor.u32 %v1194, 2147483648
        %v2737 = vxor.u32 %v1372, 2147483648
        %v2738 = vxor.u32 %v1550, 2147483648
        %v2739 = vxor.u32 %v1018, 2147483648
        %v2740 = vxor.u32 %v1196, 2147483648
        %v2741 = vxor.u32 %v1374, 2147483648
        %v2742 = vxor.u32 %v1552, 2147483648
        %v2743 = vxor.u32 %v1021, 2147483648
        %v2744 = vxor.u32 %v1199, 2147483648
        %v2745 = vxor.u32 %v1377, 2147483648
        %v2746 = vxor.u32 %v1555, 2147483648
        %v2747 = vxor.u32 %v1023, 2147483648
        %v2748 = vxor.u32 %v1201, 2147483648
        %v2749 = vxor.u32 %v1379, 2147483648
        %v2750 = vxor.u32 %v1557, 2147483648
        %v2751 = vxor.u32 %v1026, 2147483648
        %v2752 = vxor.u32 %v1204, 2147483648
        %v2753 = vxor.u32 %v1382, 2147483648
        %v2754 = vxor.u32 %v1560, 2147483648
        %v2755 = vxor.u32 %v1028, 2147483648
        %v2756 = vxor.u32 %v1206, 2147483648
        %v2757 = vxor.u32 %v1384, 2147483648
        %v2758 = vxor.u32 %v1562, 2147483648
        %v2759 = vxor.u32 %v1031, 2147483648
        %v2760 = vxor.u32 %v1209, 2147483648
        %v2761 = vxor.u32 %v1387, 2147483648
        %v2762 = vxor.u32 %v1565, 2147483648
        %v2763 = vxor.u32 %v1033, 2147483648
        %v2764 = vxor.u32 %v1211, 2147483648
        %v2765 = vxor.u32 %v1389, 2147483648
        %v2766 = vxor.u32 %v1567, 2147483648
        %v2767 = vxor.u32 %v1036, 2147483648
        %v2768 = vxor.u32 %v1214, 2147483648
        %v2769 = vxor.u32 %v1392, 2147483648
        %v2770 = vxor.u32 %v1570, 2147483648
        %v2771 = vxor.u32 %v1038, 2147483648
        %v2772 = vxor.u32 %v1216, 2147483648
        %v2773 = vxor.u32 %v1394, 2147483648
        %v2774 = vxor.u32 %v1572, 2147483648
        %v2775 = vxor.u32 %v1041, 2147483648
        %v2776 = vxor.u32 %v1219, 2147483648
        %v2777 = vxor.u32 %v1397, 2147483648
        %v2778 = vxor.u32 %v1575, 2147483648
        %v2779 = vxor.u32 %v1043, 2147483648
        %v2780 = vxor.u32 %v1221, 2147483648
        %v2781 = vxor.u32 %v1399, 2147483648
        %v2782 = vxor.u32 %v1577, 2147483648
        %v2783 = vxor.u32 %v1046, 2147483648
        %v2784 = vxor.u32 %v1224, 2147483648
        %v2785 = vxor.u32 %v1402, 2147483648
        %v2786 = vxor.u32 %v1580, 2147483648
        %v2787 = vxor.u32 %v1048, 2147483648
        %v2788 = vxor.u32 %v1226, 2147483648
        %v2789 = vxor.u32 %v1404, 2147483648
        %v2790 = vxor.u32 %v1582, 2147483648
        %v2791 = vxor.u32 %v1051, 2147483648
        %v2792 = vxor.u32 %v1229, 2147483648
        %v2793 = vxor.u32 %v1407, 2147483648
        %v2794 = vxor.u32 %v1585, 2147483648
        %v2795 = vxor.u32 %v1053, 2147483648
        %v2796 = vxor.u32 %v1231, 2147483648
        %v2797 = vxor.u32 %v1409, 2147483648
        %v2798 = vxor.u32 %v1587, 2147483648
        %v2799 = vxor.u32 %v1056, 2147483648
        %v2800 = vxor.u32 %v1234, 2147483648
        %v2801 = vxor.u32 %v1412, 2147483648
        %v2802 = vxor.u32 %v1590, 2147483648
        %v2803 = vxor.u32 %v1058, 2147483648
        %v2804 = vxor.u32 %v1236, 2147483648
        %v2805 = vxor.u32 %v1414, 2147483648
        %v2806 = vxor.u32 %v1592, 2147483648
        %v2807 = vxor.u32 %v1061, 2147483648
        %v2808 = vxor.u32 %v1239, 2147483648
        %v2809 = vxor.u32 %v1417, 2147483648
        %v2810 = vxor.u32 %v1595, 2147483648
        %v2811 = vxor.u32 %v1063, 2147483648
        %v2812 = vxor.u32 %v1241, 2147483648
        %v2813 = vxor.u32 %v1419, 2147483648
        %v2814 = vxor.u32 %v1597, 2147483648
        %v2815 = vxor.u32 %v1066, 2147483648
        %v2816 = vxor.u32 %v1244, 2147483648
        %v2817 = vxor.u32 %v1422, 2147483648
        %v2818 = vxor.u32 %v1600, 2147483648
        %v2819 = vxor.u32 %v1068, 2147483648
        %v2820 = vxor.u32 %v1246, 2147483648
        %v2821 = vxor.u32 %v1424, 2147483648
        %v2822 = vxor.u32 %v1602, 2147483648
        %v2823 = vxor.u32 %v1071, 2147483648
        %v2824 = vxor.u32 %v1249, 2147483648
        %v2825 = vxor.u32 %v1427, 2147483648
        %v2826 = vxor.u32 %v1605, 2147483648
        %v2827 = vxor.u32 %v1073, 2147483648
        %v2828 = vxor.u32 %v1251, 2147483648
        %v2829 = vxor.u32 %v1429, 2147483648
        %v2830 = vxor.u32 %v1607, 2147483648
        %v2831 = vxor.u32 %v1076, 2147483648
        %v2832 = vxor.u32 %v1254, 2147483648
        %v2833 = vxor.u32 %v1432, 2147483648
        %v2834 = vxor.u32 %v1610, 2147483648
        %v2835 = vxor.u32 %v1078, 2147483648
        %v2836 = vxor.u32 %v1256, 2147483648
        %v2837 = vxor.u32 %v1434, 2147483648
        %v2838 = vxor.u32 %v1612, 2147483648
        %v2839 = vmul.f32 %v2711, 1.442695
        %v2840 = vpow.pop %v2839
        %v2841 = vmul.f32 %v2712, 1.442695
        %v2842 = vpow.pop %v2841
        %v2843 = vmul.f32 %v2713, 1.442695
        %v2844 = vpow.pop %v2843
        %v2845 = vmul.f32 %v2714, 1.442695
        %v2846 = vpow.pop %v2845
        %v2847 = vmul.f32 %v2715, 1.442695
        %v2848 = vpow.pop %v2847
        %v2849 = vmul.f32 %v2716, 1.442695
        %v2850 = vpow.pop %v2849
        %v2851 = vmul.f32 %v2717, 1.442695
        %v2852 = vpow.pop %v2851
        %v2853 = vmul.f32 %v2718, 1.442695
        %v2854 = vpow.pop %v2853
        %v2855 = vmul.f32 %v2719, 1.442695
        %v2856 = vpow.pop %v2855
        %v2857 = vmul.f32 %v2720, 1.442695
        %v2858 = vpow.pop %v2857
        %v2859 = vmul.f32 %v2721, 1.442695
        %v2860 = vpow.pop %v2859
        %v2861 = vmul.f32 %v2722, 1.442695
        %v2862 = vpow.pop %v2861
        %v2863 = vmul.f32 %v2723, 1.442695
        %v2864 = vpow.pop %v2863
        %v2865 = vmul.f32 %v2724, 1.442695
        %v2866 = vpow.pop %v2865
        %v2867 = vmul.f32 %v2725, 1.442695
        %v2868 = vpow.pop %v2867
        %v2869 = vmul.f32 %v2726, 1.442695
        %v2870 = vpow.pop %v2869
        %v2871 = vmul.f32 %v2727, 1.442695
        %v2872 = vpow.pop %v2871
        %v2873 = vmul.f32 %v2728, 1.442695
        %v2874 = vpow.pop %v2873
        %v2875 = vmul.f32 %v2729, 1.442695
        %v2876 = vpow.pop %v2875
        %v2877 = vmul.f32 %v2730, 1.442695
        %v2878 = vpow.pop %v2877
        %v2879 = vmul.f32 %v2731, 1.442695
        %v2880 = vpow.pop %v2879
        %v2881 = vmul.f32 %v2732, 1.442695
        %v2882 = vpow.pop %v2881
        %v2883 = vmul.f32 %v2733, 1.442695
        %v2884 = vpow.pop %v2883
        %v2885 = vmul.f32 %v2734, 1.442695
        %v2886 = vpow.pop %v2885
        %v2887 = vmul.f32 %v2735, 1.442695
        %v2888 = vpow.pop %v2887
        %v2889 = vmul.f32 %v2736, 1.442695
        %v2890 = vpow.pop %v2889
        %v2891 = vmul.f32 %v2737, 1.442695
        %v2892 = vpow.pop %v2891
        %v2893 = vmul.f32 %v2738, 1.442695
        %v2894 = vpow.pop %v2893
        %v2895 = vmul.f32 %v2739, 1.442695
        %v2896 = vpow.pop %v2895
        %v2897 = vmul.f32 %v2740, 1.442695
        %v2898 = vpow.pop %v2897
        %v2899 = vmul.f32 %v2741, 1.442695
        %v2900 = vpow.pop %v2899
        %v2901 = vmul.f32 %v2742, 1.442695
        %v2902 = vpow.pop %v2901
        %v2903 = vmul.f32 %v2743, 1.442695
        %v2904 = vpow.pop %v2903
        %v2905 = vmul.f32 %v2744, 1.442695
        %v2906 = vpow.pop %v2905
        %v2907 = vmul.f32 %v2745, 1.442695
        %v2908 = vpow.pop %v2907
        %v2909 = vmul.f32 %v2746, 1.442695
        %v2910 = vpow.pop %v2909
        %v2911 = vmul.f32 %v2747, 1.442695
        %v2912 = vpow.pop %v2911
        %v2913 = vmul.f32 %v2748, 1.442695
        %v2914 = vpow.pop %v2913
        %v2915 = vmul.f32 %v2749, 1.442695
        %v2916 = vpow.pop %v2915
        %v2917 = vmul.f32 %v2750, 1.442695
        %v2918 = vpow.pop %v2917
        %v2919 = vmul.f32 %v2751, 1.442695
        %v2920 = vpow.pop %v2919
        %v2921 = vmul.f32 %v2752, 1.442695
        %v2922 = vpow.pop %v2921
        %v2923 = vmul.f32 %v2753, 1.442695
        %v2924 = vpow.pop %v2923
        %v2925 = vmul.f32 %v2754, 1.442695
        %v2926 = vpow.pop %v2925
        %v2927 = vmul.f32 %v2755, 1.442695
        %v2928 = vpow.pop %v2927
        %v2929 = vmul.f32 %v2756, 1.442695
        %v2930 = vpow.pop %v2929
        %v2931 = vmul.f32 %v2757, 1.442695
        %v2932 = vpow.pop %v2931
        %v2933 = vmul.f32 %v2758, 1.442695
        %v2934 = vpow.pop %v2933
        %v2935 = vmul.f32 %v2759, 1.442695
        %v2936 = vpow.pop %v2935
        %v2937 = vmul.f32 %v2760, 1.442695
        %v2938 = vpow.pop %v2937
        %v2939 = vmul.f32 %v2761, 1.442695
        %v2940 = vpow.pop %v2939
        %v2941 = vmul.f32 %v2762, 1.442695
        %v2942 = vpow.pop %v2941
        %v2943 = vmul.f32 %v2763, 1.442695
        %v2944 = vpow.pop %v2943
        %v2945 = vmul.f32 %v2764, 1.442695
        %v2946 = vpow.pop %v2945
        %v2947 = vmul.f32 %v2765, 1.442695
        %v2948 = vpow.pop %v2947
        %v2949 = vmul.f32 %v2766, 1.442695
        %v2950 = vpow.pop %v2949
        %v2951 = vmul.f32 %v2767, 1.442695
        %v2952 = vpow.pop %v2951
        %v2953 = vmul.f32 %v2768, 1.442695
        %v2954 = vpow.pop %v2953
        %v2955 = vmul.f32 %v2769, 1.442695
        %v2956 = vpow.pop %v2955
        %v2957 = vmul.f32 %v2770, 1.442695
        %v2958 = vpow.pop %v2957
        %v2959 = vmul.f32 %v2771, 1.442695
        %v2960 = vpow.pop %v2959
        %v2961 = vmul.f32 %v2772, 1.442695
        %v2962 = vpow.pop %v2961
        %v2963 = vmul.f32 %v2773, 1.442695
        %v2964 = vpow.pop %v2963
        %v2965 = vmul.f32 %v2774, 1.442695
        %v2966 = vpow.pop %v2965
        %v2967 = vmul.f32 %v2775, 1.442695
        %v2968 = vpow.pop %v2967
        %v2969 = vmul.f32 %v2776, 1.442695
        %v2970 = vpow.pop %v2969
        %v2971 = vmul.f32 %v2777, 1.442695
        %v2972 = vpow.pop %v2971
        %v2973 = vmul.f32 %v2778, 1.442695
        %v2974 = vpow.pop %v2973
        %v2975 = vmul.f32 %v2779, 1.442695
        %v2976 = vpow.pop %v2975
        %v2977 = vmul.f32 %v2780, 1.442695
        %v2978 = vpow.pop %v2977
        %v2979 = vmul.f32 %v2781, 1.442695
        %v2980 = vpow.pop %v2979
        %v2981 = vmul.f32 %v2782, 1.442695
        %v2982 = vpow.pop %v2981
        %v2983 = vmul.f32 %v2783, 1.442695
        %v2984 = vpow.pop %v2983
        %v2985 = vmul.f32 %v2784, 1.442695
        %v2986 = vpow.pop %v2985
        %v2987 = vmul.f32 %v2785, 1.442695
        %v2988 = vpow.pop %v2987
        %v2989 = vmul.f32 %v2786, 1.442695
        %v2990 = vpow.pop %v2989
        %v2991 = vmul.f32 %v2787, 1.442695
        %v2992 = vpow.pop %v2991
        %v2993 = vmul.f32 %v2788, 1.442695
        %v2994 = vpow.pop %v2993
        %v2995 = vmul.f32 %v2789, 1.442695
        %v2996 = vpow.pop %v2995
        %v2997 = vmul.f32 %v2790, 1.442695
        %v2998 = vpow.pop %v2997
        %v2999 = vmul.f32 %v2791, 1.442695
        %v3000 = vpow.pop %v2999
        %v3001 = vmul.f32 %v2792, 1.442695
        %v3002 = vpow.pop %v3001
        %v3003 = vmul.f32 %v2793, 1.442695
        %v3004 = vpow.pop %v3003
        %v3005 = vmul.f32 %v2794, 1.442695
        %v3006 = vpow.pop %v3005
        %v3007 = vmul.f32 %v2795, 1.442695
        %v3008 = vpow.pop %v3007
        %v3009 = vmul.f32 %v2796, 1.442695
        %v3010 = vpow.pop %v3009
        %v3011 = vmul.f32 %v2797, 1.442695
        %v3012 = vpow.pop %v3011
        %v3013 = vmul.f32 %v2798, 1.442695
        %v3014 = vpow.pop %v3013
        %v3015 = vmul.f32 %v2799, 1.442695
        %v3016 = vpow.pop %v3015
        %v3017 = vmul.f32 %v2800, 1.442695
        %v3018 = vpow.pop %v3017
        %v3019 = vmul.f32 %v2801, 1.442695
        %v3020 = vpow.pop %v3019
        %v3021 = vmul.f32 %v2802, 1.442695
        %v3022 = vpow.pop %v3021
        %v3023 = vmul.f32 %v2803, 1.442695
        %v3024 = vpow.pop %v3023
        %v3025 = vmul.f32 %v2804, 1.442695
        %v3026 = vpow.pop %v3025
        %v3027 = vmul.f32 %v2805, 1.442695
        %v3028 = vpow.pop %v3027
        %v3029 = vmul.f32 %v2806, 1.442695
        %v3030 = vpow.pop %v3029
        %v3031 = vmul.f32 %v2807, 1.442695
        %v3032 = vpow.pop %v3031
        %v3033 = vmul.f32 %v2808, 1.442695
        %v3034 = vpow.pop %v3033
        %v3035 = vmul.f32 %v2809, 1.442695
        %v3036 = vpow.pop %v3035
        %v3037 = vmul.f32 %v2810, 1.442695
        %v3038 = vpow.pop %v3037
        %v3039 = vmul.f32 %v2811, 1.442695
        %v3040 = vpow.pop %v3039
        %v3041 = vmul.f32 %v2812, 1.442695
        %v3042 = vpow.pop %v3041
        %v3043 = vmul.f32 %v2813, 1.442695
        %v3044 = vpow.pop %v3043
        %v3045 = vmul.f32 %v2814, 1.442695
        %v3046 = vpow.pop %v3045
        %v3047 = vmul.f32 %v2815, 1.442695
        %v3048 = vpow.pop %v3047
        %v3049 = vmul.f32 %v2816, 1.442695
        %v3050 = vpow.pop %v3049
        %v3051 = vmul.f32 %v2817, 1.442695
        %v3052 = vpow.pop %v3051
        %v3053 = vmul.f32 %v2818, 1.442695
        %v3054 = vpow.pop %v3053
        %v3055 = vmul.f32 %v2819, 1.442695
        %v3056 = vpow.pop %v3055
        %v3057 = vmul.f32 %v2820, 1.442695
        %v3058 = vpow.pop %v3057
        %v3059 = vmul.f32 %v2821, 1.442695
        %v3060 = vpow.pop %v3059
        %v3061 = vmul.f32 %v2822, 1.442695
        %v3062 = vpow.pop %v3061
        %v3063 = vmul.f32 %v2823, 1.442695
        %v3064 = vpow.pop %v3063
        %v3065 = vmul.f32 %v2824, 1.442695
        %v3066 = vpow.pop %v3065
        %v3067 = vmul.f32 %v2825, 1.442695
        %v3068 = vpow.pop %v3067
        %v3069 = vmul.f32 %v2826, 1.442695
        %v3070 = vpow.pop %v3069
        %v3071 = vmul.f32 %v2827, 1.442695
        %v3072 = vpow.pop %v3071
        %v3073 = vmul.f32 %v2828, 1.442695
        %v3074 = vpow.pop %v3073
        %v3075 = vmul.f32 %v2829, 1.442695
        %v3076 = vpow.pop %v3075
        %v3077 = vmul.f32 %v2830, 1.442695
        %v3078 = vpow.pop %v3077
        %v3079 = vmul.f32 %v2831, 1.442695
        %v3080 = vpow.pop %v3079
        %v3081 = vmul.f32 %v2832, 1.442695
        %v3082 = vpow.pop %v3081
        %v3083 = vmul.f32 %v2833, 1.442695
        %v3084 = vpow.pop %v3083
        %v3085 = vmul.f32 %v2834, 1.442695
        %v3086 = vpow.pop %v3085
        %v3087 = vmul.f32 %v2835, 1.442695
        %v3088 = vpow.pop %v3087
        %v3089 = vmul.f32 %v2836, 1.442695
        %v3090 = vpow.pop %v3089
        %v3091 = vmul.f32 %v2837, 1.442695
        %v3092 = vpow.pop %v3091
        %v3093 = vmul.f32 %v2838, 1.442695
        %v3094 = vpow.pop %v3093
        %v3095 = vadd.f32 %v2840, 1.0
        %v3096 = vadd.f32 %v2842, 1.0
        %v3097 = vadd.f32 %v2844, 1.0
        %v3098 = vadd.f32 %v2846, 1.0
        %v3099 = vadd.f32 %v2848, 1.0
        %v3100 = vadd.f32 %v2850, 1.0
        %v3101 = vadd.f32 %v2852, 1.0
        %v3102 = vadd.f32 %v2854, 1.0
        %v3103 = vadd.f32 %v2856, 1.0
        %v3104 = vadd.f32 %v2858, 1.0
        %v3105 = vadd.f32 %v2860, 1.0
        %v3106 = vadd.f32 %v2862, 1.0
        %v3107 = vadd.f32 %v2864, 1.0
        %v3108 = vadd.f32 %v2866, 1.0
        %v3109 = vadd.f32 %v2868, 1.0
        %v3110 = vadd.f32 %v2870, 1.0
        %v3111 = vadd.f32 %v2872, 1.0
        %v3112 = vadd.f32 %v2874, 1.0
        %v3113 = vadd.f32 %v2876, 1.0
        %v3114 = vadd.f32 %v2878, 1.0
        %v3115 = vadd.f32 %v2880, 1.0
        %v3116 = vadd.f32 %v2882, 1.0
        %v3117 = vadd.f32 %v2884, 1.0
        %v3118 = vadd.f32 %v2886, 1.0
        %v3119 = vadd.f32 %v2888, 1.0
        %v3120 = vadd.f32 %v2890, 1.0
        %v3121 = vadd.f32 %v2892, 1.0
        %v3122 = vadd.f32 %v2894, 1.0
        %v3123 = vadd.f32 %v2896, 1.0
        %v3124 = vadd.f32 %v2898, 1.0
        %v3125 = vadd.f32 %v2900, 1.0
        %v3126 = vadd.f32 %v2902, 1.0
        %v3127 = vadd.f32 %v2904, 1.0
        %v3128 = vadd.f32 %v2906, 1.0
        %v3129 = vadd.f32 %v2908, 1.0
        %v3130 = vadd.f32 %v2910, 1.0
        %v3131 = vadd.f32 %v2912, 1.0
        %v3132 = vadd.f32 %v2914, 1.0
        %v3133 = vadd.f32 %v2916, 1.0
        %v3134 = vadd.f32 %v2918, 1.0
        %v3135 = vadd.f32 %v2920, 1.0
        %v3136 = vadd.f32 %v2922, 1.0
        %v3137 = vadd.f32 %v2924, 1.0
        %v3138 = vadd.f32 %v2926, 1.0
        %v3139 = vadd.f32 %v2928, 1.0
        %v3140 = vadd.f32 %v2930, 1.0
        %v3141 = vadd.f32 %v2932, 1.0
        %v3142 = vadd.f32 %v2934, 1.0
        %v3143 = vadd.f32 %v2936, 1.0
        %v3144 = vadd.f32 %v2938, 1.0
        %v3145 = vadd.f32 %v2940, 1.0
        %v3146 = vadd.f32 %v2942, 1.0
        %v3147 = vadd.f32 %v2944, 1.0
        %v3148 = vadd.f32 %v2946, 1.0
        %v3149 = vadd.f32 %v2948, 1.0
        %v3150 = vadd.f32 %v2950, 1.0
        %v3151 = vadd.f32 %v2952, 1.0
        %v3152 = vadd.f32 %v2954, 1.0
        %v3153 = vadd.f32 %v2956, 1.0
        %v3154 = vadd.f32 %v2958, 1.0
        %v3155 = vadd.f32 %v2960, 1.0
        %v3156 = vadd.f32 %v2962, 1.0
        %v3157 = vadd.f32 %v2964, 1.0
        %v3158 = vadd.f32 %v2966, 1.0
        %v3159 = vadd.f32 %v2968, 1.0
        %v3160 = vadd.f32 %v2970, 1.0
        %v3161 = vadd.f32 %v2972, 1.0
        %v3162 = vadd.f32 %v2974, 1.0
        %v3163 = vadd.f32 %v2976, 1.0
        %v3164 = vadd.f32 %v2978, 1.0
        %v3165 = vadd.f32 %v2980, 1.0
        %v3166 = vadd.f32 %v2982, 1.0
        %v3167 = vadd.f32 %v2984, 1.0
        %v3168 = vadd.f32 %v2986, 1.0
        %v3169 = vadd.f32 %v2988, 1.0
        %v3170 = vadd.f32 %v2990, 1.0
        %v3171 = vadd.f32 %v2992, 1.0
        %v3172 = vadd.f32 %v2994, 1.0
        %v3173 = vadd.f32 %v2996, 1.0
        %v3174 = vadd.f32 %v2998, 1.0
        %v3175 = vadd.f32 %v3000, 1.0
        %v3176 = vadd.f32 %v3002, 1.0
        %v3177 = vadd.f32 %v3004, 1.0
        %v3178 = vadd.f32 %v3006, 1.0
        %v3179 = vadd.f32 %v3008, 1.0
        %v3180 = vadd.f32 %v3010, 1.0
        %v3181 = vadd.f32 %v3012, 1.0
        %v3182 = vadd.f32 %v3014, 1.0
        %v3183 = vadd.f32 %v3016, 1.0
        %v3184 = vadd.f32 %v3018, 1.0
        %v3185 = vadd.f32 %v3020, 1.0
        %v3186 = vadd.f32 %v3022, 1.0
        %v3187 = vadd.f32 %v3024, 1.0
        %v3188 = vadd.f32 %v3026, 1.0
        %v3189 = vadd.f32 %v3028, 1.0
        %v3190 = vadd.f32 %v3030, 1.0
        %v3191 = vadd.f32 %v3032, 1.0
        %v3192 = vadd.f32 %v3034, 1.0
        %v3193 = vadd.f32 %v3036, 1.0
        %v3194 = vadd.f32 %v3038, 1.0
        %v3195 = vadd.f32 %v3040, 1.0
        %v3196 = vadd.f32 %v3042, 1.0
        %v3197 = vadd.f32 %v3044, 1.0
        %v3198 = vadd.f32 %v3046, 1.0
        %v3199 = vadd.f32 %v3048, 1.0
        %v3200 = vadd.f32 %v3050, 1.0
        %v3201 = vadd.f32 %v3052, 1.0
        %v3202 = vadd.f32 %v3054, 1.0
        %v3203 = vadd.f32 %v3056, 1.0
        %v3204 = vadd.f32 %v3058, 1.0
        %v3205 = vadd.f32 %v3060, 1.0
        %v3206 = vadd.f32 %v3062, 1.0
        %v3207 = vadd.f32 %v3064, 1.0
        %v3208 = vadd.f32 %v3066, 1.0
        %v3209 = vadd.f32 %v3068, 1.0
        %v3210 = vadd.f32 %v3070, 1.0
        %v3211 = vadd.f32 %v3072, 1.0
        %v3212 = vadd.f32 %v3074, 1.0
        %v3213 = vadd.f32 %v3076, 1.0
        %v3214 = vadd.f32 %v3078, 1.0
        %v3215 = vadd.f32 %v3080, 1.0
        %v3216 = vadd.f32 %v3082, 1.0
        %v3217 = vadd.f32 %v3084, 1.0
        %v3218 = vadd.f32 %v3086, 1.0
        %v3219 = vadd.f32 %v3088, 1.0
        %v3220 = vadd.f32 %v3090, 1.0
        %v3221 = vadd.f32 %v3092, 1.0
        %v3222 = vadd.f32 %v3094, 1.0
        %v3223 = vrcp.pop %v3095
        %v3224 = vmul.f32 %v3095, %v3223
        %v3225 = vsub.f32 1.0, %v3224
        %v3226 = vmul.f32 %v3223, %v3225
        %v3227 = vadd.f32 %v3223, %v3226
        %vm3228 = vweird.f32 %v3095
        %vm3229 = vweird.f32 %v3223
        %vm3230 = vmor %vm3228, %vm3229
        %v3231 = vsel %vm3230, %v3223, %v3227
        %v3232 = vand.u32 2147483647, %v3095
        %vm3233 = vcmp.eq.f32.partialorder %v3232, 8.507059e+37
        %v3234 = vand.u32 %v3095, 2147483648
        %v3235 = vor.u32 1.1754944e-38, %v3234
        %v3236 = vsel %vm3233, %v3235, %v3231
        %v3237 = vmul.f32 1.0, %v3236
        %v3238 = vrcp.pop %v3096
        %v3239 = vmul.f32 %v3096, %v3238
        %v3240 = vsub.f32 1.0, %v3239
        %v3241 = vmul.f32 %v3238, %v3240
        %v3242 = vadd.f32 %v3238, %v3241
        %vm3243 = vweird.f32 %v3096
        %vm3244 = vweird.f32 %v3238
        %vm3245 = vmor %vm3243, %vm3244
        %v3246 = vsel %vm3245, %v3238, %v3242
        %v3247 = vand.u32 2147483647, %v3096
        %vm3248 = vcmp.eq.f32.partialorder %v3247, 8.507059e+37
        %v3249 = vand.u32 %v3096, 2147483648
        %v3250 = vor.u32 1.1754944e-38, %v3249
        %v3251 = vsel %vm3248, %v3250, %v3246
        %v3252 = vmul.f32 1.0, %v3251
        %v3253 = vrcp.pop %v3097
        %v3254 = vmul.f32 %v3097, %v3253
        %v3255 = vsub.f32 1.0, %v3254
        %v3256 = vmul.f32 %v3253, %v3255
        %v3257 = vadd.f32 %v3253, %v3256
        %vm3258 = vweird.f32 %v3097
        %vm3259 = vweird.f32 %v3253
        %vm3260 = vmor %vm3258, %vm3259
        %v3261 = vsel %vm3260, %v3253, %v3257
        %v3262 = vand.u32 2147483647, %v3097
        %vm3263 = vcmp.eq.f32.partialorder %v3262, 8.507059e+37
        %v3264 = vand.u32 %v3097, 2147483648
        %v3265 = vor.u32 1.1754944e-38, %v3264
        %v3266 = vsel %vm3263, %v3265, %v3261
        %v3267 = vmul.f32 1.0, %v3266
        %v3268 = vrcp.pop %v3098
        %v3269 = vmul.f32 %v3098, %v3268
        %v3270 = vsub.f32 1.0, %v3269
        %v3271 = vmul.f32 %v3268, %v3270
        %v3272 = vadd.f32 %v3268, %v3271
        %vm3273 = vweird.f32 %v3098
        %vm3274 = vweird.f32 %v3268
        %vm3275 = vmor %vm3273, %vm3274
        %v3276 = vsel %vm3275, %v3268, %v3272
        %v3277 = vand.u32 2147483647, %v3098
        %vm3278 = vcmp.eq.f32.partialorder %v3277, 8.507059e+37
        %v3279 = vand.u32 %v3098, 2147483648
        %v3280 = vor.u32 1.1754944e-38, %v3279
        %v3281 = vsel %vm3278, %v3280, %v3276
        %v3282 = vmul.f32 1.0, %v3281
        %v3283 = vrcp.pop %v3099
        %v3284 = vmul.f32 %v3099, %v3283
        %v3285 = vsub.f32 1.0, %v3284
        %v3286 = vmul.f32 %v3283, %v3285
        %v3287 = vadd.f32 %v3283, %v3286
        %vm3288 = vweird.f32 %v3099
        %vm3289 = vweird.f32 %v3283
        %vm3290 = vmor %vm3288, %vm3289
        %v3291 = vsel %vm3290, %v3283, %v3287
        %v3292 = vand.u32 2147483647, %v3099
        %vm3293 = vcmp.eq.f32.partialorder %v3292, 8.507059e+37
        %v3294 = vand.u32 %v3099, 2147483648
        %v3295 = vor.u32 1.1754944e-38, %v3294
        %v3296 = vsel %vm3293, %v3295, %v3291
        %v3297 = vmul.f32 1.0, %v3296
        %v3298 = vrcp.pop %v3100
        %v3299 = vmul.f32 %v3100, %v3298
        %v3300 = vsub.f32 1.0, %v3299
        %v3301 = vmul.f32 %v3298, %v3300
        %v3302 = vadd.f32 %v3298, %v3301
        %vm3303 = vweird.f32 %v3100
        %vm3304 = vweird.f32 %v3298
        %vm3305 = vmor %vm3303, %vm3304
        %v3306 = vsel %vm3305, %v3298, %v3302
        %v3307 = vand.u32 2147483647, %v3100
        %vm3308 = vcmp.eq.f32.partialorder %v3307, 8.507059e+37
        %v3309 = vand.u32 %v3100, 2147483648
        %v3310 = vor.u32 1.1754944e-38, %v3309
        %v3311 = vsel %vm3308, %v3310, %v3306
        %v3312 = vmul.f32 1.0, %v3311
        %v3313 = vrcp.pop %v3101
        %v3314 = vmul.f32 %v3101, %v3313
        %v3315 = vsub.f32 1.0, %v3314
        %v3316 = vmul.f32 %v3313, %v3315
        %v3317 = vadd.f32 %v3313, %v3316
        %vm3318 = vweird.f32 %v3101
        %vm3319 = vweird.f32 %v3313
        %vm3320 = vmor %vm3318, %vm3319
        %v3321 = vsel %vm3320, %v3313, %v3317
        %v3322 = vand.u32 2147483647, %v3101
        %vm3323 = vcmp.eq.f32.partialorder %v3322, 8.507059e+37
        %v3324 = vand.u32 %v3101, 2147483648
        %v3325 = vor.u32 1.1754944e-38, %v3324
        %v3326 = vsel %vm3323, %v3325, %v3321
        %v3327 = vmul.f32 1.0, %v3326
        %v3328 = vrcp.pop %v3102
        %v3329 = vmul.f32 %v3102, %v3328
        %v3330 = vsub.f32 1.0, %v3329
        %v3331 = vmul.f32 %v3328, %v3330
        %v3332 = vadd.f32 %v3328, %v3331
        %vm3333 = vweird.f32 %v3102
        %vm3334 = vweird.f32 %v3328
        %vm3335 = vmor %vm3333, %vm3334
        %v3336 = vsel %vm3335, %v3328, %v3332
        %v3337 = vand.u32 2147483647, %v3102
        %vm3338 = vcmp.eq.f32.partialorder %v3337, 8.507059e+37
        %v3339 = vand.u32 %v3102, 2147483648
        %v3340 = vor.u32 1.1754944e-38, %v3339
        %v3341 = vsel %vm3338, %v3340, %v3336
        %v3342 = vmul.f32 1.0, %v3341
        %v3343 = vrcp.pop %v3103
        %v3344 = vmul.f32 %v3103, %v3343
        %v3345 = vsub.f32 1.0, %v3344
        %v3346 = vmul.f32 %v3343, %v3345
        %v3347 = vadd.f32 %v3343, %v3346
        %vm3348 = vweird.f32 %v3103
        %vm3349 = vweird.f32 %v3343
        %vm3350 = vmor %vm3348, %vm3349
        %v3351 = vsel %vm3350, %v3343, %v3347
        %v3352 = vand.u32 2147483647, %v3103
        %vm3353 = vcmp.eq.f32.partialorder %v3352, 8.507059e+37
        %v3354 = vand.u32 %v3103, 2147483648
        %v3355 = vor.u32 1.1754944e-38, %v3354
        %v3356 = vsel %vm3353, %v3355, %v3351
        %v3357 = vmul.f32 1.0, %v3356
        %v3358 = vrcp.pop %v3104
        %v3359 = vmul.f32 %v3104, %v3358
        %v3360 = vsub.f32 1.0, %v3359
        %v3361 = vmul.f32 %v3358, %v3360
        %v3362 = vadd.f32 %v3358, %v3361
        %vm3363 = vweird.f32 %v3104
        %vm3364 = vweird.f32 %v3358
        %vm3365 = vmor %vm3363, %vm3364
        %v3366 = vsel %vm3365, %v3358, %v3362
        %v3367 = vand.u32 2147483647, %v3104
        %vm3368 = vcmp.eq.f32.partialorder %v3367, 8.507059e+37
        %v3369 = vand.u32 %v3104, 2147483648
        %v3370 = vor.u32 1.1754944e-38, %v3369
        %v3371 = vsel %vm3368, %v3370, %v3366
        %v3372 = vmul.f32 1.0, %v3371
        %v3373 = vrcp.pop %v3105
        %v3374 = vmul.f32 %v3105, %v3373
        %v3375 = vsub.f32 1.0, %v3374
        %v3376 = vmul.f32 %v3373, %v3375
        %v3377 = vadd.f32 %v3373, %v3376
        %vm3378 = vweird.f32 %v3105
        %vm3379 = vweird.f32 %v3373
        %vm3380 = vmor %vm3378, %vm3379
        %v3381 = vsel %vm3380, %v3373, %v3377
        %v3382 = vand.u32 2147483647, %v3105
        %vm3383 = vcmp.eq.f32.partialorder %v3382, 8.507059e+37
        %v3384 = vand.u32 %v3105, 2147483648
        %v3385 = vor.u32 1.1754944e-38, %v3384
        %v3386 = vsel %vm3383, %v3385, %v3381
        %v3387 = vmul.f32 1.0, %v3386
        %v3388 = vrcp.pop %v3106
        %v3389 = vmul.f32 %v3106, %v3388
        %v3390 = vsub.f32 1.0, %v3389
        %v3391 = vmul.f32 %v3388, %v3390
        %v3392 = vadd.f32 %v3388, %v3391
        %vm3393 = vweird.f32 %v3106
        %vm3394 = vweird.f32 %v3388
        %vm3395 = vmor %vm3393, %vm3394
        %v3396 = vsel %vm3395, %v3388, %v3392
        %v3397 = vand.u32 2147483647, %v3106
        %vm3398 = vcmp.eq.f32.partialorder %v3397, 8.507059e+37
        %v3399 = vand.u32 %v3106, 2147483648
        %v3400 = vor.u32 1.1754944e-38, %v3399
        %v3401 = vsel %vm3398, %v3400, %v3396
        %v3402 = vmul.f32 1.0, %v3401
        %v3403 = vrcp.pop %v3107
        %v3404 = vmul.f32 %v3107, %v3403
        %v3405 = vsub.f32 1.0, %v3404
        %v3406 = vmul.f32 %v3403, %v3405
        %v3407 = vadd.f32 %v3403, %v3406
        %vm3408 = vweird.f32 %v3107
        %vm3409 = vweird.f32 %v3403
        %vm3410 = vmor %vm3408, %vm3409
        %v3411 = vsel %vm3410, %v3403, %v3407
        %v3412 = vand.u32 2147483647, %v3107
        %vm3413 = vcmp.eq.f32.partialorder %v3412, 8.507059e+37
        %v3414 = vand.u32 %v3107, 2147483648
        %v3415 = vor.u32 1.1754944e-38, %v3414
        %v3416 = vsel %vm3413, %v3415, %v3411
        %v3417 = vmul.f32 1.0, %v3416
        %v3418 = vrcp.pop %v3108
        %v3419 = vmul.f32 %v3108, %v3418
        %v3420 = vsub.f32 1.0, %v3419
        %v3421 = vmul.f32 %v3418, %v3420
        %v3422 = vadd.f32 %v3418, %v3421
        %vm3423 = vweird.f32 %v3108
        %vm3424 = vweird.f32 %v3418
        %vm3425 = vmor %vm3423, %vm3424
        %v3426 = vsel %vm3425, %v3418, %v3422
        %v3427 = vand.u32 2147483647, %v3108
        %vm3428 = vcmp.eq.f32.partialorder %v3427, 8.507059e+37
        %v3429 = vand.u32 %v3108, 2147483648
        %v3430 = vor.u32 1.1754944e-38, %v3429
        %v3431 = vsel %vm3428, %v3430, %v3426
        %v3432 = vmul.f32 1.0, %v3431
        %v3433 = vrcp.pop %v3109
        %v3434 = vmul.f32 %v3109, %v3433
        %v3435 = vsub.f32 1.0, %v3434
        %v3436 = vmul.f32 %v3433, %v3435
        %v3437 = vadd.f32 %v3433, %v3436
        %vm3438 = vweird.f32 %v3109
        %vm3439 = vweird.f32 %v3433
        %vm3440 = vmor %vm3438, %vm3439
        %v3441 = vsel %vm3440, %v3433, %v3437
        %v3442 = vand.u32 2147483647, %v3109
        %vm3443 = vcmp.eq.f32.partialorder %v3442, 8.507059e+37
        %v3444 = vand.u32 %v3109, 2147483648
        %v3445 = vor.u32 1.1754944e-38, %v3444
        %v3446 = vsel %vm3443, %v3445, %v3441
        %v3447 = vmul.f32 1.0, %v3446
        %v3448 = vrcp.pop %v3110
        %v3449 = vmul.f32 %v3110, %v3448
        %v3450 = vsub.f32 1.0, %v3449
        %v3451 = vmul.f32 %v3448, %v3450
        %v3452 = vadd.f32 %v3448, %v3451
        %vm3453 = vweird.f32 %v3110
        %vm3454 = vweird.f32 %v3448
        %vm3455 = vmor %vm3453, %vm3454
        %v3456 = vsel %vm3455, %v3448, %v3452
        %v3457 = vand.u32 2147483647, %v3110
        %vm3458 = vcmp.eq.f32.partialorder %v3457, 8.507059e+37
        %v3459 = vand.u32 %v3110, 2147483648
        %v3460 = vor.u32 1.1754944e-38, %v3459
        %v3461 = vsel %vm3458, %v3460, %v3456
        %v3462 = vmul.f32 1.0, %v3461
        %v3463 = vrcp.pop %v3111
        %v3464 = vmul.f32 %v3111, %v3463
        %v3465 = vsub.f32 1.0, %v3464
        %v3466 = vmul.f32 %v3463, %v3465
        %v3467 = vadd.f32 %v3463, %v3466
        %vm3468 = vweird.f32 %v3111
        %vm3469 = vweird.f32 %v3463
        %vm3470 = vmor %vm3468, %vm3469
        %v3471 = vsel %vm3470, %v3463, %v3467
        %v3472 = vand.u32 2147483647, %v3111
        %vm3473 = vcmp.eq.f32.partialorder %v3472, 8.507059e+37
        %v3474 = vand.u32 %v3111, 2147483648
        %v3475 = vor.u32 1.1754944e-38, %v3474
        %v3476 = vsel %vm3473, %v3475, %v3471
        %v3477 = vmul.f32 1.0, %v3476
        %v3478 = vrcp.pop %v3112
        %v3479 = vmul.f32 %v3112, %v3478
        %v3480 = vsub.f32 1.0, %v3479
        %v3481 = vmul.f32 %v3478, %v3480
        %v3482 = vadd.f32 %v3478, %v3481
        %vm3483 = vweird.f32 %v3112
        %vm3484 = vweird.f32 %v3478
        %vm3485 = vmor %vm3483, %vm3484
        %v3486 = vsel %vm3485, %v3478, %v3482
        %v3487 = vand.u32 2147483647, %v3112
        %vm3488 = vcmp.eq.f32.partialorder %v3487, 8.507059e+37
        %v3489 = vand.u32 %v3112, 2147483648
        %v3490 = vor.u32 1.1754944e-38, %v3489
        %v3491 = vsel %vm3488, %v3490, %v3486
        %v3492 = vmul.f32 1.0, %v3491
        %v3493 = vrcp.pop %v3113
        %v3494 = vmul.f32 %v3113, %v3493
        %v3495 = vsub.f32 1.0, %v3494
        %v3496 = vmul.f32 %v3493, %v3495
        %v3497 = vadd.f32 %v3493, %v3496
        %vm3498 = vweird.f32 %v3113
        %vm3499 = vweird.f32 %v3493
        %vm3500 = vmor %vm3498, %vm3499
        %v3501 = vsel %vm3500, %v3493, %v3497
        %v3502 = vand.u32 2147483647, %v3113
        %vm3503 = vcmp.eq.f32.partialorder %v3502, 8.507059e+37
        %v3504 = vand.u32 %v3113, 2147483648
        %v3505 = vor.u32 1.1754944e-38, %v3504
        %v3506 = vsel %vm3503, %v3505, %v3501
        %v3507 = vmul.f32 1.0, %v3506
        %v3508 = vrcp.pop %v3114
        %v3509 = vmul.f32 %v3114, %v3508
        %v3510 = vsub.f32 1.0, %v3509
        %v3511 = vmul.f32 %v3508, %v3510
        %v3512 = vadd.f32 %v3508, %v3511
        %vm3513 = vweird.f32 %v3114
        %vm3514 = vweird.f32 %v3508
        %vm3515 = vmor %vm3513, %vm3514
        %v3516 = vsel %vm3515, %v3508, %v3512
        %v3517 = vand.u32 2147483647, %v3114
        %vm3518 = vcmp.eq.f32.partialorder %v3517, 8.507059e+37
        %v3519 = vand.u32 %v3114, 2147483648
        %v3520 = vor.u32 1.1754944e-38, %v3519
        %v3521 = vsel %vm3518, %v3520, %v3516
        %v3522 = vmul.f32 1.0, %v3521
        %v3523 = vrcp.pop %v3115
        %v3524 = vmul.f32 %v3115, %v3523
        %v3525 = vsub.f32 1.0, %v3524
        %v3526 = vmul.f32 %v3523, %v3525
        %v3527 = vadd.f32 %v3523, %v3526
        %vm3528 = vweird.f32 %v3115
        %vm3529 = vweird.f32 %v3523
        %vm3530 = vmor %vm3528, %vm3529
        %v3531 = vsel %vm3530, %v3523, %v3527
        %v3532 = vand.u32 2147483647, %v3115
        %vm3533 = vcmp.eq.f32.partialorder %v3532, 8.507059e+37
        %v3534 = vand.u32 %v3115, 2147483648
        %v3535 = vor.u32 1.1754944e-38, %v3534
        %v3536 = vsel %vm3533, %v3535, %v3531
        %v3537 = vmul.f32 1.0, %v3536
        %v3538 = vrcp.pop %v3116
        %v3539 = vmul.f32 %v3116, %v3538
        %v3540 = vsub.f32 1.0, %v3539
        %v3541 = vmul.f32 %v3538, %v3540
        %v3542 = vadd.f32 %v3538, %v3541
        %vm3543 = vweird.f32 %v3116
        %vm3544 = vweird.f32 %v3538
        %vm3545 = vmor %vm3543, %vm3544
        %v3546 = vsel %vm3545, %v3538, %v3542
        %v3547 = vand.u32 2147483647, %v3116
        %vm3548 = vcmp.eq.f32.partialorder %v3547, 8.507059e+37
        %v3549 = vand.u32 %v3116, 2147483648
        %v3550 = vor.u32 1.1754944e-38, %v3549
        %v3551 = vsel %vm3548, %v3550, %v3546
        %v3552 = vmul.f32 1.0, %v3551
        %v3553 = vrcp.pop %v3117
        %v3554 = vmul.f32 %v3117, %v3553
        %v3555 = vsub.f32 1.0, %v3554
        %v3556 = vmul.f32 %v3553, %v3555
        %v3557 = vadd.f32 %v3553, %v3556
        %vm3558 = vweird.f32 %v3117
        %vm3559 = vweird.f32 %v3553
        %vm3560 = vmor %vm3558, %vm3559
        %v3561 = vsel %vm3560, %v3553, %v3557
        %v3562 = vand.u32 2147483647, %v3117
        %vm3563 = vcmp.eq.f32.partialorder %v3562, 8.507059e+37
        %v3564 = vand.u32 %v3117, 2147483648
        %v3565 = vor.u32 1.1754944e-38, %v3564
        %v3566 = vsel %vm3563, %v3565, %v3561
        %v3567 = vmul.f32 1.0, %v3566
        %v3568 = vrcp.pop %v3118
        %v3569 = vmul.f32 %v3118, %v3568
        %v3570 = vsub.f32 1.0, %v3569
        %v3571 = vmul.f32 %v3568, %v3570
        %v3572 = vadd.f32 %v3568, %v3571
        %vm3573 = vweird.f32 %v3118
        %vm3574 = vweird.f32 %v3568
        %vm3575 = vmor %vm3573, %vm3574
        %v3576 = vsel %vm3575, %v3568, %v3572
        %v3577 = vand.u32 2147483647, %v3118
        %vm3578 = vcmp.eq.f32.partialorder %v3577, 8.507059e+37
        %v3579 = vand.u32 %v3118, 2147483648
        %v3580 = vor.u32 1.1754944e-38, %v3579
        %v3581 = vsel %vm3578, %v3580, %v3576
        %v3582 = vmul.f32 1.0, %v3581
        %v3583 = vrcp.pop %v3119
        %v3584 = vmul.f32 %v3119, %v3583
        %v3585 = vsub.f32 1.0, %v3584
        %v3586 = vmul.f32 %v3583, %v3585
        %v3587 = vadd.f32 %v3583, %v3586
        %vm3588 = vweird.f32 %v3119
        %vm3589 = vweird.f32 %v3583
        %vm3590 = vmor %vm3588, %vm3589
        %v3591 = vsel %vm3590, %v3583, %v3587
        %v3592 = vand.u32 2147483647, %v3119
        %vm3593 = vcmp.eq.f32.partialorder %v3592, 8.507059e+37
        %v3594 = vand.u32 %v3119, 2147483648
        %v3595 = vor.u32 1.1754944e-38, %v3594
        %v3596 = vsel %vm3593, %v3595, %v3591
        %v3597 = vmul.f32 1.0, %v3596
        %v3598 = vrcp.pop %v3120
        %v3599 = vmul.f32 %v3120, %v3598
        %v3600 = vsub.f32 1.0, %v3599
        %v3601 = vmul.f32 %v3598, %v3600
        %v3602 = vadd.f32 %v3598, %v3601
        %vm3603 = vweird.f32 %v3120
        %vm3604 = vweird.f32 %v3598
        %vm3605 = vmor %vm3603, %vm3604
        %v3606 = vsel %vm3605, %v3598, %v3602
        %v3607 = vand.u32 2147483647, %v3120
        %vm3608 = vcmp.eq.f32.partialorder %v3607, 8.507059e+37
        %v3609 = vand.u32 %v3120, 2147483648
        %v3610 = vor.u32 1.1754944e-38, %v3609
        %v3611 = vsel %vm3608, %v3610, %v3606
        %v3612 = vmul.f32 1.0, %v3611
        %v3613 = vrcp.pop %v3121
        %v3614 = vmul.f32 %v3121, %v3613
        %v3615 = vsub.f32 1.0, %v3614
        %v3616 = vmul.f32 %v3613, %v3615
        %v3617 = vadd.f32 %v3613, %v3616
        %vm3618 = vweird.f32 %v3121
        %vm3619 = vweird.f32 %v3613
        %vm3620 = vmor %vm3618, %vm3619
        %v3621 = vsel %vm3620, %v3613, %v3617
        %v3622 = vand.u32 2147483647, %v3121
        %vm3623 = vcmp.eq.f32.partialorder %v3622, 8.507059e+37
        %v3624 = vand.u32 %v3121, 2147483648
        %v3625 = vor.u32 1.1754944e-38, %v3624
        %v3626 = vsel %vm3623, %v3625, %v3621
        %v3627 = vmul.f32 1.0, %v3626
        %v3628 = vrcp.pop %v3122
        %v3629 = vmul.f32 %v3122, %v3628
        %v3630 = vsub.f32 1.0, %v3629
        %v3631 = vmul.f32 %v3628, %v3630
        %v3632 = vadd.f32 %v3628, %v3631
        %vm3633 = vweird.f32 %v3122
        %vm3634 = vweird.f32 %v3628
        %vm3635 = vmor %vm3633, %vm3634
        %v3636 = vsel %vm3635, %v3628, %v3632
        %v3637 = vand.u32 2147483647, %v3122
        %vm3638 = vcmp.eq.f32.partialorder %v3637, 8.507059e+37
        %v3639 = vand.u32 %v3122, 2147483648
        %v3640 = vor.u32 1.1754944e-38, %v3639
        %v3641 = vsel %vm3638, %v3640, %v3636
        %v3642 = vmul.f32 1.0, %v3641
        %v3643 = vrcp.pop %v3123
        %v3644 = vmul.f32 %v3123, %v3643
        %v3645 = vsub.f32 1.0, %v3644
        %v3646 = vmul.f32 %v3643, %v3645
        %v3647 = vadd.f32 %v3643, %v3646
        %vm3648 = vweird.f32 %v3123
        %vm3649 = vweird.f32 %v3643
        %vm3650 = vmor %vm3648, %vm3649
        %v3651 = vsel %vm3650, %v3643, %v3647
        %v3652 = vand.u32 2147483647, %v3123
        %vm3653 = vcmp.eq.f32.partialorder %v3652, 8.507059e+37
        %v3654 = vand.u32 %v3123, 2147483648
        %v3655 = vor.u32 1.1754944e-38, %v3654
        %v3656 = vsel %vm3653, %v3655, %v3651
        %v3657 = vmul.f32 1.0, %v3656
        %v3658 = vrcp.pop %v3124
        %v3659 = vmul.f32 %v3124, %v3658
        %v3660 = vsub.f32 1.0, %v3659
        %v3661 = vmul.f32 %v3658, %v3660
        %v3662 = vadd.f32 %v3658, %v3661
        %vm3663 = vweird.f32 %v3124
        %vm3664 = vweird.f32 %v3658
        %vm3665 = vmor %vm3663, %vm3664
        %v3666 = vsel %vm3665, %v3658, %v3662
        %v3667 = vand.u32 2147483647, %v3124
        %vm3668 = vcmp.eq.f32.partialorder %v3667, 8.507059e+37
        %v3669 = vand.u32 %v3124, 2147483648
        %v3670 = vor.u32 1.1754944e-38, %v3669
        %v3671 = vsel %vm3668, %v3670, %v3666
        %v3672 = vmul.f32 1.0, %v3671
        %v3673 = vrcp.pop %v3125
        %v3674 = vmul.f32 %v3125, %v3673
        %v3675 = vsub.f32 1.0, %v3674
        %v3676 = vmul.f32 %v3673, %v3675
        %v3677 = vadd.f32 %v3673, %v3676
        %vm3678 = vweird.f32 %v3125
        %vm3679 = vweird.f32 %v3673
        %vm3680 = vmor %vm3678, %vm3679
        %v3681 = vsel %vm3680, %v3673, %v3677
        %v3682 = vand.u32 2147483647, %v3125
        %vm3683 = vcmp.eq.f32.partialorder %v3682, 8.507059e+37
        %v3684 = vand.u32 %v3125, 2147483648
        %v3685 = vor.u32 1.1754944e-38, %v3684
        %v3686 = vsel %vm3683, %v3685, %v3681
        %v3687 = vmul.f32 1.0, %v3686
        %v3688 = vrcp.pop %v3126
        %v3689 = vmul.f32 %v3126, %v3688
        %v3690 = vsub.f32 1.0, %v3689
        %v3691 = vmul.f32 %v3688, %v3690
        %v3692 = vadd.f32 %v3688, %v3691
        %vm3693 = vweird.f32 %v3126
        %vm3694 = vweird.f32 %v3688
        %vm3695 = vmor %vm3693, %vm3694
        %v3696 = vsel %vm3695, %v3688, %v3692
        %v3697 = vand.u32 2147483647, %v3126
        %vm3698 = vcmp.eq.f32.partialorder %v3697, 8.507059e+37
        %v3699 = vand.u32 %v3126, 2147483648
        %v3700 = vor.u32 1.1754944e-38, %v3699
        %v3701 = vsel %vm3698, %v3700, %v3696
        %v3702 = vmul.f32 1.0, %v3701
        %v3703 = vrcp.pop %v3127
        %v3704 = vmul.f32 %v3127, %v3703
        %v3705 = vsub.f32 1.0, %v3704
        %v3706 = vmul.f32 %v3703, %v3705
        %v3707 = vadd.f32 %v3703, %v3706
        %vm3708 = vweird.f32 %v3127
        %vm3709 = vweird.f32 %v3703
        %vm3710 = vmor %vm3708, %vm3709
        %v3711 = vsel %vm3710, %v3703, %v3707
        %v3712 = vand.u32 2147483647, %v3127
        %vm3713 = vcmp.eq.f32.partialorder %v3712, 8.507059e+37
        %v3714 = vand.u32 %v3127, 2147483648
        %v3715 = vor.u32 1.1754944e-38, %v3714
        %v3716 = vsel %vm3713, %v3715, %v3711
        %v3717 = vmul.f32 1.0, %v3716
        %v3718 = vrcp.pop %v3128
        %v3719 = vmul.f32 %v3128, %v3718
        %v3720 = vsub.f32 1.0, %v3719
        %v3721 = vmul.f32 %v3718, %v3720
        %v3722 = vadd.f32 %v3718, %v3721
        %vm3723 = vweird.f32 %v3128
        %vm3724 = vweird.f32 %v3718
        %vm3725 = vmor %vm3723, %vm3724
        %v3726 = vsel %vm3725, %v3718, %v3722
        %v3727 = vand.u32 2147483647, %v3128
        %vm3728 = vcmp.eq.f32.partialorder %v3727, 8.507059e+37
        %v3729 = vand.u32 %v3128, 2147483648
        %v3730 = vor.u32 1.1754944e-38, %v3729
        %v3731 = vsel %vm3728, %v3730, %v3726
        %v3732 = vmul.f32 1.0, %v3731
        %v3733 = vrcp.pop %v3129
        %v3734 = vmul.f32 %v3129, %v3733
        %v3735 = vsub.f32 1.0, %v3734
        %v3736 = vmul.f32 %v3733, %v3735
        %v3737 = vadd.f32 %v3733, %v3736
        %vm3738 = vweird.f32 %v3129
        %vm3739 = vweird.f32 %v3733
        %vm3740 = vmor %vm3738, %vm3739
        %v3741 = vsel %vm3740, %v3733, %v3737
        %v3742 = vand.u32 2147483647, %v3129
        %vm3743 = vcmp.eq.f32.partialorder %v3742, 8.507059e+37
        %v3744 = vand.u32 %v3129, 2147483648
        %v3745 = vor.u32 1.1754944e-38, %v3744
        %v3746 = vsel %vm3743, %v3745, %v3741
        %v3747 = vmul.f32 1.0, %v3746
        %v3748 = vrcp.pop %v3130
        %v3749 = vmul.f32 %v3130, %v3748
        %v3750 = vsub.f32 1.0, %v3749
        %v3751 = vmul.f32 %v3748, %v3750
        %v3752 = vadd.f32 %v3748, %v3751
        %vm3753 = vweird.f32 %v3130
        %vm3754 = vweird.f32 %v3748
        %vm3755 = vmor %vm3753, %vm3754
        %v3756 = vsel %vm3755, %v3748, %v3752
        %v3757 = vand.u32 2147483647, %v3130
        %vm3758 = vcmp.eq.f32.partialorder %v3757, 8.507059e+37
        %v3759 = vand.u32 %v3130, 2147483648
        %v3760 = vor.u32 1.1754944e-38, %v3759
        %v3761 = vsel %vm3758, %v3760, %v3756
        %v3762 = vmul.f32 1.0, %v3761
        %v3763 = vrcp.pop %v3131
        %v3764 = vmul.f32 %v3131, %v3763
        %v3765 = vsub.f32 1.0, %v3764
        %v3766 = vmul.f32 %v3763, %v3765
        %v3767 = vadd.f32 %v3763, %v3766
        %vm3768 = vweird.f32 %v3131
        %vm3769 = vweird.f32 %v3763
        %vm3770 = vmor %vm3768, %vm3769
        %v3771 = vsel %vm3770, %v3763, %v3767
        %v3772 = vand.u32 2147483647, %v3131
        %vm3773 = vcmp.eq.f32.partialorder %v3772, 8.507059e+37
        %v3774 = vand.u32 %v3131, 2147483648
        %v3775 = vor.u32 1.1754944e-38, %v3774
        %v3776 = vsel %vm3773, %v3775, %v3771
        %v3777 = vmul.f32 1.0, %v3776
        %v3778 = vrcp.pop %v3132
        %v3779 = vmul.f32 %v3132, %v3778
        %v3780 = vsub.f32 1.0, %v3779
        %v3781 = vmul.f32 %v3778, %v3780
        %v3782 = vadd.f32 %v3778, %v3781
        %vm3783 = vweird.f32 %v3132
        %vm3784 = vweird.f32 %v3778
        %vm3785 = vmor %vm3783, %vm3784
        %v3786 = vsel %vm3785, %v3778, %v3782
        %v3787 = vand.u32 2147483647, %v3132
        %vm3788 = vcmp.eq.f32.partialorder %v3787, 8.507059e+37
        %v3789 = vand.u32 %v3132, 2147483648
        %v3790 = vor.u32 1.1754944e-38, %v3789
        %v3791 = vsel %vm3788, %v3790, %v3786
        %v3792 = vmul.f32 1.0, %v3791
        %v3793 = vrcp.pop %v3133
        %v3794 = vmul.f32 %v3133, %v3793
        %v3795 = vsub.f32 1.0, %v3794
        %v3796 = vmul.f32 %v3793, %v3795
        %v3797 = vadd.f32 %v3793, %v3796
        %vm3798 = vweird.f32 %v3133
        %vm3799 = vweird.f32 %v3793
        %vm3800 = vmor %vm3798, %vm3799
        %v3801 = vsel %vm3800, %v3793, %v3797
        %v3802 = vand.u32 2147483647, %v3133
        %vm3803 = vcmp.eq.f32.partialorder %v3802, 8.507059e+37
        %v3804 = vand.u32 %v3133, 2147483648
        %v3805 = vor.u32 1.1754944e-38, %v3804
        %v3806 = vsel %vm3803, %v3805, %v3801
        %v3807 = vmul.f32 1.0, %v3806
        %v3808 = vrcp.pop %v3134
        %v3809 = vmul.f32 %v3134, %v3808
        %v3810 = vsub.f32 1.0, %v3809
        %v3811 = vmul.f32 %v3808, %v3810
        %v3812 = vadd.f32 %v3808, %v3811
        %vm3813 = vweird.f32 %v3134
        %vm3814 = vweird.f32 %v3808
        %vm3815 = vmor %vm3813, %vm3814
        %v3816 = vsel %vm3815, %v3808, %v3812
        %v3817 = vand.u32 2147483647, %v3134
        %vm3818 = vcmp.eq.f32.partialorder %v3817, 8.507059e+37
        %v3819 = vand.u32 %v3134, 2147483648
        %v3820 = vor.u32 1.1754944e-38, %v3819
        %v3821 = vsel %vm3818, %v3820, %v3816
        %v3822 = vmul.f32 1.0, %v3821
        %v3823 = vrcp.pop %v3135
        %v3824 = vmul.f32 %v3135, %v3823
        %v3825 = vsub.f32 1.0, %v3824
        %v3826 = vmul.f32 %v3823, %v3825
        %v3827 = vadd.f32 %v3823, %v3826
        %vm3828 = vweird.f32 %v3135
        %vm3829 = vweird.f32 %v3823
        %vm3830 = vmor %vm3828, %vm3829
        %v3831 = vsel %vm3830, %v3823, %v3827
        %v3832 = vand.u32 2147483647, %v3135
        %vm3833 = vcmp.eq.f32.partialorder %v3832, 8.507059e+37
        %v3834 = vand.u32 %v3135, 2147483648
        %v3835 = vor.u32 1.1754944e-38, %v3834
        %v3836 = vsel %vm3833, %v3835, %v3831
        %v3837 = vmul.f32 1.0, %v3836
        %v3838 = vrcp.pop %v3136
        %v3839 = vmul.f32 %v3136, %v3838
        %v3840 = vsub.f32 1.0, %v3839
        %v3841 = vmul.f32 %v3838, %v3840
        %v3842 = vadd.f32 %v3838, %v3841
        %vm3843 = vweird.f32 %v3136
        %vm3844 = vweird.f32 %v3838
        %vm3845 = vmor %vm3843, %vm3844
        %v3846 = vsel %vm3845, %v3838, %v3842
        %v3847 = vand.u32 2147483647, %v3136
        %vm3848 = vcmp.eq.f32.partialorder %v3847, 8.507059e+37
        %v3849 = vand.u32 %v3136, 2147483648
        %v3850 = vor.u32 1.1754944e-38, %v3849
        %v3851 = vsel %vm3848, %v3850, %v3846
        %v3852 = vmul.f32 1.0, %v3851
        %v3853 = vrcp.pop %v3137
        %v3854 = vmul.f32 %v3137, %v3853
        %v3855 = vsub.f32 1.0, %v3854
        %v3856 = vmul.f32 %v3853, %v3855
        %v3857 = vadd.f32 %v3853, %v3856
        %vm3858 = vweird.f32 %v3137
        %vm3859 = vweird.f32 %v3853
        %vm3860 = vmor %vm3858, %vm3859
        %v3861 = vsel %vm3860, %v3853, %v3857
        %v3862 = vand.u32 2147483647, %v3137
        %vm3863 = vcmp.eq.f32.partialorder %v3862, 8.507059e+37
        %v3864 = vand.u32 %v3137, 2147483648
        %v3865 = vor.u32 1.1754944e-38, %v3864
        %v3866 = vsel %vm3863, %v3865, %v3861
        %v3867 = vmul.f32 1.0, %v3866
        %v3868 = vrcp.pop %v3138
        %v3869 = vmul.f32 %v3138, %v3868
        %v3870 = vsub.f32 1.0, %v3869
        %v3871 = vmul.f32 %v3868, %v3870
        %v3872 = vadd.f32 %v3868, %v3871
        %vm3873 = vweird.f32 %v3138
        %vm3874 = vweird.f32 %v3868
        %vm3875 = vmor %vm3873, %vm3874
        %v3876 = vsel %vm3875, %v3868, %v3872
        %v3877 = vand.u32 2147483647, %v3138
        %vm3878 = vcmp.eq.f32.partialorder %v3877, 8.507059e+37
        %v3879 = vand.u32 %v3138, 2147483648
        %v3880 = vor.u32 1.1754944e-38, %v3879
        %v3881 = vsel %vm3878, %v3880, %v3876
        %v3882 = vmul.f32 1.0, %v3881
        %v3883 = vrcp.pop %v3139
        %v3884 = vmul.f32 %v3139, %v3883
        %v3885 = vsub.f32 1.0, %v3884
        %v3886 = vmul.f32 %v3883, %v3885
        %v3887 = vadd.f32 %v3883, %v3886
        %vm3888 = vweird.f32 %v3139
        %vm3889 = vweird.f32 %v3883
        %vm3890 = vmor %vm3888, %vm3889
        %v3891 = vsel %vm3890, %v3883, %v3887
        %v3892 = vand.u32 2147483647, %v3139
        %vm3893 = vcmp.eq.f32.partialorder %v3892, 8.507059e+37
        %v3894 = vand.u32 %v3139, 2147483648
        %v3895 = vor.u32 1.1754944e-38, %v3894
        %v3896 = vsel %vm3893, %v3895, %v3891
        %v3897 = vmul.f32 1.0, %v3896
        %v3898 = vrcp.pop %v3140
        %v3899 = vmul.f32 %v3140, %v3898
        %v3900 = vsub.f32 1.0, %v3899
        %v3901 = vmul.f32 %v3898, %v3900
        %v3902 = vadd.f32 %v3898, %v3901
        %vm3903 = vweird.f32 %v3140
        %vm3904 = vweird.f32 %v3898
        %vm3905 = vmor %vm3903, %vm3904
        %v3906 = vsel %vm3905, %v3898, %v3902
        %v3907 = vand.u32 2147483647, %v3140
        %vm3908 = vcmp.eq.f32.partialorder %v3907, 8.507059e+37
        %v3909 = vand.u32 %v3140, 2147483648
        %v3910 = vor.u32 1.1754944e-38, %v3909
        %v3911 = vsel %vm3908, %v3910, %v3906
        %v3912 = vmul.f32 1.0, %v3911
        %v3913 = vrcp.pop %v3141
        %v3914 = vmul.f32 %v3141, %v3913
        %v3915 = vsub.f32 1.0, %v3914
        %v3916 = vmul.f32 %v3913, %v3915
        %v3917 = vadd.f32 %v3913, %v3916
        %vm3918 = vweird.f32 %v3141
        %vm3919 = vweird.f32 %v3913
        %vm3920 = vmor %vm3918, %vm3919
        %v3921 = vsel %vm3920, %v3913, %v3917
        %v3922 = vand.u32 2147483647, %v3141
        %vm3923 = vcmp.eq.f32.partialorder %v3922, 8.507059e+37
        %v3924 = vand.u32 %v3141, 2147483648
        %v3925 = vor.u32 1.1754944e-38, %v3924
        %v3926 = vsel %vm3923, %v3925, %v3921
        %v3927 = vmul.f32 1.0, %v3926
        %v3928 = vrcp.pop %v3142
        %v3929 = vmul.f32 %v3142, %v3928
        %v3930 = vsub.f32 1.0, %v3929
        %v3931 = vmul.f32 %v3928, %v3930
        %v3932 = vadd.f32 %v3928, %v3931
        %vm3933 = vweird.f32 %v3142
        %vm3934 = vweird.f32 %v3928
        %vm3935 = vmor %vm3933, %vm3934
        %v3936 = vsel %vm3935, %v3928, %v3932
        %v3937 = vand.u32 2147483647, %v3142
        %vm3938 = vcmp.eq.f32.partialorder %v3937, 8.507059e+37
        %v3939 = vand.u32 %v3142, 2147483648
        %v3940 = vor.u32 1.1754944e-38, %v3939
        %v3941 = vsel %vm3938, %v3940, %v3936
        %v3942 = vmul.f32 1.0, %v3941
        %v3943 = vrcp.pop %v3143
        %v3944 = vmul.f32 %v3143, %v3943
        %v3945 = vsub.f32 1.0, %v3944
        %v3946 = vmul.f32 %v3943, %v3945
        %v3947 = vadd.f32 %v3943, %v3946
        %vm3948 = vweird.f32 %v3143
        %vm3949 = vweird.f32 %v3943
        %vm3950 = vmor %vm3948, %vm3949
        %v3951 = vsel %vm3950, %v3943, %v3947
        %v3952 = vand.u32 2147483647, %v3143
        %vm3953 = vcmp.eq.f32.partialorder %v3952, 8.507059e+37
        %v3954 = vand.u32 %v3143, 2147483648
        %v3955 = vor.u32 1.1754944e-38, %v3954
        %v3956 = vsel %vm3953, %v3955, %v3951
        %v3957 = vmul.f32 1.0, %v3956
        %v3958 = vrcp.pop %v3144
        %v3959 = vmul.f32 %v3144, %v3958
        %v3960 = vsub.f32 1.0, %v3959
        %v3961 = vmul.f32 %v3958, %v3960
        %v3962 = vadd.f32 %v3958, %v3961
        %vm3963 = vweird.f32 %v3144
        %vm3964 = vweird.f32 %v3958
        %vm3965 = vmor %vm3963, %vm3964
        %v3966 = vsel %vm3965, %v3958, %v3962
        %v3967 = vand.u32 2147483647, %v3144
        %vm3968 = vcmp.eq.f32.partialorder %v3967, 8.507059e+37
        %v3969 = vand.u32 %v3144, 2147483648
        %v3970 = vor.u32 1.1754944e-38, %v3969
        %v3971 = vsel %vm3968, %v3970, %v3966
        %v3972 = vmul.f32 1.0, %v3971
        %v3973 = vrcp.pop %v3145
        %v3974 = vmul.f32 %v3145, %v3973
        %v3975 = vsub.f32 1.0, %v3974
        %v3976 = vmul.f32 %v3973, %v3975
        %v3977 = vadd.f32 %v3973, %v3976
        %vm3978 = vweird.f32 %v3145
        %vm3979 = vweird.f32 %v3973
        %vm3980 = vmor %vm3978, %vm3979
        %v3981 = vsel %vm3980, %v3973, %v3977
        %v3982 = vand.u32 2147483647, %v3145
        %vm3983 = vcmp.eq.f32.partialorder %v3982, 8.507059e+37
        %v3984 = vand.u32 %v3145, 2147483648
        %v3985 = vor.u32 1.1754944e-38, %v3984
        %v3986 = vsel %vm3983, %v3985, %v3981
        %v3987 = vmul.f32 1.0, %v3986
        %v3988 = vrcp.pop %v3146
        %v3989 = vmul.f32 %v3146, %v3988
        %v3990 = vsub.f32 1.0, %v3989
        %v3991 = vmul.f32 %v3988, %v3990
        %v3992 = vadd.f32 %v3988, %v3991
        %vm3993 = vweird.f32 %v3146
        %vm3994 = vweird.f32 %v3988
        %vm3995 = vmor %vm3993, %vm3994
        %v3996 = vsel %vm3995, %v3988, %v3992
        %v3997 = vand.u32 2147483647, %v3146
        %vm3998 = vcmp.eq.f32.partialorder %v3997, 8.507059e+37
        %v3999 = vand.u32 %v3146, 2147483648
        %v4000 = vor.u32 1.1754944e-38, %v3999
        %v4001 = vsel %vm3998, %v4000, %v3996
        %v4002 = vmul.f32 1.0, %v4001
        %v4003 = vrcp.pop %v3147
        %v4004 = vmul.f32 %v3147, %v4003
        %v4005 = vsub.f32 1.0, %v4004
        %v4006 = vmul.f32 %v4003, %v4005
        %v4007 = vadd.f32 %v4003, %v4006
        %vm4008 = vweird.f32 %v3147
        %vm4009 = vweird.f32 %v4003
        %vm4010 = vmor %vm4008, %vm4009
        %v4011 = vsel %vm4010, %v4003, %v4007
        %v4012 = vand.u32 2147483647, %v3147
        %vm4013 = vcmp.eq.f32.partialorder %v4012, 8.507059e+37
        %v4014 = vand.u32 %v3147, 2147483648
        %v4015 = vor.u32 1.1754944e-38, %v4014
        %v4016 = vsel %vm4013, %v4015, %v4011
        %v4017 = vmul.f32 1.0, %v4016
        %v4018 = vrcp.pop %v3148
        %v4019 = vmul.f32 %v3148, %v4018
        %v4020 = vsub.f32 1.0, %v4019
        %v4021 = vmul.f32 %v4018, %v4020
        %v4022 = vadd.f32 %v4018, %v4021
        %vm4023 = vweird.f32 %v3148
        %vm4024 = vweird.f32 %v4018
        %vm4025 = vmor %vm4023, %vm4024
        %v4026 = vsel %vm4025, %v4018, %v4022
        %v4027 = vand.u32 2147483647, %v3148
        %vm4028 = vcmp.eq.f32.partialorder %v4027, 8.507059e+37
        %v4029 = vand.u32 %v3148, 2147483648
        %v4030 = vor.u32 1.1754944e-38, %v4029
        %v4031 = vsel %vm4028, %v4030, %v4026
        %v4032 = vmul.f32 1.0, %v4031
        %v4033 = vrcp.pop %v3149
        %v4034 = vmul.f32 %v3149, %v4033
        %v4035 = vsub.f32 1.0, %v4034
        %v4036 = vmul.f32 %v4033, %v4035
        %v4037 = vadd.f32 %v4033, %v4036
        %vm4038 = vweird.f32 %v3149
        %vm4039 = vweird.f32 %v4033
        %vm4040 = vmor %vm4038, %vm4039
        %v4041 = vsel %vm4040, %v4033, %v4037
        %v4042 = vand.u32 2147483647, %v3149
        %vm4043 = vcmp.eq.f32.partialorder %v4042, 8.507059e+37
        %v4044 = vand.u32 %v3149, 2147483648
        %v4045 = vor.u32 1.1754944e-38, %v4044
        %v4046 = vsel %vm4043, %v4045, %v4041
        %v4047 = vmul.f32 1.0, %v4046
        %v4048 = vrcp.pop %v3150
        %v4049 = vmul.f32 %v3150, %v4048
        %v4050 = vsub.f32 1.0, %v4049
        %v4051 = vmul.f32 %v4048, %v4050
        %v4052 = vadd.f32 %v4048, %v4051
        %vm4053 = vweird.f32 %v3150
        %vm4054 = vweird.f32 %v4048
        %vm4055 = vmor %vm4053, %vm4054
        %v4056 = vsel %vm4055, %v4048, %v4052
        %v4057 = vand.u32 2147483647, %v3150
        %vm4058 = vcmp.eq.f32.partialorder %v4057, 8.507059e+37
        %v4059 = vand.u32 %v3150, 2147483648
        %v4060 = vor.u32 1.1754944e-38, %v4059
        %v4061 = vsel %vm4058, %v4060, %v4056
        %v4062 = vmul.f32 1.0, %v4061
        %v4063 = vrcp.pop %v3151
        %v4064 = vmul.f32 %v3151, %v4063
        %v4065 = vsub.f32 1.0, %v4064
        %v4066 = vmul.f32 %v4063, %v4065
        %v4067 = vadd.f32 %v4063, %v4066
        %vm4068 = vweird.f32 %v3151
        %vm4069 = vweird.f32 %v4063
        %vm4070 = vmor %vm4068, %vm4069
        %v4071 = vsel %vm4070, %v4063, %v4067
        %v4072 = vand.u32 2147483647, %v3151
        %vm4073 = vcmp.eq.f32.partialorder %v4072, 8.507059e+37
        %v4074 = vand.u32 %v3151, 2147483648
        %v4075 = vor.u32 1.1754944e-38, %v4074
        %v4076 = vsel %vm4073, %v4075, %v4071
        %v4077 = vmul.f32 1.0, %v4076
        %v4078 = vrcp.pop %v3152
        %v4079 = vmul.f32 %v3152, %v4078
        %v4080 = vsub.f32 1.0, %v4079
        %v4081 = vmul.f32 %v4078, %v4080
        %v4082 = vadd.f32 %v4078, %v4081
        %vm4083 = vweird.f32 %v3152
        %vm4084 = vweird.f32 %v4078
        %vm4085 = vmor %vm4083, %vm4084
        %v4086 = vsel %vm4085, %v4078, %v4082
        %v4087 = vand.u32 2147483647, %v3152
        %vm4088 = vcmp.eq.f32.partialorder %v4087, 8.507059e+37
        %v4089 = vand.u32 %v3152, 2147483648
        %v4090 = vor.u32 1.1754944e-38, %v4089
        %v4091 = vsel %vm4088, %v4090, %v4086
        %v4092 = vmul.f32 1.0, %v4091
        %v4093 = vrcp.pop %v3153
        %v4094 = vmul.f32 %v3153, %v4093
        %v4095 = vsub.f32 1.0, %v4094
        %v4096 = vmul.f32 %v4093, %v4095
        %v4097 = vadd.f32 %v4093, %v4096
        %vm4098 = vweird.f32 %v3153
        %vm4099 = vweird.f32 %v4093
        %vm4100 = vmor %vm4098, %vm4099
        %v4101 = vsel %vm4100, %v4093, %v4097
        %v4102 = vand.u32 2147483647, %v3153
        %vm4103 = vcmp.eq.f32.partialorder %v4102, 8.507059e+37
        %v4104 = vand.u32 %v3153, 2147483648
        %v4105 = vor.u32 1.1754944e-38, %v4104
        %v4106 = vsel %vm4103, %v4105, %v4101
        %v4107 = vmul.f32 1.0, %v4106
        %v4108 = vrcp.pop %v3154
        %v4109 = vmul.f32 %v3154, %v4108
        %v4110 = vsub.f32 1.0, %v4109
        %v4111 = vmul.f32 %v4108, %v4110
        %v4112 = vadd.f32 %v4108, %v4111
        %vm4113 = vweird.f32 %v3154
        %vm4114 = vweird.f32 %v4108
        %vm4115 = vmor %vm4113, %vm4114
        %v4116 = vsel %vm4115, %v4108, %v4112
        %v4117 = vand.u32 2147483647, %v3154
        %vm4118 = vcmp.eq.f32.partialorder %v4117, 8.507059e+37
        %v4119 = vand.u32 %v3154, 2147483648
        %v4120 = vor.u32 1.1754944e-38, %v4119
        %v4121 = vsel %vm4118, %v4120, %v4116
        %v4122 = vmul.f32 1.0, %v4121
        %v4123 = vrcp.pop %v3155
        %v4124 = vmul.f32 %v3155, %v4123
        %v4125 = vsub.f32 1.0, %v4124
        %v4126 = vmul.f32 %v4123, %v4125
        %v4127 = vadd.f32 %v4123, %v4126
        %vm4128 = vweird.f32 %v3155
        %vm4129 = vweird.f32 %v4123
        %vm4130 = vmor %vm4128, %vm4129
        %v4131 = vsel %vm4130, %v4123, %v4127
        %v4132 = vand.u32 2147483647, %v3155
        %vm4133 = vcmp.eq.f32.partialorder %v4132, 8.507059e+37
        %v4134 = vand.u32 %v3155, 2147483648
        %v4135 = vor.u32 1.1754944e-38, %v4134
        %v4136 = vsel %vm4133, %v4135, %v4131
        %v4137 = vmul.f32 1.0, %v4136
        %v4138 = vrcp.pop %v3156
        %v4139 = vmul.f32 %v3156, %v4138
        %v4140 = vsub.f32 1.0, %v4139
        %v4141 = vmul.f32 %v4138, %v4140
        %v4142 = vadd.f32 %v4138, %v4141
        %vm4143 = vweird.f32 %v3156
        %vm4144 = vweird.f32 %v4138
        %vm4145 = vmor %vm4143, %vm4144
        %v4146 = vsel %vm4145, %v4138, %v4142
        %v4147 = vand.u32 2147483647, %v3156
        %vm4148 = vcmp.eq.f32.partialorder %v4147, 8.507059e+37
        %v4149 = vand.u32 %v3156, 2147483648
        %v4150 = vor.u32 1.1754944e-38, %v4149
        %v4151 = vsel %vm4148, %v4150, %v4146
        %v4152 = vmul.f32 1.0, %v4151
        %v4153 = vrcp.pop %v3157
        %v4154 = vmul.f32 %v3157, %v4153
        %v4155 = vsub.f32 1.0, %v4154
        %v4156 = vmul.f32 %v4153, %v4155
        %v4157 = vadd.f32 %v4153, %v4156
        %vm4158 = vweird.f32 %v3157
        %vm4159 = vweird.f32 %v4153
        %vm4160 = vmor %vm4158, %vm4159
        %v4161 = vsel %vm4160, %v4153, %v4157
        %v4162 = vand.u32 2147483647, %v3157
        %vm4163 = vcmp.eq.f32.partialorder %v4162, 8.507059e+37
        %v4164 = vand.u32 %v3157, 2147483648
        %v4165 = vor.u32 1.1754944e-38, %v4164
        %v4166 = vsel %vm4163, %v4165, %v4161
        %v4167 = vmul.f32 1.0, %v4166
        %v4168 = vrcp.pop %v3158
        %v4169 = vmul.f32 %v3158, %v4168
        %v4170 = vsub.f32 1.0, %v4169
        %v4171 = vmul.f32 %v4168, %v4170
        %v4172 = vadd.f32 %v4168, %v4171
        %vm4173 = vweird.f32 %v3158
        %vm4174 = vweird.f32 %v4168
        %vm4175 = vmor %vm4173, %vm4174
        %v4176 = vsel %vm4175, %v4168, %v4172
        %v4177 = vand.u32 2147483647, %v3158
        %vm4178 = vcmp.eq.f32.partialorder %v4177, 8.507059e+37
        %v4179 = vand.u32 %v3158, 2147483648
        %v4180 = vor.u32 1.1754944e-38, %v4179
        %v4181 = vsel %vm4178, %v4180, %v4176
        %v4182 = vmul.f32 1.0, %v4181
        %v4183 = vrcp.pop %v3159
        %v4184 = vmul.f32 %v3159, %v4183
        %v4185 = vsub.f32 1.0, %v4184
        %v4186 = vmul.f32 %v4183, %v4185
        %v4187 = vadd.f32 %v4183, %v4186
        %vm4188 = vweird.f32 %v3159
        %vm4189 = vweird.f32 %v4183
        %vm4190 = vmor %vm4188, %vm4189
        %v4191 = vsel %vm4190, %v4183, %v4187
        %v4192 = vand.u32 2147483647, %v3159
        %vm4193 = vcmp.eq.f32.partialorder %v4192, 8.507059e+37
        %v4194 = vand.u32 %v3159, 2147483648
        %v4195 = vor.u32 1.1754944e-38, %v4194
        %v4196 = vsel %vm4193, %v4195, %v4191
        %v4197 = vmul.f32 1.0, %v4196
        %v4198 = vrcp.pop %v3160
        %v4199 = vmul.f32 %v3160, %v4198
        %v4200 = vsub.f32 1.0, %v4199
        %v4201 = vmul.f32 %v4198, %v4200
        %v4202 = vadd.f32 %v4198, %v4201
        %vm4203 = vweird.f32 %v3160
        %vm4204 = vweird.f32 %v4198
        %vm4205 = vmor %vm4203, %vm4204
        %v4206 = vsel %vm4205, %v4198, %v4202
        %v4207 = vand.u32 2147483647, %v3160
        %vm4208 = vcmp.eq.f32.partialorder %v4207, 8.507059e+37
        %v4209 = vand.u32 %v3160, 2147483648
        %v4210 = vor.u32 1.1754944e-38, %v4209
        %v4211 = vsel %vm4208, %v4210, %v4206
        %v4212 = vmul.f32 1.0, %v4211
        %v4213 = vrcp.pop %v3161
        %v4214 = vmul.f32 %v3161, %v4213
        %v4215 = vsub.f32 1.0, %v4214
        %v4216 = vmul.f32 %v4213, %v4215
        %v4217 = vadd.f32 %v4213, %v4216
        %vm4218 = vweird.f32 %v3161
        %vm4219 = vweird.f32 %v4213
        %vm4220 = vmor %vm4218, %vm4219
        %v4221 = vsel %vm4220, %v4213, %v4217
        %v4222 = vand.u32 2147483647, %v3161
        %vm4223 = vcmp.eq.f32.partialorder %v4222, 8.507059e+37
        %v4224 = vand.u32 %v3161, 2147483648
        %v4225 = vor.u32 1.1754944e-38, %v4224
        %v4226 = vsel %vm4223, %v4225, %v4221
        %v4227 = vmul.f32 1.0, %v4226
        %v4228 = vrcp.pop %v3162
        %v4229 = vmul.f32 %v3162, %v4228
        %v4230 = vsub.f32 1.0, %v4229
        %v4231 = vmul.f32 %v4228, %v4230
        %v4232 = vadd.f32 %v4228, %v4231
        %vm4233 = vweird.f32 %v3162
        %vm4234 = vweird.f32 %v4228
        %vm4235 = vmor %vm4233, %vm4234
        %v4236 = vsel %vm4235, %v4228, %v4232
        %v4237 = vand.u32 2147483647, %v3162
        %vm4238 = vcmp.eq.f32.partialorder %v4237, 8.507059e+37
        %v4239 = vand.u32 %v3162, 2147483648
        %v4240 = vor.u32 1.1754944e-38, %v4239
        %v4241 = vsel %vm4238, %v4240, %v4236
        %v4242 = vmul.f32 1.0, %v4241
        %v4243 = vrcp.pop %v3163
        %v4244 = vmul.f32 %v3163, %v4243
        %v4245 = vsub.f32 1.0, %v4244
        %v4246 = vmul.f32 %v4243, %v4245
        %v4247 = vadd.f32 %v4243, %v4246
        %vm4248 = vweird.f32 %v3163
        %vm4249 = vweird.f32 %v4243
        %vm4250 = vmor %vm4248, %vm4249
        %v4251 = vsel %vm4250, %v4243, %v4247
        %v4252 = vand.u32 2147483647, %v3163
        %vm4253 = vcmp.eq.f32.partialorder %v4252, 8.507059e+37
        %v4254 = vand.u32 %v3163, 2147483648
        %v4255 = vor.u32 1.1754944e-38, %v4254
        %v4256 = vsel %vm4253, %v4255, %v4251
        %v4257 = vmul.f32 1.0, %v4256
        %v4258 = vrcp.pop %v3164
        %v4259 = vmul.f32 %v3164, %v4258
        %v4260 = vsub.f32 1.0, %v4259
        %v4261 = vmul.f32 %v4258, %v4260
        %v4262 = vadd.f32 %v4258, %v4261
        %vm4263 = vweird.f32 %v3164
        %vm4264 = vweird.f32 %v4258
        %vm4265 = vmor %vm4263, %vm4264
        %v4266 = vsel %vm4265, %v4258, %v4262
        %v4267 = vand.u32 2147483647, %v3164
        %vm4268 = vcmp.eq.f32.partialorder %v4267, 8.507059e+37
        %v4269 = vand.u32 %v3164, 2147483648
        %v4270 = vor.u32 1.1754944e-38, %v4269
        %v4271 = vsel %vm4268, %v4270, %v4266
        %v4272 = vmul.f32 1.0, %v4271
        %v4273 = vrcp.pop %v3165
        %v4274 = vmul.f32 %v3165, %v4273
        %v4275 = vsub.f32 1.0, %v4274
        %v4276 = vmul.f32 %v4273, %v4275
        %v4277 = vadd.f32 %v4273, %v4276
        %vm4278 = vweird.f32 %v3165
        %vm4279 = vweird.f32 %v4273
        %vm4280 = vmor %vm4278, %vm4279
        %v4281 = vsel %vm4280, %v4273, %v4277
        %v4282 = vand.u32 2147483647, %v3165
        %vm4283 = vcmp.eq.f32.partialorder %v4282, 8.507059e+37
        %v4284 = vand.u32 %v3165, 2147483648
        %v4285 = vor.u32 1.1754944e-38, %v4284
        %v4286 = vsel %vm4283, %v4285, %v4281
        %v4287 = vmul.f32 1.0, %v4286
        %v4288 = vrcp.pop %v3166
        %v4289 = vmul.f32 %v3166, %v4288
        %v4290 = vsub.f32 1.0, %v4289
        %v4291 = vmul.f32 %v4288, %v4290
        %v4292 = vadd.f32 %v4288, %v4291
        %vm4293 = vweird.f32 %v3166
        %vm4294 = vweird.f32 %v4288
        %vm4295 = vmor %vm4293, %vm4294
        %v4296 = vsel %vm4295, %v4288, %v4292
        %v4297 = vand.u32 2147483647, %v3166
        %vm4298 = vcmp.eq.f32.partialorder %v4297, 8.507059e+37
        %v4299 = vand.u32 %v3166, 2147483648
        %v4300 = vor.u32 1.1754944e-38, %v4299
        %v4301 = vsel %vm4298, %v4300, %v4296
        %v4302 = vmul.f32 1.0, %v4301
        %v4303 = vrcp.pop %v3167
        %v4304 = vmul.f32 %v3167, %v4303
        %v4305 = vsub.f32 1.0, %v4304
        %v4306 = vmul.f32 %v4303, %v4305
        %v4307 = vadd.f32 %v4303, %v4306
        %vm4308 = vweird.f32 %v3167
        %vm4309 = vweird.f32 %v4303
        %vm4310 = vmor %vm4308, %vm4309
        %v4311 = vsel %vm4310, %v4303, %v4307
        %v4312 = vand.u32 2147483647, %v3167
        %vm4313 = vcmp.eq.f32.partialorder %v4312, 8.507059e+37
        %v4314 = vand.u32 %v3167, 2147483648
        %v4315 = vor.u32 1.1754944e-38, %v4314
        %v4316 = vsel %vm4313, %v4315, %v4311
        %v4317 = vmul.f32 1.0, %v4316
        %v4318 = vrcp.pop %v3168
        %v4319 = vmul.f32 %v3168, %v4318
        %v4320 = vsub.f32 1.0, %v4319
        %v4321 = vmul.f32 %v4318, %v4320
        %v4322 = vadd.f32 %v4318, %v4321
        %vm4323 = vweird.f32 %v3168
        %vm4324 = vweird.f32 %v4318
        %vm4325 = vmor %vm4323, %vm4324
        %v4326 = vsel %vm4325, %v4318, %v4322
        %v4327 = vand.u32 2147483647, %v3168
        %vm4328 = vcmp.eq.f32.partialorder %v4327, 8.507059e+37
        %v4329 = vand.u32 %v3168, 2147483648
        %v4330 = vor.u32 1.1754944e-38, %v4329
        %v4331 = vsel %vm4328, %v4330, %v4326
        %v4332 = vmul.f32 1.0, %v4331
        %v4333 = vrcp.pop %v3169
        %v4334 = vmul.f32 %v3169, %v4333
        %v4335 = vsub.f32 1.0, %v4334
        %v4336 = vmul.f32 %v4333, %v4335
        %v4337 = vadd.f32 %v4333, %v4336
        %vm4338 = vweird.f32 %v3169
        %vm4339 = vweird.f32 %v4333
        %vm4340 = vmor %vm4338, %vm4339
        %v4341 = vsel %vm4340, %v4333, %v4337
        %v4342 = vand.u32 2147483647, %v3169
        %vm4343 = vcmp.eq.f32.partialorder %v4342, 8.507059e+37
        %v4344 = vand.u32 %v3169, 2147483648
        %v4345 = vor.u32 1.1754944e-38, %v4344
        %v4346 = vsel %vm4343, %v4345, %v4341
        %v4347 = vmul.f32 1.0, %v4346
        %v4348 = vrcp.pop %v3170
        %v4349 = vmul.f32 %v3170, %v4348
        %v4350 = vsub.f32 1.0, %v4349
        %v4351 = vmul.f32 %v4348, %v4350
        %v4352 = vadd.f32 %v4348, %v4351
        %vm4353 = vweird.f32 %v3170
        %vm4354 = vweird.f32 %v4348
        %vm4355 = vmor %vm4353, %vm4354
        %v4356 = vsel %vm4355, %v4348, %v4352
        %v4357 = vand.u32 2147483647, %v3170
        %vm4358 = vcmp.eq.f32.partialorder %v4357, 8.507059e+37
        %v4359 = vand.u32 %v3170, 2147483648
        %v4360 = vor.u32 1.1754944e-38, %v4359
        %v4361 = vsel %vm4358, %v4360, %v4356
        %v4362 = vmul.f32 1.0, %v4361
        %v4363 = vrcp.pop %v3171
        %v4364 = vmul.f32 %v3171, %v4363
        %v4365 = vsub.f32 1.0, %v4364
        %v4366 = vmul.f32 %v4363, %v4365
        %v4367 = vadd.f32 %v4363, %v4366
        %vm4368 = vweird.f32 %v3171
        %vm4369 = vweird.f32 %v4363
        %vm4370 = vmor %vm4368, %vm4369
        %v4371 = vsel %vm4370, %v4363, %v4367
        %v4372 = vand.u32 2147483647, %v3171
        %vm4373 = vcmp.eq.f32.partialorder %v4372, 8.507059e+37
        %v4374 = vand.u32 %v3171, 2147483648
        %v4375 = vor.u32 1.1754944e-38, %v4374
        %v4376 = vsel %vm4373, %v4375, %v4371
        %v4377 = vmul.f32 1.0, %v4376
        %v4378 = vrcp.pop %v3172
        %v4379 = vmul.f32 %v3172, %v4378
        %v4380 = vsub.f32 1.0, %v4379
        %v4381 = vmul.f32 %v4378, %v4380
        %v4382 = vadd.f32 %v4378, %v4381
        %vm4383 = vweird.f32 %v3172
        %vm4384 = vweird.f32 %v4378
        %vm4385 = vmor %vm4383, %vm4384
        %v4386 = vsel %vm4385, %v4378, %v4382
        %v4387 = vand.u32 2147483647, %v3172
        %vm4388 = vcmp.eq.f32.partialorder %v4387, 8.507059e+37
        %v4389 = vand.u32 %v3172, 2147483648
        %v4390 = vor.u32 1.1754944e-38, %v4389
        %v4391 = vsel %vm4388, %v4390, %v4386
        %v4392 = vmul.f32 1.0, %v4391
        %v4393 = vrcp.pop %v3173
        %v4394 = vmul.f32 %v3173, %v4393
        %v4395 = vsub.f32 1.0, %v4394
        %v4396 = vmul.f32 %v4393, %v4395
        %v4397 = vadd.f32 %v4393, %v4396
        %vm4398 = vweird.f32 %v3173
        %vm4399 = vweird.f32 %v4393
        %vm4400 = vmor %vm4398, %vm4399
        %v4401 = vsel %vm4400, %v4393, %v4397
        %v4402 = vand.u32 2147483647, %v3173
        %vm4403 = vcmp.eq.f32.partialorder %v4402, 8.507059e+37
        %v4404 = vand.u32 %v3173, 2147483648
        %v4405 = vor.u32 1.1754944e-38, %v4404
        %v4406 = vsel %vm4403, %v4405, %v4401
        %v4407 = vmul.f32 1.0, %v4406
        %v4408 = vrcp.pop %v3174
        %v4409 = vmul.f32 %v3174, %v4408
        %v4410 = vsub.f32 1.0, %v4409
        %v4411 = vmul.f32 %v4408, %v4410
        %v4412 = vadd.f32 %v4408, %v4411
        %vm4413 = vweird.f32 %v3174
        %vm4414 = vweird.f32 %v4408
        %vm4415 = vmor %vm4413, %vm4414
        %v4416 = vsel %vm4415, %v4408, %v4412
        %v4417 = vand.u32 2147483647, %v3174
        %vm4418 = vcmp.eq.f32.partialorder %v4417, 8.507059e+37
        %v4419 = vand.u32 %v3174, 2147483648
        %v4420 = vor.u32 1.1754944e-38, %v4419
        %v4421 = vsel %vm4418, %v4420, %v4416
        %v4422 = vmul.f32 1.0, %v4421
        %v4423 = vrcp.pop %v3175
        %v4424 = vmul.f32 %v3175, %v4423
        %v4425 = vsub.f32 1.0, %v4424
        %v4426 = vmul.f32 %v4423, %v4425
        %v4427 = vadd.f32 %v4423, %v4426
        %vm4428 = vweird.f32 %v3175
        %vm4429 = vweird.f32 %v4423
        %vm4430 = vmor %vm4428, %vm4429
        %v4431 = vsel %vm4430, %v4423, %v4427
        %v4432 = vand.u32 2147483647, %v3175
        %vm4433 = vcmp.eq.f32.partialorder %v4432, 8.507059e+37
        %v4434 = vand.u32 %v3175, 2147483648
        %v4435 = vor.u32 1.1754944e-38, %v4434
        %v4436 = vsel %vm4433, %v4435, %v4431
        %v4437 = vmul.f32 1.0, %v4436
        %v4438 = vrcp.pop %v3176
        %v4439 = vmul.f32 %v3176, %v4438
        %v4440 = vsub.f32 1.0, %v4439
        %v4441 = vmul.f32 %v4438, %v4440
        %v4442 = vadd.f32 %v4438, %v4441
        %vm4443 = vweird.f32 %v3176
        %vm4444 = vweird.f32 %v4438
        %vm4445 = vmor %vm4443, %vm4444
        %v4446 = vsel %vm4445, %v4438, %v4442
        %v4447 = vand.u32 2147483647, %v3176
        %vm4448 = vcmp.eq.f32.partialorder %v4447, 8.507059e+37
        %v4449 = vand.u32 %v3176, 2147483648
        %v4450 = vor.u32 1.1754944e-38, %v4449
        %v4451 = vsel %vm4448, %v4450, %v4446
        %v4452 = vmul.f32 1.0, %v4451
        %v4453 = vrcp.pop %v3177
        %v4454 = vmul.f32 %v3177, %v4453
        %v4455 = vsub.f32 1.0, %v4454
        %v4456 = vmul.f32 %v4453, %v4455
        %v4457 = vadd.f32 %v4453, %v4456
        %vm4458 = vweird.f32 %v3177
        %vm4459 = vweird.f32 %v4453
        %vm4460 = vmor %vm4458, %vm4459
        %v4461 = vsel %vm4460, %v4453, %v4457
        %v4462 = vand.u32 2147483647, %v3177
        %vm4463 = vcmp.eq.f32.partialorder %v4462, 8.507059e+37
        %v4464 = vand.u32 %v3177, 2147483648
        %v4465 = vor.u32 1.1754944e-38, %v4464
        %v4466 = vsel %vm4463, %v4465, %v4461
        %v4467 = vmul.f32 1.0, %v4466
        %v4468 = vrcp.pop %v3178
        %v4469 = vmul.f32 %v3178, %v4468
        %v4470 = vsub.f32 1.0, %v4469
        %v4471 = vmul.f32 %v4468, %v4470
        %v4472 = vadd.f32 %v4468, %v4471
        %vm4473 = vweird.f32 %v3178
        %vm4474 = vweird.f32 %v4468
        %vm4475 = vmor %vm4473, %vm4474
        %v4476 = vsel %vm4475, %v4468, %v4472
        %v4477 = vand.u32 2147483647, %v3178
        %vm4478 = vcmp.eq.f32.partialorder %v4477, 8.507059e+37
        %v4479 = vand.u32 %v3178, 2147483648
        %v4480 = vor.u32 1.1754944e-38, %v4479
        %v4481 = vsel %vm4478, %v4480, %v4476
        %v4482 = vmul.f32 1.0, %v4481
        %v4483 = vrcp.pop %v3179
        %v4484 = vmul.f32 %v3179, %v4483
        %v4485 = vsub.f32 1.0, %v4484
        %v4486 = vmul.f32 %v4483, %v4485
        %v4487 = vadd.f32 %v4483, %v4486
        %vm4488 = vweird.f32 %v3179
        %vm4489 = vweird.f32 %v4483
        %vm4490 = vmor %vm4488, %vm4489
        %v4491 = vsel %vm4490, %v4483, %v4487
        %v4492 = vand.u32 2147483647, %v3179
        %vm4493 = vcmp.eq.f32.partialorder %v4492, 8.507059e+37
        %v4494 = vand.u32 %v3179, 2147483648
        %v4495 = vor.u32 1.1754944e-38, %v4494
        %v4496 = vsel %vm4493, %v4495, %v4491
        %v4497 = vmul.f32 1.0, %v4496
        %v4498 = vrcp.pop %v3180
        %v4499 = vmul.f32 %v3180, %v4498
        %v4500 = vsub.f32 1.0, %v4499
        %v4501 = vmul.f32 %v4498, %v4500
        %v4502 = vadd.f32 %v4498, %v4501
        %vm4503 = vweird.f32 %v3180
        %vm4504 = vweird.f32 %v4498
        %vm4505 = vmor %vm4503, %vm4504
        %v4506 = vsel %vm4505, %v4498, %v4502
        %v4507 = vand.u32 2147483647, %v3180
        %vm4508 = vcmp.eq.f32.partialorder %v4507, 8.507059e+37
        %v4509 = vand.u32 %v3180, 2147483648
        %v4510 = vor.u32 1.1754944e-38, %v4509
        %v4511 = vsel %vm4508, %v4510, %v4506
        %v4512 = vmul.f32 1.0, %v4511
        %v4513 = vrcp.pop %v3181
        %v4514 = vmul.f32 %v3181, %v4513
        %v4515 = vsub.f32 1.0, %v4514
        %v4516 = vmul.f32 %v4513, %v4515
        %v4517 = vadd.f32 %v4513, %v4516
        %vm4518 = vweird.f32 %v3181
        %vm4519 = vweird.f32 %v4513
        %vm4520 = vmor %vm4518, %vm4519
        %v4521 = vsel %vm4520, %v4513, %v4517
        %v4522 = vand.u32 2147483647, %v3181
        %vm4523 = vcmp.eq.f32.partialorder %v4522, 8.507059e+37
        %v4524 = vand.u32 %v3181, 2147483648
        %v4525 = vor.u32 1.1754944e-38, %v4524
        %v4526 = vsel %vm4523, %v4525, %v4521
        %v4527 = vmul.f32 1.0, %v4526
        %v4528 = vrcp.pop %v3182
        %v4529 = vmul.f32 %v3182, %v4528
        %v4530 = vsub.f32 1.0, %v4529
        %v4531 = vmul.f32 %v4528, %v4530
        %v4532 = vadd.f32 %v4528, %v4531
        %vm4533 = vweird.f32 %v3182
        %vm4534 = vweird.f32 %v4528
        %vm4535 = vmor %vm4533, %vm4534
        %v4536 = vsel %vm4535, %v4528, %v4532
        %v4537 = vand.u32 2147483647, %v3182
        %vm4538 = vcmp.eq.f32.partialorder %v4537, 8.507059e+37
        %v4539 = vand.u32 %v3182, 2147483648
        %v4540 = vor.u32 1.1754944e-38, %v4539
        %v4541 = vsel %vm4538, %v4540, %v4536
        %v4542 = vmul.f32 1.0, %v4541
        %v4543 = vrcp.pop %v3183
        %v4544 = vmul.f32 %v3183, %v4543
        %v4545 = vsub.f32 1.0, %v4544
        %v4546 = vmul.f32 %v4543, %v4545
        %v4547 = vadd.f32 %v4543, %v4546
        %vm4548 = vweird.f32 %v3183
        %vm4549 = vweird.f32 %v4543
        %vm4550 = vmor %vm4548, %vm4549
        %v4551 = vsel %vm4550, %v4543, %v4547
        %v4552 = vand.u32 2147483647, %v3183
        %vm4553 = vcmp.eq.f32.partialorder %v4552, 8.507059e+37
        %v4554 = vand.u32 %v3183, 2147483648
        %v4555 = vor.u32 1.1754944e-38, %v4554
        %v4556 = vsel %vm4553, %v4555, %v4551
        %v4557 = vmul.f32 1.0, %v4556
        %v4558 = vrcp.pop %v3184
        %v4559 = vmul.f32 %v3184, %v4558
        %v4560 = vsub.f32 1.0, %v4559
        %v4561 = vmul.f32 %v4558, %v4560
        %v4562 = vadd.f32 %v4558, %v4561
        %vm4563 = vweird.f32 %v3184
        %vm4564 = vweird.f32 %v4558
        %vm4565 = vmor %vm4563, %vm4564
        %v4566 = vsel %vm4565, %v4558, %v4562
        %v4567 = vand.u32 2147483647, %v3184
        %vm4568 = vcmp.eq.f32.partialorder %v4567, 8.507059e+37
        %v4569 = vand.u32 %v3184, 2147483648
        %v4570 = vor.u32 1.1754944e-38, %v4569
        %v4571 = vsel %vm4568, %v4570, %v4566
        %v4572 = vmul.f32 1.0, %v4571
        %v4573 = vrcp.pop %v3185
        %v4574 = vmul.f32 %v3185, %v4573
        %v4575 = vsub.f32 1.0, %v4574
        %v4576 = vmul.f32 %v4573, %v4575
        %v4577 = vadd.f32 %v4573, %v4576
        %vm4578 = vweird.f32 %v3185
        %vm4579 = vweird.f32 %v4573
        %vm4580 = vmor %vm4578, %vm4579
        %v4581 = vsel %vm4580, %v4573, %v4577
        %v4582 = vand.u32 2147483647, %v3185
        %vm4583 = vcmp.eq.f32.partialorder %v4582, 8.507059e+37
        %v4584 = vand.u32 %v3185, 2147483648
        %v4585 = vor.u32 1.1754944e-38, %v4584
        %v4586 = vsel %vm4583, %v4585, %v4581
        %v4587 = vmul.f32 1.0, %v4586
        %v4588 = vrcp.pop %v3186
        %v4589 = vmul.f32 %v3186, %v4588
        %v4590 = vsub.f32 1.0, %v4589
        %v4591 = vmul.f32 %v4588, %v4590
        %v4592 = vadd.f32 %v4588, %v4591
        %vm4593 = vweird.f32 %v3186
        %vm4594 = vweird.f32 %v4588
        %vm4595 = vmor %vm4593, %vm4594
        %v4596 = vsel %vm4595, %v4588, %v4592
        %v4597 = vand.u32 2147483647, %v3186
        %vm4598 = vcmp.eq.f32.partialorder %v4597, 8.507059e+37
        %v4599 = vand.u32 %v3186, 2147483648
        %v4600 = vor.u32 1.1754944e-38, %v4599
        %v4601 = vsel %vm4598, %v4600, %v4596
        %v4602 = vmul.f32 1.0, %v4601
        %v4603 = vrcp.pop %v3187
        %v4604 = vmul.f32 %v3187, %v4603
        %v4605 = vsub.f32 1.0, %v4604
        %v4606 = vmul.f32 %v4603, %v4605
        %v4607 = vadd.f32 %v4603, %v4606
        %vm4608 = vweird.f32 %v3187
        %vm4609 = vweird.f32 %v4603
        %vm4610 = vmor %vm4608, %vm4609
        %v4611 = vsel %vm4610, %v4603, %v4607
        %v4612 = vand.u32 2147483647, %v3187
        %vm4613 = vcmp.eq.f32.partialorder %v4612, 8.507059e+37
        %v4614 = vand.u32 %v3187, 2147483648
        %v4615 = vor.u32 1.1754944e-38, %v4614
        %v4616 = vsel %vm4613, %v4615, %v4611
        %v4617 = vmul.f32 1.0, %v4616
        %v4618 = vrcp.pop %v3188
        %v4619 = vmul.f32 %v3188, %v4618
        %v4620 = vsub.f32 1.0, %v4619
        %v4621 = vmul.f32 %v4618, %v4620
        %v4622 = vadd.f32 %v4618, %v4621
        %vm4623 = vweird.f32 %v3188
        %vm4624 = vweird.f32 %v4618
        %vm4625 = vmor %vm4623, %vm4624
        %v4626 = vsel %vm4625, %v4618, %v4622
        %v4627 = vand.u32 2147483647, %v3188
        %vm4628 = vcmp.eq.f32.partialorder %v4627, 8.507059e+37
        %v4629 = vand.u32 %v3188, 2147483648
        %v4630 = vor.u32 1.1754944e-38, %v4629
        %v4631 = vsel %vm4628, %v4630, %v4626
        %v4632 = vmul.f32 1.0, %v4631
        %v4633 = vrcp.pop %v3189
        %v4634 = vmul.f32 %v3189, %v4633
        %v4635 = vsub.f32 1.0, %v4634
        %v4636 = vmul.f32 %v4633, %v4635
        %v4637 = vadd.f32 %v4633, %v4636
        %vm4638 = vweird.f32 %v3189
        %vm4639 = vweird.f32 %v4633
        %vm4640 = vmor %vm4638, %vm4639
        %v4641 = vsel %vm4640, %v4633, %v4637
        %v4642 = vand.u32 2147483647, %v3189
        %vm4643 = vcmp.eq.f32.partialorder %v4642, 8.507059e+37
        %v4644 = vand.u32 %v3189, 2147483648
        %v4645 = vor.u32 1.1754944e-38, %v4644
        %v4646 = vsel %vm4643, %v4645, %v4641
        %v4647 = vmul.f32 1.0, %v4646
        %v4648 = vrcp.pop %v3190
        %v4649 = vmul.f32 %v3190, %v4648
        %v4650 = vsub.f32 1.0, %v4649
        %v4651 = vmul.f32 %v4648, %v4650
        %v4652 = vadd.f32 %v4648, %v4651
        %vm4653 = vweird.f32 %v3190
        %vm4654 = vweird.f32 %v4648
        %vm4655 = vmor %vm4653, %vm4654
        %v4656 = vsel %vm4655, %v4648, %v4652
        %v4657 = vand.u32 2147483647, %v3190
        %vm4658 = vcmp.eq.f32.partialorder %v4657, 8.507059e+37
        %v4659 = vand.u32 %v3190, 2147483648
        %v4660 = vor.u32 1.1754944e-38, %v4659
        %v4661 = vsel %vm4658, %v4660, %v4656
        %v4662 = vmul.f32 1.0, %v4661
        %v4663 = vrcp.pop %v3191
        %v4664 = vmul.f32 %v3191, %v4663
        %v4665 = vsub.f32 1.0, %v4664
        %v4666 = vmul.f32 %v4663, %v4665
        %v4667 = vadd.f32 %v4663, %v4666
        %vm4668 = vweird.f32 %v3191
        %vm4669 = vweird.f32 %v4663
        %vm4670 = vmor %vm4668, %vm4669
        %v4671 = vsel %vm4670, %v4663, %v4667
        %v4672 = vand.u32 2147483647, %v3191
        %vm4673 = vcmp.eq.f32.partialorder %v4672, 8.507059e+37
        %v4674 = vand.u32 %v3191, 2147483648
        %v4675 = vor.u32 1.1754944e-38, %v4674
        %v4676 = vsel %vm4673, %v4675, %v4671
        %v4677 = vmul.f32 1.0, %v4676
        %v4678 = vrcp.pop %v3192
        %v4679 = vmul.f32 %v3192, %v4678
        %v4680 = vsub.f32 1.0, %v4679
        %v4681 = vmul.f32 %v4678, %v4680
        %v4682 = vadd.f32 %v4678, %v4681
        %vm4683 = vweird.f32 %v3192
        %vm4684 = vweird.f32 %v4678
        %vm4685 = vmor %vm4683, %vm4684
        %v4686 = vsel %vm4685, %v4678, %v4682
        %v4687 = vand.u32 2147483647, %v3192
        %vm4688 = vcmp.eq.f32.partialorder %v4687, 8.507059e+37
        %v4689 = vand.u32 %v3192, 2147483648
        %v4690 = vor.u32 1.1754944e-38, %v4689
        %v4691 = vsel %vm4688, %v4690, %v4686
        %v4692 = vmul.f32 1.0, %v4691
        %v4693 = vrcp.pop %v3193
        %v4694 = vmul.f32 %v3193, %v4693
        %v4695 = vsub.f32 1.0, %v4694
        %v4696 = vmul.f32 %v4693, %v4695
        %v4697 = vadd.f32 %v4693, %v4696
        %vm4698 = vweird.f32 %v3193
        %vm4699 = vweird.f32 %v4693
        %vm4700 = vmor %vm4698, %vm4699
        %v4701 = vsel %vm4700, %v4693, %v4697
        %v4702 = vand.u32 2147483647, %v3193
        %vm4703 = vcmp.eq.f32.partialorder %v4702, 8.507059e+37
        %v4704 = vand.u32 %v3193, 2147483648
        %v4705 = vor.u32 1.1754944e-38, %v4704
        %v4706 = vsel %vm4703, %v4705, %v4701
        %v4707 = vmul.f32 1.0, %v4706
        %v4708 = vrcp.pop %v3194
        %v4709 = vmul.f32 %v3194, %v4708
        %v4710 = vsub.f32 1.0, %v4709
        %v4711 = vmul.f32 %v4708, %v4710
        %v4712 = vadd.f32 %v4708, %v4711
        %vm4713 = vweird.f32 %v3194
        %vm4714 = vweird.f32 %v4708
        %vm4715 = vmor %vm4713, %vm4714
        %v4716 = vsel %vm4715, %v4708, %v4712
        %v4717 = vand.u32 2147483647, %v3194
        %vm4718 = vcmp.eq.f32.partialorder %v4717, 8.507059e+37
        %v4719 = vand.u32 %v3194, 2147483648
        %v4720 = vor.u32 1.1754944e-38, %v4719
        %v4721 = vsel %vm4718, %v4720, %v4716
        %v4722 = vmul.f32 1.0, %v4721
        %v4723 = vrcp.pop %v3195
        %v4724 = vmul.f32 %v3195, %v4723
        %v4725 = vsub.f32 1.0, %v4724
        %v4726 = vmul.f32 %v4723, %v4725
        %v4727 = vadd.f32 %v4723, %v4726
        %vm4728 = vweird.f32 %v3195
        %vm4729 = vweird.f32 %v4723
        %vm4730 = vmor %vm4728, %vm4729
        %v4731 = vsel %vm4730, %v4723, %v4727
        %v4732 = vand.u32 2147483647, %v3195
        %vm4733 = vcmp.eq.f32.partialorder %v4732, 8.507059e+37
        %v4734 = vand.u32 %v3195, 2147483648
        %v4735 = vor.u32 1.1754944e-38, %v4734
        %v4736 = vsel %vm4733, %v4735, %v4731
        %v4737 = vmul.f32 1.0, %v4736
        %v4738 = vrcp.pop %v3196
        %v4739 = vmul.f32 %v3196, %v4738
        %v4740 = vsub.f32 1.0, %v4739
        %v4741 = vmul.f32 %v4738, %v4740
        %v4742 = vadd.f32 %v4738, %v4741
        %vm4743 = vweird.f32 %v3196
        %vm4744 = vweird.f32 %v4738
        %vm4745 = vmor %vm4743, %vm4744
        %v4746 = vsel %vm4745, %v4738, %v4742
        %v4747 = vand.u32 2147483647, %v3196
        %vm4748 = vcmp.eq.f32.partialorder %v4747, 8.507059e+37
        %v4749 = vand.u32 %v3196, 2147483648
        %v4750 = vor.u32 1.1754944e-38, %v4749
        %v4751 = vsel %vm4748, %v4750, %v4746
        %v4752 = vmul.f32 1.0, %v4751
        %v4753 = vrcp.pop %v3197
        %v4754 = vmul.f32 %v3197, %v4753
        %v4755 = vsub.f32 1.0, %v4754
        %v4756 = vmul.f32 %v4753, %v4755
        %v4757 = vadd.f32 %v4753, %v4756
        %vm4758 = vweird.f32 %v3197
        %vm4759 = vweird.f32 %v4753
        %vm4760 = vmor %vm4758, %vm4759
        %v4761 = vsel %vm4760, %v4753, %v4757
        %v4762 = vand.u32 2147483647, %v3197
        %vm4763 = vcmp.eq.f32.partialorder %v4762, 8.507059e+37
        %v4764 = vand.u32 %v3197, 2147483648
        %v4765 = vor.u32 1.1754944e-38, %v4764
        %v4766 = vsel %vm4763, %v4765, %v4761
        %v4767 = vmul.f32 1.0, %v4766
        %v4768 = vrcp.pop %v3198
        %v4769 = vmul.f32 %v3198, %v4768
        %v4770 = vsub.f32 1.0, %v4769
        %v4771 = vmul.f32 %v4768, %v4770
        %v4772 = vadd.f32 %v4768, %v4771
        %vm4773 = vweird.f32 %v3198
        %vm4774 = vweird.f32 %v4768
        %vm4775 = vmor %vm4773, %vm4774
        %v4776 = vsel %vm4775, %v4768, %v4772
        %v4777 = vand.u32 2147483647, %v3198
        %vm4778 = vcmp.eq.f32.partialorder %v4777, 8.507059e+37
        %v4779 = vand.u32 %v3198, 2147483648
        %v4780 = vor.u32 1.1754944e-38, %v4779
        %v4781 = vsel %vm4778, %v4780, %v4776
        %v4782 = vmul.f32 1.0, %v4781
        %v4783 = vrcp.pop %v3199
        %v4784 = vmul.f32 %v3199, %v4783
        %v4785 = vsub.f32 1.0, %v4784
        %v4786 = vmul.f32 %v4783, %v4785
        %v4787 = vadd.f32 %v4783, %v4786
        %vm4788 = vweird.f32 %v3199
        %vm4789 = vweird.f32 %v4783
        %vm4790 = vmor %vm4788, %vm4789
        %v4791 = vsel %vm4790, %v4783, %v4787
        %v4792 = vand.u32 2147483647, %v3199
        %vm4793 = vcmp.eq.f32.partialorder %v4792, 8.507059e+37
        %v4794 = vand.u32 %v3199, 2147483648
        %v4795 = vor.u32 1.1754944e-38, %v4794
        %v4796 = vsel %vm4793, %v4795, %v4791
        %v4797 = vmul.f32 1.0, %v4796
        %v4798 = vrcp.pop %v3200
        %v4799 = vmul.f32 %v3200, %v4798
        %v4800 = vsub.f32 1.0, %v4799
        %v4801 = vmul.f32 %v4798, %v4800
        %v4802 = vadd.f32 %v4798, %v4801
        %vm4803 = vweird.f32 %v3200
        %vm4804 = vweird.f32 %v4798
        %vm4805 = vmor %vm4803, %vm4804
        %v4806 = vsel %vm4805, %v4798, %v4802
        %v4807 = vand.u32 2147483647, %v3200
        %vm4808 = vcmp.eq.f32.partialorder %v4807, 8.507059e+37
        %v4809 = vand.u32 %v3200, 2147483648
        %v4810 = vor.u32 1.1754944e-38, %v4809
        %v4811 = vsel %vm4808, %v4810, %v4806
        %v4812 = vmul.f32 1.0, %v4811
        %v4813 = vrcp.pop %v3201
        %v4814 = vmul.f32 %v3201, %v4813
        %v4815 = vsub.f32 1.0, %v4814
        %v4816 = vmul.f32 %v4813, %v4815
        %v4817 = vadd.f32 %v4813, %v4816
        %vm4818 = vweird.f32 %v3201
        %vm4819 = vweird.f32 %v4813
        %vm4820 = vmor %vm4818, %vm4819
        %v4821 = vsel %vm4820, %v4813, %v4817
        %v4822 = vand.u32 2147483647, %v3201
        %vm4823 = vcmp.eq.f32.partialorder %v4822, 8.507059e+37
        %v4824 = vand.u32 %v3201, 2147483648
        %v4825 = vor.u32 1.1754944e-38, %v4824
        %v4826 = vsel %vm4823, %v4825, %v4821
        %v4827 = vmul.f32 1.0, %v4826
        %v4828 = vrcp.pop %v3202
        %v4829 = vmul.f32 %v3202, %v4828
        %v4830 = vsub.f32 1.0, %v4829
        %v4831 = vmul.f32 %v4828, %v4830
        %v4832 = vadd.f32 %v4828, %v4831
        %vm4833 = vweird.f32 %v3202
        %vm4834 = vweird.f32 %v4828
        %vm4835 = vmor %vm4833, %vm4834
        %v4836 = vsel %vm4835, %v4828, %v4832
        %v4837 = vand.u32 2147483647, %v3202
        %vm4838 = vcmp.eq.f32.partialorder %v4837, 8.507059e+37
        %v4839 = vand.u32 %v3202, 2147483648
        %v4840 = vor.u32 1.1754944e-38, %v4839
        %v4841 = vsel %vm4838, %v4840, %v4836
        %v4842 = vmul.f32 1.0, %v4841
        %v4843 = vrcp.pop %v3203
        %v4844 = vmul.f32 %v3203, %v4843
        %v4845 = vsub.f32 1.0, %v4844
        %v4846 = vmul.f32 %v4843, %v4845
        %v4847 = vadd.f32 %v4843, %v4846
        %vm4848 = vweird.f32 %v3203
        %vm4849 = vweird.f32 %v4843
        %vm4850 = vmor %vm4848, %vm4849
        %v4851 = vsel %vm4850, %v4843, %v4847
        %v4852 = vand.u32 2147483647, %v3203
        %vm4853 = vcmp.eq.f32.partialorder %v4852, 8.507059e+37
        %v4854 = vand.u32 %v3203, 2147483648
        %v4855 = vor.u32 1.1754944e-38, %v4854
        %v4856 = vsel %vm4853, %v4855, %v4851
        %v4857 = vmul.f32 1.0, %v4856
        %v4858 = vrcp.pop %v3204
        %v4859 = vmul.f32 %v3204, %v4858
        %v4860 = vsub.f32 1.0, %v4859
        %v4861 = vmul.f32 %v4858, %v4860
        %v4862 = vadd.f32 %v4858, %v4861
        %vm4863 = vweird.f32 %v3204
        %vm4864 = vweird.f32 %v4858
        %vm4865 = vmor %vm4863, %vm4864
        %v4866 = vsel %vm4865, %v4858, %v4862
        %v4867 = vand.u32 2147483647, %v3204
        %vm4868 = vcmp.eq.f32.partialorder %v4867, 8.507059e+37
        %v4869 = vand.u32 %v3204, 2147483648
        %v4870 = vor.u32 1.1754944e-38, %v4869
        %v4871 = vsel %vm4868, %v4870, %v4866
        %v4872 = vmul.f32 1.0, %v4871
        %v4873 = vrcp.pop %v3205
        %v4874 = vmul.f32 %v3205, %v4873
        %v4875 = vsub.f32 1.0, %v4874
        %v4876 = vmul.f32 %v4873, %v4875
        %v4877 = vadd.f32 %v4873, %v4876
        %vm4878 = vweird.f32 %v3205
        %vm4879 = vweird.f32 %v4873
        %vm4880 = vmor %vm4878, %vm4879
        %v4881 = vsel %vm4880, %v4873, %v4877
        %v4882 = vand.u32 2147483647, %v3205
        %vm4883 = vcmp.eq.f32.partialorder %v4882, 8.507059e+37
        %v4884 = vand.u32 %v3205, 2147483648
        %v4885 = vor.u32 1.1754944e-38, %v4884
        %v4886 = vsel %vm4883, %v4885, %v4881
        %v4887 = vmul.f32 1.0, %v4886
        %v4888 = vrcp.pop %v3206
        %v4889 = vmul.f32 %v3206, %v4888
        %v4890 = vsub.f32 1.0, %v4889
        %v4891 = vmul.f32 %v4888, %v4890
        %v4892 = vadd.f32 %v4888, %v4891
        %vm4893 = vweird.f32 %v3206
        %vm4894 = vweird.f32 %v4888
        %vm4895 = vmor %vm4893, %vm4894
        %v4896 = vsel %vm4895, %v4888, %v4892
        %v4897 = vand.u32 2147483647, %v3206
        %vm4898 = vcmp.eq.f32.partialorder %v4897, 8.507059e+37
        %v4899 = vand.u32 %v3206, 2147483648
        %v4900 = vor.u32 1.1754944e-38, %v4899
        %v4901 = vsel %vm4898, %v4900, %v4896
        %v4902 = vmul.f32 1.0, %v4901
        %v4903 = vrcp.pop %v3207
        %v4904 = vmul.f32 %v3207, %v4903
        %v4905 = vsub.f32 1.0, %v4904
        %v4906 = vmul.f32 %v4903, %v4905
        %v4907 = vadd.f32 %v4903, %v4906
        %vm4908 = vweird.f32 %v3207
        %vm4909 = vweird.f32 %v4903
        %vm4910 = vmor %vm4908, %vm4909
        %v4911 = vsel %vm4910, %v4903, %v4907
        %v4912 = vand.u32 2147483647, %v3207
        %vm4913 = vcmp.eq.f32.partialorder %v4912, 8.507059e+37
        %v4914 = vand.u32 %v3207, 2147483648
        %v4915 = vor.u32 1.1754944e-38, %v4914
        %v4916 = vsel %vm4913, %v4915, %v4911
        %v4917 = vmul.f32 1.0, %v4916
        %v4918 = vrcp.pop %v3208
        %v4919 = vmul.f32 %v3208, %v4918
        %v4920 = vsub.f32 1.0, %v4919
        %v4921 = vmul.f32 %v4918, %v4920
        %v4922 = vadd.f32 %v4918, %v4921
        %vm4923 = vweird.f32 %v3208
        %vm4924 = vweird.f32 %v4918
        %vm4925 = vmor %vm4923, %vm4924
        %v4926 = vsel %vm4925, %v4918, %v4922
        %v4927 = vand.u32 2147483647, %v3208
        %vm4928 = vcmp.eq.f32.partialorder %v4927, 8.507059e+37
        %v4929 = vand.u32 %v3208, 2147483648
        %v4930 = vor.u32 1.1754944e-38, %v4929
        %v4931 = vsel %vm4928, %v4930, %v4926
        %v4932 = vmul.f32 1.0, %v4931
        %v4933 = vrcp.pop %v3209
        %v4934 = vmul.f32 %v3209, %v4933
        %v4935 = vsub.f32 1.0, %v4934
        %v4936 = vmul.f32 %v4933, %v4935
        %v4937 = vadd.f32 %v4933, %v4936
        %vm4938 = vweird.f32 %v3209
        %vm4939 = vweird.f32 %v4933
        %vm4940 = vmor %vm4938, %vm4939
        %v4941 = vsel %vm4940, %v4933, %v4937
        %v4942 = vand.u32 2147483647, %v3209
        %vm4943 = vcmp.eq.f32.partialorder %v4942, 8.507059e+37
        %v4944 = vand.u32 %v3209, 2147483648
        %v4945 = vor.u32 1.1754944e-38, %v4944
        %v4946 = vsel %vm4943, %v4945, %v4941
        %v4947 = vmul.f32 1.0, %v4946
        %v4948 = vrcp.pop %v3210
        %v4949 = vmul.f32 %v3210, %v4948
        %v4950 = vsub.f32 1.0, %v4949
        %v4951 = vmul.f32 %v4948, %v4950
        %v4952 = vadd.f32 %v4948, %v4951
        %vm4953 = vweird.f32 %v3210
        %vm4954 = vweird.f32 %v4948
        %vm4955 = vmor %vm4953, %vm4954
        %v4956 = vsel %vm4955, %v4948, %v4952
        %v4957 = vand.u32 2147483647, %v3210
        %vm4958 = vcmp.eq.f32.partialorder %v4957, 8.507059e+37
        %v4959 = vand.u32 %v3210, 2147483648
        %v4960 = vor.u32 1.1754944e-38, %v4959
        %v4961 = vsel %vm4958, %v4960, %v4956
        %v4962 = vmul.f32 1.0, %v4961
        %v4963 = vrcp.pop %v3211
        %v4964 = vmul.f32 %v3211, %v4963
        %v4965 = vsub.f32 1.0, %v4964
        %v4966 = vmul.f32 %v4963, %v4965
        %v4967 = vadd.f32 %v4963, %v4966
        %vm4968 = vweird.f32 %v3211
        %vm4969 = vweird.f32 %v4963
        %vm4970 = vmor %vm4968, %vm4969
        %v4971 = vsel %vm4970, %v4963, %v4967
        %v4972 = vand.u32 2147483647, %v3211
        %vm4973 = vcmp.eq.f32.partialorder %v4972, 8.507059e+37
        %v4974 = vand.u32 %v3211, 2147483648
        %v4975 = vor.u32 1.1754944e-38, %v4974
        %v4976 = vsel %vm4973, %v4975, %v4971
        %v4977 = vmul.f32 1.0, %v4976
        %v4978 = vrcp.pop %v3212
        %v4979 = vmul.f32 %v3212, %v4978
        %v4980 = vsub.f32 1.0, %v4979
        %v4981 = vmul.f32 %v4978, %v4980
        %v4982 = vadd.f32 %v4978, %v4981
        %vm4983 = vweird.f32 %v3212
        %vm4984 = vweird.f32 %v4978
        %vm4985 = vmor %vm4983, %vm4984
        %v4986 = vsel %vm4985, %v4978, %v4982
        %v4987 = vand.u32 2147483647, %v3212
        %vm4988 = vcmp.eq.f32.partialorder %v4987, 8.507059e+37
        %v4989 = vand.u32 %v3212, 2147483648
        %v4990 = vor.u32 1.1754944e-38, %v4989
        %v4991 = vsel %vm4988, %v4990, %v4986
        %v4992 = vmul.f32 1.0, %v4991
        %v4993 = vrcp.pop %v3213
        %v4994 = vmul.f32 %v3213, %v4993
        %v4995 = vsub.f32 1.0, %v4994
        %v4996 = vmul.f32 %v4993, %v4995
        %v4997 = vadd.f32 %v4993, %v4996
        %vm4998 = vweird.f32 %v3213
        %vm4999 = vweird.f32 %v4993
        %vm5000 = vmor %vm4998, %vm4999
        %v5001 = vsel %vm5000, %v4993, %v4997
        %v5002 = vand.u32 2147483647, %v3213
        %vm5003 = vcmp.eq.f32.partialorder %v5002, 8.507059e+37
        %v5004 = vand.u32 %v3213, 2147483648
        %v5005 = vor.u32 1.1754944e-38, %v5004
        %v5006 = vsel %vm5003, %v5005, %v5001
        %v5007 = vmul.f32 1.0, %v5006
        %v5008 = vrcp.pop %v3214
        %v5009 = vmul.f32 %v3214, %v5008
        %v5010 = vsub.f32 1.0, %v5009
        %v5011 = vmul.f32 %v5008, %v5010
        %v5012 = vadd.f32 %v5008, %v5011
        %vm5013 = vweird.f32 %v3214
        %vm5014 = vweird.f32 %v5008
        %vm5015 = vmor %vm5013, %vm5014
        %v5016 = vsel %vm5015, %v5008, %v5012
        %v5017 = vand.u32 2147483647, %v3214
        %vm5018 = vcmp.eq.f32.partialorder %v5017, 8.507059e+37
        %v5019 = vand.u32 %v3214, 2147483648
        %v5020 = vor.u32 1.1754944e-38, %v5019
        %v5021 = vsel %vm5018, %v5020, %v5016
        %v5022 = vmul.f32 1.0, %v5021
        %v5023 = vrcp.pop %v3215
        %v5024 = vmul.f32 %v3215, %v5023
        %v5025 = vsub.f32 1.0, %v5024
        %v5026 = vmul.f32 %v5023, %v5025
        %v5027 = vadd.f32 %v5023, %v5026
        %vm5028 = vweird.f32 %v3215
        %vm5029 = vweird.f32 %v5023
        %vm5030 = vmor %vm5028, %vm5029
        %v5031 = vsel %vm5030, %v5023, %v5027
        %v5032 = vand.u32 2147483647, %v3215
        %vm5033 = vcmp.eq.f32.partialorder %v5032, 8.507059e+37
        %v5034 = vand.u32 %v3215, 2147483648
        %v5035 = vor.u32 1.1754944e-38, %v5034
        %v5036 = vsel %vm5033, %v5035, %v5031
        %v5037 = vmul.f32 1.0, %v5036
        %v5038 = vrcp.pop %v3216
        %v5039 = vmul.f32 %v3216, %v5038
        %v5040 = vsub.f32 1.0, %v5039
        %v5041 = vmul.f32 %v5038, %v5040
        %v5042 = vadd.f32 %v5038, %v5041
        %vm5043 = vweird.f32 %v3216
        %vm5044 = vweird.f32 %v5038
        %vm5045 = vmor %vm5043, %vm5044
        %v5046 = vsel %vm5045, %v5038, %v5042
        %v5047 = vand.u32 2147483647, %v3216
        %vm5048 = vcmp.eq.f32.partialorder %v5047, 8.507059e+37
        %v5049 = vand.u32 %v3216, 2147483648
        %v5050 = vor.u32 1.1754944e-38, %v5049
        %v5051 = vsel %vm5048, %v5050, %v5046
        %v5052 = vmul.f32 1.0, %v5051
        %v5053 = vrcp.pop %v3217
        %v5054 = vmul.f32 %v3217, %v5053
        %v5055 = vsub.f32 1.0, %v5054
        %v5056 = vmul.f32 %v5053, %v5055
        %v5057 = vadd.f32 %v5053, %v5056
        %vm5058 = vweird.f32 %v3217
        %vm5059 = vweird.f32 %v5053
        %vm5060 = vmor %vm5058, %vm5059
        %v5061 = vsel %vm5060, %v5053, %v5057
        %v5062 = vand.u32 2147483647, %v3217
        %vm5063 = vcmp.eq.f32.partialorder %v5062, 8.507059e+37
        %v5064 = vand.u32 %v3217, 2147483648
        %v5065 = vor.u32 1.1754944e-38, %v5064
        %v5066 = vsel %vm5063, %v5065, %v5061
        %v5067 = vmul.f32 1.0, %v5066
        %v5068 = vrcp.pop %v3218
        %v5069 = vmul.f32 %v3218, %v5068
        %v5070 = vsub.f32 1.0, %v5069
        %v5071 = vmul.f32 %v5068, %v5070
        %v5072 = vadd.f32 %v5068, %v5071
        %vm5073 = vweird.f32 %v3218
        %vm5074 = vweird.f32 %v5068
        %vm5075 = vmor %vm5073, %vm5074
        %v5076 = vsel %vm5075, %v5068, %v5072
        %v5077 = vand.u32 2147483647, %v3218
        %vm5078 = vcmp.eq.f32.partialorder %v5077, 8.507059e+37
        %v5079 = vand.u32 %v3218, 2147483648
        %v5080 = vor.u32 1.1754944e-38, %v5079
        %v5081 = vsel %vm5078, %v5080, %v5076
        %v5082 = vmul.f32 1.0, %v5081
        %v5083 = vrcp.pop %v3219
        %v5084 = vmul.f32 %v3219, %v5083
        %v5085 = vsub.f32 1.0, %v5084
        %v5086 = vmul.f32 %v5083, %v5085
        %v5087 = vadd.f32 %v5083, %v5086
        %vm5088 = vweird.f32 %v3219
        %vm5089 = vweird.f32 %v5083
        %vm5090 = vmor %vm5088, %vm5089
        %v5091 = vsel %vm5090, %v5083, %v5087
        %v5092 = vand.u32 2147483647, %v3219
        %vm5093 = vcmp.eq.f32.partialorder %v5092, 8.507059e+37
        %v5094 = vand.u32 %v3219, 2147483648
        %v5095 = vor.u32 1.1754944e-38, %v5094
        %v5096 = vsel %vm5093, %v5095, %v5091
        %v5097 = vmul.f32 1.0, %v5096
        %v5098 = vrcp.pop %v3220
        %v5099 = vmul.f32 %v3220, %v5098
        %v5100 = vsub.f32 1.0, %v5099
        %v5101 = vmul.f32 %v5098, %v5100
        %v5102 = vadd.f32 %v5098, %v5101
        %vm5103 = vweird.f32 %v3220
        %vm5104 = vweird.f32 %v5098
        %vm5105 = vmor %vm5103, %vm5104
        %v5106 = vsel %vm5105, %v5098, %v5102
        %v5107 = vand.u32 2147483647, %v3220
        %vm5108 = vcmp.eq.f32.partialorder %v5107, 8.507059e+37
        %v5109 = vand.u32 %v3220, 2147483648
        %v5110 = vor.u32 1.1754944e-38, %v5109
        %v5111 = vsel %vm5108, %v5110, %v5106
        %v5112 = vmul.f32 1.0, %v5111
        %v5113 = vrcp.pop %v3221
        %v5114 = vmul.f32 %v3221, %v5113
        %v5115 = vsub.f32 1.0, %v5114
        %v5116 = vmul.f32 %v5113, %v5115
        %v5117 = vadd.f32 %v5113, %v5116
        %vm5118 = vweird.f32 %v3221
        %vm5119 = vweird.f32 %v5113
        %vm5120 = vmor %vm5118, %vm5119
        %v5121 = vsel %vm5120, %v5113, %v5117
        %v5122 = vand.u32 2147483647, %v3221
        %vm5123 = vcmp.eq.f32.partialorder %v5122, 8.507059e+37
        %v5124 = vand.u32 %v3221, 2147483648
        %v5125 = vor.u32 1.1754944e-38, %v5124
        %v5126 = vsel %vm5123, %v5125, %v5121
        %v5127 = vmul.f32 1.0, %v5126
        %v5128 = vrcp.pop %v3222
        %v5129 = vmul.f32 %v3222, %v5128
        %v5130 = vsub.f32 1.0, %v5129
        %v5131 = vmul.f32 %v5128, %v5130
        %v5132 = vadd.f32 %v5128, %v5131
        %vm5133 = vweird.f32 %v3222
        %vm5134 = vweird.f32 %v5128
        %vm5135 = vmor %vm5133, %vm5134
        %v5136 = vsel %vm5135, %v5128, %v5132
        %v5137 = vand.u32 2147483647, %v3222
        %vm5138 = vcmp.eq.f32.partialorder %v5137, 8.507059e+37
        %v5139 = vand.u32 %v3222, 2147483648
        %v5140 = vor.u32 1.1754944e-38, %v5139
        %v5141 = vsel %vm5138, %v5140, %v5136
        %v5142 = vmul.f32 1.0, %v5141
        %v5143 = vmul.f32 %v1001, %v3237
        %v5144 = vmul.f32 %v1179, %v3252
        %v5145 = vmul.f32 %v1357, %v3267
        %v5146 = vmul.f32 %v1535, %v3282
        %v5147 = vmul.f32 %v1003, %v3297
        %v5148 = vmul.f32 %v1181, %v3312
        %v5149 = vmul.f32 %v1359, %v3327
        %v5150 = vmul.f32 %v1537, %v3342
        %v5151 = vmul.f32 %v1006, %v3357
        %v5152 = vmul.f32 %v1184, %v3372
        %v5153 = vmul.f32 %v1362, %v3387
        %v5154 = vmul.f32 %v1540, %v3402
        %v5155 = vmul.f32 %v1008, %v3417
        %v5156 = vmul.f32 %v1186, %v3432
        %v5157 = vmul.f32 %v1364, %v3447
        %v5158 = vmul.f32 %v1542, %v3462
        %v5159 = vmul.f32 %v1011, %v3477
        %v5160 = vmul.f32 %v1189, %v3492
        %v5161 = vmul.f32 %v1367, %v3507
        %v5162 = vmul.f32 %v1545, %v3522
        %v5163 = vmul.f32 %v1013, %v3537
        %v5164 = vmul.f32 %v1191, %v3552
        %v5165 = vmul.f32 %v1369, %v3567
        %v5166 = vmul.f32 %v1547, %v3582
        %v5167 = vmul.f32 %v1016, %v3597
        %v5168 = vmul.f32 %v1194, %v3612
        %v5169 = vmul.f32 %v1372, %v3627
        %v5170 = vmul.f32 %v1550, %v3642
        %v5171 = vmul.f32 %v1018, %v3657
        %v5172 = vmul.f32 %v1196, %v3672
        %v5173 = vmul.f32 %v1374, %v3687
        %v5174 = vmul.f32 %v1552, %v3702
        %v5175 = vmul.f32 %v1021, %v3717
        %v5176 = vmul.f32 %v1199, %v3732
        %v5177 = vmul.f32 %v1377, %v3747
        %v5178 = vmul.f32 %v1555, %v3762
        %v5179 = vmul.f32 %v1023, %v3777
        %v5180 = vmul.f32 %v1201, %v3792
        %v5181 = vmul.f32 %v1379, %v3807
        %v5182 = vmul.f32 %v1557, %v3822
        %v5183 = vmul.f32 %v1026, %v3837
        %v5184 = vmul.f32 %v1204, %v3852
        %v5185 = vmul.f32 %v1382, %v3867
        %v5186 = vmul.f32 %v1560, %v3882
        %v5187 = vmul.f32 %v1028, %v3897
        %v5188 = vmul.f32 %v1206, %v3912
        %v5189 = vmul.f32 %v1384, %v3927
        %v5190 = vmul.f32 %v1562, %v3942
        %v5191 = vmul.f32 %v1031, %v3957
        %v5192 = vmul.f32 %v1209, %v3972
        %v5193 = vmul.f32 %v1387, %v3987
        %v5194 = vmul.f32 %v1565, %v4002
        %v5195 = vmul.f32 %v1033, %v4017
        %v5196 = vmul.f32 %v1211, %v4032
        %v5197 = vmul.f32 %v1389, %v4047
        %v5198 = vmul.f32 %v1567, %v4062
        %v5199 = vmul.f32 %v1036, %v4077
        %v5200 = vmul.f32 %v1214, %v4092
        %v5201 = vmul.f32 %v1392, %v4107
        %v5202 = vmul.f32 %v1570, %v4122
        %v5203 = vmul.f32 %v1038, %v4137
        %v5204 = vmul.f32 %v1216, %v4152
        %v5205 = vmul.f32 %v1394, %v4167
        %v5206 = vmul.f32 %v1572, %v4182
        %v5207 = vmul.f32 %v1041, %v4197
        %v5208 = vmul.f32 %v1219, %v4212
        %v5209 = vmul.f32 %v1397, %v4227
        %v5210 = vmul.f32 %v1575, %v4242
        %v5211 = vmul.f32 %v1043, %v4257
        %v5212 = vmul.f32 %v1221, %v4272
        %v5213 = vmul.f32 %v1399, %v4287
        %v5214 = vmul.f32 %v1577, %v4302
        %v5215 = vmul.f32 %v1046, %v4317
        %v5216 = vmul.f32 %v1224, %v4332
        %v5217 = vmul.f32 %v1402, %v4347
        %v5218 = vmul.f32 %v1580, %v4362
        %v5219 = vmul.f32 %v1048, %v4377
        %v5220 = vmul.f32 %v1226, %v4392
        %v5221 = vmul.f32 %v1404, %v4407
        %v5222 = vmul.f32 %v1582, %v4422
        %v5223 = vmul.f32 %v1051, %v4437
        %v5224 = vmul.f32 %v1229, %v4452
        %v5225 = vmul.f32 %v1407, %v4467
        %v5226 = vmul.f32 %v1585, %v4482
        %v5227 = vmul.f32 %v1053, %v4497
        %v5228 = vmul.f32 %v1231, %v4512
        %v5229 = vmul.f32 %v1409, %v4527
        %v5230 = vmul.f32 %v1587, %v4542
        %v5231 = vmul.f32 %v1056, %v4557
        %v5232 = vmul.f32 %v1234, %v4572
        %v5233 = vmul.f32 %v1412, %v4587
        %v5234 = vmul.f32 %v1590, %v4602
        %v5235 = vmul.f32 %v1058, %v4617
        %v5236 = vmul.f32 %v1236, %v4632
        %v5237 = vmul.f32 %v1414, %v4647
        %v5238 = vmul.f32 %v1592, %v4662
        %v5239 = vmul.f32 %v1061, %v4677
        %v5240 = vmul.f32 %v1239, %v4692
        %v5241 = vmul.f32 %v1417, %v4707
        %v5242 = vmul.f32 %v1595, %v4722
        %v5243 = vmul.f32 %v1063, %v4737
        %v5244 = vmul.f32 %v1241, %v4752
        %v5245 = vmul.f32 %v1419, %v4767
        %v5246 = vmul.f32 %v1597, %v4782
        %v5247 = vmul.f32 %v1066, %v4797
        %v5248 = vmul.f32 %v1244, %v4812
        %v5249 = vmul.f32 %v1422, %v4827
        %v5250 = vmul.f32 %v1600, %v4842
        %v5251 = vmul.f32 %v1068, %v4857
        %v5252 = vmul.f32 %v1246, %v4872
        %v5253 = vmul.f32 %v1424, %v4887
        %v5254 = vmul.f32 %v1602, %v4902
        %v5255 = vmul.f32 %v1071, %v4917
        %v5256 = vmul.f32 %v1249, %v4932
        %v5257 = vmul.f32 %v1427, %v4947
        %v5258 = vmul.f32 %v1605, %v4962
        %v5259 = vmul.f32 %v1073, %v4977
        %v5260 = vmul.f32 %v1251, %v4992
        %v5261 = vmul.f32 %v1429, %v5007
        %v5262 = vmul.f32 %v1607, %v5022
        %v5263 = vmul.f32 %v1076, %v5037
        %v5264 = vmul.f32 %v1254, %v5052
        %v5265 = vmul.f32 %v1432, %v5067
        %v5266 = vmul.f32 %v1610, %v5082
        %v5267 = vmul.f32 %v1078, %v5097
        %v5268 = vmul.f32 %v1256, %v5112
        %v5269 = vmul.f32 %v1434, %v5127
        %v5270 = vmul.f32 %v1612, %v5142
        %v5271 = vmul.f32 %v5143, %v2098
        %v5272 = vmul.f32 %v5144, %v2276
        %v5273 = vmul.f32 %v5145, %v2454
        %v5274 = vmul.f32 %v5146, %v2632
        %v5275 = vmul.f32 %v5147, %v2100
        %v5276 = vmul.f32 %v5148, %v2278
        %v5277 = vmul.f32 %v5149, %v2456
        %v5278 = vmul.f32 %v5150, %v2634
        %v5279 = vmul.f32 %v5151, %v2103
        %v5280 = vmul.f32 %v5152, %v2281
        %v5281 = vmul.f32 %v5153, %v2459
        %v5282 = vmul.f32 %v5154, %v2637
        %v5283 = vmul.f32 %v5155, %v2105
        %v5284 = vmul.f32 %v5156, %v2283
        %v5285 = vmul.f32 %v5157, %v2461
        %v5286 = vmul.f32 %v5158, %v2639
        %v5287 = vmul.f32 %v5159, %v2108
        %v5288 = vmul.f32 %v5160, %v2286
        %v5289 = vmul.f32 %v5161, %v2464
        %v5290 = vmul.f32 %v5162, %v2642
        %v5291 = vmul.f32 %v5163, %v2110
        %v5292 = vmul.f32 %v5164, %v2288
        %v5293 = vmul.f32 %v5165, %v2466
        %v5294 = vmul.f32 %v5166, %v2644
        %v5295 = vmul.f32 %v5167, %v2113
        %v5296 = vmul.f32 %v5168, %v2291
        %v5297 = vmul.f32 %v5169, %v2469
        %v5298 = vmul.f32 %v5170, %v2647
        %v5299 = vmul.f32 %v5171, %v2115
        %v5300 = vmul.f32 %v5172, %v2293
        %v5301 = vmul.f32 %v5173, %v2471
        %v5302 = vmul.f32 %v5174, %v2649
        %v5303 = vmul.f32 %v5175, %v2118
        %v5304 = vmul.f32 %v5176, %v2296
        %v5305 = vmul.f32 %v5177, %v2474
        %v5306 = vmul.f32 %v5178, %v2652
        %v5307 = vmul.f32 %v5179, %v2120
        %v5308 = vmul.f32 %v5180, %v2298
        %v5309 = vmul.f32 %v5181, %v2476
        %v5310 = vmul.f32 %v5182, %v2654
        %v5311 = vmul.f32 %v5183, %v2123
        %v5312 = vmul.f32 %v5184, %v2301
        %v5313 = vmul.f32 %v5185, %v2479
        %v5314 = vmul.f32 %v5186, %v2657
        %v5315 = vmul.f32 %v5187, %v2125
        %v5316 = vmul.f32 %v5188, %v2303
        %v5317 = vmul.f32 %v5189, %v2481
        %v5318 = vmul.f32 %v5190, %v2659
        %v5319 = vmul.f32 %v5191, %v2128
        %v5320 = vmul.f32 %v5192, %v2306
        %v5321 = vmul.f32 %v5193, %v2484
        %v5322 = vmul.f32 %v5194, %v2662
        %v5323 = vmul.f32 %v5195, %v2130
        %v5324 = vmul.f32 %v5196, %v2308
        %v5325 = vmul.f32 %v5197, %v2486
        %v5326 = vmul.f32 %v5198, %v2664
        %v5327 = vmul.f32 %v5199, %v2133
        %v5328 = vmul.f32 %v5200, %v2311
        %v5329 = vmul.f32 %v5201, %v2489
        %v5330 = vmul.f32 %v5202, %v2667
        %v5331 = vmul.f32 %v5203, %v2135
        %v5332 = vmul.f32 %v5204, %v2313
        %v5333 = vmul.f32 %v5205, %v2491
        %v5334 = vmul.f32 %v5206, %v2669
        %v5335 = vmul.f32 %v5207, %v2138
        %v5336 = vmul.f32 %v5208, %v2316
        %v5337 = vmul.f32 %v5209, %v2494
        %v5338 = vmul.f32 %v5210, %v2672
        %v5339 = vmul.f32 %v5211, %v2140
        %v5340 = vmul.f32 %v5212, %v2318
        %v5341 = vmul.f32 %v5213, %v2496
        %v5342 = vmul.f32 %v5214, %v2674
        %v5343 = vmul.f32 %v5215, %v2143
        %v5344 = vmul.f32 %v5216, %v2321
        %v5345 = vmul.f32 %v5217, %v2499
        %v5346 = vmul.f32 %v5218, %v2677
        %v5347 = vmul.f32 %v5219, %v2145
        %v5348 = vmul.f32 %v5220, %v2323
        %v5349 = vmul.f32 %v5221, %v2501
        %v5350 = vmul.f32 %v5222, %v2679
        %v5351 = vmul.f32 %v5223, %v2148
        %v5352 = vmul.f32 %v5224, %v2326
        %v5353 = vmul.f32 %v5225, %v2504
        %v5354 = vmul.f32 %v5226, %v2682
        %v5355 = vmul.f32 %v5227, %v2150
        %v5356 = vmul.f32 %v5228, %v2328
        %v5357 = vmul.f32 %v5229, %v2506
        %v5358 = vmul.f32 %v5230, %v2684
        %v5359 = vmul.f32 %v5231, %v2153
        %v5360 = vmul.f32 %v5232, %v2331
        %v5361 = vmul.f32 %v5233, %v2509
        %v5362 = vmul.f32 %v5234, %v2687
        %v5363 = vmul.f32 %v5235, %v2155
        %v5364 = vmul.f32 %v5236, %v2333
        %v5365 = vmul.f32 %v5237, %v2511
        %v5366 = vmul.f32 %v5238, %v2689
        %v5367 = vmul.f32 %v5239, %v2158
        %v5368 = vmul.f32 %v5240, %v2336
        %v5369 = vmul.f32 %v5241, %v2514
        %v5370 = vmul.f32 %v5242, %v2692
        %v5371 = vmul.f32 %v5243, %v2160
        %v5372 = vmul.f32 %v5244, %v2338
        %v5373 = vmul.f32 %v5245, %v2516
        %v5374 = vmul.f32 %v5246, %v2694
        %v5375 = vmul.f32 %v5247, %v2163
        %v5376 = vmul.f32 %v5248, %v2341
        %v5377 = vmul.f32 %v5249, %v2519
        %v5378 = vmul.f32 %v5250, %v2697
        %v5379 = vmul.f32 %v5251, %v2165
        %v5380 = vmul.f32 %v5252, %v2343
        %v5381 = vmul.f32 %v5253, %v2521
        %v5382 = vmul.f32 %v5254, %v2699
        %v5383 = vmul.f32 %v5255, %v2168
        %v5384 = vmul.f32 %v5256, %v2346
        %v5385 = vmul.f32 %v5257, %v2524
        %v5386 = vmul.f32 %v5258, %v2702
        %v5387 = vmul.f32 %v5259, %v2170
        %v5388 = vmul.f32 %v5260, %v2348
        %v5389 = vmul.f32 %v5261, %v2526
        %v5390 = vmul.f32 %v5262, %v2704
        %v5391 = vmul.f32 %v5263, %v2173
        %v5392 = vmul.f32 %v5264, %v2351
        %v5393 = vmul.f32 %v5265, %v2529
        %v5394 = vmul.f32 %v5266, %v2707
        %v5395 = vmul.f32 %v5267, %v2175
        %v5396 = vmul.f32 %v5268, %v2353
        %v5397 = vmul.f32 %v5269, %v2531
        %v5398 = vmul.f32 %v5270, %v2709
        %v5399 = vpack.c.bf16 %v5275, %v5271
        %v5400 = vpack.c.bf16 %v5276, %v5272
        %v5401 = vpack.c.bf16 %v5277, %v5273
        %v5402 = vpack.c.bf16 %v5278, %v5274
        %v5403 = vpack.c.bf16 %v5283, %v5279
        %v5404 = vpack.c.bf16 %v5284, %v5280
        %v5405 = vpack.c.bf16 %v5285, %v5281
        %v5406 = vpack.c.bf16 %v5286, %v5282
        %v5407 = vpack.c.bf16 %v5291, %v5287
        %v5408 = vpack.c.bf16 %v5292, %v5288
        %v5409 = vpack.c.bf16 %v5293, %v5289
        %v5410 = vpack.c.bf16 %v5294, %v5290
        %v5411 = vpack.c.bf16 %v5299, %v5295
        %v5412 = vpack.c.bf16 %v5300, %v5296
        %v5413 = vpack.c.bf16 %v5301, %v5297
        %v5414 = vpack.c.bf16 %v5302, %v5298
        %v5415 = vpack.c.bf16 %v5307, %v5303
        %v5416 = vpack.c.bf16 %v5308, %v5304
        %v5417 = vpack.c.bf16 %v5309, %v5305
        %v5418 = vpack.c.bf16 %v5310, %v5306
        %v5419 = vpack.c.bf16 %v5315, %v5311
        %v5420 = vpack.c.bf16 %v5316, %v5312
        %v5421 = vpack.c.bf16 %v5317, %v5313
        %v5422 = vpack.c.bf16 %v5318, %v5314
        %v5423 = vpack.c.bf16 %v5323, %v5319
        %v5424 = vpack.c.bf16 %v5324, %v5320
        %v5425 = vpack.c.bf16 %v5325, %v5321
        %v5426 = vpack.c.bf16 %v5326, %v5322
        %v5427 = vpack.c.bf16 %v5331, %v5327
        %v5428 = vpack.c.bf16 %v5332, %v5328
        %v5429 = vpack.c.bf16 %v5333, %v5329
        %v5430 = vpack.c.bf16 %v5334, %v5330
        %v5431 = vpack.c.bf16 %v5339, %v5335
        %v5432 = vpack.c.bf16 %v5340, %v5336
        %v5433 = vpack.c.bf16 %v5341, %v5337
        %v5434 = vpack.c.bf16 %v5342, %v5338
        %v5435 = vpack.c.bf16 %v5347, %v5343
        %v5436 = vpack.c.bf16 %v5348, %v5344
        %v5437 = vpack.c.bf16 %v5349, %v5345
        %v5438 = vpack.c.bf16 %v5350, %v5346
        %v5439 = vpack.c.bf16 %v5355, %v5351
        %v5440 = vpack.c.bf16 %v5356, %v5352
        %v5441 = vpack.c.bf16 %v5357, %v5353
        %v5442 = vpack.c.bf16 %v5358, %v5354
        %v5443 = vpack.c.bf16 %v5363, %v5359
        %v5444 = vpack.c.bf16 %v5364, %v5360
        %v5445 = vpack.c.bf16 %v5365, %v5361
        %v5446 = vpack.c.bf16 %v5366, %v5362
        %v5447 = vpack.c.bf16 %v5371, %v5367
        %v5448 = vpack.c.bf16 %v5372, %v5368
        %v5449 = vpack.c.bf16 %v5373, %v5369
        %v5450 = vpack.c.bf16 %v5374, %v5370
        %v5451 = vpack.c.bf16 %v5379, %v5375
        %v5452 = vpack.c.bf16 %v5380, %v5376
        %v5453 = vpack.c.bf16 %v5381, %v5377
        %v5454 = vpack.c.bf16 %v5382, %v5378
        %v5455 = vpack.c.bf16 %v5387, %v5383
        %v5456 = vpack.c.bf16 %v5388, %v5384
        %v5457 = vpack.c.bf16 %v5389, %v5385
        %v5458 = vpack.c.bf16 %v5390, %v5386
        %v5459 = vpack.c.bf16 %v5395, %v5391
        %v5460 = vpack.c.bf16 %v5396, %v5392
        %v5461 = vpack.c.bf16 %v5397, %v5393
        %v5462 = vpack.c.bf16 %v5398, %v5394
        %v5463 = vld [vmem:[#allocation2] sm:$0xff]
        %v5464 = vld [vmem:[#allocation2 + $0x8] sm:$0xff]
        %v5465 = vld [vmem:[#allocation2 + $0x10] sm:$0xff]
        %v5466 = vld [vmem:[#allocation2 + $0x18] sm:$0xff]
        %v5467 = vld [vmem:[#allocation2 + $0x20] sm:$0xff]
        %v5468 = vld [vmem:[#allocation2 + $0x28] sm:$0xff]
        %v5469 = vld [vmem:[#allocation2 + $0x30] sm:$0xff]
        %v5470 = vld [vmem:[#allocation2 + $0x38] sm:$0xff]
        %v5471 = vld [vmem:[#allocation2 + $0x40] sm:$0xff]
        %v5472 = vld [vmem:[#allocation2 + $0x48] sm:$0xff]
        %v5473 = vld [vmem:[#allocation2 + $0x50] sm:$0xff]
        %v5474 = vld [vmem:[#allocation2 + $0x58] sm:$0xff]
        %v5475 = vld [vmem:[#allocation2 + $0x60] sm:$0xff]
        %v5476 = vld [vmem:[#allocation2 + $0x68] sm:$0xff]
        %v5477 = vld [vmem:[#allocation2 + $0x70] sm:$0xff]
        %v5478 = vld [vmem:[#allocation2 + $0x78] sm:$0xff]
        %v5479 = vld [vmem:[#allocation2 + $0x80] sm:$0xff]
        %v5480 = vld [vmem:[#allocation2 + $0x88] sm:$0xff]
        %v5481 = vld [vmem:[#allocation2 + $0x90] sm:$0xff]
        %v5482 = vld [vmem:[#allocation2 + $0x98] sm:$0xff]
        %v5483 = vld [vmem:[#allocation2 + $0xa0] sm:$0xff]
        %v5484 = vld [vmem:[#allocation2 + $0xa8] sm:$0xff]
        %v5485 = vld [vmem:[#allocation2 + $0xb0] sm:$0xff]
        %v5486 = vld [vmem:[#allocation2 + $0xb8] sm:$0xff]
        %v5487 = vld [vmem:[#allocation2 + $0xc0] sm:$0xff]
        %v5488 = vld [vmem:[#allocation2 + $0xc8] sm:$0xff]
        %v5489 = vld [vmem:[#allocation2 + $0xd0] sm:$0xff]
        %v5490 = vld [vmem:[#allocation2 + $0xd8] sm:$0xff]
        %v5491 = vld [vmem:[#allocation2 + $0xe0] sm:$0xff]
        %v5492 = vld [vmem:[#allocation2 + $0xe8] sm:$0xff]
        %v5493 = vld [vmem:[#allocation2 + $0xf0] sm:$0xff]
        %v5494 = vld [vmem:[#allocation2 + $0xf8] sm:$0xff]
        %v5495 = vld [vmem:[#allocation2 + $0x100] sm:$0xff]
        %v5496 = vld [vmem:[#allocation2 + $0x108] sm:$0xff]
        %v5497 = vld [vmem:[#allocation2 + $0x110] sm:$0xff]
        %v5498 = vld [vmem:[#allocation2 + $0x118] sm:$0xff]
        %v5499 = vld [vmem:[#allocation2 + $0x120] sm:$0xff]
        %v5500 = vld [vmem:[#allocation2 + $0x128] sm:$0xff]
        %v5501 = vld [vmem:[#allocation2 + $0x130] sm:$0xff]
        %v5502 = vld [vmem:[#allocation2 + $0x138] sm:$0xff]
        %v5503 = vld [vmem:[#allocation2 + $0x140] sm:$0xff]
        %v5504 = vld [vmem:[#allocation2 + $0x148] sm:$0xff]
        %v5505 = vld [vmem:[#allocation2 + $0x150] sm:$0xff]
        %v5506 = vld [vmem:[#allocation2 + $0x158] sm:$0xff]
        %v5507 = vld [vmem:[#allocation2 + $0x160] sm:$0xff]
        %v5508 = vld [vmem:[#allocation2 + $0x168] sm:$0xff]
        %v5509 = vld [vmem:[#allocation2 + $0x170] sm:$0xff]
        %v5510 = vld [vmem:[#allocation2 + $0x178] sm:$0xff]
        %v5511 = vld [vmem:[#allocation2 + $0x180] sm:$0xff]
        %v5512 = vld [vmem:[#allocation2 + $0x188] sm:$0xff]
        %v5513 = vld [vmem:[#allocation2 + $0x190] sm:$0xff]
        %v5514 = vld [vmem:[#allocation2 + $0x198] sm:$0xff]
        %v5515 = vld [vmem:[#allocation2 + $0x1a0] sm:$0xff]
        %v5516 = vld [vmem:[#allocation2 + $0x1a8] sm:$0xff]
        %v5517 = vld [vmem:[#allocation2 + $0x1b0] sm:$0xff]
        %v5518 = vld [vmem:[#allocation2 + $0x1b8] sm:$0xff]
        %v5519 = vld [vmem:[#allocation2 + $0x1c0] sm:$0xff]
        %v5520 = vld [vmem:[#allocation2 + $0x1c8] sm:$0xff]
        %v5521 = vld [vmem:[#allocation2 + $0x1d0] sm:$0xff]
        %v5522 = vld [vmem:[#allocation2 + $0x1d8] sm:$0xff]
        %v5523 = vld [vmem:[#allocation2 + $0x1e0] sm:$0xff]
        %v5524 = vld [vmem:[#allocation2 + $0x1e8] sm:$0xff]
        %v5525 = vld [vmem:[#allocation2 + $0x1f0] sm:$0xff]
        %v5526 = vld [vmem:[#allocation2 + $0x1f8] sm:$0xff]
        %v5527 = vld [vmem:[#allocation8] sm:$0xff]
        %v5528 = vld [vmem:[#allocation8 + $0x8] sm:$0xff]
        %v5529 = vld [vmem:[#allocation8 + $0x10] sm:$0xff]
        %v5530 = vld [vmem:[#allocation8 + $0x18] sm:$0xff]
        %v5531 = vld [vmem:[#allocation8 + $0x20] sm:$0xff]
        %v5532 = vld [vmem:[#allocation8 + $0x28] sm:$0xff]
        %v5533 = vld [vmem:[#allocation8 + $0x30] sm:$0xff]
        %v5534 = vld [vmem:[#allocation8 + $0x38] sm:$0xff]
        %v5535 = vld [vmem:[#allocation8 + $0x40] sm:$0xff]
        %v5536 = vld [vmem:[#allocation8 + $0x48] sm:$0xff]
        %v5537 = vld [vmem:[#allocation8 + $0x50] sm:$0xff]
        %v5538 = vld [vmem:[#allocation8 + $0x58] sm:$0xff]
        %v5539 = vld [vmem:[#allocation8 + $0x60] sm:$0xff]
        %v5540 = vld [vmem:[#allocation8 + $0x68] sm:$0xff]
        %v5541 = vld [vmem:[#allocation8 + $0x70] sm:$0xff]
        %v5542 = vld [vmem:[#allocation8 + $0x78] sm:$0xff]
        %v5543 = vld [vmem:[#allocation8 + $0x80] sm:$0xff]
        %v5544 = vld [vmem:[#allocation8 + $0x88] sm:$0xff]
        %v5545 = vld [vmem:[#allocation8 + $0x90] sm:$0xff]
        %v5546 = vld [vmem:[#allocation8 + $0x98] sm:$0xff]
        %v5547 = vld [vmem:[#allocation8 + $0xa0] sm:$0xff]
        %v5548 = vld [vmem:[#allocation8 + $0xa8] sm:$0xff]
        %v5549 = vld [vmem:[#allocation8 + $0xb0] sm:$0xff]
        %v5550 = vld [vmem:[#allocation8 + $0xb8] sm:$0xff]
        %v5551 = vld [vmem:[#allocation8 + $0xc0] sm:$0xff]
        %v5552 = vld [vmem:[#allocation8 + $0xc8] sm:$0xff]
        %v5553 = vld [vmem:[#allocation8 + $0xd0] sm:$0xff]
        %v5554 = vld [vmem:[#allocation8 + $0xd8] sm:$0xff]
        %v5555 = vld [vmem:[#allocation8 + $0xe0] sm:$0xff]
        %v5556 = vld [vmem:[#allocation8 + $0xe8] sm:$0xff]
        %v5557 = vld [vmem:[#allocation8 + $0xf0] sm:$0xff]
        %v5558 = vld [vmem:[#allocation8 + $0xf8] sm:$0xff]
        %v5559 = vld [vmem:[#allocation8 + $0x100] sm:$0xff]
        %v5560 = vld [vmem:[#allocation8 + $0x108] sm:$0xff]
        %v5561 = vld [vmem:[#allocation8 + $0x110] sm:$0xff]
        %v5562 = vld [vmem:[#allocation8 + $0x118] sm:$0xff]
        %v5563 = vld [vmem:[#allocation8 + $0x120] sm:$0xff]
        %v5564 = vld [vmem:[#allocation8 + $0x128] sm:$0xff]
        %v5565 = vld [vmem:[#allocation8 + $0x130] sm:$0xff]
        %v5566 = vld [vmem:[#allocation8 + $0x138] sm:$0xff]
        %v5567 = vld [vmem:[#allocation8 + $0x140] sm:$0xff]
        %v5568 = vld [vmem:[#allocation8 + $0x148] sm:$0xff]
        %v5569 = vld [vmem:[#allocation8 + $0x150] sm:$0xff]
        %v5570 = vld [vmem:[#allocation8 + $0x158] sm:$0xff]
        %v5571 = vld [vmem:[#allocation8 + $0x160] sm:$0xff]
        %v5572 = vld [vmem:[#allocation8 + $0x168] sm:$0xff]
        %v5573 = vld [vmem:[#allocation8 + $0x170] sm:$0xff]
        %v5574 = vld [vmem:[#allocation8 + $0x178] sm:$0xff]
        %v5575 = vld [vmem:[#allocation8 + $0x180] sm:$0xff]
        %v5576 = vld [vmem:[#allocation8 + $0x188] sm:$0xff]
        %v5577 = vld [vmem:[#allocation8 + $0x190] sm:$0xff]
        %v5578 = vld [vmem:[#allocation8 + $0x198] sm:$0xff]
        %v5579 = vld [vmem:[#allocation8 + $0x1a0] sm:$0xff]
        %v5580 = vld [vmem:[#allocation8 + $0x1a8] sm:$0xff]
        %v5581 = vld [vmem:[#allocation8 + $0x1b0] sm:$0xff]
        %v5582 = vld [vmem:[#allocation8 + $0x1b8] sm:$0xff]
        %v5583 = vld [vmem:[#allocation8 + $0x1c0] sm:$0xff]
        %v5584 = vld [vmem:[#allocation8 + $0x1c8] sm:$0xff]
        %v5585 = vld [vmem:[#allocation8 + $0x1d0] sm:$0xff]
        %v5586 = vld [vmem:[#allocation8 + $0x1d8] sm:$0xff]
        %v5587 = vld [vmem:[#allocation8 + $0x1e0] sm:$0xff]
        %v5588 = vld [vmem:[#allocation8 + $0x1e8] sm:$0xff]
        %v5589 = vld [vmem:[#allocation8 + $0x1f0] sm:$0xff]
        %v5590 = vld [vmem:[#allocation8 + $0x1f8] sm:$0xff]
        %v5655 = vunpack.c.l.b16 %v5527
        %v5656 = vunpack.c.h.b16 %v5527
        %v5657 = vunpack.c.l.b16 %v5528
        %v5658 = vunpack.c.h.b16 %v5528
        %v5659 = vunpack.c.l.b16 %v5529
        %v5660 = vunpack.c.h.b16 %v5529
        %v5661 = vunpack.c.l.b16 %v5530
        %v5662 = vunpack.c.h.b16 %v5530
        %v5663 = vunpack.c.l.b16 %v5531
        %v5664 = vunpack.c.h.b16 %v5531
        %v5665 = vunpack.c.l.b16 %v5532
        %v5666 = vunpack.c.h.b16 %v5532
        %v5667 = vunpack.c.l.b16 %v5533
        %v5668 = vunpack.c.h.b16 %v5533
        %v5669 = vunpack.c.l.b16 %v5534
        %v5670 = vunpack.c.h.b16 %v5534
        %v5671 = vunpack.c.l.b16 %v5535
        %v5672 = vunpack.c.h.b16 %v5535
        %v5673 = vunpack.c.l.b16 %v5536
        %v5674 = vunpack.c.h.b16 %v5536
        %v5675 = vunpack.c.l.b16 %v5537
        %v5676 = vunpack.c.h.b16 %v5537
        %v5677 = vunpack.c.l.b16 %v5538
        %v5678 = vunpack.c.h.b16 %v5538
        %v5679 = vunpack.c.l.b16 %v5539
        %v5680 = vunpack.c.h.b16 %v5539
        %v5681 = vunpack.c.l.b16 %v5540
        %v5682 = vunpack.c.h.b16 %v5540
        %v5683 = vunpack.c.l.b16 %v5541
        %v5684 = vunpack.c.h.b16 %v5541
        %v5685 = vunpack.c.l.b16 %v5542
        %v5686 = vunpack.c.h.b16 %v5542
        %v5687 = vunpack.c.l.b16 %v5543
        %v5688 = vunpack.c.h.b16 %v5543
        %v5689 = vunpack.c.l.b16 %v5544
        %v5690 = vunpack.c.h.b16 %v5544
        %v5691 = vunpack.c.l.b16 %v5545
        %v5692 = vunpack.c.h.b16 %v5545
        %v5693 = vunpack.c.l.b16 %v5546
        %v5694 = vunpack.c.h.b16 %v5546
        %v5695 = vunpack.c.l.b16 %v5547
        %v5696 = vunpack.c.h.b16 %v5547
        %v5697 = vunpack.c.l.b16 %v5548
        %v5698 = vunpack.c.h.b16 %v5548
        %v5699 = vunpack.c.l.b16 %v5549
        %v5700 = vunpack.c.h.b16 %v5549
        %v5701 = vunpack.c.l.b16 %v5550
        %v5702 = vunpack.c.h.b16 %v5550
        %v5703 = vunpack.c.l.b16 %v5551
        %v5704 = vunpack.c.h.b16 %v5551
        %v5705 = vunpack.c.l.b16 %v5552
        %v5706 = vunpack.c.h.b16 %v5552
        %v5707 = vunpack.c.l.b16 %v5553
        %v5708 = vunpack.c.h.b16 %v5553
        %v5709 = vunpack.c.l.b16 %v5554
        %v5710 = vunpack.c.h.b16 %v5554
        %v5711 = vunpack.c.l.b16 %v5555
        %v5712 = vunpack.c.h.b16 %v5555
        %v5713 = vunpack.c.l.b16 %v5556
        %v5714 = vunpack.c.h.b16 %v5556
        %v5715 = vunpack.c.l.b16 %v5557
        %v5716 = vunpack.c.h.b16 %v5557
        %v5717 = vunpack.c.l.b16 %v5558
        %v5718 = vunpack.c.h.b16 %v5558
        %v5719 = vunpack.c.l.b16 %v5559
        %v5720 = vunpack.c.h.b16 %v5559
        %v5721 = vunpack.c.l.b16 %v5560
        %v5722 = vunpack.c.h.b16 %v5560
        %v5723 = vunpack.c.l.b16 %v5561
        %v5724 = vunpack.c.h.b16 %v5561
        %v5725 = vunpack.c.l.b16 %v5562
        %v5726 = vunpack.c.h.b16 %v5562
        %v5727 = vunpack.c.l.b16 %v5563
        %v5728 = vunpack.c.h.b16 %v5563
        %v5729 = vunpack.c.l.b16 %v5564
        %v5730 = vunpack.c.h.b16 %v5564
        %v5731 = vunpack.c.l.b16 %v5565
        %v5732 = vunpack.c.h.b16 %v5565
        %v5733 = vunpack.c.l.b16 %v5566
        %v5734 = vunpack.c.h.b16 %v5566
        %v5735 = vunpack.c.l.b16 %v5567
        %v5736 = vunpack.c.h.b16 %v5567
        %v5737 = vunpack.c.l.b16 %v5568
        %v5738 = vunpack.c.h.b16 %v5568
        %v5739 = vunpack.c.l.b16 %v5569
        %v5740 = vunpack.c.h.b16 %v5569
        %v5741 = vunpack.c.l.b16 %v5570
        %v5742 = vunpack.c.h.b16 %v5570
        %v5743 = vunpack.c.l.b16 %v5571
        %v5744 = vunpack.c.h.b16 %v5571
        %v5745 = vunpack.c.l.b16 %v5572
        %v5746 = vunpack.c.h.b16 %v5572
        %v5747 = vunpack.c.l.b16 %v5573
        %v5748 = vunpack.c.h.b16 %v5573
        %v5749 = vunpack.c.l.b16 %v5574
        %v5750 = vunpack.c.h.b16 %v5574
        %v5751 = vunpack.c.l.b16 %v5575
        %v5752 = vunpack.c.h.b16 %v5575
        %v5753 = vunpack.c.l.b16 %v5576
        %v5754 = vunpack.c.h.b16 %v5576
        %v5755 = vunpack.c.l.b16 %v5577
        %v5756 = vunpack.c.h.b16 %v5577
        %v5757 = vunpack.c.l.b16 %v5578
        %v5758 = vunpack.c.h.b16 %v5578
        %v5759 = vunpack.c.l.b16 %v5579
        %v5760 = vunpack.c.h.b16 %v5579
        %v5761 = vunpack.c.l.b16 %v5580
        %v5762 = vunpack.c.h.b16 %v5580
        %v5763 = vunpack.c.l.b16 %v5581
        %v5764 = vunpack.c.h.b16 %v5581
        %v5765 = vunpack.c.l.b16 %v5582
        %v5766 = vunpack.c.h.b16 %v5582
        %v5767 = vunpack.c.l.b16 %v5583
        %v5768 = vunpack.c.h.b16 %v5583
        %v5769 = vunpack.c.l.b16 %v5584
        %v5770 = vunpack.c.h.b16 %v5584
        %v5771 = vunpack.c.l.b16 %v5585
        %v5772 = vunpack.c.h.b16 %v5585
        %v5773 = vunpack.c.l.b16 %v5586
        %v5774 = vunpack.c.h.b16 %v5586
        %v5775 = vunpack.c.l.b16 %v5587
        %v5776 = vunpack.c.h.b16 %v5587
        %v5777 = vunpack.c.l.b16 %v5588
        %v5778 = vunpack.c.h.b16 %v5588
        %v5779 = vunpack.c.l.b16 %v5589
        %v5780 = vunpack.c.h.b16 %v5589
        %v5781 = vunpack.c.l.b16 %v5590
        %v5782 = vunpack.c.h.b16 %v5590
        %v5783 = vpack.c.b16 %v5657, %v5655
        %v5784 = vpack.c.b16 %v5658, %v5656
        %v5785 = vpack.c.b16 %v5661, %v5659
        %v5786 = vpack.c.b16 %v5662, %v5660
        %v5787 = vpack.c.b16 %v5665, %v5663
        %v5788 = vpack.c.b16 %v5666, %v5664
        %v5789 = vpack.c.b16 %v5669, %v5667
        %v5790 = vpack.c.b16 %v5670, %v5668
        %v5791 = vpack.c.b16 %v5673, %v5671
        %v5792 = vpack.c.b16 %v5674, %v5672
        %v5793 = vpack.c.b16 %v5677, %v5675
        %v5794 = vpack.c.b16 %v5678, %v5676
        %v5795 = vpack.c.b16 %v5681, %v5679
        %v5796 = vpack.c.b16 %v5682, %v5680
        %v5797 = vpack.c.b16 %v5685, %v5683
        %v5798 = vpack.c.b16 %v5686, %v5684
        %v5799 = vpack.c.b16 %v5689, %v5687
        %v5800 = vpack.c.b16 %v5690, %v5688
        %v5801 = vpack.c.b16 %v5693, %v5691
        %v5802 = vpack.c.b16 %v5694, %v5692
        %v5803 = vpack.c.b16 %v5697, %v5695
        %v5804 = vpack.c.b16 %v5698, %v5696
        %v5805 = vpack.c.b16 %v5701, %v5699
        %v5806 = vpack.c.b16 %v5702, %v5700
        %v5807 = vpack.c.b16 %v5705, %v5703
        %v5808 = vpack.c.b16 %v5706, %v5704
        %v5809 = vpack.c.b16 %v5709, %v5707
        %v5810 = vpack.c.b16 %v5710, %v5708
        %v5811 = vpack.c.b16 %v5713, %v5711
        %v5812 = vpack.c.b16 %v5714, %v5712
        %v5813 = vpack.c.b16 %v5717, %v5715
        %v5814 = vpack.c.b16 %v5718, %v5716
        %v5815 = vpack.c.b16 %v5721, %v5719
        %v5816 = vpack.c.b16 %v5722, %v5720
        %v5817 = vpack.c.b16 %v5725, %v5723
        %v5818 = vpack.c.b16 %v5726, %v5724
        %v5819 = vpack.c.b16 %v5729, %v5727
        %v5820 = vpack.c.b16 %v5730, %v5728
        %v5821 = vpack.c.b16 %v5733, %v5731
        %v5822 = vpack.c.b16 %v5734, %v5732
        %v5823 = vpack.c.b16 %v5737, %v5735
        %v5824 = vpack.c.b16 %v5738, %v5736
        %v5825 = vpack.c.b16 %v5741, %v5739
        %v5826 = vpack.c.b16 %v5742, %v5740
        %v5827 = vpack.c.b16 %v5745, %v5743
        %v5828 = vpack.c.b16 %v5746, %v5744
        %v5829 = vpack.c.b16 %v5749, %v5747
        %v5830 = vpack.c.b16 %v5750, %v5748
        %v5831 = vpack.c.b16 %v5753, %v5751
        %v5832 = vpack.c.b16 %v5754, %v5752
        %v5833 = vpack.c.b16 %v5757, %v5755
        %v5834 = vpack.c.b16 %v5758, %v5756
        %v5835 = vpack.c.b16 %v5761, %v5759
        %v5836 = vpack.c.b16 %v5762, %v5760
        %v5837 = vpack.c.b16 %v5765, %v5763
        %v5838 = vpack.c.b16 %v5766, %v5764
        %v5839 = vpack.c.b16 %v5769, %v5767
        %v5840 = vpack.c.b16 %v5770, %v5768
        %v5841 = vpack.c.b16 %v5773, %v5771
        %v5842 = vpack.c.b16 %v5774, %v5772
        %v5843 = vpack.c.b16 %v5777, %v5775
        %v5844 = vpack.c.b16 %v5778, %v5776
        %v5845 = vpack.c.b16 %v5781, %v5779
        %v5846 = vpack.c.b16 %v5782, %v5780
        %5911 = vmatpush.bf16.msra.mxu0 %v5797
        %5912 = vmatpush.bf16.msra.mxu0 %v5795
        %5913 = vmatpush.bf16.msra.mxu0 %v5793
        %5914 = vmatpush.bf16.msra.mxu0 %v5791
        %5915 = vmatpush.bf16.msra.mxu0 %v5789
        %5916 = vmatpush.bf16.msra.mxu0 %v5787
        %5917 = vmatpush.bf16.msra.mxu0 %v5785
        %5918 = vmatpush.bf16.msra.mxu0 %v5783
        %5919 = vmatmul.bf16.gmra.mxu0 %v5399
        %v5920 = vpop.f32.mrf.mxu0
        %v5921 = vadd.f32 0.0, %v5920
        %v5922 = vpop.f32.mrf.mxu0
        %v5923 = vadd.f32 0.0, %v5922
        %5924 = vmatmul.bf16.gmra.mxu0 %v5403
        %v5925 = vpop.f32.mrf.mxu0
        %v5926 = vadd.f32 0.0, %v5925
        %v5927 = vpop.f32.mrf.mxu0
        %v5928 = vadd.f32 0.0, %v5927
        %5929 = vmatmul.bf16.gmra.mxu0 %v5407
        %v5930 = vpop.f32.mrf.mxu0
        %v5931 = vadd.f32 0.0, %v5930
        %v5932 = vpop.f32.mrf.mxu0
        %v5933 = vadd.f32 0.0, %v5932
        %5934 = vmatmul.bf16.gmra.mxu0 %v5411
        %v5935 = vpop.f32.mrf.mxu0
        %v5936 = vadd.f32 0.0, %v5935
        %v5937 = vpop.f32.mrf.mxu0
        %v5938 = vadd.f32 0.0, %v5937
        %5939 = vmatmul.bf16.gmra.mxu0 %v5415
        %v5940 = vpop.f32.mrf.mxu0
        %v5941 = vadd.f32 0.0, %v5940
        %v5942 = vpop.f32.mrf.mxu0
        %v5943 = vadd.f32 0.0, %v5942
        %5944 = vmatmul.bf16.gmra.mxu0 %v5419
        %v5945 = vpop.f32.mrf.mxu0
        %v5946 = vadd.f32 0.0, %v5945
        %v5947 = vpop.f32.mrf.mxu0
        %v5948 = vadd.f32 0.0, %v5947
        %5949 = vmatmul.bf16.gmra.mxu0 %v5423
        %v5950 = vpop.f32.mrf.mxu0
        %v5951 = vadd.f32 0.0, %v5950
        %v5952 = vpop.f32.mrf.mxu0
        %v5953 = vadd.f32 0.0, %v5952
        %5954 = vmatmul.bf16.gmra.mxu0 %v5427
        %v5955 = vpop.f32.mrf.mxu0
        %v5956 = vadd.f32 0.0, %v5955
        %v5957 = vpop.f32.mrf.mxu0
        %v5958 = vadd.f32 0.0, %v5957
        %5959 = vmatmul.bf16.gmra.mxu0 %v5431
        %v5960 = vpop.f32.mrf.mxu0
        %v5961 = vadd.f32 0.0, %v5960
        %v5962 = vpop.f32.mrf.mxu0
        %v5963 = vadd.f32 0.0, %v5962
        %5964 = vmatmul.bf16.gmra.mxu0 %v5435
        %v5965 = vpop.f32.mrf.mxu0
        %v5966 = vadd.f32 0.0, %v5965
        %v5967 = vpop.f32.mrf.mxu0
        %v5968 = vadd.f32 0.0, %v5967
        %5969 = vmatmul.bf16.gmra.mxu0 %v5439
        %v5970 = vpop.f32.mrf.mxu0
        %v5971 = vadd.f32 0.0, %v5970
        %v5972 = vpop.f32.mrf.mxu0
        %v5973 = vadd.f32 0.0, %v5972
        %5974 = vmatmul.bf16.gmra.mxu0 %v5443
        %v5975 = vpop.f32.mrf.mxu0
        %v5976 = vadd.f32 0.0, %v5975
        %v5977 = vpop.f32.mrf.mxu0
        %v5978 = vadd.f32 0.0, %v5977
        %5979 = vmatmul.bf16.gmra.mxu0 %v5447
        %v5980 = vpop.f32.mrf.mxu0
        %v5981 = vadd.f32 0.0, %v5980
        %v5982 = vpop.f32.mrf.mxu0
        %v5983 = vadd.f32 0.0, %v5982
        %5984 = vmatmul.bf16.gmra.mxu0 %v5451
        %v5985 = vpop.f32.mrf.mxu0
        %v5986 = vadd.f32 0.0, %v5985
        %v5987 = vpop.f32.mrf.mxu0
        %v5988 = vadd.f32 0.0, %v5987
        %5989 = vmatmul.bf16.gmra.mxu0 %v5455
        %v5990 = vpop.f32.mrf.mxu0
        %v5991 = vadd.f32 0.0, %v5990
        %v5992 = vpop.f32.mrf.mxu0
        %v5993 = vadd.f32 0.0, %v5992
        %5994 = vmatmul.bf16.gmra.mxu0 %v5459
        %v5995 = vpop.f32.mrf.mxu0
        %v5996 = vadd.f32 0.0, %v5995
        %v5997 = vpop.f32.mrf.mxu0
        %v5998 = vadd.f32 0.0, %v5997
        %5999 = vdwg.mxu0
        %6000 = vmatpush.bf16.msra.mxu0 %v5813
        %6001 = vmatpush.bf16.msra.mxu0 %v5811
        %6002 = vmatpush.bf16.msra.mxu0 %v5809
        %6003 = vmatpush.bf16.msra.mxu0 %v5807
        %6004 = vmatpush.bf16.msra.mxu0 %v5805
        %6005 = vmatpush.bf16.msra.mxu0 %v5803
        %6006 = vmatpush.bf16.msra.mxu0 %v5801
        %6007 = vmatpush.bf16.msra.mxu0 %v5799
        %6008 = vmatmul.bf16.gmra.mxu0 %v5400
        %v6009 = vpop.f32.mrf.mxu0
        %v6010 = vadd.f32 %v5921, %v6009
        %v6011 = vpop.f32.mrf.mxu0
        %v6012 = vadd.f32 %v5923, %v6011
        %6013 = vmatmul.bf16.gmra.mxu0 %v5404
        %v6014 = vpop.f32.mrf.mxu0
        %v6015 = vadd.f32 %v5926, %v6014
        %v6016 = vpop.f32.mrf.mxu0
        %v6017 = vadd.f32 %v5928, %v6016
        %6018 = vmatmul.bf16.gmra.mxu0 %v5408
        %v6019 = vpop.f32.mrf.mxu0
        %v6020 = vadd.f32 %v5931, %v6019
        %v6021 = vpop.f32.mrf.mxu0
        %v6022 = vadd.f32 %v5933, %v6021
        %6023 = vmatmul.bf16.gmra.mxu0 %v5412
        %v6024 = vpop.f32.mrf.mxu0
        %v6025 = vadd.f32 %v5936, %v6024
        %v6026 = vpop.f32.mrf.mxu0
        %v6027 = vadd.f32 %v5938, %v6026
        %6028 = vmatmul.bf16.gmra.mxu0 %v5416
        %v6029 = vpop.f32.mrf.mxu0
        %v6030 = vadd.f32 %v5941, %v6029
        %v6031 = vpop.f32.mrf.mxu0
        %v6032 = vadd.f32 %v5943, %v6031
        %6033 = vmatmul.bf16.gmra.mxu0 %v5420
        %v6034 = vpop.f32.mrf.mxu0
        %v6035 = vadd.f32 %v5946, %v6034
        %v6036 = vpop.f32.mrf.mxu0
        %v6037 = vadd.f32 %v5948, %v6036
        %6038 = vmatmul.bf16.gmra.mxu0 %v5424
        %v6039 = vpop.f32.mrf.mxu0
        %v6040 = vadd.f32 %v5951, %v6039
        %v6041 = vpop.f32.mrf.mxu0
        %v6042 = vadd.f32 %v5953, %v6041
        %6043 = vmatmul.bf16.gmra.mxu0 %v5428
        %v6044 = vpop.f32.mrf.mxu0
        %v6045 = vadd.f32 %v5956, %v6044
        %v6046 = vpop.f32.mrf.mxu0
        %v6047 = vadd.f32 %v5958, %v6046
        %6048 = vmatmul.bf16.gmra.mxu0 %v5432
        %v6049 = vpop.f32.mrf.mxu0
        %v6050 = vadd.f32 %v5961, %v6049
        %v6051 = vpop.f32.mrf.mxu0
        %v6052 = vadd.f32 %v5963, %v6051
        %6053 = vmatmul.bf16.gmra.mxu0 %v5436
        %v6054 = vpop.f32.mrf.mxu0
        %v6055 = vadd.f32 %v5966, %v6054
        %v6056 = vpop.f32.mrf.mxu0
        %v6057 = vadd.f32 %v5968, %v6056
        %6058 = vmatmul.bf16.gmra.mxu0 %v5440
        %v6059 = vpop.f32.mrf.mxu0
        %v6060 = vadd.f32 %v5971, %v6059
        %v6061 = vpop.f32.mrf.mxu0
        %v6062 = vadd.f32 %v5973, %v6061
        %6063 = vmatmul.bf16.gmra.mxu0 %v5444
        %v6064 = vpop.f32.mrf.mxu0
        %v6065 = vadd.f32 %v5976, %v6064
        %v6066 = vpop.f32.mrf.mxu0
        %v6067 = vadd.f32 %v5978, %v6066
        %6068 = vmatmul.bf16.gmra.mxu0 %v5448
        %v6069 = vpop.f32.mrf.mxu0
        %v6070 = vadd.f32 %v5981, %v6069
        %v6071 = vpop.f32.mrf.mxu0
        %v6072 = vadd.f32 %v5983, %v6071
        %6073 = vmatmul.bf16.gmra.mxu0 %v5452
        %v6074 = vpop.f32.mrf.mxu0
        %v6075 = vadd.f32 %v5986, %v6074
        %v6076 = vpop.f32.mrf.mxu0
        %v6077 = vadd.f32 %v5988, %v6076
        %6078 = vmatmul.bf16.gmra.mxu0 %v5456
        %v6079 = vpop.f32.mrf.mxu0
        %v6080 = vadd.f32 %v5991, %v6079
        %v6081 = vpop.f32.mrf.mxu0
        %v6082 = vadd.f32 %v5993, %v6081
        %6083 = vmatmul.bf16.gmra.mxu0 %v5460
        %v6084 = vpop.f32.mrf.mxu0
        %v6085 = vadd.f32 %v5996, %v6084
        %v6086 = vpop.f32.mrf.mxu0
        %v6087 = vadd.f32 %v5998, %v6086
        %6088 = vdwg.mxu0
        %6089 = vmatpush.bf16.msra.mxu0 %v5829
        %6090 = vmatpush.bf16.msra.mxu0 %v5827
        %6091 = vmatpush.bf16.msra.mxu0 %v5825
        %6092 = vmatpush.bf16.msra.mxu0 %v5823
        %6093 = vmatpush.bf16.msra.mxu0 %v5821
        %6094 = vmatpush.bf16.msra.mxu0 %v5819
        %6095 = vmatpush.bf16.msra.mxu0 %v5817
        %6096 = vmatpush.bf16.msra.mxu0 %v5815
        %6097 = vmatmul.bf16.gmra.mxu0 %v5401
        %v6098 = vpop.f32.mrf.mxu0
        %v6099 = vadd.f32 %v6010, %v6098
        %v6100 = vpop.f32.mrf.mxu0
        %v6101 = vadd.f32 %v6012, %v6100
        %6102 = vmatmul.bf16.gmra.mxu0 %v5405
        %v6103 = vpop.f32.mrf.mxu0
        %v6104 = vadd.f32 %v6015, %v6103
        %v6105 = vpop.f32.mrf.mxu0
        %v6106 = vadd.f32 %v6017, %v6105
        %6107 = vmatmul.bf16.gmra.mxu0 %v5409
        %v6108 = vpop.f32.mrf.mxu0
        %v6109 = vadd.f32 %v6020, %v6108
        %v6110 = vpop.f32.mrf.mxu0
        %v6111 = vadd.f32 %v6022, %v6110
        %6112 = vmatmul.bf16.gmra.mxu0 %v5413
        %v6113 = vpop.f32.mrf.mxu0
        %v6114 = vadd.f32 %v6025, %v6113
        %v6115 = vpop.f32.mrf.mxu0
        %v6116 = vadd.f32 %v6027, %v6115
        %6117 = vmatmul.bf16.gmra.mxu0 %v5417
        %v6118 = vpop.f32.mrf.mxu0
        %v6119 = vadd.f32 %v6030, %v6118
        %v6120 = vpop.f32.mrf.mxu0
        %v6121 = vadd.f32 %v6032, %v6120
        %6122 = vmatmul.bf16.gmra.mxu0 %v5421
        %v6123 = vpop.f32.mrf.mxu0
        %v6124 = vadd.f32 %v6035, %v6123
        %v6125 = vpop.f32.mrf.mxu0
        %v6126 = vadd.f32 %v6037, %v6125
        %6127 = vmatmul.bf16.gmra.mxu0 %v5425
        %v6128 = vpop.f32.mrf.mxu0
        %v6129 = vadd.f32 %v6040, %v6128
        %v6130 = vpop.f32.mrf.mxu0
        %v6131 = vadd.f32 %v6042, %v6130
        %6132 = vmatmul.bf16.gmra.mxu0 %v5429
        %v6133 = vpop.f32.mrf.mxu0
        %v6134 = vadd.f32 %v6045, %v6133
        %v6135 = vpop.f32.mrf.mxu0
        %v6136 = vadd.f32 %v6047, %v6135
        %6137 = vmatmul.bf16.gmra.mxu0 %v5433
        %v6138 = vpop.f32.mrf.mxu0
        %v6139 = vadd.f32 %v6050, %v6138
        %v6140 = vpop.f32.mrf.mxu0
        %v6141 = vadd.f32 %v6052, %v6140
        %6142 = vmatmul.bf16.gmra.mxu0 %v5437
        %v6143 = vpop.f32.mrf.mxu0
        %v6144 = vadd.f32 %v6055, %v6143
        %v6145 = vpop.f32.mrf.mxu0
        %v6146 = vadd.f32 %v6057, %v6145
        %6147 = vmatmul.bf16.gmra.mxu0 %v5441
        %v6148 = vpop.f32.mrf.mxu0
        %v6149 = vadd.f32 %v6060, %v6148
        %v6150 = vpop.f32.mrf.mxu0
        %v6151 = vadd.f32 %v6062, %v6150
        %6152 = vmatmul.bf16.gmra.mxu0 %v5445
        %v6153 = vpop.f32.mrf.mxu0
        %v6154 = vadd.f32 %v6065, %v6153
        %v6155 = vpop.f32.mrf.mxu0
        %v6156 = vadd.f32 %v6067, %v6155
        %6157 = vmatmul.bf16.gmra.mxu0 %v5449
        %v6158 = vpop.f32.mrf.mxu0
        %v6159 = vadd.f32 %v6070, %v6158
        %v6160 = vpop.f32.mrf.mxu0
        %v6161 = vadd.f32 %v6072, %v6160
        %6162 = vmatmul.bf16.gmra.mxu0 %v5453
        %v6163 = vpop.f32.mrf.mxu0
        %v6164 = vadd.f32 %v6075, %v6163
        %v6165 = vpop.f32.mrf.mxu0
        %v6166 = vadd.f32 %v6077, %v6165
        %6167 = vmatmul.bf16.gmra.mxu0 %v5457
        %v6168 = vpop.f32.mrf.mxu0
        %v6169 = vadd.f32 %v6080, %v6168
        %v6170 = vpop.f32.mrf.mxu0
        %v6171 = vadd.f32 %v6082, %v6170
        %6172 = vmatmul.bf16.gmra.mxu0 %v5461
        %v6173 = vpop.f32.mrf.mxu0
        %v6174 = vadd.f32 %v6085, %v6173
        %v6175 = vpop.f32.mrf.mxu0
        %v6176 = vadd.f32 %v6087, %v6175
        %6177 = vdwg.mxu0
        %6178 = vmatpush.bf16.msra.mxu0 %v5845
        %6179 = vmatpush.bf16.msra.mxu0 %v5843
        %6180 = vmatpush.bf16.msra.mxu0 %v5841
        %6181 = vmatpush.bf16.msra.mxu0 %v5839
        %6182 = vmatpush.bf16.msra.mxu0 %v5837
        %6183 = vmatpush.bf16.msra.mxu0 %v5835
        %6184 = vmatpush.bf16.msra.mxu0 %v5833
        %6185 = vmatpush.bf16.msra.mxu0 %v5831
        %6186 = vmatmul.bf16.gmra.mxu0 %v5402
        %v6187 = vpop.f32.mrf.mxu0
        %v6188 = vadd.f32 %v6099, %v6187
        %v6189 = vpop.f32.mrf.mxu0
        %v6190 = vadd.f32 %v6101, %v6189
        %6191 = vmatmul.bf16.gmra.mxu0 %v5406
        %v6192 = vpop.f32.mrf.mxu0
        %v6193 = vadd.f32 %v6104, %v6192
        %v6194 = vpop.f32.mrf.mxu0
        %v6195 = vadd.f32 %v6106, %v6194
        %6196 = vmatmul.bf16.gmra.mxu0 %v5410
        %v6197 = vpop.f32.mrf.mxu0
        %v6198 = vadd.f32 %v6109, %v6197
        %v6199 = vpop.f32.mrf.mxu0
        %v6200 = vadd.f32 %v6111, %v6199
        %6201 = vmatmul.bf16.gmra.mxu0 %v5414
        %v6202 = vpop.f32.mrf.mxu0
        %v6203 = vadd.f32 %v6114, %v6202
        %v6204 = vpop.f32.mrf.mxu0
        %v6205 = vadd.f32 %v6116, %v6204
        %6206 = vmatmul.bf16.gmra.mxu0 %v5418
        %v6207 = vpop.f32.mrf.mxu0
        %v6208 = vadd.f32 %v6119, %v6207
        %v6209 = vpop.f32.mrf.mxu0
        %v6210 = vadd.f32 %v6121, %v6209
        %6211 = vmatmul.bf16.gmra.mxu0 %v5422
        %v6212 = vpop.f32.mrf.mxu0
        %v6213 = vadd.f32 %v6124, %v6212
        %v6214 = vpop.f32.mrf.mxu0
        %v6215 = vadd.f32 %v6126, %v6214
        %6216 = vmatmul.bf16.gmra.mxu0 %v5426
        %v6217 = vpop.f32.mrf.mxu0
        %v6218 = vadd.f32 %v6129, %v6217
        %v6219 = vpop.f32.mrf.mxu0
        %v6220 = vadd.f32 %v6131, %v6219
        %6221 = vmatmul.bf16.gmra.mxu0 %v5430
        %v6222 = vpop.f32.mrf.mxu0
        %v6223 = vadd.f32 %v6134, %v6222
        %v6224 = vpop.f32.mrf.mxu0
        %v6225 = vadd.f32 %v6136, %v6224
        %6226 = vmatmul.bf16.gmra.mxu0 %v5434
        %v6227 = vpop.f32.mrf.mxu0
        %v6228 = vadd.f32 %v6139, %v6227
        %v6229 = vpop.f32.mrf.mxu0
        %v6230 = vadd.f32 %v6141, %v6229
        %6231 = vmatmul.bf16.gmra.mxu0 %v5438
        %v6232 = vpop.f32.mrf.mxu0
        %v6233 = vadd.f32 %v6144, %v6232
        %v6234 = vpop.f32.mrf.mxu0
        %v6235 = vadd.f32 %v6146, %v6234
        %6236 = vmatmul.bf16.gmra.mxu0 %v5442
        %v6237 = vpop.f32.mrf.mxu0
        %v6238 = vadd.f32 %v6149, %v6237
        %v6239 = vpop.f32.mrf.mxu0
        %v6240 = vadd.f32 %v6151, %v6239
        %6241 = vmatmul.bf16.gmra.mxu0 %v5446
        %v6242 = vpop.f32.mrf.mxu0
        %v6243 = vadd.f32 %v6154, %v6242
        %v6244 = vpop.f32.mrf.mxu0
        %v6245 = vadd.f32 %v6156, %v6244
        %6246 = vmatmul.bf16.gmra.mxu0 %v5450
        %v6247 = vpop.f32.mrf.mxu0
        %v6248 = vadd.f32 %v6159, %v6247
        %v6249 = vpop.f32.mrf.mxu0
        %v6250 = vadd.f32 %v6161, %v6249
        %6251 = vmatmul.bf16.gmra.mxu0 %v5454
        %v6252 = vpop.f32.mrf.mxu0
        %v6253 = vadd.f32 %v6164, %v6252
        %v6254 = vpop.f32.mrf.mxu0
        %v6255 = vadd.f32 %v6166, %v6254
        %6256 = vmatmul.bf16.gmra.mxu0 %v5458
        %v6257 = vpop.f32.mrf.mxu0
        %v6258 = vadd.f32 %v6169, %v6257
        %v6259 = vpop.f32.mrf.mxu0
        %v6260 = vadd.f32 %v6171, %v6259
        %6261 = vmatmul.bf16.gmra.mxu0 %v5462
        %v6262 = vpop.f32.mrf.mxu0
        %v6263 = vadd.f32 %v6174, %v6262
        %v6264 = vpop.f32.mrf.mxu0
        %v6265 = vadd.f32 %v6176, %v6264
        %6266 = vdwg.mxu0
        %6267 = vmatpush.bf16.msra.mxu0 %v5798
        %6268 = vmatpush.bf16.msra.mxu0 %v5796
        %6269 = vmatpush.bf16.msra.mxu0 %v5794
        %6270 = vmatpush.bf16.msra.mxu0 %v5792
        %6271 = vmatpush.bf16.msra.mxu0 %v5790
        %6272 = vmatpush.bf16.msra.mxu0 %v5788
        %6273 = vmatpush.bf16.msra.mxu0 %v5786
        %6274 = vmatpush.bf16.msra.mxu0 %v5784
        %6275 = vmatmul.bf16.gmra.mxu0 %v5399
        %v6276 = vpop.f32.mrf.mxu0
        %v6277 = vadd.f32 0.0, %v6276
        %v6278 = vpop.f32.mrf.mxu0
        %v6279 = vadd.f32 0.0, %v6278
        %6280 = vmatmul.bf16.gmra.mxu0 %v5403
        %v6281 = vpop.f32.mrf.mxu0
        %v6282 = vadd.f32 0.0, %v6281
        %v6283 = vpop.f32.mrf.mxu0
        %v6284 = vadd.f32 0.0, %v6283
        %6285 = vmatmul.bf16.gmra.mxu0 %v5407
        %v6286 = vpop.f32.mrf.mxu0
        %v6287 = vadd.f32 0.0, %v6286
        %v6288 = vpop.f32.mrf.mxu0
        %v6289 = vadd.f32 0.0, %v6288
        %6290 = vmatmul.bf16.gmra.mxu0 %v5411
        %v6291 = vpop.f32.mrf.mxu0
        %v6292 = vadd.f32 0.0, %v6291
        %v6293 = vpop.f32.mrf.mxu0
        %v6294 = vadd.f32 0.0, %v6293
        %6295 = vmatmul.bf16.gmra.mxu0 %v5415
        %v6296 = vpop.f32.mrf.mxu0
        %v6297 = vadd.f32 0.0, %v6296
        %v6298 = vpop.f32.mrf.mxu0
        %v6299 = vadd.f32 0.0, %v6298
        %6300 = vmatmul.bf16.gmra.mxu0 %v5419
        %v6301 = vpop.f32.mrf.mxu0
        %v6302 = vadd.f32 0.0, %v6301
        %v6303 = vpop.f32.mrf.mxu0
        %v6304 = vadd.f32 0.0, %v6303
        %6305 = vmatmul.bf16.gmra.mxu0 %v5423
        %v6306 = vpop.f32.mrf.mxu0
        %v6307 = vadd.f32 0.0, %v6306
        %v6308 = vpop.f32.mrf.mxu0
        %v6309 = vadd.f32 0.0, %v6308
        %6310 = vmatmul.bf16.gmra.mxu0 %v5427
        %v6311 = vpop.f32.mrf.mxu0
        %v6312 = vadd.f32 0.0, %v6311
        %v6313 = vpop.f32.mrf.mxu0
        %v6314 = vadd.f32 0.0, %v6313
        %6315 = vmatmul.bf16.gmra.mxu0 %v5431
        %v6316 = vpop.f32.mrf.mxu0
        %v6317 = vadd.f32 0.0, %v6316
        %v6318 = vpop.f32.mrf.mxu0
        %v6319 = vadd.f32 0.0, %v6318
        %6320 = vmatmul.bf16.gmra.mxu0 %v5435
        %v6321 = vpop.f32.mrf.mxu0
        %v6322 = vadd.f32 0.0, %v6321
        %v6323 = vpop.f32.mrf.mxu0
        %v6324 = vadd.f32 0.0, %v6323
        %6325 = vmatmul.bf16.gmra.mxu0 %v5439
        %v6326 = vpop.f32.mrf.mxu0
        %v6327 = vadd.f32 0.0, %v6326
        %v6328 = vpop.f32.mrf.mxu0
        %v6329 = vadd.f32 0.0, %v6328
        %6330 = vmatmul.bf16.gmra.mxu0 %v5443
        %v6331 = vpop.f32.mrf.mxu0
        %v6332 = vadd.f32 0.0, %v6331
        %v6333 = vpop.f32.mrf.mxu0
        %v6334 = vadd.f32 0.0, %v6333
        %6335 = vmatmul.bf16.gmra.mxu0 %v5447
        %v6336 = vpop.f32.mrf.mxu0
        %v6337 = vadd.f32 0.0, %v6336
        %v6338 = vpop.f32.mrf.mxu0
        %v6339 = vadd.f32 0.0, %v6338
        %6340 = vmatmul.bf16.gmra.mxu0 %v5451
        %v6341 = vpop.f32.mrf.mxu0
        %v6342 = vadd.f32 0.0, %v6341
        %v6343 = vpop.f32.mrf.mxu0
        %v6344 = vadd.f32 0.0, %v6343
        %6345 = vmatmul.bf16.gmra.mxu0 %v5455
        %v6346 = vpop.f32.mrf.mxu0
        %v6347 = vadd.f32 0.0, %v6346
        %v6348 = vpop.f32.mrf.mxu0
        %v6349 = vadd.f32 0.0, %v6348
        %6350 = vmatmul.bf16.gmra.mxu0 %v5459
        %v6351 = vpop.f32.mrf.mxu0
        %v6352 = vadd.f32 0.0, %v6351
        %v6353 = vpop.f32.mrf.mxu0
        %v6354 = vadd.f32 0.0, %v6353
        %6355 = vdwg.mxu0
        %6356 = vmatpush.bf16.msra.mxu0 %v5814
        %6357 = vmatpush.bf16.msra.mxu0 %v5812
        %6358 = vmatpush.bf16.msra.mxu0 %v5810
        %6359 = vmatpush.bf16.msra.mxu0 %v5808
        %6360 = vmatpush.bf16.msra.mxu0 %v5806
        %6361 = vmatpush.bf16.msra.mxu0 %v5804
        %6362 = vmatpush.bf16.msra.mxu0 %v5802
        %6363 = vmatpush.bf16.msra.mxu0 %v5800
        %6364 = vmatmul.bf16.gmra.mxu0 %v5400
        %v6365 = vpop.f32.mrf.mxu0
        %v6366 = vadd.f32 %v6277, %v6365
        %v6367 = vpop.f32.mrf.mxu0
        %v6368 = vadd.f32 %v6279, %v6367
        %6369 = vmatmul.bf16.gmra.mxu0 %v5404
        %v6370 = vpop.f32.mrf.mxu0
        %v6371 = vadd.f32 %v6282, %v6370
        %v6372 = vpop.f32.mrf.mxu0
        %v6373 = vadd.f32 %v6284, %v6372
        %6374 = vmatmul.bf16.gmra.mxu0 %v5408
        %v6375 = vpop.f32.mrf.mxu0
        %v6376 = vadd.f32 %v6287, %v6375
        %v6377 = vpop.f32.mrf.mxu0
        %v6378 = vadd.f32 %v6289, %v6377
        %6379 = vmatmul.bf16.gmra.mxu0 %v5412
        %v6380 = vpop.f32.mrf.mxu0
        %v6381 = vadd.f32 %v6292, %v6380
        %v6382 = vpop.f32.mrf.mxu0
        %v6383 = vadd.f32 %v6294, %v6382
        %6384 = vmatmul.bf16.gmra.mxu0 %v5416
        %v6385 = vpop.f32.mrf.mxu0
        %v6386 = vadd.f32 %v6297, %v6385
        %v6387 = vpop.f32.mrf.mxu0
        %v6388 = vadd.f32 %v6299, %v6387
        %6389 = vmatmul.bf16.gmra.mxu0 %v5420
        %v6390 = vpop.f32.mrf.mxu0
        %v6391 = vadd.f32 %v6302, %v6390
        %v6392 = vpop.f32.mrf.mxu0
        %v6393 = vadd.f32 %v6304, %v6392
        %6394 = vmatmul.bf16.gmra.mxu0 %v5424
        %v6395 = vpop.f32.mrf.mxu0
        %v6396 = vadd.f32 %v6307, %v6395
        %v6397 = vpop.f32.mrf.mxu0
        %v6398 = vadd.f32 %v6309, %v6397
        %6399 = vmatmul.bf16.gmra.mxu0 %v5428
        %v6400 = vpop.f32.mrf.mxu0
        %v6401 = vadd.f32 %v6312, %v6400
        %v6402 = vpop.f32.mrf.mxu0
        %v6403 = vadd.f32 %v6314, %v6402
        %6404 = vmatmul.bf16.gmra.mxu0 %v5432
        %v6405 = vpop.f32.mrf.mxu0
        %v6406 = vadd.f32 %v6317, %v6405
        %v6407 = vpop.f32.mrf.mxu0
        %v6408 = vadd.f32 %v6319, %v6407
        %6409 = vmatmul.bf16.gmra.mxu0 %v5436
        %v6410 = vpop.f32.mrf.mxu0
        %v6411 = vadd.f32 %v6322, %v6410
        %v6412 = vpop.f32.mrf.mxu0
        %v6413 = vadd.f32 %v6324, %v6412
        %6414 = vmatmul.bf16.gmra.mxu0 %v5440
        %v6415 = vpop.f32.mrf.mxu0
        %v6416 = vadd.f32 %v6327, %v6415
        %v6417 = vpop.f32.mrf.mxu0
        %v6418 = vadd.f32 %v6329, %v6417
        %6419 = vmatmul.bf16.gmra.mxu0 %v5444
        %v6420 = vpop.f32.mrf.mxu0
        %v6421 = vadd.f32 %v6332, %v6420
        %v6422 = vpop.f32.mrf.mxu0
        %v6423 = vadd.f32 %v6334, %v6422
        %6424 = vmatmul.bf16.gmra.mxu0 %v5448
        %v6425 = vpop.f32.mrf.mxu0
        %v6426 = vadd.f32 %v6337, %v6425
        %v6427 = vpop.f32.mrf.mxu0
        %v6428 = vadd.f32 %v6339, %v6427
        %6429 = vmatmul.bf16.gmra.mxu0 %v5452
        %v6430 = vpop.f32.mrf.mxu0
        %v6431 = vadd.f32 %v6342, %v6430
        %v6432 = vpop.f32.mrf.mxu0
        %v6433 = vadd.f32 %v6344, %v6432
        %6434 = vmatmul.bf16.gmra.mxu0 %v5456
        %v6435 = vpop.f32.mrf.mxu0
        %v6436 = vadd.f32 %v6347, %v6435
        %v6437 = vpop.f32.mrf.mxu0
        %v6438 = vadd.f32 %v6349, %v6437
        %6439 = vmatmul.bf16.gmra.mxu0 %v5460
        %v6440 = vpop.f32.mrf.mxu0
        %v6441 = vadd.f32 %v6352, %v6440
        %v6442 = vpop.f32.mrf.mxu0
        %v6443 = vadd.f32 %v6354, %v6442
        %6444 = vdwg.mxu0
        %6445 = vmatpush.bf16.msra.mxu0 %v5830
        %6446 = vmatpush.bf16.msra.mxu0 %v5828
        %6447 = vmatpush.bf16.msra.mxu0 %v5826
        %6448 = vmatpush.bf16.msra.mxu0 %v5824
        %6449 = vmatpush.bf16.msra.mxu0 %v5822
        %6450 = vmatpush.bf16.msra.mxu0 %v5820
        %6451 = vmatpush.bf16.msra.mxu0 %v5818
        %6452 = vmatpush.bf16.msra.mxu0 %v5816
        %6453 = vmatmul.bf16.gmra.mxu0 %v5401
        %v6454 = vpop.f32.mrf.mxu0
        %v6455 = vadd.f32 %v6366, %v6454
        %v6456 = vpop.f32.mrf.mxu0
        %v6457 = vadd.f32 %v6368, %v6456
        %6458 = vmatmul.bf16.gmra.mxu0 %v5405
        %v6459 = vpop.f32.mrf.mxu0
        %v6460 = vadd.f32 %v6371, %v6459
        %v6461 = vpop.f32.mrf.mxu0
        %v6462 = vadd.f32 %v6373, %v6461
        %6463 = vmatmul.bf16.gmra.mxu0 %v5409
        %v6464 = vpop.f32.mrf.mxu0
        %v6465 = vadd.f32 %v6376, %v6464
        %v6466 = vpop.f32.mrf.mxu0
        %v6467 = vadd.f32 %v6378, %v6466
        %6468 = vmatmul.bf16.gmra.mxu0 %v5413
        %v6469 = vpop.f32.mrf.mxu0
        %v6470 = vadd.f32 %v6381, %v6469
        %v6471 = vpop.f32.mrf.mxu0
        %v6472 = vadd.f32 %v6383, %v6471
        %6473 = vmatmul.bf16.gmra.mxu0 %v5417
        %v6474 = vpop.f32.mrf.mxu0
        %v6475 = vadd.f32 %v6386, %v6474
        %v6476 = vpop.f32.mrf.mxu0
        %v6477 = vadd.f32 %v6388, %v6476
        %6478 = vmatmul.bf16.gmra.mxu0 %v5421
        %v6479 = vpop.f32.mrf.mxu0
        %v6480 = vadd.f32 %v6391, %v6479
        %v6481 = vpop.f32.mrf.mxu0
        %v6482 = vadd.f32 %v6393, %v6481
        %6483 = vmatmul.bf16.gmra.mxu0 %v5425
        %v6484 = vpop.f32.mrf.mxu0
        %v6485 = vadd.f32 %v6396, %v6484
        %v6486 = vpop.f32.mrf.mxu0
        %v6487 = vadd.f32 %v6398, %v6486
        %6488 = vmatmul.bf16.gmra.mxu0 %v5429
        %v6489 = vpop.f32.mrf.mxu0
        %v6490 = vadd.f32 %v6401, %v6489
        %v6491 = vpop.f32.mrf.mxu0
        %v6492 = vadd.f32 %v6403, %v6491
        %6493 = vmatmul.bf16.gmra.mxu0 %v5433
        %v6494 = vpop.f32.mrf.mxu0
        %v6495 = vadd.f32 %v6406, %v6494
        %v6496 = vpop.f32.mrf.mxu0
        %v6497 = vadd.f32 %v6408, %v6496
        %6498 = vmatmul.bf16.gmra.mxu0 %v5437
        %v6499 = vpop.f32.mrf.mxu0
        %v6500 = vadd.f32 %v6411, %v6499
        %v6501 = vpop.f32.mrf.mxu0
        %v6502 = vadd.f32 %v6413, %v6501
        %6503 = vmatmul.bf16.gmra.mxu0 %v5441
        %v6504 = vpop.f32.mrf.mxu0
        %v6505 = vadd.f32 %v6416, %v6504
        %v6506 = vpop.f32.mrf.mxu0
        %v6507 = vadd.f32 %v6418, %v6506
        %6508 = vmatmul.bf16.gmra.mxu0 %v5445
        %v6509 = vpop.f32.mrf.mxu0
        %v6510 = vadd.f32 %v6421, %v6509
        %v6511 = vpop.f32.mrf.mxu0
        %v6512 = vadd.f32 %v6423, %v6511
        %6513 = vmatmul.bf16.gmra.mxu0 %v5449
        %v6514 = vpop.f32.mrf.mxu0
        %v6515 = vadd.f32 %v6426, %v6514
        %v6516 = vpop.f32.mrf.mxu0
        %v6517 = vadd.f32 %v6428, %v6516
        %6518 = vmatmul.bf16.gmra.mxu0 %v5453
        %v6519 = vpop.f32.mrf.mxu0
        %v6520 = vadd.f32 %v6431, %v6519
        %v6521 = vpop.f32.mrf.mxu0
        %v6522 = vadd.f32 %v6433, %v6521
        %6523 = vmatmul.bf16.gmra.mxu0 %v5457
        %v6524 = vpop.f32.mrf.mxu0
        %v6525 = vadd.f32 %v6436, %v6524
        %v6526 = vpop.f32.mrf.mxu0
        %v6527 = vadd.f32 %v6438, %v6526
        %6528 = vmatmul.bf16.gmra.mxu0 %v5461
        %v6529 = vpop.f32.mrf.mxu0
        %v6530 = vadd.f32 %v6441, %v6529
        %v6531 = vpop.f32.mrf.mxu0
        %v6532 = vadd.f32 %v6443, %v6531
        %6533 = vdwg.mxu0
        %6534 = vmatpush.bf16.msra.mxu0 %v5846
        %6535 = vmatpush.bf16.msra.mxu0 %v5844
        %6536 = vmatpush.bf16.msra.mxu0 %v5842
        %6537 = vmatpush.bf16.msra.mxu0 %v5840
        %6538 = vmatpush.bf16.msra.mxu0 %v5838
        %6539 = vmatpush.bf16.msra.mxu0 %v5836
        %6540 = vmatpush.bf16.msra.mxu0 %v5834
        %6541 = vmatpush.bf16.msra.mxu0 %v5832
        %6542 = vmatmul.bf16.gmra.mxu0 %v5402
        %v6543 = vpop.f32.mrf.mxu0
        %v6544 = vadd.f32 %v6455, %v6543
        %v6545 = vpop.f32.mrf.mxu0
        %v6546 = vadd.f32 %v6457, %v6545
        %6547 = vmatmul.bf16.gmra.mxu0 %v5406
        %v6548 = vpop.f32.mrf.mxu0
        %v6549 = vadd.f32 %v6460, %v6548
        %v6550 = vpop.f32.mrf.mxu0
        %v6551 = vadd.f32 %v6462, %v6550
        %6552 = vmatmul.bf16.gmra.mxu0 %v5410
        %v6553 = vpop.f32.mrf.mxu0
        %v6554 = vadd.f32 %v6465, %v6553
        %v6555 = vpop.f32.mrf.mxu0
        %v6556 = vadd.f32 %v6467, %v6555
        %6557 = vmatmul.bf16.gmra.mxu0 %v5414
        %v6558 = vpop.f32.mrf.mxu0
        %v6559 = vadd.f32 %v6470, %v6558
        %v6560 = vpop.f32.mrf.mxu0
        %v6561 = vadd.f32 %v6472, %v6560
        %6562 = vmatmul.bf16.gmra.mxu0 %v5418
        %v6563 = vpop.f32.mrf.mxu0
        %v6564 = vadd.f32 %v6475, %v6563
        %v6565 = vpop.f32.mrf.mxu0
        %v6566 = vadd.f32 %v6477, %v6565
        %6567 = vmatmul.bf16.gmra.mxu0 %v5422
        %v6568 = vpop.f32.mrf.mxu0
        %v6569 = vadd.f32 %v6480, %v6568
        %v6570 = vpop.f32.mrf.mxu0
        %v6571 = vadd.f32 %v6482, %v6570
        %6572 = vmatmul.bf16.gmra.mxu0 %v5426
        %v6573 = vpop.f32.mrf.mxu0
        %v6574 = vadd.f32 %v6485, %v6573
        %v6575 = vpop.f32.mrf.mxu0
        %v6576 = vadd.f32 %v6487, %v6575
        %6577 = vmatmul.bf16.gmra.mxu0 %v5430
        %v6578 = vpop.f32.mrf.mxu0
        %v6579 = vadd.f32 %v6490, %v6578
        %v6580 = vpop.f32.mrf.mxu0
        %v6581 = vadd.f32 %v6492, %v6580
        %6582 = vmatmul.bf16.gmra.mxu0 %v5434
        %v6583 = vpop.f32.mrf.mxu0
        %v6584 = vadd.f32 %v6495, %v6583
        %v6585 = vpop.f32.mrf.mxu0
        %v6586 = vadd.f32 %v6497, %v6585
        %6587 = vmatmul.bf16.gmra.mxu0 %v5438
        %v6588 = vpop.f32.mrf.mxu0
        %v6589 = vadd.f32 %v6500, %v6588
        %v6590 = vpop.f32.mrf.mxu0
        %v6591 = vadd.f32 %v6502, %v6590
        %6592 = vmatmul.bf16.gmra.mxu0 %v5442
        %v6593 = vpop.f32.mrf.mxu0
        %v6594 = vadd.f32 %v6505, %v6593
        %v6595 = vpop.f32.mrf.mxu0
        %v6596 = vadd.f32 %v6507, %v6595
        %6597 = vmatmul.bf16.gmra.mxu0 %v5446
        %v6598 = vpop.f32.mrf.mxu0
        %v6599 = vadd.f32 %v6510, %v6598
        %v6600 = vpop.f32.mrf.mxu0
        %v6601 = vadd.f32 %v6512, %v6600
        %6602 = vmatmul.bf16.gmra.mxu0 %v5450
        %v6603 = vpop.f32.mrf.mxu0
        %v6604 = vadd.f32 %v6515, %v6603
        %v6605 = vpop.f32.mrf.mxu0
        %v6606 = vadd.f32 %v6517, %v6605
        %6607 = vmatmul.bf16.gmra.mxu0 %v5454
        %v6608 = vpop.f32.mrf.mxu0
        %v6609 = vadd.f32 %v6520, %v6608
        %v6610 = vpop.f32.mrf.mxu0
        %v6611 = vadd.f32 %v6522, %v6610
        %6612 = vmatmul.bf16.gmra.mxu0 %v5458
        %v6613 = vpop.f32.mrf.mxu0
        %v6614 = vadd.f32 %v6525, %v6613
        %v6615 = vpop.f32.mrf.mxu0
        %v6616 = vadd.f32 %v6527, %v6615
        %6617 = vmatmul.bf16.gmra.mxu0 %v5462
        %v6618 = vpop.f32.mrf.mxu0
        %v6619 = vadd.f32 %v6530, %v6618
        %v6620 = vpop.f32.mrf.mxu0
        %v6621 = vadd.f32 %v6532, %v6620
        %6622 = vdwg.mxu0
        %v6623 = vadd.f32 %v5463, %v6188
        %v6624 = vadd.f32 %v5464, %v6544
        %v6625 = vadd.f32 %v5465, %v6190
        %v6626 = vadd.f32 %v5466, %v6546
        %v6627 = vadd.f32 %v5467, %v6193
        %v6628 = vadd.f32 %v5468, %v6549
        %v6629 = vadd.f32 %v5469, %v6195
        %v6630 = vadd.f32 %v5470, %v6551
        %v6631 = vadd.f32 %v5471, %v6198
        %v6632 = vadd.f32 %v5472, %v6554
        %v6633 = vadd.f32 %v5473, %v6200
        %v6634 = vadd.f32 %v5474, %v6556
        %v6635 = vadd.f32 %v5475, %v6203
        %v6636 = vadd.f32 %v5476, %v6559
        %v6637 = vadd.f32 %v5477, %v6205
        %v6638 = vadd.f32 %v5478, %v6561
        %v6639 = vadd.f32 %v5479, %v6208
        %v6640 = vadd.f32 %v5480, %v6564
        %v6641 = vadd.f32 %v5481, %v6210
        %v6642 = vadd.f32 %v5482, %v6566
        %v6643 = vadd.f32 %v5483, %v6213
        %v6644 = vadd.f32 %v5484, %v6569
        %v6645 = vadd.f32 %v5485, %v6215
        %v6646 = vadd.f32 %v5486, %v6571
        %v6647 = vadd.f32 %v5487, %v6218
        %v6648 = vadd.f32 %v5488, %v6574
        %v6649 = vadd.f32 %v5489, %v6220
        %v6650 = vadd.f32 %v5490, %v6576
        %v6651 = vadd.f32 %v5491, %v6223
        %v6652 = vadd.f32 %v5492, %v6579
        %v6653 = vadd.f32 %v5493, %v6225
        %v6654 = vadd.f32 %v5494, %v6581
        %v6655 = vadd.f32 %v5495, %v6228
        %v6656 = vadd.f32 %v5496, %v6584
        %v6657 = vadd.f32 %v5497, %v6230
        %v6658 = vadd.f32 %v5498, %v6586
        %v6659 = vadd.f32 %v5499, %v6233
        %v6660 = vadd.f32 %v5500, %v6589
        %v6661 = vadd.f32 %v5501, %v6235
        %v6662 = vadd.f32 %v5502, %v6591
        %v6663 = vadd.f32 %v5503, %v6238
        %v6664 = vadd.f32 %v5504, %v6594
        %v6665 = vadd.f32 %v5505, %v6240
        %v6666 = vadd.f32 %v5506, %v6596
        %v6667 = vadd.f32 %v5507, %v6243
        %v6668 = vadd.f32 %v5508, %v6599
        %v6669 = vadd.f32 %v5509, %v6245
        %v6670 = vadd.f32 %v5510, %v6601
        %v6671 = vadd.f32 %v5511, %v6248
        %v6672 = vadd.f32 %v5512, %v6604
        %v6673 = vadd.f32 %v5513, %v6250
        %v6674 = vadd.f32 %v5514, %v6606
        %v6675 = vadd.f32 %v5515, %v6253
        %v6676 = vadd.f32 %v5516, %v6609
        %v6677 = vadd.f32 %v5517, %v6255
        %v6678 = vadd.f32 %v5518, %v6611
        %v6679 = vadd.f32 %v5519, %v6258
        %v6680 = vadd.f32 %v5520, %v6614
        %v6681 = vadd.f32 %v5521, %v6260
        %v6682 = vadd.f32 %v5522, %v6616
        %v6683 = vadd.f32 %v5523, %v6263
        %v6684 = vadd.f32 %v5524, %v6619
        %v6685 = vadd.f32 %v5525, %v6265
        %v6686 = vadd.f32 %v5526, %v6621
        %6687 = vst [vmem:[#allocation2] sm:$0xff] %v6623
        %6688 = vst [vmem:[#allocation2 + $0x8] sm:$0xff] %v6624
        %6689 = vst [vmem:[#allocation2 + $0x10] sm:$0xff] %v6625
        %6690 = vst [vmem:[#allocation2 + $0x18] sm:$0xff] %v6626
        %6691 = vst [vmem:[#allocation2 + $0x20] sm:$0xff] %v6627
        %6692 = vst [vmem:[#allocation2 + $0x28] sm:$0xff] %v6628
        %6693 = vst [vmem:[#allocation2 + $0x30] sm:$0xff] %v6629
        %6694 = vst [vmem:[#allocation2 + $0x38] sm:$0xff] %v6630
        %6695 = vst [vmem:[#allocation2 + $0x40] sm:$0xff] %v6631
        %6696 = vst [vmem:[#allocation2 + $0x48] sm:$0xff] %v6632
        %6697 = vst [vmem:[#allocation2 + $0x50] sm:$0xff] %v6633
        %6698 = vst [vmem:[#allocation2 + $0x58] sm:$0xff] %v6634
        %6699 = vst [vmem:[#allocation2 + $0x60] sm:$0xff] %v6635
        %6700 = vst [vmem:[#allocation2 + $0x68] sm:$0xff] %v6636
        %6701 = vst [vmem:[#allocation2 + $0x70] sm:$0xff] %v6637
        %6702 = vst [vmem:[#allocation2 + $0x78] sm:$0xff] %v6638
        %6703 = vst [vmem:[#allocation2 + $0x80] sm:$0xff] %v6639
        %6704 = vst [vmem:[#allocation2 + $0x88] sm:$0xff] %v6640
        %6705 = vst [vmem:[#allocation2 + $0x90] sm:$0xff] %v6641
        %6706 = vst [vmem:[#allocation2 + $0x98] sm:$0xff] %v6642
        %6707 = vst [vmem:[#allocation2 + $0xa0] sm:$0xff] %v6643
        %6708 = vst [vmem:[#allocation2 + $0xa8] sm:$0xff] %v6644
        %6709 = vst [vmem:[#allocation2 + $0xb0] sm:$0xff] %v6645
        %6710 = vst [vmem:[#allocation2 + $0xb8] sm:$0xff] %v6646
        %6711 = vst [vmem:[#allocation2 + $0xc0] sm:$0xff] %v6647
        %6712 = vst [vmem:[#allocation2 + $0xc8] sm:$0xff] %v6648
        %6713 = vst [vmem:[#allocation2 + $0xd0] sm:$0xff] %v6649
        %6714 = vst [vmem:[#allocation2 + $0xd8] sm:$0xff] %v6650
        %6715 = vst [vmem:[#allocation2 + $0xe0] sm:$0xff] %v6651
        %6716 = vst [vmem:[#allocation2 + $0xe8] sm:$0xff] %v6652
        %6717 = vst [vmem:[#allocation2 + $0xf0] sm:$0xff] %v6653
        %6718 = vst [vmem:[#allocation2 + $0xf8] sm:$0xff] %v6654
        %6719 = vst [vmem:[#allocation2 + $0x100] sm:$0xff] %v6655
        %6720 = vst [vmem:[#allocation2 + $0x108] sm:$0xff] %v6656
        %6721 = vst [vmem:[#allocation2 + $0x110] sm:$0xff] %v6657
        %6722 = vst [vmem:[#allocation2 + $0x118] sm:$0xff] %v6658
        %6723 = vst [vmem:[#allocation2 + $0x120] sm:$0xff] %v6659
        %6724 = vst [vmem:[#allocation2 + $0x128] sm:$0xff] %v6660
        %6725 = vst [vmem:[#allocation2 + $0x130] sm:$0xff] %v6661
        %6726 = vst [vmem:[#allocation2 + $0x138] sm:$0xff] %v6662
        %6727 = vst [vmem:[#allocation2 + $0x140] sm:$0xff] %v6663
        %6728 = vst [vmem:[#allocation2 + $0x148] sm:$0xff] %v6664
        %6729 = vst [vmem:[#allocation2 + $0x150] sm:$0xff] %v6665
        %6730 = vst [vmem:[#allocation2 + $0x158] sm:$0xff] %v6666
        %6731 = vst [vmem:[#allocation2 + $0x160] sm:$0xff] %v6667
        %6732 = vst [vmem:[#allocation2 + $0x168] sm:$0xff] %v6668
        %6733 = vst [vmem:[#allocation2 + $0x170] sm:$0xff] %v6669
        %6734 = vst [vmem:[#allocation2 + $0x178] sm:$0xff] %v6670
        %6735 = vst [vmem:[#allocation2 + $0x180] sm:$0xff] %v6671
        %6736 = vst [vmem:[#allocation2 + $0x188] sm:$0xff] %v6672
        %6737 = vst [vmem:[#allocation2 + $0x190] sm:$0xff] %v6673
        %6738 = vst [vmem:[#allocation2 + $0x198] sm:$0xff] %v6674
        %6739 = vst [vmem:[#allocation2 + $0x1a0] sm:$0xff] %v6675
        %6740 = vst [vmem:[#allocation2 + $0x1a8] sm:$0xff] %v6676
        %6741 = vst [vmem:[#allocation2 + $0x1b0] sm:$0xff] %v6677
        %6742 = vst [vmem:[#allocation2 + $0x1b8] sm:$0xff] %v6678
        %6743 = vst [vmem:[#allocation2 + $0x1c0] sm:$0xff] %v6679
        %6744 = vst [vmem:[#allocation2 + $0x1c8] sm:$0xff] %v6680
        %6745 = vst [vmem:[#allocation2 + $0x1d0] sm:$0xff] %v6681
        %6746 = vst [vmem:[#allocation2 + $0x1d8] sm:$0xff] %v6682
        %6747 = vst [vmem:[#allocation2 + $0x1e0] sm:$0xff] %v6683
        %6748 = vst [vmem:[#allocation2 + $0x1e8] sm:$0xff] %v6684
        %6749 = vst [vmem:[#allocation2 + $0x1f0] sm:$0xff] %v6685
        %6750 = vst [vmem:[#allocation2 + $0x1f8] sm:$0xff] %v6686
        // Predicated region
        $region49: #{tpu_custom_call.1} parent=31 // pred_check
          %p6751 = pneg %p258
        $region50: #{tpu_custom_call.1} parent=31 // pred_check_branch
          %6753 = sbr.rel (%p6751) target = $region52
        $region51: #{tpu_custom_call.1} parent=31 // pred_region
          %v6754 = vld [vmem:[#allocation2] sm:$0xff]
          %v6755 = vld [vmem:[#allocation2 + $0x8] sm:$0xff]
          %v6756 = vld [vmem:[#allocation2 + $0x10] sm:$0xff]
          %v6757 = vld [vmem:[#allocation2 + $0x18] sm:$0xff]
          %v6758 = vld [vmem:[#allocation2 + $0x20] sm:$0xff]
          %v6759 = vld [vmem:[#allocation2 + $0x28] sm:$0xff]
          %v6760 = vld [vmem:[#allocation2 + $0x30] sm:$0xff]
          %v6761 = vld [vmem:[#allocation2 + $0x38] sm:$0xff]
          %v6762 = vld [vmem:[#allocation2 + $0x40] sm:$0xff]
          %v6763 = vld [vmem:[#allocation2 + $0x48] sm:$0xff]
          %v6764 = vld [vmem:[#allocation2 + $0x50] sm:$0xff]
          %v6765 = vld [vmem:[#allocation2 + $0x58] sm:$0xff]
          %v6766 = vld [vmem:[#allocation2 + $0x60] sm:$0xff]
          %v6767 = vld [vmem:[#allocation2 + $0x68] sm:$0xff]
          %v6768 = vld [vmem:[#allocation2 + $0x70] sm:$0xff]
          %v6769 = vld [vmem:[#allocation2 + $0x78] sm:$0xff]
          %v6770 = vld [vmem:[#allocation2 + $0x80] sm:$0xff]
          %v6771 = vld [vmem:[#allocation2 + $0x88] sm:$0xff]
          %v6772 = vld [vmem:[#allocation2 + $0x90] sm:$0xff]
          %v6773 = vld [vmem:[#allocation2 + $0x98] sm:$0xff]
          %v6774 = vld [vmem:[#allocation2 + $0xa0] sm:$0xff]
          %v6775 = vld [vmem:[#allocation2 + $0xa8] sm:$0xff]
          %v6776 = vld [vmem:[#allocation2 + $0xb0] sm:$0xff]
          %v6777 = vld [vmem:[#allocation2 + $0xb8] sm:$0xff]
          %v6778 = vld [vmem:[#allocation2 + $0xc0] sm:$0xff]
          %v6779 = vld [vmem:[#allocation2 + $0xc8] sm:$0xff]
          %v6780 = vld [vmem:[#allocation2 + $0xd0] sm:$0xff]
          %v6781 = vld [vmem:[#allocation2 + $0xd8] sm:$0xff]
          %v6782 = vld [vmem:[#allocation2 + $0xe0] sm:$0xff]
          %v6783 = vld [vmem:[#allocation2 + $0xe8] sm:$0xff]
          %v6784 = vld [vmem:[#allocation2 + $0xf0] sm:$0xff]
          %v6785 = vld [vmem:[#allocation2 + $0xf8] sm:$0xff]
          %v6786 = vld [vmem:[#allocation2 + $0x100] sm:$0xff]
          %v6787 = vld [vmem:[#allocation2 + $0x108] sm:$0xff]
          %v6788 = vld [vmem:[#allocation2 + $0x110] sm:$0xff]
          %v6789 = vld [vmem:[#allocation2 + $0x118] sm:$0xff]
          %v6790 = vld [vmem:[#allocation2 + $0x120] sm:$0xff]
          %v6791 = vld [vmem:[#allocation2 + $0x128] sm:$0xff]
          %v6792 = vld [vmem:[#allocation2 + $0x130] sm:$0xff]
          %v6793 = vld [vmem:[#allocation2 + $0x138] sm:$0xff]
          %v6794 = vld [vmem:[#allocation2 + $0x140] sm:$0xff]
          %v6795 = vld [vmem:[#allocation2 + $0x148] sm:$0xff]
          %v6796 = vld [vmem:[#allocation2 + $0x150] sm:$0xff]
          %v6797 = vld [vmem:[#allocation2 + $0x158] sm:$0xff]
          %v6798 = vld [vmem:[#allocation2 + $0x160] sm:$0xff]
          %v6799 = vld [vmem:[#allocation2 + $0x168] sm:$0xff]
          %v6800 = vld [vmem:[#allocation2 + $0x170] sm:$0xff]
          %v6801 = vld [vmem:[#allocation2 + $0x178] sm:$0xff]
          %v6802 = vld [vmem:[#allocation2 + $0x180] sm:$0xff]
          %v6803 = vld [vmem:[#allocation2 + $0x188] sm:$0xff]
          %v6804 = vld [vmem:[#allocation2 + $0x190] sm:$0xff]
          %v6805 = vld [vmem:[#allocation2 + $0x198] sm:$0xff]
          %v6806 = vld [vmem:[#allocation2 + $0x1a0] sm:$0xff]
          %v6807 = vld [vmem:[#allocation2 + $0x1a8] sm:$0xff]
          %v6808 = vld [vmem:[#allocation2 + $0x1b0] sm:$0xff]
          %v6809 = vld [vmem:[#allocation2 + $0x1b8] sm:$0xff]
          %v6810 = vld [vmem:[#allocation2 + $0x1c0] sm:$0xff]
          %v6811 = vld [vmem:[#allocation2 + $0x1c8] sm:$0xff]
          %v6812 = vld [vmem:[#allocation2 + $0x1d0] sm:$0xff]
          %v6813 = vld [vmem:[#allocation2 + $0x1d8] sm:$0xff]
          %v6814 = vld [vmem:[#allocation2 + $0x1e0] sm:$0xff]
          %v6815 = vld [vmem:[#allocation2 + $0x1e8] sm:$0xff]
          %v6816 = vld [vmem:[#allocation2 + $0x1f0] sm:$0xff]
          %v6817 = vld [vmem:[#allocation2 + $0x1f8] sm:$0xff]
          %v6818 = vpack.c.bf16 %v6755, %v6754
          %v6819 = vpack.c.bf16 %v6757, %v6756
          %v6820 = vpack.c.bf16 %v6759, %v6758
          %v6821 = vpack.c.bf16 %v6761, %v6760
          %v6822 = vpack.c.bf16 %v6763, %v6762
          %v6823 = vpack.c.bf16 %v6765, %v6764
          %v6824 = vpack.c.bf16 %v6767, %v6766
          %v6825 = vpack.c.bf16 %v6769, %v6768
          %v6826 = vpack.c.bf16 %v6771, %v6770
          %v6827 = vpack.c.bf16 %v6773, %v6772
          %v6828 = vpack.c.bf16 %v6775, %v6774
          %v6829 = vpack.c.bf16 %v6777, %v6776
          %v6830 = vpack.c.bf16 %v6779, %v6778
          %v6831 = vpack.c.bf16 %v6781, %v6780
          %v6832 = vpack.c.bf16 %v6783, %v6782
          %v6833 = vpack.c.bf16 %v6785, %v6784
          %v6834 = vpack.c.bf16 %v6787, %v6786
          %v6835 = vpack.c.bf16 %v6789, %v6788
          %v6836 = vpack.c.bf16 %v6791, %v6790
          %v6837 = vpack.c.bf16 %v6793, %v6792
          %v6838 = vpack.c.bf16 %v6795, %v6794
          %v6839 = vpack.c.bf16 %v6797, %v6796
          %v6840 = vpack.c.bf16 %v6799, %v6798
          %v6841 = vpack.c.bf16 %v6801, %v6800
          %v6842 = vpack.c.bf16 %v6803, %v6802
          %v6843 = vpack.c.bf16 %v6805, %v6804
          %v6844 = vpack.c.bf16 %v6807, %v6806
          %v6845 = vpack.c.bf16 %v6809, %v6808
          %v6846 = vpack.c.bf16 %v6811, %v6810
          %v6847 = vpack.c.bf16 %v6813, %v6812
          %v6848 = vpack.c.bf16 %v6815, %v6814
          %v6849 = vpack.c.bf16 %v6817, %v6816
          %6850 = vst [vmem:[%s253] sm:$0xff] %v6818
          %6851 = vst [vmem:[%s253 + $0x8] sm:$0xff] %v6819
          %6852 = vst [vmem:[%s253 + $0x10] sm:$0xff] %v6820
          %6853 = vst [vmem:[%s253 + $0x18] sm:$0xff] %v6821
          %6854 = vst [vmem:[%s253 + $0x20] sm:$0xff] %v6822
          %6855 = vst [vmem:[%s253 + $0x28] sm:$0xff] %v6823
          %6856 = vst [vmem:[%s253 + $0x30] sm:$0xff] %v6824
          %6857 = vst [vmem:[%s253 + $0x38] sm:$0xff] %v6825
          %6858 = vst [vmem:[%s253 + $0x40] sm:$0xff] %v6826
          %6859 = vst [vmem:[%s253 + $0x48] sm:$0xff] %v6827
          %6860 = vst [vmem:[%s253 + $0x50] sm:$0xff] %v6828
          %6861 = vst [vmem:[%s253 + $0x58] sm:$0xff] %v6829
          %6862 = vst [vmem:[%s253 + $0x60] sm:$0xff] %v6830
          %6863 = vst [vmem:[%s253 + $0x68] sm:$0xff] %v6831
          %6864 = vst [vmem:[%s253 + $0x70] sm:$0xff] %v6832
          %6865 = vst [vmem:[%s253 + $0x78] sm:$0xff] %v6833
          %6866 = vst [vmem:[%s253 + $0x80] sm:$0xff] %v6834
          %6867 = vst [vmem:[%s253 + $0x88] sm:$0xff] %v6835
          %6868 = vst [vmem:[%s253 + $0x90] sm:$0xff] %v6836
          %6869 = vst [vmem:[%s253 + $0x98] sm:$0xff] %v6837
          %6870 = vst [vmem:[%s253 + $0xa0] sm:$0xff] %v6838
          %6871 = vst [vmem:[%s253 + $0xa8] sm:$0xff] %v6839
          %6872 = vst [vmem:[%s253 + $0xb0] sm:$0xff] %v6840
          %6873 = vst [vmem:[%s253 + $0xb8] sm:$0xff] %v6841
          %6874 = vst [vmem:[%s253 + $0xc0] sm:$0xff] %v6842
          %6875 = vst [vmem:[%s253 + $0xc8] sm:$0xff] %v6843
          %6876 = vst [vmem:[%s253 + $0xd0] sm:$0xff] %v6844
          %6877 = vst [vmem:[%s253 + $0xd8] sm:$0xff] %v6845
          %6878 = vst [vmem:[%s253 + $0xe0] sm:$0xff] %v6846
          %6879 = vst [vmem:[%s253 + $0xe8] sm:$0xff] %v6847
          %6880 = vst [vmem:[%s253 + $0xf0] sm:$0xff] %v6848
          %6881 = vst [vmem:[%s253 + $0xf8] sm:$0xff] %v6849
        $region52: #{tpu_custom_call.1} parent=31 // pred_fallthru
          _
        %s6882 = sand.u32 %s119, 1
        %s6883 = scalar_lea.sflag [#allocation5], %s6882
        %s6884 = sand.u32 %s119, 1
        %s6885 = smul.addr %s6884, 256
        %s6886 = scalar_lea.vmem [#allocation9], %s6885
        // Predicated region
        $region53: #{tpu_custom_call.1} parent=31 // pred_check
          %p6887 = pneg %p129
        $region54: #{tpu_custom_call.1} parent=31 // pred_check_branch
          %6889 = sbr.rel (%p6887) target = $region56
        $region55: #{tpu_custom_call.1} parent=31 // pred_region
          %s6890 = smul.u32 32, %s25
          %6892 = vsyncadd %s6883, 0
          %s6893 = smul.addr %s6890, 2
          %s6894 = smul.addr %s6893, 4
          %s6895 = scalar_lea.hbm %s3, %s6894
          %s6896 = sshll.u32 %s6886, 4
          %s6897 = int_to_ptr.vmem [resolvable:$true] %s6896
          %s6898 = sshll.u32 %s6895, 4
          %s6899 = int_to_ptr.hbm [resolvable:$true] %s6898
          %6904 = dma.vmem_to_hbm [thread:$0]  %s6897, 4096, %s6899, %s6883, 128, 128, 8
        $region56: #{tpu_custom_call.1} parent=31 // pred_fallthru
          _
      $region32: #{tpu_custom_call.1} parent=5 // pred_fallthru
        _
      %p6905 = scmp.le.s32.totalorder 2, %s16
      // Predicated region
      $region57: #{tpu_custom_call.1} parent=5 // pred_check
        %p6906 = pneg %p6905
      $region58: #{tpu_custom_call.1} parent=5 // pred_check_branch
        %6908 = sbr.rel (%p6906) target = $region60
      $region59: #{tpu_custom_call.1} parent=5 // pred_region
        %s6909 = ssub.s32 %s16, 2
        // Predicated region
        $region61: #{tpu_custom_call.1} parent=59 // pred_check
          %p6910 = pneg %p135
        $region62: #{tpu_custom_call.1} parent=59 // pred_check_branch
          %6912 = sbr.rel (%p6910) target = $region64
        $region63: #{tpu_custom_call.1} parent=59 // pred_region
          %s6913 = sand.u32 %s120, 1
          %s6914 = scalar_lea.sflag [#allocation5], %s6913
          %s6915 = sand.u32 %s120, 1
          %s6916 = smul.addr %s6915, 256
          %s6917 = scalar_lea.vmem [#allocation9], %s6916
          %6919 = dma.done %s6914, 4096
        $region64: #{tpu_custom_call.1} parent=59 // pred_fallthru
          _
      $region60: #{tpu_custom_call.1} parent=5 // pred_fallthru
        _
    $region6: #{tpu_custom_call.1} parent=1 // loop_footer
      %s20 = sadd.s32 1, %s16
    $region7: #{tpu_custom_call.1} parent=1 // loop_footer_branch
      %15 = sbr.rel target = $region3
    $region8: #{tpu_custom_call.1} parent=1 // loop_exit
      _
    %6920 = vsyncpa [#allocation4], 1
    %s6921 = scalar_lea.sflag [#allocation4], 1
    %6922 = vsyncpa %s6921, 1
    %6923 = vsyncpa [#allocation7], 1
    %6924 = vsyncpa [#allocation5], 1
    %s6925 = scalar_lea.sflag [#allocation5], 1
    %6926 = vsyncpa %s6925, 1

</llo_original>
